<compile_context>
chip_gen: v7x
topology: tpu7x:2x2x1
jax: 0.10.0
libtpu: 0.0.40
codegen_flags: <defaults>
</compile_context>

<pallas_src>
import functools

import jax
import jax.numpy as jnp
from jax.experimental import pallas as pl
from jax.experimental.pallas import tpu as pltpu


# --------------------------- fused per-batch-element kernel ---------------------------
def _conv3x3_bn_relu(pad_ref, col_ref, x_hwc, w_ref, scale_ref, bias_ref, H, W):
    """3x3 same-padding conv + folded-BN + ReLU for one image via a single im2col matmul.

    x_hwc     : (H, W, Cin) value
    pad_ref   : VMEM (H+2, W+2, Cpad) scratch (Cpad >= Cin); border is already zero
    col_ref   : VMEM (H, W, 9*Cpad) scratch, im2col patch matrix
    w_ref     : (9*Cin, Cout) flattened HWIO weight
    scale_ref : (1, Cout) folded BN scale
    bias_ref  : (1, Cout) folded BN bias
    returns   : (H*W, Cout) f32
    """
    cin = x_hwc.shape[-1]
    # Interior write only; the zero halo (rows/cols 0 and H+1/W+1) was written once at
    # kernel start and is never overwritten, so padding=1 stays correct for every layer.
    pad_ref[1:H + 1, 1:W + 1, :cin] = x_hwc
    # im2col: lay the 9 shifted taps side by side along the lane axis.
    for t in range(9):
        dy, dx = divmod(t, 3)
        col_ref[:, :, t * cin:(t + 1) * cin] = pad_ref[dy:dy + H, dx:dx + W, :cin]
    patches = col_ref[:, :, :9 * cin].reshape(H * W, 9 * cin)
    # One MXU matmul with K = 9*Cin instead of 9 small K=Cin matmuls.
    y = jnp.dot(patches, w_ref[...], preferred_element_type=jnp.float32)
    y = y * scale_ref[...] + bias_ref[...]
    return jnp.maximum(y, 0.0)


def _disc_kernel(x_ref, w1_ref, s1_ref, b1_ref, w2_ref, s2_ref, b2_ref,
                 w3_ref, s3_ref, b3_ref, fw1_ref, fb1_ref, fw2_ref, fb2_ref,
                 fw3_ref, fb3_ref, o_ref, pad_ref, col_ref, *, H, W):
    # Zero the padded-activation scratch once; only its interior is rewritten per layer,
    # so the halo remains zero for all three convolutions.
    pad_ref[...] = jnp.zeros_like(pad_ref)

    x = x_ref[0]                                                  # (H, W, Cin)
    h = _conv3x3_bn_relu(pad_ref, col_ref, x, w1_ref, s1_ref, b1_ref, H, W)
    h = _conv3x3_bn_relu(pad_ref, col_ref, h.reshape(H, W, -1),
                         w2_ref, s2_ref, b2_ref, H, W)
    h = _conv3x3_bn_relu(pad_ref, col_ref, h.reshape(H, W, -1),
                         w3_ref, s3_ref, b3_ref, H, W)            # (H*W, 128)

    # AdaptiveAvgPool2d(1) + squeeze -> (1, 128)
    pooled = jnp.mean(h, axis=0, keepdims=True)

    # 3-layer MLP head.
    z = jnp.maximum(
        jnp.dot(pooled, fw1_ref[...], preferred_element_type=jnp.float32) + fb1_ref[...],
        0.0)
    z = jnp.maximum(
        jnp.dot(z, fw2_ref[...], preferred_element_type=jnp.float32) + fb2_ref[...],
        0.0)
    logits = jnp.dot(z, fw3_ref[...], preferred_element_type=jnp.float32) + fb3_ref[...]

    # Softmax over the class dimension.
    m = jnp.max(logits, axis=1, keepdims=True)
    e = jnp.exp(logits - m)
    inv = pl.reciprocal(jnp.sum(e, axis=1, keepdims=True), approx=True)
    o_ref[0] = e * inv                                            # (1, n_out)


# -------------------------------------- wrapper ---------------------------------------
def discriminator_forward(x_nchw, params):
    x = jnp.transpose(x_nchw, (0, 2, 3, 1)).astype(jnp.float32)   # NCHW -> NHWC
    N, H, W, Cin = x.shape
    (w1, s1, b1), (w2, s2, b2), (w3, s3, b3) = params["conv"]
    fw1, fb1, fw2, fb2, fw3, fb3 = params["fc"]
    n_out = fw3.shape[-1]

    def flat(w):  # HWIO (3,3,cin,cout) -> (9*cin, cout); matches im2col column order.
        return w.reshape(9 * w.shape[2], w.shape[3])

    w1f, w2f, w3f = flat(w1), flat(w2), flat(w3)
    cpad = max(w1.shape[2], w2.shape[2], w3.shape[2])   # widest conv input channel count

    def full_spec(a):  # whole-array block, loaded once (constant block index).
        return pl.BlockSpec(a.shape, lambda b: (0,) * a.ndim)

    weights = (w1f, s1, b1, w2f, s2, b2, w3f, s3, b3, fw1, fb1, fw2, fb2, fw3, fb3)
    kern = functools.partial(_disc_kernel, H=H, W=W)

    out = pl.pallas_call(
        kern,
        out_shape=jax.ShapeDtypeStruct((N, 1, n_out), jnp.float32),
        grid=(N,),
        in_specs=[pl.BlockSpec((1, H, W, Cin), lambda b: (b, 0, 0, 0))]
                 + [full_spec(a) for a in weights],
        out_specs=pl.BlockSpec((1, 1, n_out), lambda b: (b, 0, 0)),
        scratch_shapes=[
            pltpu.VMEM((H + 2, W + 2, cpad), jnp.float32),   # padded activation halo
            pltpu.VMEM((H, W, 9 * cpad), jnp.float32),       # im2col patch matrix
        ],
        compiler_params=pltpu.CompilerParams(
            dimension_semantics=("parallel",)),               # batch across TCs (v7x)
    )(x, *weights)
    return out.reshape(N, n_out)


# ------------------------------ deterministic parameters ------------------------------
def init_params(key, in_channels, out_channels=3):
    ks = jax.random.split(key, 32)
    eps = 1e-5
    conv_params = []
    cin = in_channels
    i = 0
    for cout in (32, 64, 128):
        w = 0.1 * jax.random.normal(ks[i], (3, 3, cin, cout), jnp.float32)
        b = 0.05 * jax.random.normal(ks[i + 1], (cout,), jnp.float32)
        gamma = 1.0 + 0.1 * jax.random.normal(ks[i + 2], (cout,), jnp.float32)
        beta = 0.05 * jax.random.normal(ks[i + 3], (cout,), jnp.float32)
        mean = 0.05 * jax.random.normal(ks[i + 4], (cout,), jnp.float32)
        var = 1.0 + 0.1 * jax.random.uniform(ks[i + 5], (cout,), jnp.float32)
        scale = gamma / jnp.sqrt(var + eps)
        bias = beta + (b - mean) * scale
        conv_params.append((w, scale.reshape(1, cout), bias.reshape(1, cout)))
        cin = cout
        i += 6

    dims = [(128, 64), (64, 32), (32, out_channels)]
    fc = []
    for (din, dout) in dims:
        w = 0.1 * jax.random.normal(ks[i], (din, dout), jnp.float32)
        b = 0.05 * jax.random.normal(ks[i + 1], (1, dout), jnp.float32)
        fc.extend([w, b])
        i += 2
    return {"conv": conv_params, "fc": tuple(fc)}


# -------------------------------- pure-JAX reference -----------------------------------
def reference_forward(x_nchw, params):
    x = jnp.transpose(x_nchw, (0, 2, 3, 1))
    for (w, scale, bias) in params["conv"]:
        y = jax.lax.conv_general_dilated(
            x, w, window_strides=(1, 1), padding="SAME",
            dimension_numbers=("NHWC", "HWIO", "NHWC"))
        x = jnp.maximum(y * scale.reshape(1, 1, 1, -1) + bias.reshape(1, 1, 1, -1), 0.0)
    pooled = jnp.mean(x, axis=(1, 2))
    w1, b1, w2, b2, w3, b3 = params["fc"]
    h = jnp.maximum(pooled @ w1 + b1, 0.0)
    h = jnp.maximum(h @ w2 + b2, 0.0)
    logits = h @ w3 + b3
    return jax.nn.softmax(logits, axis=1)


if __name__ == "__main__":
    key = jax.random.PRNGKey(0)
    pkey, xkey = jax.random.split(key)
    params = init_params(pkey, in_channels=4, out_channels=3)
    x = jax.random.normal(xkey, (2, 4, 16, 16), jnp.float32)  # NCHW, like PyTorch

    out = discriminator_forward(x, params)
    out = jax.block_until_ready(out)

    ref = reference_forward(x, params)
    assert out.shape == (2, 3), out.shape
    if not bool(jnp.allclose(out, ref, atol=2e-2, rtol=2e-2)):
        raise AssertionError("Pallas output mismatches pure-JAX reference")
    print("KERNEL_OK")
</pallas_src>

<mosaic_0001>
module attributes {stable_mosaic.version = 11 : i64} {
  func.func @_disc_kernel(%arg0: i32, %arg1: memref<1x16x16x4xf32, #tpu.memory_space<vmem>>, %arg2: memref<36x32xf32, #tpu.memory_space<vmem>>, %arg3: memref<1x32xf32, #tpu.memory_space<vmem>>, %arg4: memref<1x32xf32, #tpu.memory_space<vmem>>, %arg5: memref<288x64xf32, #tpu.memory_space<vmem>>, %arg6: memref<1x64xf32, #tpu.memory_space<vmem>>, %arg7: memref<1x64xf32, #tpu.memory_space<vmem>>, %arg8: memref<576x128xf32, #tpu.memory_space<vmem>>, %arg9: memref<1x128xf32, #tpu.memory_space<vmem>>, %arg10: memref<1x128xf32, #tpu.memory_space<vmem>>, %arg11: memref<128x64xf32, #tpu.memory_space<vmem>>, %arg12: memref<1x64xf32, #tpu.memory_space<vmem>>, %arg13: memref<64x32xf32, #tpu.memory_space<vmem>>, %arg14: memref<1x32xf32, #tpu.memory_space<vmem>>, %arg15: memref<32x3xf32, #tpu.memory_space<vmem>>, %arg16: memref<1x3xf32, #tpu.memory_space<vmem>>, %arg17: memref<1x1x3xf32, #tpu.memory_space<vmem>>, %arg18: memref<18x18x64xf32, #tpu.memory_space<vmem>>, %arg19: memref<16x16x576xf32, #tpu.memory_space<vmem>>) attributes {dimension_semantics = [#tpu.dimension_semantics<parallel>], iteration_bounds = array<i64: 2>, scalar_prefetch = 0 : i64, scratch_operands = 2 : i64, tpu.core_type = #tpu.core_type<tc>, window_params = [{transform_indices = @transform_0, window_bounds = array<i64: 1, 16, 16, 4>}, {pipeline_mode = #tpu.pipeline_mode<synchronous>, transform_indices = @transform_1, window_bounds = array<i64: 36, 32>}, {pipeline_mode = #tpu.pipeline_mode<synchronous>, transform_indices = @transform_2, window_bounds = array<i64: 1, 32>}, {pipeline_mode = #tpu.pipeline_mode<synchronous>, transform_indices = @transform_3, window_bounds = array<i64: 1, 32>}, {pipeline_mode = #tpu.pipeline_mode<synchronous>, transform_indices = @transform_4, window_bounds = array<i64: 288, 64>}, {pipeline_mode = #tpu.pipeline_mode<synchronous>, transform_indices = @transform_5, window_bounds = array<i64: 1, 64>}, {pipeline_mode = #tpu.pipeline_mode<synchronous>, transform_indices = @transform_6, window_bounds = array<i64: 1, 64>}, {pipeline_mode = #tpu.pipeline_mode<synchronous>, transform_indices = @transform_7, window_bounds = array<i64: 576, 128>}, {pipeline_mode = #tpu.pipeline_mode<synchronous>, transform_indices = @transform_8, window_bounds = array<i64: 1, 128>}, {pipeline_mode = #tpu.pipeline_mode<synchronous>, transform_indices = @transform_9, window_bounds = array<i64: 1, 128>}, {pipeline_mode = #tpu.pipeline_mode<synchronous>, transform_indices = @transform_10, window_bounds = array<i64: 128, 64>}, {pipeline_mode = #tpu.pipeline_mode<synchronous>, transform_indices = @transform_11, window_bounds = array<i64: 1, 64>}, {pipeline_mode = #tpu.pipeline_mode<synchronous>, transform_indices = @transform_12, window_bounds = array<i64: 64, 32>}, {pipeline_mode = #tpu.pipeline_mode<synchronous>, transform_indices = @transform_13, window_bounds = array<i64: 1, 32>}, {pipeline_mode = #tpu.pipeline_mode<synchronous>, transform_indices = @transform_14, window_bounds = array<i64: 32, 3>}, {pipeline_mode = #tpu.pipeline_mode<synchronous>, transform_indices = @transform_15, window_bounds = array<i64: 1, 3>}, {transform_indices = @transform_16, window_bounds = array<i64: 1, 1, 3>}]} {
    %cst = arith.constant 0.000000e+00 : f32
    %0 = vector.broadcast %cst : f32 to vector<18x18x64xf32>
    %c0 = arith.constant 0 : index
    %c0_0 = arith.constant 0 : index
    %c0_1 = arith.constant 0 : index
    %1 = vector.load %arg18[%c0, %c0_0, %c0_1] : memref<18x18x64xf32, #tpu.memory_space<vmem>>, vector<18x18x64xf32>
    tpu.vector_store %arg18[%c0, %c0_0, %c0_1], %0 {strides = array<i32>} : memref<18x18x64xf32, #tpu.memory_space<vmem>>, vector<18x18x64xf32>,
    %c0_2 = arith.constant 0 : index
    %c0_3 = arith.constant 0 : index
    %c0_4 = arith.constant 0 : index
    %c0_5 = arith.constant 0 : index
    %2 = vector.load %arg1[%c0_2, %c0_3, %c0_4, %c0_5] : memref<1x16x16x4xf32, #tpu.memory_space<vmem>>, vector<1x16x16x4xf32>
    %3 = vector.shape_cast %2 : vector<1x16x16x4xf32> to vector<16x16x4xf32>
    %c1 = arith.constant 1 : index
    %c1_6 = arith.constant 1 : index
    %c0_7 = arith.constant 0 : index
    %4 = vector.load %arg18[%c1, %c1_6, %c0_7] : memref<18x18x64xf32, #tpu.memory_space<vmem>>, vector<16x16x4xf32>
    tpu.vector_store %arg18[%c1, %c1_6, %c0_7], %3 {strides = array<i32>} : memref<18x18x64xf32, #tpu.memory_space<vmem>>, vector<16x16x4xf32>,
    %c0_8 = arith.constant 0 : index
    %c0_9 = arith.constant 0 : index
    %c0_10 = arith.constant 0 : index
    %5 = vector.load %arg18[%c0_8, %c0_9, %c0_10] : memref<18x18x64xf32, #tpu.memory_space<vmem>>, vector<16x16x4xf32>
    %c0_11 = arith.constant 0 : index
    %c0_12 = arith.constant 0 : index
    %c0_13 = arith.constant 0 : index
    %6 = vector.load %arg19[%c0_11, %c0_12, %c0_13] : memref<16x16x576xf32, #tpu.memory_space<vmem>>, vector<16x16x4xf32>
    tpu.vector_store %arg19[%c0_11, %c0_12, %c0_13], %5 {strides = array<i32>} : memref<16x16x576xf32, #tpu.memory_space<vmem>>, vector<16x16x4xf32>,
    %c0_14 = arith.constant 0 : index
    %c1_15 = arith.constant 1 : index
    %c0_16 = arith.constant 0 : index
    %7 = vector.load %arg18[%c0_14, %c1_15, %c0_16] : memref<18x18x64xf32, #tpu.memory_space<vmem>>, vector<16x16x4xf32>
    %c0_17 = arith.constant 0 : index
    %c0_18 = arith.constant 0 : index
    %c4 = arith.constant 4 : index
    %8 = vector.load %arg19[%c0_17, %c0_18, %c4] : memref<16x16x576xf32, #tpu.memory_space<vmem>>, vector<16x16x4xf32>
    tpu.vector_store %arg19[%c0_17, %c0_18, %c4], %7 {strides = array<i32>} : memref<16x16x576xf32, #tpu.memory_space<vmem>>, vector<16x16x4xf32>,
    %c0_19 = arith.constant 0 : index
    %c2 = arith.constant 2 : index
    %c0_20 = arith.constant 0 : index
    %9 = vector.load %arg18[%c0_19, %c2, %c0_20] : memref<18x18x64xf32, #tpu.memory_space<vmem>>, vector<16x16x4xf32>
    %c0_21 = arith.constant 0 : index
    %c0_22 = arith.constant 0 : index
    %c8 = arith.constant 8 : index
    %10 = vector.load %arg19[%c0_21, %c0_22, %c8] : memref<16x16x576xf32, #tpu.memory_space<vmem>>, vector<16x16x4xf32>
    tpu.vector_store %arg19[%c0_21, %c0_22, %c8], %9 {strides = array<i32>} : memref<16x16x576xf32, #tpu.memory_space<vmem>>, vector<16x16x4xf32>,
    %c1_23 = arith.constant 1 : index
    %c0_24 = arith.constant 0 : index
    %c0_25 = arith.constant 0 : index
    %11 = vector.load %arg18[%c1_23, %c0_24, %c0_25] : memref<18x18x64xf32, #tpu.memory_space<vmem>>, vector<16x16x4xf32>
    %c0_26 = arith.constant 0 : index
    %c0_27 = arith.constant 0 : index
    %c12 = arith.constant 12 : index
    %12 = vector.load %arg19[%c0_26, %c0_27, %c12] : memref<16x16x576xf32, #tpu.memory_space<vmem>>, vector<16x16x4xf32>
    tpu.vector_store %arg19[%c0_26, %c0_27, %c12], %11 {strides = array<i32>} : memref<16x16x576xf32, #tpu.memory_space<vmem>>, vector<16x16x4xf32>,
    %c1_28 = arith.constant 1 : index
    %c1_29 = arith.constant 1 : index
    %c0_30 = arith.constant 0 : index
    %13 = vector.load %arg18[%c1_28, %c1_29, %c0_30] : memref<18x18x64xf32, #tpu.memory_space<vmem>>, vector<16x16x4xf32>
    %c0_31 = arith.constant 0 : index
    %c0_32 = arith.constant 0 : index
    %c16 = arith.constant 16 : index
    %14 = vector.load %arg19[%c0_31, %c0_32, %c16] : memref<16x16x576xf32, #tpu.memory_space<vmem>>, vector<16x16x4xf32>
    tpu.vector_store %arg19[%c0_31, %c0_32, %c16], %13 {strides = array<i32>} : memref<16x16x576xf32, #tpu.memory_space<vmem>>, vector<16x16x4xf32>,
    %c1_33 = arith.constant 1 : index
    %c2_34 = arith.constant 2 : index
    %c0_35 = arith.constant 0 : index
    %15 = vector.load %arg18[%c1_33, %c2_34, %c0_35] : memref<18x18x64xf32, #tpu.memory_space<vmem>>, vector<16x16x4xf32>
    %c0_36 = arith.constant 0 : index
    %c0_37 = arith.constant 0 : index
    %c20 = arith.constant 20 : index
    %16 = vector.load %arg19[%c0_36, %c0_37, %c20] : memref<16x16x576xf32, #tpu.memory_space<vmem>>, vector<16x16x4xf32>
    tpu.vector_store %arg19[%c0_36, %c0_37, %c20], %15 {strides = array<i32>} : memref<16x16x576xf32, #tpu.memory_space<vmem>>, vector<16x16x4xf32>,
    %c2_38 = arith.constant 2 : index
    %c0_39 = arith.constant 0 : index
    %c0_40 = arith.constant 0 : index
    %17 = vector.load %arg18[%c2_38, %c0_39, %c0_40] : memref<18x18x64xf32, #tpu.memory_space<vmem>>, vector<16x16x4xf32>
    %c0_41 = arith.constant 0 : index
    %c0_42 = arith.constant 0 : index
    %c24 = arith.constant 24 : index
    %18 = vector.load %arg19[%c0_41, %c0_42, %c24] : memref<16x16x576xf32, #tpu.memory_space<vmem>>, vector<16x16x4xf32>
    tpu.vector_store %arg19[%c0_41, %c0_42, %c24], %17 {strides = array<i32>} : memref<16x16x576xf32, #tpu.memory_space<vmem>>, vector<16x16x4xf32>,
    %c2_43 = arith.constant 2 : index
    %c1_44 = arith.constant 1 : index
    %c0_45 = arith.constant 0 : index
    %19 = vector.load %arg18[%c2_43, %c1_44, %c0_45] : memref<18x18x64xf32, #tpu.memory_space<vmem>>, vector<16x16x4xf32>
    %c0_46 = arith.constant 0 : index
    %c0_47 = arith.constant 0 : index
    %c28 = arith.constant 28 : index
    %20 = vector.load %arg19[%c0_46, %c0_47, %c28] : memref<16x16x576xf32, #tpu.memory_space<vmem>>, vector<16x16x4xf32>
    tpu.vector_store %arg19[%c0_46, %c0_47, %c28], %19 {strides = array<i32>} : memref<16x16x576xf32, #tpu.memory_space<vmem>>, vector<16x16x4xf32>,
    %c2_48 = arith.constant 2 : index
    %c2_49 = arith.constant 2 : index
    %c0_50 = arith.constant 0 : index
    %21 = vector.load %arg18[%c2_48, %c2_49, %c0_50] : memref<18x18x64xf32, #tpu.memory_space<vmem>>, vector<16x16x4xf32>
    %c0_51 = arith.constant 0 : index
    %c0_52 = arith.constant 0 : index
    %c32 = arith.constant 32 : index
    %22 = vector.load %arg19[%c0_51, %c0_52, %c32] : memref<16x16x576xf32, #tpu.memory_space<vmem>>, vector<16x16x4xf32>
    tpu.vector_store %arg19[%c0_51, %c0_52, %c32], %21 {strides = array<i32>} : memref<16x16x576xf32, #tpu.memory_space<vmem>>, vector<16x16x4xf32>,
    %c0_53 = arith.constant 0 : index
    %c0_54 = arith.constant 0 : index
    %c0_55 = arith.constant 0 : index
    %23 = vector.load %arg19[%c0_53, %c0_54, %c0_55] : memref<16x16x576xf32, #tpu.memory_space<vmem>>, vector<16x16x36xf32>
    %24 = vector.shape_cast %23 : vector<16x16x36xf32> to vector<256x36xf32>
    %c0_56 = arith.constant 0 : index
    %c0_57 = arith.constant 0 : index
    %25 = vector.load %arg2[%c0_56, %c0_57] : memref<36x32xf32, #tpu.memory_space<vmem>>, vector<36x32xf32>
    %cst_58 = arith.constant dense<0.000000e+00> : vector<256x32xf32>
    %26 = tpu.matmul %24, %25, %cst_58 {dimension_numbers = #tpu.dot_dimension_numbers<[1], [0], [0], [1], [0, 0, 1, 1], [], []>} : vector<256x36xf32>, vector<36x32xf32>, vector<256x32xf32> -> vector<256x32xf32>
    %c0_59 = arith.constant 0 : index
    %c0_60 = arith.constant 0 : index
    %27 = vector.load %arg3[%c0_59, %c0_60] : memref<1x32xf32, #tpu.memory_space<vmem>>, vector<1x32xf32>
    %28 = vector.broadcast %27 : vector<1x32xf32> to vector<256x32xf32>
    %29 = arith.mulf %26, %28 : vector<256x32xf32>
    %c0_61 = arith.constant 0 : index
    %c0_62 = arith.constant 0 : index
    %30 = vector.load %arg4[%c0_61, %c0_62] : memref<1x32xf32, #tpu.memory_space<vmem>>, vector<1x32xf32>
    %31 = vector.broadcast %30 : vector<1x32xf32> to vector<256x32xf32>
    %32 = arith.addf %29, %31 : vector<256x32xf32>
    %cst_63 = arith.constant 0.000000e+00 : f32
    %33 = vector.broadcast %cst_63 : f32 to vector<256x32xf32>
    %34 = arith.maximumf %32, %33 : vector<256x32xf32>
    %35 = vector.shape_cast %34 : vector<256x32xf32> to vector<16x16x32xf32>
    %c1_64 = arith.constant 1 : index
    %c1_65 = arith.constant 1 : index
    %c0_66 = arith.constant 0 : index
    %36 = vector.load %arg18[%c1_64, %c1_65, %c0_66] : memref<18x18x64xf32, #tpu.memory_space<vmem>>, vector<16x16x32xf32>
    tpu.vector_store %arg18[%c1_64, %c1_65, %c0_66], %35 {strides = array<i32>} : memref<18x18x64xf32, #tpu.memory_space<vmem>>, vector<16x16x32xf32>,
    %c0_67 = arith.constant 0 : index
    %c0_68 = arith.constant 0 : index
    %c0_69 = arith.constant 0 : index
    %37 = vector.load %arg18[%c0_67, %c0_68, %c0_69] : memref<18x18x64xf32, #tpu.memory_space<vmem>>, vector<16x16x32xf32>
    %c0_70 = arith.constant 0 : index
    %c0_71 = arith.constant 0 : index
    %c0_72 = arith.constant 0 : index
    %38 = vector.load %arg19[%c0_70, %c0_71, %c0_72] : memref<16x16x576xf32, #tpu.memory_space<vmem>>, vector<16x16x32xf32>
    tpu.vector_store %arg19[%c0_70, %c0_71, %c0_72], %37 {strides = array<i32>} : memref<16x16x576xf32, #tpu.memory_space<vmem>>, vector<16x16x32xf32>,
    %c0_73 = arith.constant 0 : index
    %c1_74 = arith.constant 1 : index
    %c0_75 = arith.constant 0 : index
    %39 = vector.load %arg18[%c0_73, %c1_74, %c0_75] : memref<18x18x64xf32, #tpu.memory_space<vmem>>, vector<16x16x32xf32>
    %c0_76 = arith.constant 0 : index
    %c0_77 = arith.constant 0 : index
    %c32_78 = arith.constant 32 : index
    %40 = vector.load %arg19[%c0_76, %c0_77, %c32_78] : memref<16x16x576xf32, #tpu.memory_space<vmem>>, vector<16x16x32xf32>
    tpu.vector_store %arg19[%c0_76, %c0_77, %c32_78], %39 {strides = array<i32>} : memref<16x16x576xf32, #tpu.memory_space<vmem>>, vector<16x16x32xf32>,
    %c0_79 = arith.constant 0 : index
    %c2_80 = arith.constant 2 : index
    %c0_81 = arith.constant 0 : index
    %41 = vector.load %arg18[%c0_79, %c2_80, %c0_81] : memref<18x18x64xf32, #tpu.memory_space<vmem>>, vector<16x16x32xf32>
    %c0_82 = arith.constant 0 : index
    %c0_83 = arith.constant 0 : index
    %c64 = arith.constant 64 : index
    %42 = vector.load %arg19[%c0_82, %c0_83, %c64] : memref<16x16x576xf32, #tpu.memory_space<vmem>>, vector<16x16x32xf32>
    tpu.vector_store %arg19[%c0_82, %c0_83, %c64], %41 {strides = array<i32>} : memref<16x16x576xf32, #tpu.memory_space<vmem>>, vector<16x16x32xf32>,
    %c1_84 = arith.constant 1 : index
    %c0_85 = arith.constant 0 : index
    %c0_86 = arith.constant 0 : index
    %43 = vector.load %arg18[%c1_84, %c0_85, %c0_86] : memref<18x18x64xf32, #tpu.memory_space<vmem>>, vector<16x16x32xf32>
    %c0_87 = arith.constant 0 : index
    %c0_88 = arith.constant 0 : index
    %c96 = arith.constant 96 : index
    %44 = vector.load %arg19[%c0_87, %c0_88, %c96] : memref<16x16x576xf32, #tpu.memory_space<vmem>>, vector<16x16x32xf32>
    tpu.vector_store %arg19[%c0_87, %c0_88, %c96], %43 {strides = array<i32>} : memref<16x16x576xf32, #tpu.memory_space<vmem>>, vector<16x16x32xf32>,
    %c1_89 = arith.constant 1 : index
    %c1_90 = arith.constant 1 : index
    %c0_91 = arith.constant 0 : index
    %45 = vector.load %arg18[%c1_89, %c1_90, %c0_91] : memref<18x18x64xf32, #tpu.memory_space<vmem>>, vector<16x16x32xf32>
    %c0_92 = arith.constant 0 : index
    %c0_93 = arith.constant 0 : index
    %c128 = arith.constant 128 : index
    %46 = vector.load %arg19[%c0_92, %c0_93, %c128] : memref<16x16x576xf32, #tpu.memory_space<vmem>>, vector<16x16x32xf32>
    tpu.vector_store %arg19[%c0_92, %c0_93, %c128], %45 {strides = array<i32>} : memref<16x16x576xf32, #tpu.memory_space<vmem>>, vector<16x16x32xf32>,
    %c1_94 = arith.constant 1 : index
    %c2_95 = arith.constant 2 : index
    %c0_96 = arith.constant 0 : index
    %47 = vector.load %arg18[%c1_94, %c2_95, %c0_96] : memref<18x18x64xf32, #tpu.memory_space<vmem>>, vector<16x16x32xf32>
    %c0_97 = arith.constant 0 : index
    %c0_98 = arith.constant 0 : index
    %c160 = arith.constant 160 : index
    %48 = vector.load %arg19[%c0_97, %c0_98, %c160] : memref<16x16x576xf32, #tpu.memory_space<vmem>>, vector<16x16x32xf32>
    tpu.vector_store %arg19[%c0_97, %c0_98, %c160], %47 {strides = array<i32>} : memref<16x16x576xf32, #tpu.memory_space<vmem>>, vector<16x16x32xf32>,
    %c2_99 = arith.constant 2 : index
    %c0_100 = arith.constant 0 : index
    %c0_101 = arith.constant 0 : index
    %49 = vector.load %arg18[%c2_99, %c0_100, %c0_101] : memref<18x18x64xf32, #tpu.memory_space<vmem>>, vector<16x16x32xf32>
    %c0_102 = arith.constant 0 : index
    %c0_103 = arith.constant 0 : index
    %c192 = arith.constant 192 : index
    %50 = vector.load %arg19[%c0_102, %c0_103, %c192] : memref<16x16x576xf32, #tpu.memory_space<vmem>>, vector<16x16x32xf32>
    tpu.vector_store %arg19[%c0_102, %c0_103, %c192], %49 {strides = array<i32>} : memref<16x16x576xf32, #tpu.memory_space<vmem>>, vector<16x16x32xf32>,
    %c2_104 = arith.constant 2 : index
    %c1_105 = arith.constant 1 : index
    %c0_106 = arith.constant 0 : index
    %51 = vector.load %arg18[%c2_104, %c1_105, %c0_106] : memref<18x18x64xf32, #tpu.memory_space<vmem>>, vector<16x16x32xf32>
    %c0_107 = arith.constant 0 : index
    %c0_108 = arith.constant 0 : index
    %c224 = arith.constant 224 : index
    %52 = vector.load %arg19[%c0_107, %c0_108, %c224] : memref<16x16x576xf32, #tpu.memory_space<vmem>>, vector<16x16x32xf32>
    tpu.vector_store %arg19[%c0_107, %c0_108, %c224], %51 {strides = array<i32>} : memref<16x16x576xf32, #tpu.memory_space<vmem>>, vector<16x16x32xf32>,
    %c2_109 = arith.constant 2 : index
    %c2_110 = arith.constant 2 : index
    %c0_111 = arith.constant 0 : index
    %53 = vector.load %arg18[%c2_109, %c2_110, %c0_111] : memref<18x18x64xf32, #tpu.memory_space<vmem>>, vector<16x16x32xf32>
    %c0_112 = arith.constant 0 : index
    %c0_113 = arith.constant 0 : index
    %c256 = arith.constant 256 : index
    %54 = vector.load %arg19[%c0_112, %c0_113, %c256] : memref<16x16x576xf32, #tpu.memory_space<vmem>>, vector<16x16x32xf32>
    tpu.vector_store %arg19[%c0_112, %c0_113, %c256], %53 {strides = array<i32>} : memref<16x16x576xf32, #tpu.memory_space<vmem>>, vector<16x16x32xf32>,
    %c0_114 = arith.constant 0 : index
    %c0_115 = arith.constant 0 : index
    %c0_116 = arith.constant 0 : index
    %55 = vector.load %arg19[%c0_114, %c0_115, %c0_116] : memref<16x16x576xf32, #tpu.memory_space<vmem>>, vector<16x16x288xf32>
    %56 = vector.shape_cast %55 : vector<16x16x288xf32> to vector<256x288xf32>
    %c0_117 = arith.constant 0 : index
    %c0_118 = arith.constant 0 : index
    %57 = vector.load %arg5[%c0_117, %c0_118] : memref<288x64xf32, #tpu.memory_space<vmem>>, vector<288x64xf32>
    %cst_119 = arith.constant dense<0.000000e+00> : vector<256x64xf32>
    %58 = tpu.matmul %56, %57, %cst_119 {dimension_numbers = #tpu.dot_dimension_numbers<[1], [0], [0], [1], [0, 0, 1, 1], [], []>} : vector<256x288xf32>, vector<288x64xf32>, vector<256x64xf32> -> vector<256x64xf32>
    %c0_120 = arith.constant 0 : index
    %c0_121 = arith.constant 0 : index
    %59 = vector.load %arg6[%c0_120, %c0_121] : memref<1x64xf32, #tpu.memory_space<vmem>>, vector<1x64xf32>
    %60 = vector.broadcast %59 : vector<1x64xf32> to vector<256x64xf32>
    %61 = arith.mulf %58, %60 : vector<256x64xf32>
    %c0_122 = arith.constant 0 : index
    %c0_123 = arith.constant 0 : index
    %62 = vector.load %arg7[%c0_122, %c0_123] : memref<1x64xf32, #tpu.memory_space<vmem>>, vector<1x64xf32>
    %63 = vector.broadcast %62 : vector<1x64xf32> to vector<256x64xf32>
    %64 = arith.addf %61, %63 : vector<256x64xf32>
    %cst_124 = arith.constant 0.000000e+00 : f32
    %65 = vector.broadcast %cst_124 : f32 to vector<256x64xf32>
    %66 = arith.maximumf %64, %65 : vector<256x64xf32>
    %67 = vector.shape_cast %66 : vector<256x64xf32> to vector<16x16x64xf32>
    %c1_125 = arith.constant 1 : index
    %c1_126 = arith.constant 1 : index
    %c0_127 = arith.constant 0 : index
    %68 = vector.load %arg18[%c1_125, %c1_126, %c0_127] : memref<18x18x64xf32, #tpu.memory_space<vmem>>, vector<16x16x64xf32>
    tpu.vector_store %arg18[%c1_125, %c1_126, %c0_127], %67 {strides = array<i32>} : memref<18x18x64xf32, #tpu.memory_space<vmem>>, vector<16x16x64xf32>,
    %c0_128 = arith.constant 0 : index
    %c0_129 = arith.constant 0 : index
    %c0_130 = arith.constant 0 : index
    %69 = vector.load %arg18[%c0_128, %c0_129, %c0_130] : memref<18x18x64xf32, #tpu.memory_space<vmem>>, vector<16x16x64xf32>
    %c0_131 = arith.constant 0 : index
    %c0_132 = arith.constant 0 : index
    %c0_133 = arith.constant 0 : index
    %70 = vector.load %arg19[%c0_131, %c0_132, %c0_133] : memref<16x16x576xf32, #tpu.memory_space<vmem>>, vector<16x16x64xf32>
    tpu.vector_store %arg19[%c0_131, %c0_132, %c0_133], %69 {strides = array<i32>} : memref<16x16x576xf32, #tpu.memory_space<vmem>>, vector<16x16x64xf32>,
    %c0_134 = arith.constant 0 : index
    %c1_135 = arith.constant 1 : index
    %c0_136 = arith.constant 0 : index
    %71 = vector.load %arg18[%c0_134, %c1_135, %c0_136] : memref<18x18x64xf32, #tpu.memory_space<vmem>>, vector<16x16x64xf32>
    %c0_137 = arith.constant 0 : index
    %c0_138 = arith.constant 0 : index
    %c64_139 = arith.constant 64 : index
    %72 = vector.load %arg19[%c0_137, %c0_138, %c64_139] : memref<16x16x576xf32, #tpu.memory_space<vmem>>, vector<16x16x64xf32>
    tpu.vector_store %arg19[%c0_137, %c0_138, %c64_139], %71 {strides = array<i32>} : memref<16x16x576xf32, #tpu.memory_space<vmem>>, vector<16x16x64xf32>,
    %c0_140 = arith.constant 0 : index
    %c2_141 = arith.constant 2 : index
    %c0_142 = arith.constant 0 : index
    %73 = vector.load %arg18[%c0_140, %c2_141, %c0_142] : memref<18x18x64xf32, #tpu.memory_space<vmem>>, vector<16x16x64xf32>
    %c0_143 = arith.constant 0 : index
    %c0_144 = arith.constant 0 : index
    %c128_145 = arith.constant 128 : index
    %74 = vector.load %arg19[%c0_143, %c0_144, %c128_145] : memref<16x16x576xf32, #tpu.memory_space<vmem>>, vector<16x16x64xf32>
    tpu.vector_store %arg19[%c0_143, %c0_144, %c128_145], %73 {strides = array<i32>} : memref<16x16x576xf32, #tpu.memory_space<vmem>>, vector<16x16x64xf32>,
    %c1_146 = arith.constant 1 : index
    %c0_147 = arith.constant 0 : index
    %c0_148 = arith.constant 0 : index
    %75 = vector.load %arg18[%c1_146, %c0_147, %c0_148] : memref<18x18x64xf32, #tpu.memory_space<vmem>>, vector<16x16x64xf32>
    %c0_149 = arith.constant 0 : index
    %c0_150 = arith.constant 0 : index
    %c192_151 = arith.constant 192 : index
    %76 = vector.load %arg19[%c0_149, %c0_150, %c192_151] : memref<16x16x576xf32, #tpu.memory_space<vmem>>, vector<16x16x64xf32>
    tpu.vector_store %arg19[%c0_149, %c0_150, %c192_151], %75 {strides = array<i32>} : memref<16x16x576xf32, #tpu.memory_space<vmem>>, vector<16x16x64xf32>,
    %c1_152 = arith.constant 1 : index
    %c1_153 = arith.constant 1 : index
    %c0_154 = arith.constant 0 : index
    %77 = vector.load %arg18[%c1_152, %c1_153, %c0_154] : memref<18x18x64xf32, #tpu.memory_space<vmem>>, vector<16x16x64xf32>
    %c0_155 = arith.constant 0 : index
    %c0_156 = arith.constant 0 : index
    %c256_157 = arith.constant 256 : index
    %78 = vector.load %arg19[%c0_155, %c0_156, %c256_157] : memref<16x16x576xf32, #tpu.memory_space<vmem>>, vector<16x16x64xf32>
    tpu.vector_store %arg19[%c0_155, %c0_156, %c256_157], %77 {strides = array<i32>} : memref<16x16x576xf32, #tpu.memory_space<vmem>>, vector<16x16x64xf32>,
    %c1_158 = arith.constant 1 : index
    %c2_159 = arith.constant 2 : index
    %c0_160 = arith.constant 0 : index
    %79 = vector.load %arg18[%c1_158, %c2_159, %c0_160] : memref<18x18x64xf32, #tpu.memory_space<vmem>>, vector<16x16x64xf32>
    %c0_161 = arith.constant 0 : index
    %c0_162 = arith.constant 0 : index
    %c320 = arith.constant 320 : index
    %80 = vector.load %arg19[%c0_161, %c0_162, %c320] : memref<16x16x576xf32, #tpu.memory_space<vmem>>, vector<16x16x64xf32>
    tpu.vector_store %arg19[%c0_161, %c0_162, %c320], %79 {strides = array<i32>} : memref<16x16x576xf32, #tpu.memory_space<vmem>>, vector<16x16x64xf32>,
    %c2_163 = arith.constant 2 : index
    %c0_164 = arith.constant 0 : index
    %c0_165 = arith.constant 0 : index
    %81 = vector.load %arg18[%c2_163, %c0_164, %c0_165] : memref<18x18x64xf32, #tpu.memory_space<vmem>>, vector<16x16x64xf32>
    %c0_166 = arith.constant 0 : index
    %c0_167 = arith.constant 0 : index
    %c384 = arith.constant 384 : index
    %82 = vector.load %arg19[%c0_166, %c0_167, %c384] : memref<16x16x576xf32, #tpu.memory_space<vmem>>, vector<16x16x64xf32>
    tpu.vector_store %arg19[%c0_166, %c0_167, %c384], %81 {strides = array<i32>} : memref<16x16x576xf32, #tpu.memory_space<vmem>>, vector<16x16x64xf32>,
    %c2_168 = arith.constant 2 : index
    %c1_169 = arith.constant 1 : index
    %c0_170 = arith.constant 0 : index
    %83 = vector.load %arg18[%c2_168, %c1_169, %c0_170] : memref<18x18x64xf32, #tpu.memory_space<vmem>>, vector<16x16x64xf32>
    %c0_171 = arith.constant 0 : index
    %c0_172 = arith.constant 0 : index
    %c448 = arith.constant 448 : index
    %84 = vector.load %arg19[%c0_171, %c0_172, %c448] : memref<16x16x576xf32, #tpu.memory_space<vmem>>, vector<16x16x64xf32>
    tpu.vector_store %arg19[%c0_171, %c0_172, %c448], %83 {strides = array<i32>} : memref<16x16x576xf32, #tpu.memory_space<vmem>>, vector<16x16x64xf32>,
    %c2_173 = arith.constant 2 : index
    %c2_174 = arith.constant 2 : index
    %c0_175 = arith.constant 0 : index
    %85 = vector.load %arg18[%c2_173, %c2_174, %c0_175] : memref<18x18x64xf32, #tpu.memory_space<vmem>>, vector<16x16x64xf32>
    %c0_176 = arith.constant 0 : index
    %c0_177 = arith.constant 0 : index
    %c512 = arith.constant 512 : index
    %86 = vector.load %arg19[%c0_176, %c0_177, %c512] : memref<16x16x576xf32, #tpu.memory_space<vmem>>, vector<16x16x64xf32>
    tpu.vector_store %arg19[%c0_176, %c0_177, %c512], %85 {strides = array<i32>} : memref<16x16x576xf32, #tpu.memory_space<vmem>>, vector<16x16x64xf32>,
    %c0_178 = arith.constant 0 : index
    %c0_179 = arith.constant 0 : index
    %c0_180 = arith.constant 0 : index
    %87 = vector.load %arg19[%c0_178, %c0_179, %c0_180] : memref<16x16x576xf32, #tpu.memory_space<vmem>>, vector<16x16x576xf32>
    %88 = vector.shape_cast %87 : vector<16x16x576xf32> to vector<256x576xf32>
    %c0_181 = arith.constant 0 : index
    %c0_182 = arith.constant 0 : index
    %89 = vector.load %arg8[%c0_181, %c0_182] : memref<576x128xf32, #tpu.memory_space<vmem>>, vector<576x128xf32>
    %cst_183 = arith.constant dense<0.000000e+00> : vector<256x128xf32>
    %90 = tpu.matmul %88, %89, %cst_183 {dimension_numbers = #tpu.dot_dimension_numbers<[1], [0], [0], [1], [0, 0, 1, 1], [], []>} : vector<256x576xf32>, vector<576x128xf32>, vector<256x128xf32> -> vector<256x128xf32>
    %c0_184 = arith.constant 0 : index
    %c0_185 = arith.constant 0 : index
    %91 = vector.load %arg9[%c0_184, %c0_185] : memref<1x128xf32, #tpu.memory_space<vmem>>, vector<1x128xf32>
    %92 = vector.broadcast %91 : vector<1x128xf32> to vector<256x128xf32>
    %93 = arith.mulf %90, %92 : vector<256x128xf32>
    %c0_186 = arith.constant 0 : index
    %c0_187 = arith.constant 0 : index
    %94 = vector.load %arg10[%c0_186, %c0_187] : memref<1x128xf32, #tpu.memory_space<vmem>>, vector<1x128xf32>
    %95 = vector.broadcast %94 : vector<1x128xf32> to vector<256x128xf32>
    %96 = arith.addf %93, %95 : vector<256x128xf32>
    %cst_188 = arith.constant 0.000000e+00 : f32
    %97 = vector.broadcast %cst_188 : f32 to vector<256x128xf32>
    %98 = arith.maximumf %96, %97 : vector<256x128xf32>
    %cst_189 = arith.constant dense<0.000000e+00> : vector<128xf32>
    %99 = vector.multi_reduction <add>, %98, %cst_189 [0] : vector<256x128xf32> to vector<128xf32>
    %100 = vector.shape_cast %99 : vector<128xf32> to vector<1x128xf32>
    %cst_190 = arith.constant 2.560000e+02 : f32
    %101 = vector.broadcast %cst_190 : f32 to vector<1x128xf32>
    %102 = arith.divf %100, %101 : vector<1x128xf32>
    %c0_191 = arith.constant 0 : index
    %c0_192 = arith.constant 0 : index
    %103 = vector.load %arg11[%c0_191, %c0_192] : memref<128x64xf32, #tpu.memory_space<vmem>>, vector<128x64xf32>
    %cst_193 = arith.constant dense<0.000000e+00> : vector<1x64xf32>
    %104 = tpu.matmul %102, %103, %cst_193 {dimension_numbers = #tpu.dot_dimension_numbers<[1], [0], [0], [1], [0, 0, 1, 1], [], []>} : vector<1x128xf32>, vector<128x64xf32>, vector<1x64xf32> -> vector<1x64xf32>
    %c0_194 = arith.constant 0 : index
    %c0_195 = arith.constant 0 : index
    %105 = vector.load %arg12[%c0_194, %c0_195] : memref<1x64xf32, #tpu.memory_space<vmem>>, vector<1x64xf32>
    %106 = arith.addf %104, %105 : vector<1x64xf32>
    %cst_196 = arith.constant 0.000000e+00 : f32
    %107 = vector.broadcast %cst_196 : f32 to vector<1x64xf32>
    %108 = arith.maximumf %106, %107 : vector<1x64xf32>
    %c0_197 = arith.constant 0 : index
    %c0_198 = arith.constant 0 : index
    %109 = vector.load %arg13[%c0_197, %c0_198] : memref<64x32xf32, #tpu.memory_space<vmem>>, vector<64x32xf32>
    %cst_199 = arith.constant dense<0.000000e+00> : vector<1x32xf32>
    %110 = tpu.matmul %108, %109, %cst_199 {dimension_numbers = #tpu.dot_dimension_numbers<[1], [0], [0], [1], [0, 0, 1, 1], [], []>} : vector<1x64xf32>, vector<64x32xf32>, vector<1x32xf32> -> vector<1x32xf32>
    %c0_200 = arith.constant 0 : index
    %c0_201 = arith.constant 0 : index
    %111 = vector.load %arg14[%c0_200, %c0_201] : memref<1x32xf32, #tpu.memory_space<vmem>>, vector<1x32xf32>
    %112 = arith.addf %110, %111 : vector<1x32xf32>
    %cst_202 = arith.constant 0.000000e+00 : f32
    %113 = vector.broadcast %cst_202 : f32 to vector<1x32xf32>
    %114 = arith.maximumf %112, %113 : vector<1x32xf32>
    %c0_203 = arith.constant 0 : index
    %c0_204 = arith.constant 0 : index
    %115 = vector.load %arg15[%c0_203, %c0_204] : memref<32x3xf32, #tpu.memory_space<vmem>>, vector<32x3xf32>
    %cst_205 = arith.constant dense<0.000000e+00> : vector<1x3xf32>
    %116 = tpu.matmul %114, %115, %cst_205 {dimension_numbers = #tpu.dot_dimension_numbers<[1], [0], [0], [1], [0, 0, 1, 1], [], []>} : vector<1x32xf32>, vector<32x3xf32>, vector<1x3xf32> -> vector<1x3xf32>
    %c0_206 = arith.constant 0 : index
    %c0_207 = arith.constant 0 : index
    %117 = vector.load %arg16[%c0_206, %c0_207] : memref<1x3xf32, #tpu.memory_space<vmem>>, vector<1x3xf32>
    %118 = arith.addf %116, %117 : vector<1x3xf32>
    %cst_208 = arith.constant dense<0xFF800000> : vector<1xf32>
    %119 = vector.multi_reduction <maximumf>, %118, %cst_208 [1] : vector<1x3xf32> to vector<1xf32>
    %120 = vector.shape_cast %119 : vector<1xf32> to vector<1x1xf32>
    %121 = vector.broadcast %120 : vector<1x1xf32> to vector<1x3xf32>
    %122 = arith.subf %118, %121 : vector<1x3xf32>
    %123 = math.exp %122 : vector<1x3xf32>
    %cst_209 = arith.constant dense<0.000000e+00> : vector<1xf32>
    %124 = vector.multi_reduction <add>, %123, %cst_209 [1] : vector<1x3xf32> to vector<1xf32>
    %125 = vector.shape_cast %124 : vector<1xf32> to vector<1x1xf32>
    %126 = tpu.reciprocal %125 {approx = true} : vector<1x1xf32> -> vector<1x1xf32>
    %127 = vector.broadcast %126 : vector<1x1xf32> to vector<1x3xf32>
    %128 = arith.mulf %123, %127 : vector<1x3xf32>
    %c0_210 = arith.constant 0 : index
    %c0_211 = arith.constant 0 : index
    %c0_212 = arith.constant 0 : index
    %129 = vector.load %arg17[%c0_210, %c0_211, %c0_212] : memref<1x1x3xf32, #tpu.memory_space<vmem>>, vector<1x1x3xf32>
    %130 = vector.shape_cast %129 : vector<1x1x3xf32> to vector<1x3xf32>
    %131 = vector.shape_cast %128 : vector<1x3xf32> to vector<1x1x3xf32>
    tpu.vector_store %arg17[%c0_210, %c0_211, %c0_212], %131 {strides = array<i32>} : memref<1x1x3xf32, #tpu.memory_space<vmem>>, vector<1x1x3xf32>,
    return
  }
  func.func @transform_0(%arg0: i32) -> (i32, i32, i32, i32) {
    %c0_i32 = arith.constant 0 : i32
    %c0_i32_0 = arith.constant 0 : i32
    %c0_i32_1 = arith.constant 0 : i32
    %c0_i32_2 = arith.constant 0 : i32
    return %arg0, %c0_i32, %c0_i32_0, %c0_i32_1 : i32, i32, i32, i32
  }
  func.func @transform_1(%arg0: i32) -> (i32, i32) {
    %c0_i32 = arith.constant 0 : i32
    %c0_i32_0 = arith.constant 0 : i32
    %c0_i32_1 = arith.constant 0 : i32
    return %c0_i32, %c0_i32_0 : i32, i32
  }
  func.func @transform_2(%arg0: i32) -> (i32, i32) {
    %c0_i32 = arith.constant 0 : i32
    %c0_i32_0 = arith.constant 0 : i32
    %c0_i32_1 = arith.constant 0 : i32
    return %c0_i32, %c0_i32_0 : i32, i32
  }
  func.func @transform_3(%arg0: i32) -> (i32, i32) {
    %c0_i32 = arith.constant 0 : i32
    %c0_i32_0 = arith.constant 0 : i32
    %c0_i32_1 = arith.constant 0 : i32
    return %c0_i32, %c0_i32_0 : i32, i32
  }
  func.func @transform_4(%arg0: i32) -> (i32, i32) {
    %c0_i32 = arith.constant 0 : i32
    %c0_i32_0 = arith.constant 0 : i32
    %c0_i32_1 = arith.constant 0 : i32
    return %c0_i32, %c0_i32_0 : i32, i32
  }
  func.func @transform_5(%arg0: i32) -> (i32, i32) {
    %c0_i32 = arith.constant 0 : i32
    %c0_i32_0 = arith.constant 0 : i32
    %c0_i32_1 = arith.constant 0 : i32
    return %c0_i32, %c0_i32_0 : i32, i32
  }
  func.func @transform_6(%arg0: i32) -> (i32, i32) {
    %c0_i32 = arith.constant 0 : i32
    %c0_i32_0 = arith.constant 0 : i32
    %c0_i32_1 = arith.constant 0 : i32
    return %c0_i32, %c0_i32_0 : i32, i32
  }
  func.func @transform_7(%arg0: i32) -> (i32, i32) {
    %c0_i32 = arith.constant 0 : i32
    %c0_i32_0 = arith.constant 0 : i32
    %c0_i32_1 = arith.constant 0 : i32
    return %c0_i32, %c0_i32_0 : i32, i32
  }
  func.func @transform_8(%arg0: i32) -> (i32, i32) {
    %c0_i32 = arith.constant 0 : i32
    %c0_i32_0 = arith.constant 0 : i32
    %c0_i32_1 = arith.constant 0 : i32
    return %c0_i32, %c0_i32_0 : i32, i32
  }
  func.func @transform_9(%arg0: i32) -> (i32, i32) {
    %c0_i32 = arith.constant 0 : i32
    %c0_i32_0 = arith.constant 0 : i32
    %c0_i32_1 = arith.constant 0 : i32
    return %c0_i32, %c0_i32_0 : i32, i32
  }
  func.func @transform_10(%arg0: i32) -> (i32, i32) {
    %c0_i32 = arith.constant 0 : i32
    %c0_i32_0 = arith.constant 0 : i32
    %c0_i32_1 = arith.constant 0 : i32
    return %c0_i32, %c0_i32_0 : i32, i32
  }
  func.func @transform_11(%arg0: i32) -> (i32, i32) {
    %c0_i32 = arith.constant 0 : i32
    %c0_i32_0 = arith.constant 0 : i32
    %c0_i32_1 = arith.constant 0 : i32
    return %c0_i32, %c0_i32_0 : i32, i32
  }
  func.func @transform_12(%arg0: i32) -> (i32, i32) {
    %c0_i32 = arith.constant 0 : i32
    %c0_i32_0 = arith.constant 0 : i32
    %c0_i32_1 = arith.constant 0 : i32
    return %c0_i32, %c0_i32_0 : i32, i32
  }
  func.func @transform_13(%arg0: i32) -> (i32, i32) {
    %c0_i32 = arith.constant 0 : i32
    %c0_i32_0 = arith.constant 0 : i32
    %c0_i32_1 = arith.constant 0 : i32
    return %c0_i32, %c0_i32_0 : i32, i32
  }
  func.func @transform_14(%arg0: i32) -> (i32, i32) {
    %c0_i32 = arith.constant 0 : i32
    %c0_i32_0 = arith.constant 0 : i32
    %c0_i32_1 = arith.constant 0 : i32
    return %c0_i32, %c0_i32_0 : i32, i32
  }
  func.func @transform_15(%arg0: i32) -> (i32, i32) {
    %c0_i32 = arith.constant 0 : i32
    %c0_i32_0 = arith.constant 0 : i32
    %c0_i32_1 = arith.constant 0 : i32
    return %c0_i32, %c0_i32_0 : i32, i32
  }
  func.func @transform_16(%arg0: i32) -> (i32, i32, i32) {
    %c0_i32 = arith.constant 0 : i32
    %c0_i32_0 = arith.constant 0 : i32
    %c0_i32_1 = arith.constant 0 : i32
    return %arg0, %c0_i32, %c0_i32_0 : i32, i32, i32
  }
}

</mosaic_0001>

<llo_original>
// kernel: tpu_custom_call.1
$region0: #{tpu_custom_call.1}
  #allocation0 [shape = 'u32[]', space=smem, size = 0x4, offset = 0x4, fixed_abs, tag = 'smem constant byte address 0x4 - core index']
  #allocation1 [shape = 'u32[144,128]{1,0:T(1,128)}', space=vmem, size = 0x12000, scoped, tag = 'internal scratch']
  #allocation2 [shape = 'f32[18,18,64]{2,1,0:T(8,128)}', space=vmem, size = 0x36000, scoped, tag = 'scratch operand']
  #allocation3 [shape = 'f32[16,16,576]{2,1,0:T(8,128)}', space=vmem, size = 0xa0000, scoped, tag = 'scratch operand']
  %s0 = inlined_call_operand.vmem [shape: f32[2,16,16,4], index: 0, kind: input, shape index: {}]
  %s1 = inlined_call_operand.vmem [shape: f32[36,32], index: 1, kind: input, shape index: {}]
  %s2 = inlined_call_operand.vmem [shape: f32[1,32], index: 2, kind: input, shape index: {}]
  %s3 = inlined_call_operand.vmem [shape: f32[1,32], index: 3, kind: input, shape index: {}]
  %s4 = inlined_call_operand.vmem [shape: f32[288,64], index: 4, kind: input, shape index: {}]
  %s5 = inlined_call_operand.vmem [shape: f32[1,64], index: 5, kind: input, shape index: {}]
  %s6 = inlined_call_operand.vmem [shape: f32[1,64], index: 6, kind: input, shape index: {}]
  %s7 = inlined_call_operand.vmem [shape: f32[576,128], index: 7, kind: input, shape index: {}]
  %s8 = inlined_call_operand.vmem [shape: f32[1,128], index: 8, kind: input, shape index: {}]
  %s9 = inlined_call_operand.vmem [shape: f32[1,128], index: 9, kind: input, shape index: {}]
  %s10 = inlined_call_operand.vmem [shape: f32[128,64], index: 10, kind: input, shape index: {}]
  %s11 = inlined_call_operand.vmem [shape: f32[1,64], index: 11, kind: input, shape index: {}]
  %s12 = inlined_call_operand.vmem [shape: f32[64,32], index: 12, kind: input, shape index: {}]
  %s13 = inlined_call_operand.vmem [shape: f32[1,32], index: 13, kind: input, shape index: {}]
  %s14 = inlined_call_operand.vmem [shape: f32[32,3], index: 14, kind: input, shape index: {}]
  %s15 = inlined_call_operand.vmem [shape: f32[1,3], index: 15, kind: input, shape index: {}]
  %s16 = inlined_call_operand.hbm [shape: f32[2,1,3], index: 16, kind: output, shape index: {}]
  %s17 = sld [smem:[#allocation0]]
  $region97: #{tpu_custom_call.1} parent=0
    _
  %s19 = ssub.s32 1, %s17
  %s20 = scalar_select 0, %s19, %s17
  $region1: #{tpu_custom_call.1} parent=0
    #allocation4 [shape = 'u8[1024]{0}', space=vmem, size = 0x400, scoped, tag = 'output window, operand 0']
    #allocation5 [shape = 's32[2]{0}', space=sflag, size = 0x8, scoped, tag = 'scoped memory for tpu_custom_call.1']
    %21 = vsyncpa [#allocation5], 0
    %s22 = scalar_lea.sflag [#allocation5], 1
    %23 = vsyncpa %s22, 0
    loop: start=0, step=1, limit=4
    $region2: #{tpu_custom_call.1} parent=1 // loop_pre_header
      _
    $region3: #{tpu_custom_call.1} parent=1 // loop_header
      %s25 = sphi 0, %s29
      %p26 = scmp.ge.s32.totalorder %s25, 4
      %s35 = sphi 0, %s37
      %s38 = sphi 0, %s35
      %s39 = sphi 0, %s38
      %s55 = sphi 0, %s39
      %s59 = sphi 0, %s59
      %s61 = sphi 0, %s59
      %s62 = sphi 0, %s61
      %s76 = sphi 0, %s62
      %s80 = sphi 0, %s80
      %s82 = sphi 0, %s80
      %s83 = sphi 0, %s82
      %s97 = sphi 0, %s83
      %s101 = sphi 0, %s101
      %s103 = sphi 0, %s101
      %s104 = sphi 0, %s103
      %s118 = sphi 0, %s104
      %s122 = sphi 0, %s122
      %s124 = sphi 0, %s122
      %s125 = sphi 0, %s124
      %s139 = sphi 0, %s125
      %s143 = sphi 0, %s143
      %s145 = sphi 0, %s143
      %s146 = sphi 0, %s145
      %s160 = sphi 0, %s146
      %s164 = sphi 0, %s164
      %s166 = sphi 0, %s164
      %s167 = sphi 0, %s166
      %s181 = sphi 0, %s167
      %s185 = sphi 0, %s185
      %s187 = sphi 0, %s185
      %s188 = sphi 0, %s187
      %s202 = sphi 0, %s188
      %s206 = sphi 0, %s206
      %s208 = sphi 0, %s206
      %s209 = sphi 0, %s208
      %s223 = sphi 0, %s209
      %s227 = sphi 0, %s227
      %s229 = sphi 0, %s227
      %s230 = sphi 0, %s229
      %s244 = sphi 0, %s230
      %s248 = sphi 0, %s248
      %s250 = sphi 0, %s248
      %s251 = sphi 0, %s250
      %s265 = sphi 0, %s251
      %s269 = sphi 0, %s269
      %s271 = sphi 0, %s269
      %s272 = sphi 0, %s271
      %s286 = sphi 0, %s272
      %s290 = sphi 0, %s290
      %s292 = sphi 0, %s290
      %s293 = sphi 0, %s292
      %s307 = sphi 0, %s293
      %s311 = sphi 0, %s311
      %s313 = sphi 0, %s311
      %s314 = sphi 0, %s313
      %s328 = sphi 0, %s314
      %s332 = sphi 0, %s332
      %s334 = sphi 0, %s332
      %s335 = sphi 0, %s334
      %s349 = sphi 0, %s335
      %s353 = sphi 0, %s353
      %s355 = sphi 0, %s353
      %s356 = sphi 0, %s355
      %s370 = sphi 0, %s356
      %s376 = sphi 0, %s378
      %s379 = sphi 0, %s376
      %s380 = sphi 0, %s379
      %s396 = sphi 0, %s380
    $region4: #{tpu_custom_call.1} parent=1 // loop_header_branch
      %28 = sbr.rel (%p26) target = $region8
    $region5: #{tpu_custom_call.1} parent=1 // loop_body
      %s30 = ssub.s32 %s25, 1
      %s31 = ssub.s32 %s25, 2
      %s32 = sadd.s32 %s25, 1
      %s33 = ssub.s32 %s25, %s32
      %p34 = scmp.eq.s32.totalorder %s33, 0
      %s36 = sadd.s32 %s35, 1
      %s37 = scalar_select %p34, %s35, %s36
      %p40 = pneg %p34
      %p41 = scmp.eq.s32.totalorder %s25, 1
      %p42 = por %p40, %p41
      %p43 = scmp.ne.s32.totalorder %s35, %s38
      %p44 = scmp.eq.s32.totalorder %s25, 0
      %p45 = por %p43, %p44
      %p46 = scmp.ne.s32.totalorder %s35, %s38
      %p47 = scmp.eq.s32.totalorder %s30, 1
      %p48 = por %p46, %p47
      %p49 = scmp.ne.s32.totalorder %s38, %s39
      %p50 = scmp.eq.s32.totalorder %s30, 0
      %p51 = por %p49, %p50
      %p52 = scmp.ne.s32.totalorder %s38, %s39
      %p53 = scmp.eq.s32.totalorder %s31, 1
      %p54 = por %p52, %p53
      %p56 = scmp.ne.s32.totalorder %s39, %s55
      %p57 = scmp.eq.s32.totalorder %s31, 0
      %p58 = por %p56, %p57
      %s60 = sadd.s32 %s59, 1
      %p63 = scmp.eq.s32.totalorder %s25, 1
      %p64 = scmp.ne.s32.totalorder %s59, %s61
      %p65 = scmp.eq.s32.totalorder %s25, 0
      %p66 = por %p64, %p65
      %p67 = scmp.ne.s32.totalorder %s59, %s61
      %p68 = scmp.eq.s32.totalorder %s30, 1
      %p69 = por %p67, %p68
      %p70 = scmp.ne.s32.totalorder %s61, %s62
      %p71 = scmp.eq.s32.totalorder %s30, 0
      %p72 = por %p70, %p71
      %p73 = scmp.ne.s32.totalorder %s61, %s62
      %p74 = scmp.eq.s32.totalorder %s31, 1
      %p75 = por %p73, %p74
      %p77 = scmp.ne.s32.totalorder %s62, %s76
      %p78 = scmp.eq.s32.totalorder %s31, 0
      %p79 = por %p77, %p78
      %s81 = sadd.s32 %s80, 1
      %p84 = scmp.eq.s32.totalorder %s25, 1
      %p85 = scmp.ne.s32.totalorder %s80, %s82
      %p86 = scmp.eq.s32.totalorder %s25, 0
      %p87 = por %p85, %p86
      %p88 = scmp.ne.s32.totalorder %s80, %s82
      %p89 = scmp.eq.s32.totalorder %s30, 1
      %p90 = por %p88, %p89
      %p91 = scmp.ne.s32.totalorder %s82, %s83
      %p92 = scmp.eq.s32.totalorder %s30, 0
      %p93 = por %p91, %p92
      %p94 = scmp.ne.s32.totalorder %s82, %s83
      %p95 = scmp.eq.s32.totalorder %s31, 1
      %p96 = por %p94, %p95
      %p98 = scmp.ne.s32.totalorder %s83, %s97
      %p99 = scmp.eq.s32.totalorder %s31, 0
      %p100 = por %p98, %p99
      %s102 = sadd.s32 %s101, 1
      %p105 = scmp.eq.s32.totalorder %s25, 1
      %p106 = scmp.ne.s32.totalorder %s101, %s103
      %p107 = scmp.eq.s32.totalorder %s25, 0
      %p108 = por %p106, %p107
      %p109 = scmp.ne.s32.totalorder %s101, %s103
      %p110 = scmp.eq.s32.totalorder %s30, 1
      %p111 = por %p109, %p110
      %p112 = scmp.ne.s32.totalorder %s103, %s104
      %p113 = scmp.eq.s32.totalorder %s30, 0
      %p114 = por %p112, %p113
      %p115 = scmp.ne.s32.totalorder %s103, %s104
      %p116 = scmp.eq.s32.totalorder %s31, 1
      %p117 = por %p115, %p116
      %p119 = scmp.ne.s32.totalorder %s104, %s118
      %p120 = scmp.eq.s32.totalorder %s31, 0
      %p121 = por %p119, %p120
      %s123 = sadd.s32 %s122, 1
      %p126 = scmp.eq.s32.totalorder %s25, 1
      %p127 = scmp.ne.s32.totalorder %s122, %s124
      %p128 = scmp.eq.s32.totalorder %s25, 0
      %p129 = por %p127, %p128
      %p130 = scmp.ne.s32.totalorder %s122, %s124
      %p131 = scmp.eq.s32.totalorder %s30, 1
      %p132 = por %p130, %p131
      %p133 = scmp.ne.s32.totalorder %s124, %s125
      %p134 = scmp.eq.s32.totalorder %s30, 0
      %p135 = por %p133, %p134
      %p136 = scmp.ne.s32.totalorder %s124, %s125
      %p137 = scmp.eq.s32.totalorder %s31, 1
      %p138 = por %p136, %p137
      %p140 = scmp.ne.s32.totalorder %s125, %s139
      %p141 = scmp.eq.s32.totalorder %s31, 0
      %p142 = por %p140, %p141
      %s144 = sadd.s32 %s143, 1
      %p147 = scmp.eq.s32.totalorder %s25, 1
      %p148 = scmp.ne.s32.totalorder %s143, %s145
      %p149 = scmp.eq.s32.totalorder %s25, 0
      %p150 = por %p148, %p149
      %p151 = scmp.ne.s32.totalorder %s143, %s145
      %p152 = scmp.eq.s32.totalorder %s30, 1
      %p153 = por %p151, %p152
      %p154 = scmp.ne.s32.totalorder %s145, %s146
      %p155 = scmp.eq.s32.totalorder %s30, 0
      %p156 = por %p154, %p155
      %p157 = scmp.ne.s32.totalorder %s145, %s146
      %p158 = scmp.eq.s32.totalorder %s31, 1
      %p159 = por %p157, %p158
      %p161 = scmp.ne.s32.totalorder %s146, %s160
      %p162 = scmp.eq.s32.totalorder %s31, 0
      %p163 = por %p161, %p162
      %s165 = sadd.s32 %s164, 1
      %p168 = scmp.eq.s32.totalorder %s25, 1
      %p169 = scmp.ne.s32.totalorder %s164, %s166
      %p170 = scmp.eq.s32.totalorder %s25, 0
      %p171 = por %p169, %p170
      %p172 = scmp.ne.s32.totalorder %s164, %s166
      %p173 = scmp.eq.s32.totalorder %s30, 1
      %p174 = por %p172, %p173
      %p175 = scmp.ne.s32.totalorder %s166, %s167
      %p176 = scmp.eq.s32.totalorder %s30, 0
      %p177 = por %p175, %p176
      %p178 = scmp.ne.s32.totalorder %s166, %s167
      %p179 = scmp.eq.s32.totalorder %s31, 1
      %p180 = por %p178, %p179
      %p182 = scmp.ne.s32.totalorder %s167, %s181
      %p183 = scmp.eq.s32.totalorder %s31, 0
      %p184 = por %p182, %p183
      %s186 = sadd.s32 %s185, 1
      %p189 = scmp.eq.s32.totalorder %s25, 1
      %p190 = scmp.ne.s32.totalorder %s185, %s187
      %p191 = scmp.eq.s32.totalorder %s25, 0
      %p192 = por %p190, %p191
      %p193 = scmp.ne.s32.totalorder %s185, %s187
      %p194 = scmp.eq.s32.totalorder %s30, 1
      %p195 = por %p193, %p194
      %p196 = scmp.ne.s32.totalorder %s187, %s188
      %p197 = scmp.eq.s32.totalorder %s30, 0
      %p198 = por %p196, %p197
      %p199 = scmp.ne.s32.totalorder %s187, %s188
      %p200 = scmp.eq.s32.totalorder %s31, 1
      %p201 = por %p199, %p200
      %p203 = scmp.ne.s32.totalorder %s188, %s202
      %p204 = scmp.eq.s32.totalorder %s31, 0
      %p205 = por %p203, %p204
      %s207 = sadd.s32 %s206, 1
      %p210 = scmp.eq.s32.totalorder %s25, 1
      %p211 = scmp.ne.s32.totalorder %s206, %s208
      %p212 = scmp.eq.s32.totalorder %s25, 0
      %p213 = por %p211, %p212
      %p214 = scmp.ne.s32.totalorder %s206, %s208
      %p215 = scmp.eq.s32.totalorder %s30, 1
      %p216 = por %p214, %p215
      %p217 = scmp.ne.s32.totalorder %s208, %s209
      %p218 = scmp.eq.s32.totalorder %s30, 0
      %p219 = por %p217, %p218
      %p220 = scmp.ne.s32.totalorder %s208, %s209
      %p221 = scmp.eq.s32.totalorder %s31, 1
      %p222 = por %p220, %p221
      %p224 = scmp.ne.s32.totalorder %s209, %s223
      %p225 = scmp.eq.s32.totalorder %s31, 0
      %p226 = por %p224, %p225
      %s228 = sadd.s32 %s227, 1
      %p231 = scmp.eq.s32.totalorder %s25, 1
      %p232 = scmp.ne.s32.totalorder %s227, %s229
      %p233 = scmp.eq.s32.totalorder %s25, 0
      %p234 = por %p232, %p233
      %p235 = scmp.ne.s32.totalorder %s227, %s229
      %p236 = scmp.eq.s32.totalorder %s30, 1
      %p237 = por %p235, %p236
      %p238 = scmp.ne.s32.totalorder %s229, %s230
      %p239 = scmp.eq.s32.totalorder %s30, 0
      %p240 = por %p238, %p239
      %p241 = scmp.ne.s32.totalorder %s229, %s230
      %p242 = scmp.eq.s32.totalorder %s31, 1
      %p243 = por %p241, %p242
      %p245 = scmp.ne.s32.totalorder %s230, %s244
      %p246 = scmp.eq.s32.totalorder %s31, 0
      %p247 = por %p245, %p246
      %s249 = sadd.s32 %s248, 1
      %p252 = scmp.eq.s32.totalorder %s25, 1
      %p253 = scmp.ne.s32.totalorder %s248, %s250
      %p254 = scmp.eq.s32.totalorder %s25, 0
      %p255 = por %p253, %p254
      %p256 = scmp.ne.s32.totalorder %s248, %s250
      %p257 = scmp.eq.s32.totalorder %s30, 1
      %p258 = por %p256, %p257
      %p259 = scmp.ne.s32.totalorder %s250, %s251
      %p260 = scmp.eq.s32.totalorder %s30, 0
      %p261 = por %p259, %p260
      %p262 = scmp.ne.s32.totalorder %s250, %s251
      %p263 = scmp.eq.s32.totalorder %s31, 1
      %p264 = por %p262, %p263
      %p266 = scmp.ne.s32.totalorder %s251, %s265
      %p267 = scmp.eq.s32.totalorder %s31, 0
      %p268 = por %p266, %p267
      %s270 = sadd.s32 %s269, 1
      %p273 = scmp.eq.s32.totalorder %s25, 1
      %p274 = scmp.ne.s32.totalorder %s269, %s271
      %p275 = scmp.eq.s32.totalorder %s25, 0
      %p276 = por %p274, %p275
      %p277 = scmp.ne.s32.totalorder %s269, %s271
      %p278 = scmp.eq.s32.totalorder %s30, 1
      %p279 = por %p277, %p278
      %p280 = scmp.ne.s32.totalorder %s271, %s272
      %p281 = scmp.eq.s32.totalorder %s30, 0
      %p282 = por %p280, %p281
      %p283 = scmp.ne.s32.totalorder %s271, %s272
      %p284 = scmp.eq.s32.totalorder %s31, 1
      %p285 = por %p283, %p284
      %p287 = scmp.ne.s32.totalorder %s272, %s286
      %p288 = scmp.eq.s32.totalorder %s31, 0
      %p289 = por %p287, %p288
      %s291 = sadd.s32 %s290, 1
      %p294 = scmp.eq.s32.totalorder %s25, 1
      %p295 = scmp.ne.s32.totalorder %s290, %s292
      %p296 = scmp.eq.s32.totalorder %s25, 0
      %p297 = por %p295, %p296
      %p298 = scmp.ne.s32.totalorder %s290, %s292
      %p299 = scmp.eq.s32.totalorder %s30, 1
      %p300 = por %p298, %p299
      %p301 = scmp.ne.s32.totalorder %s292, %s293
      %p302 = scmp.eq.s32.totalorder %s30, 0
      %p303 = por %p301, %p302
      %p304 = scmp.ne.s32.totalorder %s292, %s293
      %p305 = scmp.eq.s32.totalorder %s31, 1
      %p306 = por %p304, %p305
      %p308 = scmp.ne.s32.totalorder %s293, %s307
      %p309 = scmp.eq.s32.totalorder %s31, 0
      %p310 = por %p308, %p309
      %s312 = sadd.s32 %s311, 1
      %p315 = scmp.eq.s32.totalorder %s25, 1
      %p316 = scmp.ne.s32.totalorder %s311, %s313
      %p317 = scmp.eq.s32.totalorder %s25, 0
      %p318 = por %p316, %p317
      %p319 = scmp.ne.s32.totalorder %s311, %s313
      %p320 = scmp.eq.s32.totalorder %s30, 1
      %p321 = por %p319, %p320
      %p322 = scmp.ne.s32.totalorder %s313, %s314
      %p323 = scmp.eq.s32.totalorder %s30, 0
      %p324 = por %p322, %p323
      %p325 = scmp.ne.s32.totalorder %s313, %s314
      %p326 = scmp.eq.s32.totalorder %s31, 1
      %p327 = por %p325, %p326
      %p329 = scmp.ne.s32.totalorder %s314, %s328
      %p330 = scmp.eq.s32.totalorder %s31, 0
      %p331 = por %p329, %p330
      %s333 = sadd.s32 %s332, 1
      %p336 = scmp.eq.s32.totalorder %s25, 1
      %p337 = scmp.ne.s32.totalorder %s332, %s334
      %p338 = scmp.eq.s32.totalorder %s25, 0
      %p339 = por %p337, %p338
      %p340 = scmp.ne.s32.totalorder %s332, %s334
      %p341 = scmp.eq.s32.totalorder %s30, 1
      %p342 = por %p340, %p341
      %p343 = scmp.ne.s32.totalorder %s334, %s335
      %p344 = scmp.eq.s32.totalorder %s30, 0
      %p345 = por %p343, %p344
      %p346 = scmp.ne.s32.totalorder %s334, %s335
      %p347 = scmp.eq.s32.totalorder %s31, 1
      %p348 = por %p346, %p347
      %p350 = scmp.ne.s32.totalorder %s335, %s349
      %p351 = scmp.eq.s32.totalorder %s31, 0
      %p352 = por %p350, %p351
      %s354 = sadd.s32 %s353, 1
      %p357 = scmp.eq.s32.totalorder %s25, 1
      %p358 = scmp.ne.s32.totalorder %s353, %s355
      %p359 = scmp.eq.s32.totalorder %s25, 0
      %p360 = por %p358, %p359
      %p361 = scmp.ne.s32.totalorder %s353, %s355
      %p362 = scmp.eq.s32.totalorder %s30, 1
      %p363 = por %p361, %p362
      %p364 = scmp.ne.s32.totalorder %s355, %s356
      %p365 = scmp.eq.s32.totalorder %s30, 0
      %p366 = por %p364, %p365
      %p367 = scmp.ne.s32.totalorder %s355, %s356
      %p368 = scmp.eq.s32.totalorder %s31, 1
      %p369 = por %p367, %p368
      %p371 = scmp.ne.s32.totalorder %s356, %s370
      %p372 = scmp.eq.s32.totalorder %s31, 0
      %p373 = por %p371, %p372
      %s374 = ssub.s32 %s25, %s32
      %p375 = scmp.eq.s32.totalorder %s374, 0
      %s377 = sadd.s32 %s376, 1
      %s378 = scalar_select %p375, %s376, %s377
      %p381 = pneg %p375
      %p382 = scmp.eq.s32.totalorder %s25, 1
      %p383 = por %p381, %p382
      %p384 = scmp.ne.s32.totalorder %s376, %s379
      %p385 = scmp.eq.s32.totalorder %s25, 0
      %p386 = por %p384, %p385
      %p387 = scmp.ne.s32.totalorder %s376, %s379
      %p388 = scmp.eq.s32.totalorder %s30, 1
      %p389 = por %p387, %p388
      %p390 = scmp.ne.s32.totalorder %s379, %s380
      %p391 = scmp.eq.s32.totalorder %s30, 0
      %p392 = por %p390, %p391
      %p393 = scmp.ne.s32.totalorder %s379, %s380
      %p394 = scmp.eq.s32.totalorder %s31, 1
      %p395 = por %p393, %p394
      %p397 = scmp.ne.s32.totalorder %s380, %s396
      %p398 = scmp.eq.s32.totalorder %s31, 0
      %p399 = por %p397, %p398
      %p400 = scmp.le.s32.totalorder 1, %s25
      %p401 = scmp.lt.s32.totalorder %s25, 3
      %p402 = pnand %p400, %p401
      %p403 = pneg %p402
      // Predicated region
      $region9: #{tpu_custom_call.1} parent=5 // pred_check
        _
      $region10: #{tpu_custom_call.1} parent=5 // pred_check_branch
        %405 = sbr.rel (%p402) target = $region12
      $region11: #{tpu_custom_call.1} parent=5 // pred_region
        %s406 = ssub.s32 %s25, 1
        // Predicated region
        $region13: #{tpu_custom_call.1} parent=11 // pred_check
          %p407 = pneg %p72
        $region14: #{tpu_custom_call.1} parent=11 // pred_check_branch
          %409 = sbr.rel (%p407) target = $region16
        $region15: #{tpu_custom_call.1} parent=11 // pred_region
          _
        $region16: #{tpu_custom_call.1} parent=11 // pred_fallthru
          _
        // Predicated region
        $region17: #{tpu_custom_call.1} parent=11 // pred_check
          %p410 = pneg %p93
        $region18: #{tpu_custom_call.1} parent=11 // pred_check_branch
          %412 = sbr.rel (%p410) target = $region20
        $region19: #{tpu_custom_call.1} parent=11 // pred_region
          _
        $region20: #{tpu_custom_call.1} parent=11 // pred_fallthru
          _
        // Predicated region
        $region21: #{tpu_custom_call.1} parent=11 // pred_check
          %p413 = pneg %p114
        $region22: #{tpu_custom_call.1} parent=11 // pred_check_branch
          %415 = sbr.rel (%p413) target = $region24
        $region23: #{tpu_custom_call.1} parent=11 // pred_region
          _
        $region24: #{tpu_custom_call.1} parent=11 // pred_fallthru
          _
        // Predicated region
        $region25: #{tpu_custom_call.1} parent=11 // pred_check
          %p416 = pneg %p135
        $region26: #{tpu_custom_call.1} parent=11 // pred_check_branch
          %418 = sbr.rel (%p416) target = $region28
        $region27: #{tpu_custom_call.1} parent=11 // pred_region
          _
        $region28: #{tpu_custom_call.1} parent=11 // pred_fallthru
          _
        // Predicated region
        $region29: #{tpu_custom_call.1} parent=11 // pred_check
          %p419 = pneg %p156
        $region30: #{tpu_custom_call.1} parent=11 // pred_check_branch
          %421 = sbr.rel (%p419) target = $region32
        $region31: #{tpu_custom_call.1} parent=11 // pred_region
          _
        $region32: #{tpu_custom_call.1} parent=11 // pred_fallthru
          _
        // Predicated region
        $region33: #{tpu_custom_call.1} parent=11 // pred_check
          %p422 = pneg %p177
        $region34: #{tpu_custom_call.1} parent=11 // pred_check_branch
          %424 = sbr.rel (%p422) target = $region36
        $region35: #{tpu_custom_call.1} parent=11 // pred_region
          _
        $region36: #{tpu_custom_call.1} parent=11 // pred_fallthru
          _
        // Predicated region
        $region37: #{tpu_custom_call.1} parent=11 // pred_check
          %p425 = pneg %p198
        $region38: #{tpu_custom_call.1} parent=11 // pred_check_branch
          %427 = sbr.rel (%p425) target = $region40
        $region39: #{tpu_custom_call.1} parent=11 // pred_region
          _
        $region40: #{tpu_custom_call.1} parent=11 // pred_fallthru
          _
        // Predicated region
        $region41: #{tpu_custom_call.1} parent=11 // pred_check
          %p428 = pneg %p219
        $region42: #{tpu_custom_call.1} parent=11 // pred_check_branch
          %430 = sbr.rel (%p428) target = $region44
        $region43: #{tpu_custom_call.1} parent=11 // pred_region
          _
        $region44: #{tpu_custom_call.1} parent=11 // pred_fallthru
          _
        // Predicated region
        $region45: #{tpu_custom_call.1} parent=11 // pred_check
          %p431 = pneg %p240
        $region46: #{tpu_custom_call.1} parent=11 // pred_check_branch
          %433 = sbr.rel (%p431) target = $region48
        $region47: #{tpu_custom_call.1} parent=11 // pred_region
          _
        $region48: #{tpu_custom_call.1} parent=11 // pred_fallthru
          _
        // Predicated region
        $region49: #{tpu_custom_call.1} parent=11 // pred_check
          %p434 = pneg %p261
        $region50: #{tpu_custom_call.1} parent=11 // pred_check_branch
          %436 = sbr.rel (%p434) target = $region52
        $region51: #{tpu_custom_call.1} parent=11 // pred_region
          _
        $region52: #{tpu_custom_call.1} parent=11 // pred_fallthru
          _
        // Predicated region
        $region53: #{tpu_custom_call.1} parent=11 // pred_check
          %p437 = pneg %p282
        $region54: #{tpu_custom_call.1} parent=11 // pred_check_branch
          %439 = sbr.rel (%p437) target = $region56
        $region55: #{tpu_custom_call.1} parent=11 // pred_region
          _
        $region56: #{tpu_custom_call.1} parent=11 // pred_fallthru
          _
        // Predicated region
        $region57: #{tpu_custom_call.1} parent=11 // pred_check
          %p440 = pneg %p303
        $region58: #{tpu_custom_call.1} parent=11 // pred_check_branch
          %442 = sbr.rel (%p440) target = $region60
        $region59: #{tpu_custom_call.1} parent=11 // pred_region
          _
        $region60: #{tpu_custom_call.1} parent=11 // pred_fallthru
          _
        // Predicated region
        $region61: #{tpu_custom_call.1} parent=11 // pred_check
          %p443 = pneg %p324
        $region62: #{tpu_custom_call.1} parent=11 // pred_check_branch
          %445 = sbr.rel (%p443) target = $region64
        $region63: #{tpu_custom_call.1} parent=11 // pred_region
          _
        $region64: #{tpu_custom_call.1} parent=11 // pred_fallthru
          _
        // Predicated region
        $region65: #{tpu_custom_call.1} parent=11 // pred_check
          %p446 = pneg %p345
        $region66: #{tpu_custom_call.1} parent=11 // pred_check_branch
          %448 = sbr.rel (%p446) target = $region68
        $region67: #{tpu_custom_call.1} parent=11 // pred_region
          _
        $region68: #{tpu_custom_call.1} parent=11 // pred_fallthru
          _
        // Predicated region
        $region69: #{tpu_custom_call.1} parent=11 // pred_check
          %p449 = pneg %p366
        $region70: #{tpu_custom_call.1} parent=11 // pred_check_branch
          %451 = sbr.rel (%p449) target = $region72
        $region71: #{tpu_custom_call.1} parent=11 // pred_region
          _
        $region72: #{tpu_custom_call.1} parent=11 // pred_fallthru
          _
      $region12: #{tpu_custom_call.1} parent=5 // pred_fallthru
        _
      %p452 = scmp.lt.s32.totalorder %s25, 2
      // Predicated region
      $region73: #{tpu_custom_call.1} parent=5 // pred_check
        %p453 = pneg %p452
      $region74: #{tpu_custom_call.1} parent=5 // pred_check_branch
        %455 = sbr.rel (%p453) target = $region76
      $region75: #{tpu_custom_call.1} parent=5 // pred_region
        // Predicated region
        $region77: #{tpu_custom_call.1} parent=75 // pred_check
          %p456 = pneg %p45
        $region78: #{tpu_custom_call.1} parent=75 // pred_check_branch
          %458 = sbr.rel (%p456) target = $region80
        $region79: #{tpu_custom_call.1} parent=75 // pred_region
          %p459 = scmp.lt.s32.totalorder %s25, 1
          %s460 = scalar_select %p459, %s25, 1
          %s461 = smul.addr %s460, 32
          %s462 = smul.addr %s461, 8
          %s463 = scalar_lea.vmem %s0, %s462
        $region80: #{tpu_custom_call.1} parent=75 // pred_fallthru
          _
      $region76: #{tpu_custom_call.1} parent=5 // pred_fallthru
        _
      %p464 = scmp.le.s32.totalorder 1, %s25
      %p465 = scmp.lt.s32.totalorder %s25, 3
      %p466 = pnand %p464, %p465
      %p467 = pneg %p466
      // Predicated region
      $region81: #{tpu_custom_call.1} parent=5 // pred_check
        _
      $region82: #{tpu_custom_call.1} parent=5 // pred_check_branch
        %469 = sbr.rel (%p466) target = $region84
      $region83: #{tpu_custom_call.1} parent=5 // pred_region
        %s470 = ssub.s32 %s25, 1
        %p471 = scmp.lt.s32.totalorder %s30, 1
        %s472 = scalar_select %p471, %s30, 1
        %s473 = smul.addr %s472, 32
        %s474 = smul.addr %s473, 8
        %s475 = scalar_lea.vmem %s0, %s474
        %p476 = pneg %p51
        %p477 = pneg %p48
        %p478 = pneg %p72
        %p479 = pneg %p69
        %p480 = pneg %p93
        %p481 = pneg %p90
        %p482 = pneg %p114
        %p483 = pneg %p111
        %p484 = pneg %p135
        %p485 = pneg %p132
        %p486 = pneg %p156
        %p487 = pneg %p153
        %p488 = pneg %p177
        %p489 = pneg %p174
        %p490 = pneg %p198
        %p491 = pneg %p195
        %p492 = pneg %p219
        %p493 = pneg %p216
        %p494 = pneg %p240
        %p495 = pneg %p237
        %p496 = pneg %p261
        %p497 = pneg %p258
        %p498 = pneg %p282
        %p499 = pneg %p279
        %p500 = pneg %p303
        %p501 = pneg %p300
        %p502 = pneg %p324
        %p503 = pneg %p321
        %p504 = pneg %p345
        %p505 = pneg %p342
        %p506 = pneg %p366
        %p507 = pneg %p363
        %p508 = pneg %p392
        %p509 = pneg %p389
        %s510 = sand.u32 %s379, 1
        %s511 = scalar_lea.sflag [#allocation5], %s510
        %s512 = sand.u32 %s379, 1
        %s513 = scalar_lea.vmem [#allocation4], %s512
        %p514 = scmp.lt.s32.totalorder %s30, 1
        %s515 = scalar_select %p514, %s30, 1
        %s516 = smul.addr %s515, 32
        %s517 = smul.addr %s516, 8
        %s518 = scalar_lea.vmem %s0, %s517
        %vm519 = vcmask 523264
        %520 = vst.msk [vmem:[#allocation2] sm:$0xff] %vm519, 0.0
        %521 = vst.msk [vmem:[#allocation2 + $0x8] sm:$0xff] %vm519, 0.0
        %vm522 = vcmask 517120
        %523 = vst.msk [vmem:[#allocation2 + $0x10] sm:$0x3] %vm522, 0.0
        %524 = vst.msk [vmem:[#allocation2 + $0x18] sm:$0xff] %vm519, 0.0
        %525 = vst.msk [vmem:[#allocation2 + $0x20] sm:$0xff] %vm519, 0.0
        %526 = vst.msk [vmem:[#allocation2 + $0x28] sm:$0x3] %vm522, 0.0
        %527 = vst.msk [vmem:[#allocation2 + $0x30] sm:$0xff] %vm519, 0.0
        %528 = vst.msk [vmem:[#allocation2 + $0x38] sm:$0xff] %vm519, 0.0
        %529 = vst.msk [vmem:[#allocation2 + $0x40] sm:$0x3] %vm522, 0.0
        %530 = vst.msk [vmem:[#allocation2 + $0x48] sm:$0xff] %vm519, 0.0
        %531 = vst.msk [vmem:[#allocation2 + $0x50] sm:$0xff] %vm519, 0.0
        %532 = vst.msk [vmem:[#allocation2 + $0x58] sm:$0x3] %vm522, 0.0
        %533 = vst.msk [vmem:[#allocation2 + $0x60] sm:$0xff] %vm519, 0.0
        %534 = vst.msk [vmem:[#allocation2 + $0x68] sm:$0xff] %vm519, 0.0
        %535 = vst.msk [vmem:[#allocation2 + $0x70] sm:$0x3] %vm522, 0.0
        %536 = vst.msk [vmem:[#allocation2 + $0x78] sm:$0xff] %vm519, 0.0
        %537 = vst.msk [vmem:[#allocation2 + $0x80] sm:$0xff] %vm519, 0.0
        %538 = vst.msk [vmem:[#allocation2 + $0x88] sm:$0x3] %vm522, 0.0
        %539 = vst.msk [vmem:[#allocation2 + $0x90] sm:$0xff] %vm519, 0.0
        %540 = vst.msk [vmem:[#allocation2 + $0x98] sm:$0xff] %vm519, 0.0
        %541 = vst.msk [vmem:[#allocation2 + $0xa0] sm:$0x3] %vm522, 0.0
        %542 = vst.msk [vmem:[#allocation2 + $0xa8] sm:$0xff] %vm519, 0.0
        %543 = vst.msk [vmem:[#allocation2 + $0xb0] sm:$0xff] %vm519, 0.0
        %544 = vst.msk [vmem:[#allocation2 + $0xb8] sm:$0x3] %vm522, 0.0
        %545 = vst.msk [vmem:[#allocation2 + $0xc0] sm:$0xff] %vm519, 0.0
        %546 = vst.msk [vmem:[#allocation2 + $0xc8] sm:$0xff] %vm519, 0.0
        %547 = vst.msk [vmem:[#allocation2 + $0xd0] sm:$0x3] %vm522, 0.0
        %548 = vst.msk [vmem:[#allocation2 + $0xd8] sm:$0xff] %vm519, 0.0
        %549 = vst.msk [vmem:[#allocation2 + $0xe0] sm:$0xff] %vm519, 0.0
        %550 = vst.msk [vmem:[#allocation2 + $0xe8] sm:$0x3] %vm522, 0.0
        %551 = vst.msk [vmem:[#allocation2 + $0xf0] sm:$0xff] %vm519, 0.0
        %552 = vst.msk [vmem:[#allocation2 + $0xf8] sm:$0xff] %vm519, 0.0
        %553 = vst.msk [vmem:[#allocation2 + $0x100] sm:$0x3] %vm522, 0.0
        %554 = vst.msk [vmem:[#allocation2 + $0x108] sm:$0xff] %vm519, 0.0
        %555 = vst.msk [vmem:[#allocation2 + $0x110] sm:$0xff] %vm519, 0.0
        %556 = vst.msk [vmem:[#allocation2 + $0x118] sm:$0x3] %vm522, 0.0
        %557 = vst.msk [vmem:[#allocation2 + $0x120] sm:$0xff] %vm519, 0.0
        %558 = vst.msk [vmem:[#allocation2 + $0x128] sm:$0xff] %vm519, 0.0
        %559 = vst.msk [vmem:[#allocation2 + $0x130] sm:$0x3] %vm522, 0.0
        %560 = vst.msk [vmem:[#allocation2 + $0x138] sm:$0xff] %vm519, 0.0
        %561 = vst.msk [vmem:[#allocation2 + $0x140] sm:$0xff] %vm519, 0.0
        %562 = vst.msk [vmem:[#allocation2 + $0x148] sm:$0x3] %vm522, 0.0
        %563 = vst.msk [vmem:[#allocation2 + $0x150] sm:$0xff] %vm519, 0.0
        %564 = vst.msk [vmem:[#allocation2 + $0x158] sm:$0xff] %vm519, 0.0
        %565 = vst.msk [vmem:[#allocation2 + $0x160] sm:$0x3] %vm522, 0.0
        %566 = vst.msk [vmem:[#allocation2 + $0x168] sm:$0xff] %vm519, 0.0
        %567 = vst.msk [vmem:[#allocation2 + $0x170] sm:$0xff] %vm519, 0.0
        %568 = vst.msk [vmem:[#allocation2 + $0x178] sm:$0x3] %vm522, 0.0
        %569 = vst.msk [vmem:[#allocation2 + $0x180] sm:$0xff] %vm519, 0.0
        %570 = vst.msk [vmem:[#allocation2 + $0x188] sm:$0xff] %vm519, 0.0
        %571 = vst.msk [vmem:[#allocation2 + $0x190] sm:$0x3] %vm522, 0.0
        %572 = vst.msk [vmem:[#allocation2 + $0x198] sm:$0xff] %vm519, 0.0
        %573 = vst.msk [vmem:[#allocation2 + $0x1a0] sm:$0xff] %vm519, 0.0
        %574 = vst.msk [vmem:[#allocation2 + $0x1a8] sm:$0x3] %vm522, 0.0
        %v575 = vld [vmem:[%s518] sm:$0xff]
        %v576 = vld [vmem:[%s518 + $0x8] sm:$0xff]
        %v577 = vld [vmem:[%s518 + $0x10] sm:$0xff]
        %v578 = vld [vmem:[%s518 + $0x18] sm:$0xff]
        %v579 = vld [vmem:[%s518 + $0x20] sm:$0xff]
        %v580 = vld [vmem:[%s518 + $0x28] sm:$0xff]
        %v581 = vld [vmem:[%s518 + $0x30] sm:$0xff]
        %v582 = vld [vmem:[%s518 + $0x38] sm:$0xff]
        %v583 = vld [vmem:[%s518 + $0x40] sm:$0xff]
        %v584 = vld [vmem:[%s518 + $0x48] sm:$0xff]
        %v585 = vld [vmem:[%s518 + $0x50] sm:$0xff]
        %v586 = vld [vmem:[%s518 + $0x58] sm:$0xff]
        %v587 = vld [vmem:[%s518 + $0x60] sm:$0xff]
        %v588 = vld [vmem:[%s518 + $0x68] sm:$0xff]
        %v589 = vld [vmem:[%s518 + $0x70] sm:$0xff]
        %v590 = vld [vmem:[%s518 + $0x78] sm:$0xff]
        %v591 = vld [vmem:[%s518 + $0x80] sm:$0xff]
        %v592 = vld [vmem:[%s518 + $0x88] sm:$0xff]
        %v593 = vld [vmem:[%s518 + $0x90] sm:$0xff]
        %v594 = vld [vmem:[%s518 + $0x98] sm:$0xff]
        %v595 = vld [vmem:[%s518 + $0xa0] sm:$0xff]
        %v596 = vld [vmem:[%s518 + $0xa8] sm:$0xff]
        %v597 = vld [vmem:[%s518 + $0xb0] sm:$0xff]
        %v598 = vld [vmem:[%s518 + $0xb8] sm:$0xff]
        %v599 = vld [vmem:[%s518 + $0xc0] sm:$0xff]
        %v600 = vld [vmem:[%s518 + $0xc8] sm:$0xff]
        %v601 = vld [vmem:[%s518 + $0xd0] sm:$0xff]
        %v602 = vld [vmem:[%s518 + $0xd8] sm:$0xff]
        %v603 = vld [vmem:[%s518 + $0xe0] sm:$0xff]
        %v604 = vld [vmem:[%s518 + $0xe8] sm:$0xff]
        %v605 = vld [vmem:[%s518 + $0xf0] sm:$0xff]
        %v606 = vld [vmem:[%s518 + $0xf8] sm:$0xff]
        %s607 = scalar_lea.vmem [#allocation2], 24
        %vm608 = vcmask 31744
        %609 = vst.msk [vmem:[%s607 + $0x1] sm:$0xff] %vm608, %v575
        %610 = vst.msk [vmem:[%s607 + $0x9] sm:$0xff] %vm608, %v576
        %611 = vst.msk [vmem:[%s607 + $0x19] sm:$0xff] %vm608, %v577
        %612 = vst.msk [vmem:[%s607 + $0x21] sm:$0xff] %vm608, %v578
        %613 = vst.msk [vmem:[%s607 + $0x31] sm:$0xff] %vm608, %v579
        %614 = vst.msk [vmem:[%s607 + $0x39] sm:$0xff] %vm608, %v580
        %615 = vst.msk [vmem:[%s607 + $0x49] sm:$0xff] %vm608, %v581
        %616 = vst.msk [vmem:[%s607 + $0x51] sm:$0xff] %vm608, %v582
        %617 = vst.msk [vmem:[%s607 + $0x61] sm:$0xff] %vm608, %v583
        %618 = vst.msk [vmem:[%s607 + $0x69] sm:$0xff] %vm608, %v584
        %619 = vst.msk [vmem:[%s607 + $0x79] sm:$0xff] %vm608, %v585
        %620 = vst.msk [vmem:[%s607 + $0x81] sm:$0xff] %vm608, %v586
        %621 = vst.msk [vmem:[%s607 + $0x91] sm:$0xff] %vm608, %v587
        %622 = vst.msk [vmem:[%s607 + $0x99] sm:$0xff] %vm608, %v588
        %623 = vst.msk [vmem:[%s607 + $0xa9] sm:$0xff] %vm608, %v589
        %624 = vst.msk [vmem:[%s607 + $0xb1] sm:$0xff] %vm608, %v590
        %625 = vst.msk [vmem:[%s607 + $0xc1] sm:$0xff] %vm608, %v591
        %626 = vst.msk [vmem:[%s607 + $0xc9] sm:$0xff] %vm608, %v592
        %627 = vst.msk [vmem:[%s607 + $0xd9] sm:$0xff] %vm608, %v593
        %628 = vst.msk [vmem:[%s607 + $0xe1] sm:$0xff] %vm608, %v594
        %629 = vst.msk [vmem:[%s607 + $0xf1] sm:$0xff] %vm608, %v595
        %630 = vst.msk [vmem:[%s607 + $0xf9] sm:$0xff] %vm608, %v596
        %631 = vst.msk [vmem:[%s607 + $0x109] sm:$0xff] %vm608, %v597
        %632 = vst.msk [vmem:[%s607 + $0x111] sm:$0xff] %vm608, %v598
        %633 = vst.msk [vmem:[%s607 + $0x121] sm:$0xff] %vm608, %v599
        %634 = vst.msk [vmem:[%s607 + $0x129] sm:$0xff] %vm608, %v600
        %635 = vst.msk [vmem:[%s607 + $0x139] sm:$0xff] %vm608, %v601
        %636 = vst.msk [vmem:[%s607 + $0x141] sm:$0xff] %vm608, %v602
        %637 = vst.msk [vmem:[%s607 + $0x151] sm:$0xff] %vm608, %v603
        %638 = vst.msk [vmem:[%s607 + $0x159] sm:$0xff] %vm608, %v604
        %639 = vst.msk [vmem:[%s607 + $0x169] sm:$0xff] %vm608, %v605
        %640 = vst.msk [vmem:[%s607 + $0x171] sm:$0xff] %vm608, %v606
        %v641 = vld [vmem:[#allocation2] sm:$0xff]
        %v642 = vld [vmem:[#allocation2 + $0x8] sm:$0xff]
        %v643 = vld [vmem:[#allocation2 + $0x18] sm:$0xff]
        %v644 = vld [vmem:[#allocation2 + $0x20] sm:$0xff]
        %v645 = vld [vmem:[#allocation2 + $0x30] sm:$0xff]
        %v646 = vld [vmem:[#allocation2 + $0x38] sm:$0xff]
        %v647 = vld [vmem:[#allocation2 + $0x48] sm:$0xff]
        %v648 = vld [vmem:[#allocation2 + $0x50] sm:$0xff]
        %v649 = vld [vmem:[#allocation2 + $0x60] sm:$0xff]
        %v650 = vld [vmem:[#allocation2 + $0x68] sm:$0xff]
        %v651 = vld [vmem:[#allocation2 + $0x78] sm:$0xff]
        %v652 = vld [vmem:[#allocation2 + $0x80] sm:$0xff]
        %v653 = vld [vmem:[#allocation2 + $0x90] sm:$0xff]
        %v654 = vld [vmem:[#allocation2 + $0x98] sm:$0xff]
        %v655 = vld [vmem:[#allocation2 + $0xa8] sm:$0xff]
        %v656 = vld [vmem:[#allocation2 + $0xb0] sm:$0xff]
        %v657 = vld [vmem:[#allocation2 + $0xc0] sm:$0xff]
        %v658 = vld [vmem:[#allocation2 + $0xc8] sm:$0xff]
        %v659 = vld [vmem:[#allocation2 + $0xd8] sm:$0xff]
        %v660 = vld [vmem:[#allocation2 + $0xe0] sm:$0xff]
        %v661 = vld [vmem:[#allocation2 + $0xf0] sm:$0xff]
        %v662 = vld [vmem:[#allocation2 + $0xf8] sm:$0xff]
        %v663 = vld [vmem:[#allocation2 + $0x108] sm:$0xff]
        %v664 = vld [vmem:[#allocation2 + $0x110] sm:$0xff]
        %v665 = vld [vmem:[#allocation2 + $0x120] sm:$0xff]
        %v666 = vld [vmem:[#allocation2 + $0x128] sm:$0xff]
        %v667 = vld [vmem:[#allocation2 + $0x138] sm:$0xff]
        %v668 = vld [vmem:[#allocation2 + $0x140] sm:$0xff]
        %v669 = vld [vmem:[#allocation2 + $0x150] sm:$0xff]
        %v670 = vld [vmem:[#allocation2 + $0x158] sm:$0xff]
        %v671 = vld [vmem:[#allocation2 + $0x168] sm:$0xff]
        %v672 = vld [vmem:[#allocation2 + $0x170] sm:$0xff]
        %673 = vst.msk [vmem:[#allocation3] sm:$0xff] %vm608, %v641
        %674 = vst.msk [vmem:[#allocation3 + $0x28] sm:$0xff] %vm608, %v642
        %675 = vst.msk [vmem:[#allocation3 + $0x50] sm:$0xff] %vm608, %v643
        %676 = vst.msk [vmem:[#allocation3 + $0x78] sm:$0xff] %vm608, %v644
        %677 = vst.msk [vmem:[#allocation3 + $0xa0] sm:$0xff] %vm608, %v645
        %678 = vst.msk [vmem:[#allocation3 + $0xc8] sm:$0xff] %vm608, %v646
        %679 = vst.msk [vmem:[#allocation3 + $0xf0] sm:$0xff] %vm608, %v647
        %680 = vst.msk [vmem:[#allocation3 + $0x118] sm:$0xff] %vm608, %v648
        %681 = vst.msk [vmem:[#allocation3 + $0x140] sm:$0xff] %vm608, %v649
        %682 = vst.msk [vmem:[#allocation3 + $0x168] sm:$0xff] %vm608, %v650
        %683 = vst.msk [vmem:[#allocation3 + $0x190] sm:$0xff] %vm608, %v651
        %684 = vst.msk [vmem:[#allocation3 + $0x1b8] sm:$0xff] %vm608, %v652
        %685 = vst.msk [vmem:[#allocation3 + $0x1e0] sm:$0xff] %vm608, %v653
        %686 = vst.msk [vmem:[#allocation3 + $0x208] sm:$0xff] %vm608, %v654
        %687 = vst.msk [vmem:[#allocation3 + $0x230] sm:$0xff] %vm608, %v655
        %688 = vst.msk [vmem:[#allocation3 + $0x258] sm:$0xff] %vm608, %v656
        %689 = vst.msk [vmem:[#allocation3 + $0x280] sm:$0xff] %vm608, %v657
        %690 = vst.msk [vmem:[#allocation3 + $0x2a8] sm:$0xff] %vm608, %v658
        %691 = vst.msk [vmem:[#allocation3 + $0x2d0] sm:$0xff] %vm608, %v659
        %692 = vst.msk [vmem:[#allocation3 + $0x2f8] sm:$0xff] %vm608, %v660
        %693 = vst.msk [vmem:[#allocation3 + $0x320] sm:$0xff] %vm608, %v661
        %694 = vst.msk [vmem:[#allocation3 + $0x348] sm:$0xff] %vm608, %v662
        %695 = vst.msk [vmem:[#allocation3 + $0x370] sm:$0xff] %vm608, %v663
        %696 = vst.msk [vmem:[#allocation3 + $0x398] sm:$0xff] %vm608, %v664
        %697 = vst.msk [vmem:[#allocation3 + $0x3c0] sm:$0xff] %vm608, %v665
        %698 = vst.msk [vmem:[#allocation3 + $0x3e8] sm:$0xff] %vm608, %v666
        %699 = vst.msk [vmem:[#allocation3 + $0x410] sm:$0xff] %vm608, %v667
        %700 = vst.msk [vmem:[#allocation3 + $0x438] sm:$0xff] %vm608, %v668
        %701 = vst.msk [vmem:[#allocation3 + $0x460] sm:$0xff] %vm608, %v669
        %702 = vst.msk [vmem:[#allocation3 + $0x488] sm:$0xff] %vm608, %v670
        %703 = vst.msk [vmem:[#allocation3 + $0x4b0] sm:$0xff] %vm608, %v671
        %704 = vst.msk [vmem:[#allocation3 + $0x4d8] sm:$0xff] %vm608, %v672
        %v705 = vld [vmem:[#allocation2 + $0x1] sm:$0xff]
        %v706 = vld [vmem:[#allocation2 + $0x9] sm:$0xff]
        %v707 = vld [vmem:[#allocation2 + $0x19] sm:$0xff]
        %v708 = vld [vmem:[#allocation2 + $0x21] sm:$0xff]
        %v709 = vld [vmem:[#allocation2 + $0x31] sm:$0xff]
        %v710 = vld [vmem:[#allocation2 + $0x39] sm:$0xff]
        %v711 = vld [vmem:[#allocation2 + $0x49] sm:$0xff]
        %v712 = vld [vmem:[#allocation2 + $0x51] sm:$0xff]
        %v713 = vld [vmem:[#allocation2 + $0x61] sm:$0xff]
        %v714 = vld [vmem:[#allocation2 + $0x69] sm:$0xff]
        %v715 = vld [vmem:[#allocation2 + $0x79] sm:$0xff]
        %v716 = vld [vmem:[#allocation2 + $0x81] sm:$0xff]
        %v717 = vld [vmem:[#allocation2 + $0x91] sm:$0xff]
        %v718 = vld [vmem:[#allocation2 + $0x99] sm:$0xff]
        %v719 = vld [vmem:[#allocation2 + $0xa9] sm:$0xff]
        %v720 = vld [vmem:[#allocation2 + $0xb1] sm:$0xff]
        %v721 = vld [vmem:[#allocation2 + $0xc1] sm:$0xff]
        %v722 = vld [vmem:[#allocation2 + $0xc9] sm:$0xff]
        %v723 = vld [vmem:[#allocation2 + $0xd9] sm:$0xff]
        %v724 = vld [vmem:[#allocation2 + $0xe1] sm:$0xff]
        %v725 = vld [vmem:[#allocation2 + $0xf1] sm:$0xff]
        %v726 = vld [vmem:[#allocation2 + $0xf9] sm:$0xff]
        %v727 = vld [vmem:[#allocation2 + $0x109] sm:$0xff]
        %v728 = vld [vmem:[#allocation2 + $0x111] sm:$0xff]
        %v729 = vld [vmem:[#allocation2 + $0x121] sm:$0xff]
        %v730 = vld [vmem:[#allocation2 + $0x129] sm:$0xff]
        %v731 = vld [vmem:[#allocation2 + $0x139] sm:$0xff]
        %v732 = vld [vmem:[#allocation2 + $0x141] sm:$0xff]
        %v733 = vld [vmem:[#allocation2 + $0x151] sm:$0xff]
        %v734 = vld [vmem:[#allocation2 + $0x159] sm:$0xff]
        %v735 = vld [vmem:[#allocation2 + $0x169] sm:$0xff]
        %v736 = vld [vmem:[#allocation2 + $0x171] sm:$0xff]
        %769 = vrot.lane.b32.xlu0 %v705, 4
        %v770 = vpop.permute.xlu0 %769
        %771 = vrot.lane.b32.xlu0 %v706, 4
        %v772 = vpop.permute.xlu0 %771
        %773 = vrot.lane.b32.xlu0 %v707, 4
        %v774 = vpop.permute.xlu0 %773
        %775 = vrot.lane.b32.xlu0 %v708, 4
        %v776 = vpop.permute.xlu0 %775
        %777 = vrot.lane.b32.xlu0 %v709, 4
        %v778 = vpop.permute.xlu0 %777
        %779 = vrot.lane.b32.xlu0 %v710, 4
        %v780 = vpop.permute.xlu0 %779
        %781 = vrot.lane.b32.xlu0 %v711, 4
        %v782 = vpop.permute.xlu0 %781
        %783 = vrot.lane.b32.xlu0 %v712, 4
        %v784 = vpop.permute.xlu0 %783
        %785 = vrot.lane.b32.xlu0 %v713, 4
        %v786 = vpop.permute.xlu0 %785
        %787 = vrot.lane.b32.xlu0 %v714, 4
        %v788 = vpop.permute.xlu0 %787
        %789 = vrot.lane.b32.xlu0 %v715, 4
        %v790 = vpop.permute.xlu0 %789
        %791 = vrot.lane.b32.xlu0 %v716, 4
        %v792 = vpop.permute.xlu0 %791
        %793 = vrot.lane.b32.xlu0 %v717, 4
        %v794 = vpop.permute.xlu0 %793
        %795 = vrot.lane.b32.xlu0 %v718, 4
        %v796 = vpop.permute.xlu0 %795
        %797 = vrot.lane.b32.xlu0 %v719, 4
        %v798 = vpop.permute.xlu0 %797
        %799 = vrot.lane.b32.xlu0 %v720, 4
        %v800 = vpop.permute.xlu0 %799
        %801 = vrot.lane.b32.xlu0 %v721, 4
        %v802 = vpop.permute.xlu0 %801
        %803 = vrot.lane.b32.xlu0 %v722, 4
        %v804 = vpop.permute.xlu0 %803
        %805 = vrot.lane.b32.xlu0 %v723, 4
        %v806 = vpop.permute.xlu0 %805
        %807 = vrot.lane.b32.xlu0 %v724, 4
        %v808 = vpop.permute.xlu0 %807
        %809 = vrot.lane.b32.xlu0 %v725, 4
        %v810 = vpop.permute.xlu0 %809
        %811 = vrot.lane.b32.xlu0 %v726, 4
        %v812 = vpop.permute.xlu0 %811
        %813 = vrot.lane.b32.xlu0 %v727, 4
        %v814 = vpop.permute.xlu0 %813
        %815 = vrot.lane.b32.xlu0 %v728, 4
        %v816 = vpop.permute.xlu0 %815
        %817 = vrot.lane.b32.xlu0 %v729, 4
        %v818 = vpop.permute.xlu0 %817
        %819 = vrot.lane.b32.xlu0 %v730, 4
        %v820 = vpop.permute.xlu0 %819
        %821 = vrot.lane.b32.xlu0 %v731, 4
        %v822 = vpop.permute.xlu0 %821
        %823 = vrot.lane.b32.xlu0 %v732, 4
        %v824 = vpop.permute.xlu0 %823
        %825 = vrot.lane.b32.xlu0 %v733, 4
        %v826 = vpop.permute.xlu0 %825
        %827 = vrot.lane.b32.xlu0 %v734, 4
        %v828 = vpop.permute.xlu0 %827
        %829 = vrot.lane.b32.xlu0 %v735, 4
        %v830 = vpop.permute.xlu0 %829
        %831 = vrot.lane.b32.xlu0 %v736, 4
        %v832 = vpop.permute.xlu0 %831
        %vm865 = vcmask 64544
        %866 = vst.msk [vmem:[#allocation3] sm:$0xff] %vm865, %v770
        %867 = vst.msk [vmem:[#allocation3 + $0x28] sm:$0xff] %vm865, %v772
        %868 = vst.msk [vmem:[#allocation3 + $0x50] sm:$0xff] %vm865, %v774
        %869 = vst.msk [vmem:[#allocation3 + $0x78] sm:$0xff] %vm865, %v776
        %870 = vst.msk [vmem:[#allocation3 + $0xa0] sm:$0xff] %vm865, %v778
        %871 = vst.msk [vmem:[#allocation3 + $0xc8] sm:$0xff] %vm865, %v780
        %872 = vst.msk [vmem:[#allocation3 + $0xf0] sm:$0xff] %vm865, %v782
        %873 = vst.msk [vmem:[#allocation3 + $0x118] sm:$0xff] %vm865, %v784
        %874 = vst.msk [vmem:[#allocation3 + $0x140] sm:$0xff] %vm865, %v786
        %875 = vst.msk [vmem:[#allocation3 + $0x168] sm:$0xff] %vm865, %v788
        %876 = vst.msk [vmem:[#allocation3 + $0x190] sm:$0xff] %vm865, %v790
        %877 = vst.msk [vmem:[#allocation3 + $0x1b8] sm:$0xff] %vm865, %v792
        %878 = vst.msk [vmem:[#allocation3 + $0x1e0] sm:$0xff] %vm865, %v794
        %879 = vst.msk [vmem:[#allocation3 + $0x208] sm:$0xff] %vm865, %v796
        %880 = vst.msk [vmem:[#allocation3 + $0x230] sm:$0xff] %vm865, %v798
        %881 = vst.msk [vmem:[#allocation3 + $0x258] sm:$0xff] %vm865, %v800
        %882 = vst.msk [vmem:[#allocation3 + $0x280] sm:$0xff] %vm865, %v802
        %883 = vst.msk [vmem:[#allocation3 + $0x2a8] sm:$0xff] %vm865, %v804
        %884 = vst.msk [vmem:[#allocation3 + $0x2d0] sm:$0xff] %vm865, %v806
        %885 = vst.msk [vmem:[#allocation3 + $0x2f8] sm:$0xff] %vm865, %v808
        %886 = vst.msk [vmem:[#allocation3 + $0x320] sm:$0xff] %vm865, %v810
        %887 = vst.msk [vmem:[#allocation3 + $0x348] sm:$0xff] %vm865, %v812
        %888 = vst.msk [vmem:[#allocation3 + $0x370] sm:$0xff] %vm865, %v814
        %889 = vst.msk [vmem:[#allocation3 + $0x398] sm:$0xff] %vm865, %v816
        %890 = vst.msk [vmem:[#allocation3 + $0x3c0] sm:$0xff] %vm865, %v818
        %891 = vst.msk [vmem:[#allocation3 + $0x3e8] sm:$0xff] %vm865, %v820
        %892 = vst.msk [vmem:[#allocation3 + $0x410] sm:$0xff] %vm865, %v822
        %893 = vst.msk [vmem:[#allocation3 + $0x438] sm:$0xff] %vm865, %v824
        %894 = vst.msk [vmem:[#allocation3 + $0x460] sm:$0xff] %vm865, %v826
        %895 = vst.msk [vmem:[#allocation3 + $0x488] sm:$0xff] %vm865, %v828
        %896 = vst.msk [vmem:[#allocation3 + $0x4b0] sm:$0xff] %vm865, %v830
        %897 = vst.msk [vmem:[#allocation3 + $0x4d8] sm:$0xff] %vm865, %v832
        %v898 = vld [vmem:[#allocation2 + $0x2] sm:$0xff]
        %v899 = vld [vmem:[#allocation2 + $0xa] sm:$0xff]
        %v900 = vld [vmem:[#allocation2 + $0x1a] sm:$0xff]
        %v901 = vld [vmem:[#allocation2 + $0x22] sm:$0xff]
        %v902 = vld [vmem:[#allocation2 + $0x32] sm:$0xff]
        %v903 = vld [vmem:[#allocation2 + $0x3a] sm:$0xff]
        %v904 = vld [vmem:[#allocation2 + $0x4a] sm:$0xff]
        %v905 = vld [vmem:[#allocation2 + $0x52] sm:$0xff]
        %v906 = vld [vmem:[#allocation2 + $0x62] sm:$0xff]
        %v907 = vld [vmem:[#allocation2 + $0x6a] sm:$0xff]
        %v908 = vld [vmem:[#allocation2 + $0x7a] sm:$0xff]
        %v909 = vld [vmem:[#allocation2 + $0x82] sm:$0xff]
        %v910 = vld [vmem:[#allocation2 + $0x92] sm:$0xff]
        %v911 = vld [vmem:[#allocation2 + $0x9a] sm:$0xff]
        %v912 = vld [vmem:[#allocation2 + $0xaa] sm:$0xff]
        %v913 = vld [vmem:[#allocation2 + $0xb2] sm:$0xff]
        %v914 = vld [vmem:[#allocation2 + $0xc2] sm:$0xff]
        %v915 = vld [vmem:[#allocation2 + $0xca] sm:$0xff]
        %v916 = vld [vmem:[#allocation2 + $0xda] sm:$0xff]
        %v917 = vld [vmem:[#allocation2 + $0xe2] sm:$0xff]
        %v918 = vld [vmem:[#allocation2 + $0xf2] sm:$0xff]
        %v919 = vld [vmem:[#allocation2 + $0xfa] sm:$0xff]
        %v920 = vld [vmem:[#allocation2 + $0x10a] sm:$0xff]
        %v921 = vld [vmem:[#allocation2 + $0x112] sm:$0xff]
        %v922 = vld [vmem:[#allocation2 + $0x122] sm:$0xff]
        %v923 = vld [vmem:[#allocation2 + $0x12a] sm:$0xff]
        %v924 = vld [vmem:[#allocation2 + $0x13a] sm:$0xff]
        %v925 = vld [vmem:[#allocation2 + $0x142] sm:$0xff]
        %v926 = vld [vmem:[#allocation2 + $0x152] sm:$0xff]
        %v927 = vld [vmem:[#allocation2 + $0x15a] sm:$0xff]
        %v928 = vld [vmem:[#allocation2 + $0x16a] sm:$0xff]
        %v929 = vld [vmem:[#allocation2 + $0x172] sm:$0xff]
        %962 = vrot.lane.b32.xlu0 %v898, 8
        %v963 = vpop.permute.xlu0 %962
        %964 = vrot.lane.b32.xlu0 %v899, 8
        %v965 = vpop.permute.xlu0 %964
        %966 = vrot.lane.b32.xlu0 %v900, 8
        %v967 = vpop.permute.xlu0 %966
        %968 = vrot.lane.b32.xlu0 %v901, 8
        %v969 = vpop.permute.xlu0 %968
        %970 = vrot.lane.b32.xlu0 %v902, 8
        %v971 = vpop.permute.xlu0 %970
        %972 = vrot.lane.b32.xlu0 %v903, 8
        %v973 = vpop.permute.xlu0 %972
        %974 = vrot.lane.b32.xlu0 %v904, 8
        %v975 = vpop.permute.xlu0 %974
        %976 = vrot.lane.b32.xlu0 %v905, 8
        %v977 = vpop.permute.xlu0 %976
        %978 = vrot.lane.b32.xlu0 %v906, 8
        %v979 = vpop.permute.xlu0 %978
        %980 = vrot.lane.b32.xlu0 %v907, 8
        %v981 = vpop.permute.xlu0 %980
        %982 = vrot.lane.b32.xlu0 %v908, 8
        %v983 = vpop.permute.xlu0 %982
        %984 = vrot.lane.b32.xlu0 %v909, 8
        %v985 = vpop.permute.xlu0 %984
        %986 = vrot.lane.b32.xlu0 %v910, 8
        %v987 = vpop.permute.xlu0 %986
        %988 = vrot.lane.b32.xlu0 %v911, 8
        %v989 = vpop.permute.xlu0 %988
        %990 = vrot.lane.b32.xlu0 %v912, 8
        %v991 = vpop.permute.xlu0 %990
        %992 = vrot.lane.b32.xlu0 %v913, 8
        %v993 = vpop.permute.xlu0 %992
        %994 = vrot.lane.b32.xlu0 %v914, 8
        %v995 = vpop.permute.xlu0 %994
        %996 = vrot.lane.b32.xlu0 %v915, 8
        %v997 = vpop.permute.xlu0 %996
        %998 = vrot.lane.b32.xlu0 %v916, 8
        %v999 = vpop.permute.xlu0 %998
        %1000 = vrot.lane.b32.xlu0 %v917, 8
        %v1001 = vpop.permute.xlu0 %1000
        %1002 = vrot.lane.b32.xlu0 %v918, 8
        %v1003 = vpop.permute.xlu0 %1002
        %1004 = vrot.lane.b32.xlu0 %v919, 8
        %v1005 = vpop.permute.xlu0 %1004
        %1006 = vrot.lane.b32.xlu0 %v920, 8
        %v1007 = vpop.permute.xlu0 %1006
        %1008 = vrot.lane.b32.xlu0 %v921, 8
        %v1009 = vpop.permute.xlu0 %1008
        %1010 = vrot.lane.b32.xlu0 %v922, 8
        %v1011 = vpop.permute.xlu0 %1010
        %1012 = vrot.lane.b32.xlu0 %v923, 8
        %v1013 = vpop.permute.xlu0 %1012
        %1014 = vrot.lane.b32.xlu0 %v924, 8
        %v1015 = vpop.permute.xlu0 %1014
        %1016 = vrot.lane.b32.xlu0 %v925, 8
        %v1017 = vpop.permute.xlu0 %1016
        %1018 = vrot.lane.b32.xlu0 %v926, 8
        %v1019 = vpop.permute.xlu0 %1018
        %1020 = vrot.lane.b32.xlu0 %v927, 8
        %v1021 = vpop.permute.xlu0 %1020
        %1022 = vrot.lane.b32.xlu0 %v928, 8
        %v1023 = vpop.permute.xlu0 %1022
        %1024 = vrot.lane.b32.xlu0 %v929, 8
        %v1025 = vpop.permute.xlu0 %1024
        %vm1058 = vcmask 97344
        %1059 = vst.msk [vmem:[#allocation3] sm:$0xff] %vm1058, %v963
        %1060 = vst.msk [vmem:[#allocation3 + $0x28] sm:$0xff] %vm1058, %v965
        %1061 = vst.msk [vmem:[#allocation3 + $0x50] sm:$0xff] %vm1058, %v967
        %1062 = vst.msk [vmem:[#allocation3 + $0x78] sm:$0xff] %vm1058, %v969
        %1063 = vst.msk [vmem:[#allocation3 + $0xa0] sm:$0xff] %vm1058, %v971
        %1064 = vst.msk [vmem:[#allocation3 + $0xc8] sm:$0xff] %vm1058, %v973
        %1065 = vst.msk [vmem:[#allocation3 + $0xf0] sm:$0xff] %vm1058, %v975
        %1066 = vst.msk [vmem:[#allocation3 + $0x118] sm:$0xff] %vm1058, %v977
        %1067 = vst.msk [vmem:[#allocation3 + $0x140] sm:$0xff] %vm1058, %v979
        %1068 = vst.msk [vmem:[#allocation3 + $0x168] sm:$0xff] %vm1058, %v981
        %1069 = vst.msk [vmem:[#allocation3 + $0x190] sm:$0xff] %vm1058, %v983
        %1070 = vst.msk [vmem:[#allocation3 + $0x1b8] sm:$0xff] %vm1058, %v985
        %1071 = vst.msk [vmem:[#allocation3 + $0x1e0] sm:$0xff] %vm1058, %v987
        %1072 = vst.msk [vmem:[#allocation3 + $0x208] sm:$0xff] %vm1058, %v989
        %1073 = vst.msk [vmem:[#allocation3 + $0x230] sm:$0xff] %vm1058, %v991
        %1074 = vst.msk [vmem:[#allocation3 + $0x258] sm:$0xff] %vm1058, %v993
        %1075 = vst.msk [vmem:[#allocation3 + $0x280] sm:$0xff] %vm1058, %v995
        %1076 = vst.msk [vmem:[#allocation3 + $0x2a8] sm:$0xff] %vm1058, %v997
        %1077 = vst.msk [vmem:[#allocation3 + $0x2d0] sm:$0xff] %vm1058, %v999
        %1078 = vst.msk [vmem:[#allocation3 + $0x2f8] sm:$0xff] %vm1058, %v1001
        %1079 = vst.msk [vmem:[#allocation3 + $0x320] sm:$0xff] %vm1058, %v1003
        %1080 = vst.msk [vmem:[#allocation3 + $0x348] sm:$0xff] %vm1058, %v1005
        %1081 = vst.msk [vmem:[#allocation3 + $0x370] sm:$0xff] %vm1058, %v1007
        %1082 = vst.msk [vmem:[#allocation3 + $0x398] sm:$0xff] %vm1058, %v1009
        %1083 = vst.msk [vmem:[#allocation3 + $0x3c0] sm:$0xff] %vm1058, %v1011
        %1084 = vst.msk [vmem:[#allocation3 + $0x3e8] sm:$0xff] %vm1058, %v1013
        %1085 = vst.msk [vmem:[#allocation3 + $0x410] sm:$0xff] %vm1058, %v1015
        %1086 = vst.msk [vmem:[#allocation3 + $0x438] sm:$0xff] %vm1058, %v1017
        %1087 = vst.msk [vmem:[#allocation3 + $0x460] sm:$0xff] %vm1058, %v1019
        %1088 = vst.msk [vmem:[#allocation3 + $0x488] sm:$0xff] %vm1058, %v1021
        %1089 = vst.msk [vmem:[#allocation3 + $0x4b0] sm:$0xff] %vm1058, %v1023
        %1090 = vst.msk [vmem:[#allocation3 + $0x4d8] sm:$0xff] %vm1058, %v1025
        %v1091 = vld [vmem:[%s607] sm:$0xff]
        %v1092 = vld [vmem:[%s607 + $0x8] sm:$0xff]
        %v1093 = vld [vmem:[%s607 + $0x18] sm:$0xff]
        %v1094 = vld [vmem:[%s607 + $0x20] sm:$0xff]
        %v1095 = vld [vmem:[%s607 + $0x30] sm:$0xff]
        %v1096 = vld [vmem:[%s607 + $0x38] sm:$0xff]
        %v1097 = vld [vmem:[%s607 + $0x48] sm:$0xff]
        %v1098 = vld [vmem:[%s607 + $0x50] sm:$0xff]
        %v1099 = vld [vmem:[%s607 + $0x60] sm:$0xff]
        %v1100 = vld [vmem:[%s607 + $0x68] sm:$0xff]
        %v1101 = vld [vmem:[%s607 + $0x78] sm:$0xff]
        %v1102 = vld [vmem:[%s607 + $0x80] sm:$0xff]
        %v1103 = vld [vmem:[%s607 + $0x90] sm:$0xff]
        %v1104 = vld [vmem:[%s607 + $0x98] sm:$0xff]
        %v1105 = vld [vmem:[%s607 + $0xa8] sm:$0xff]
        %v1106 = vld [vmem:[%s607 + $0xb0] sm:$0xff]
        %v1107 = vld [vmem:[%s607 + $0xc0] sm:$0xff]
        %v1108 = vld [vmem:[%s607 + $0xc8] sm:$0xff]
        %v1109 = vld [vmem:[%s607 + $0xd8] sm:$0xff]
        %v1110 = vld [vmem:[%s607 + $0xe0] sm:$0xff]
        %v1111 = vld [vmem:[%s607 + $0xf0] sm:$0xff]
        %v1112 = vld [vmem:[%s607 + $0xf8] sm:$0xff]
        %v1113 = vld [vmem:[%s607 + $0x108] sm:$0xff]
        %v1114 = vld [vmem:[%s607 + $0x110] sm:$0xff]
        %v1115 = vld [vmem:[%s607 + $0x120] sm:$0xff]
        %v1116 = vld [vmem:[%s607 + $0x128] sm:$0xff]
        %v1117 = vld [vmem:[%s607 + $0x138] sm:$0xff]
        %v1118 = vld [vmem:[%s607 + $0x140] sm:$0xff]
        %v1119 = vld [vmem:[%s607 + $0x150] sm:$0xff]
        %v1120 = vld [vmem:[%s607 + $0x158] sm:$0xff]
        %v1121 = vld [vmem:[%s607 + $0x168] sm:$0xff]
        %v1122 = vld [vmem:[%s607 + $0x170] sm:$0xff]
        %1155 = vrot.lane.b32.xlu0 %v1091, 12
        %v1156 = vpop.permute.xlu0 %1155
        %1157 = vrot.lane.b32.xlu0 %v1092, 12
        %v1158 = vpop.permute.xlu0 %1157
        %1159 = vrot.lane.b32.xlu0 %v1093, 12
        %v1160 = vpop.permute.xlu0 %1159
        %1161 = vrot.lane.b32.xlu0 %v1094, 12
        %v1162 = vpop.permute.xlu0 %1161
        %1163 = vrot.lane.b32.xlu0 %v1095, 12
        %v1164 = vpop.permute.xlu0 %1163
        %1165 = vrot.lane.b32.xlu0 %v1096, 12
        %v1166 = vpop.permute.xlu0 %1165
        %1167 = vrot.lane.b32.xlu0 %v1097, 12
        %v1168 = vpop.permute.xlu0 %1167
        %1169 = vrot.lane.b32.xlu0 %v1098, 12
        %v1170 = vpop.permute.xlu0 %1169
        %1171 = vrot.lane.b32.xlu0 %v1099, 12
        %v1172 = vpop.permute.xlu0 %1171
        %1173 = vrot.lane.b32.xlu0 %v1100, 12
        %v1174 = vpop.permute.xlu0 %1173
        %1175 = vrot.lane.b32.xlu0 %v1101, 12
        %v1176 = vpop.permute.xlu0 %1175
        %1177 = vrot.lane.b32.xlu0 %v1102, 12
        %v1178 = vpop.permute.xlu0 %1177
        %1179 = vrot.lane.b32.xlu0 %v1103, 12
        %v1180 = vpop.permute.xlu0 %1179
        %1181 = vrot.lane.b32.xlu0 %v1104, 12
        %v1182 = vpop.permute.xlu0 %1181
        %1183 = vrot.lane.b32.xlu0 %v1105, 12
        %v1184 = vpop.permute.xlu0 %1183
        %1185 = vrot.lane.b32.xlu0 %v1106, 12
        %v1186 = vpop.permute.xlu0 %1185
        %1187 = vrot.lane.b32.xlu0 %v1107, 12
        %v1188 = vpop.permute.xlu0 %1187
        %1189 = vrot.lane.b32.xlu0 %v1108, 12
        %v1190 = vpop.permute.xlu0 %1189
        %1191 = vrot.lane.b32.xlu0 %v1109, 12
        %v1192 = vpop.permute.xlu0 %1191
        %1193 = vrot.lane.b32.xlu0 %v1110, 12
        %v1194 = vpop.permute.xlu0 %1193
        %1195 = vrot.lane.b32.xlu0 %v1111, 12
        %v1196 = vpop.permute.xlu0 %1195
        %1197 = vrot.lane.b32.xlu0 %v1112, 12
        %v1198 = vpop.permute.xlu0 %1197
        %1199 = vrot.lane.b32.xlu0 %v1113, 12
        %v1200 = vpop.permute.xlu0 %1199
        %1201 = vrot.lane.b32.xlu0 %v1114, 12
        %v1202 = vpop.permute.xlu0 %1201
        %1203 = vrot.lane.b32.xlu0 %v1115, 12
        %v1204 = vpop.permute.xlu0 %1203
        %1205 = vrot.lane.b32.xlu0 %v1116, 12
        %v1206 = vpop.permute.xlu0 %1205
        %1207 = vrot.lane.b32.xlu0 %v1117, 12
        %v1208 = vpop.permute.xlu0 %1207
        %1209 = vrot.lane.b32.xlu0 %v1118, 12
        %v1210 = vpop.permute.xlu0 %1209
        %1211 = vrot.lane.b32.xlu0 %v1119, 12
        %v1212 = vpop.permute.xlu0 %1211
        %1213 = vrot.lane.b32.xlu0 %v1120, 12
        %v1214 = vpop.permute.xlu0 %1213
        %1215 = vrot.lane.b32.xlu0 %v1121, 12
        %v1216 = vpop.permute.xlu0 %1215
        %1217 = vrot.lane.b32.xlu0 %v1122, 12
        %v1218 = vpop.permute.xlu0 %1217
        %vm1251 = vcmask 130144
        %1252 = vst.msk [vmem:[#allocation3] sm:$0xff] %vm1251, %v1156
        %1253 = vst.msk [vmem:[#allocation3 + $0x28] sm:$0xff] %vm1251, %v1158
        %1254 = vst.msk [vmem:[#allocation3 + $0x50] sm:$0xff] %vm1251, %v1160
        %1255 = vst.msk [vmem:[#allocation3 + $0x78] sm:$0xff] %vm1251, %v1162
        %1256 = vst.msk [vmem:[#allocation3 + $0xa0] sm:$0xff] %vm1251, %v1164
        %1257 = vst.msk [vmem:[#allocation3 + $0xc8] sm:$0xff] %vm1251, %v1166
        %1258 = vst.msk [vmem:[#allocation3 + $0xf0] sm:$0xff] %vm1251, %v1168
        %1259 = vst.msk [vmem:[#allocation3 + $0x118] sm:$0xff] %vm1251, %v1170
        %1260 = vst.msk [vmem:[#allocation3 + $0x140] sm:$0xff] %vm1251, %v1172
        %1261 = vst.msk [vmem:[#allocation3 + $0x168] sm:$0xff] %vm1251, %v1174
        %1262 = vst.msk [vmem:[#allocation3 + $0x190] sm:$0xff] %vm1251, %v1176
        %1263 = vst.msk [vmem:[#allocation3 + $0x1b8] sm:$0xff] %vm1251, %v1178
        %1264 = vst.msk [vmem:[#allocation3 + $0x1e0] sm:$0xff] %vm1251, %v1180
        %1265 = vst.msk [vmem:[#allocation3 + $0x208] sm:$0xff] %vm1251, %v1182
        %1266 = vst.msk [vmem:[#allocation3 + $0x230] sm:$0xff] %vm1251, %v1184
        %1267 = vst.msk [vmem:[#allocation3 + $0x258] sm:$0xff] %vm1251, %v1186
        %1268 = vst.msk [vmem:[#allocation3 + $0x280] sm:$0xff] %vm1251, %v1188
        %1269 = vst.msk [vmem:[#allocation3 + $0x2a8] sm:$0xff] %vm1251, %v1190
        %1270 = vst.msk [vmem:[#allocation3 + $0x2d0] sm:$0xff] %vm1251, %v1192
        %1271 = vst.msk [vmem:[#allocation3 + $0x2f8] sm:$0xff] %vm1251, %v1194
        %1272 = vst.msk [vmem:[#allocation3 + $0x320] sm:$0xff] %vm1251, %v1196
        %1273 = vst.msk [vmem:[#allocation3 + $0x348] sm:$0xff] %vm1251, %v1198
        %1274 = vst.msk [vmem:[#allocation3 + $0x370] sm:$0xff] %vm1251, %v1200
        %1275 = vst.msk [vmem:[#allocation3 + $0x398] sm:$0xff] %vm1251, %v1202
        %1276 = vst.msk [vmem:[#allocation3 + $0x3c0] sm:$0xff] %vm1251, %v1204
        %1277 = vst.msk [vmem:[#allocation3 + $0x3e8] sm:$0xff] %vm1251, %v1206
        %1278 = vst.msk [vmem:[#allocation3 + $0x410] sm:$0xff] %vm1251, %v1208
        %1279 = vst.msk [vmem:[#allocation3 + $0x438] sm:$0xff] %vm1251, %v1210
        %1280 = vst.msk [vmem:[#allocation3 + $0x460] sm:$0xff] %vm1251, %v1212
        %1281 = vst.msk [vmem:[#allocation3 + $0x488] sm:$0xff] %vm1251, %v1214
        %1282 = vst.msk [vmem:[#allocation3 + $0x4b0] sm:$0xff] %vm1251, %v1216
        %1283 = vst.msk [vmem:[#allocation3 + $0x4d8] sm:$0xff] %vm1251, %v1218
        %v1284 = vld [vmem:[%s607 + $0x1] sm:$0xff]
        %v1285 = vld [vmem:[%s607 + $0x9] sm:$0xff]
        %v1286 = vld [vmem:[%s607 + $0x19] sm:$0xff]
        %v1287 = vld [vmem:[%s607 + $0x21] sm:$0xff]
        %v1288 = vld [vmem:[%s607 + $0x31] sm:$0xff]
        %v1289 = vld [vmem:[%s607 + $0x39] sm:$0xff]
        %v1290 = vld [vmem:[%s607 + $0x49] sm:$0xff]
        %v1291 = vld [vmem:[%s607 + $0x51] sm:$0xff]
        %v1292 = vld [vmem:[%s607 + $0x61] sm:$0xff]
        %v1293 = vld [vmem:[%s607 + $0x69] sm:$0xff]
        %v1294 = vld [vmem:[%s607 + $0x79] sm:$0xff]
        %v1295 = vld [vmem:[%s607 + $0x81] sm:$0xff]
        %v1296 = vld [vmem:[%s607 + $0x91] sm:$0xff]
        %v1297 = vld [vmem:[%s607 + $0x99] sm:$0xff]
        %v1298 = vld [vmem:[%s607 + $0xa9] sm:$0xff]
        %v1299 = vld [vmem:[%s607 + $0xb1] sm:$0xff]
        %v1300 = vld [vmem:[%s607 + $0xc1] sm:$0xff]
        %v1301 = vld [vmem:[%s607 + $0xc9] sm:$0xff]
        %v1302 = vld [vmem:[%s607 + $0xd9] sm:$0xff]
        %v1303 = vld [vmem:[%s607 + $0xe1] sm:$0xff]
        %v1304 = vld [vmem:[%s607 + $0xf1] sm:$0xff]
        %v1305 = vld [vmem:[%s607 + $0xf9] sm:$0xff]
        %v1306 = vld [vmem:[%s607 + $0x109] sm:$0xff]
        %v1307 = vld [vmem:[%s607 + $0x111] sm:$0xff]
        %v1308 = vld [vmem:[%s607 + $0x121] sm:$0xff]
        %v1309 = vld [vmem:[%s607 + $0x129] sm:$0xff]
        %v1310 = vld [vmem:[%s607 + $0x139] sm:$0xff]
        %v1311 = vld [vmem:[%s607 + $0x141] sm:$0xff]
        %v1312 = vld [vmem:[%s607 + $0x151] sm:$0xff]
        %v1313 = vld [vmem:[%s607 + $0x159] sm:$0xff]
        %v1314 = vld [vmem:[%s607 + $0x169] sm:$0xff]
        %v1315 = vld [vmem:[%s607 + $0x171] sm:$0xff]
        %1348 = vrot.lane.b32.xlu0 %v1284, 16
        %v1349 = vpop.permute.xlu0 %1348
        %1350 = vrot.lane.b32.xlu0 %v1285, 16
        %v1351 = vpop.permute.xlu0 %1350
        %1352 = vrot.lane.b32.xlu0 %v1286, 16
        %v1353 = vpop.permute.xlu0 %1352
        %1354 = vrot.lane.b32.xlu0 %v1287, 16
        %v1355 = vpop.permute.xlu0 %1354
        %1356 = vrot.lane.b32.xlu0 %v1288, 16
        %v1357 = vpop.permute.xlu0 %1356
        %1358 = vrot.lane.b32.xlu0 %v1289, 16
        %v1359 = vpop.permute.xlu0 %1358
        %1360 = vrot.lane.b32.xlu0 %v1290, 16
        %v1361 = vpop.permute.xlu0 %1360
        %1362 = vrot.lane.b32.xlu0 %v1291, 16
        %v1363 = vpop.permute.xlu0 %1362
        %1364 = vrot.lane.b32.xlu0 %v1292, 16
        %v1365 = vpop.permute.xlu0 %1364
        %1366 = vrot.lane.b32.xlu0 %v1293, 16
        %v1367 = vpop.permute.xlu0 %1366
        %1368 = vrot.lane.b32.xlu0 %v1294, 16
        %v1369 = vpop.permute.xlu0 %1368
        %1370 = vrot.lane.b32.xlu0 %v1295, 16
        %v1371 = vpop.permute.xlu0 %1370
        %1372 = vrot.lane.b32.xlu0 %v1296, 16
        %v1373 = vpop.permute.xlu0 %1372
        %1374 = vrot.lane.b32.xlu0 %v1297, 16
        %v1375 = vpop.permute.xlu0 %1374
        %1376 = vrot.lane.b32.xlu0 %v1298, 16
        %v1377 = vpop.permute.xlu0 %1376
        %1378 = vrot.lane.b32.xlu0 %v1299, 16
        %v1379 = vpop.permute.xlu0 %1378
        %1380 = vrot.lane.b32.xlu0 %v1300, 16
        %v1381 = vpop.permute.xlu0 %1380
        %1382 = vrot.lane.b32.xlu0 %v1301, 16
        %v1383 = vpop.permute.xlu0 %1382
        %1384 = vrot.lane.b32.xlu0 %v1302, 16
        %v1385 = vpop.permute.xlu0 %1384
        %1386 = vrot.lane.b32.xlu0 %v1303, 16
        %v1387 = vpop.permute.xlu0 %1386
        %1388 = vrot.lane.b32.xlu0 %v1304, 16
        %v1389 = vpop.permute.xlu0 %1388
        %1390 = vrot.lane.b32.xlu0 %v1305, 16
        %v1391 = vpop.permute.xlu0 %1390
        %1392 = vrot.lane.b32.xlu0 %v1306, 16
        %v1393 = vpop.permute.xlu0 %1392
        %1394 = vrot.lane.b32.xlu0 %v1307, 16
        %v1395 = vpop.permute.xlu0 %1394
        %1396 = vrot.lane.b32.xlu0 %v1308, 16
        %v1397 = vpop.permute.xlu0 %1396
        %1398 = vrot.lane.b32.xlu0 %v1309, 16
        %v1399 = vpop.permute.xlu0 %1398
        %1400 = vrot.lane.b32.xlu0 %v1310, 16
        %v1401 = vpop.permute.xlu0 %1400
        %1402 = vrot.lane.b32.xlu0 %v1311, 16
        %v1403 = vpop.permute.xlu0 %1402
        %1404 = vrot.lane.b32.xlu0 %v1312, 16
        %v1405 = vpop.permute.xlu0 %1404
        %1406 = vrot.lane.b32.xlu0 %v1313, 16
        %v1407 = vpop.permute.xlu0 %1406
        %1408 = vrot.lane.b32.xlu0 %v1314, 16
        %v1409 = vpop.permute.xlu0 %1408
        %1410 = vrot.lane.b32.xlu0 %v1315, 16
        %v1411 = vpop.permute.xlu0 %1410
        %vm1444 = vcmask 162944
        %1445 = vst.msk [vmem:[#allocation3] sm:$0xff] %vm1444, %v1349
        %1446 = vst.msk [vmem:[#allocation3 + $0x28] sm:$0xff] %vm1444, %v1351
        %1447 = vst.msk [vmem:[#allocation3 + $0x50] sm:$0xff] %vm1444, %v1353
        %1448 = vst.msk [vmem:[#allocation3 + $0x78] sm:$0xff] %vm1444, %v1355
        %1449 = vst.msk [vmem:[#allocation3 + $0xa0] sm:$0xff] %vm1444, %v1357
        %1450 = vst.msk [vmem:[#allocation3 + $0xc8] sm:$0xff] %vm1444, %v1359
        %1451 = vst.msk [vmem:[#allocation3 + $0xf0] sm:$0xff] %vm1444, %v1361
        %1452 = vst.msk [vmem:[#allocation3 + $0x118] sm:$0xff] %vm1444, %v1363
        %1453 = vst.msk [vmem:[#allocation3 + $0x140] sm:$0xff] %vm1444, %v1365
        %1454 = vst.msk [vmem:[#allocation3 + $0x168] sm:$0xff] %vm1444, %v1367
        %1455 = vst.msk [vmem:[#allocation3 + $0x190] sm:$0xff] %vm1444, %v1369
        %1456 = vst.msk [vmem:[#allocation3 + $0x1b8] sm:$0xff] %vm1444, %v1371
        %1457 = vst.msk [vmem:[#allocation3 + $0x1e0] sm:$0xff] %vm1444, %v1373
        %1458 = vst.msk [vmem:[#allocation3 + $0x208] sm:$0xff] %vm1444, %v1375
        %1459 = vst.msk [vmem:[#allocation3 + $0x230] sm:$0xff] %vm1444, %v1377
        %1460 = vst.msk [vmem:[#allocation3 + $0x258] sm:$0xff] %vm1444, %v1379
        %1461 = vst.msk [vmem:[#allocation3 + $0x280] sm:$0xff] %vm1444, %v1381
        %1462 = vst.msk [vmem:[#allocation3 + $0x2a8] sm:$0xff] %vm1444, %v1383
        %1463 = vst.msk [vmem:[#allocation3 + $0x2d0] sm:$0xff] %vm1444, %v1385
        %1464 = vst.msk [vmem:[#allocation3 + $0x2f8] sm:$0xff] %vm1444, %v1387
        %1465 = vst.msk [vmem:[#allocation3 + $0x320] sm:$0xff] %vm1444, %v1389
        %1466 = vst.msk [vmem:[#allocation3 + $0x348] sm:$0xff] %vm1444, %v1391
        %1467 = vst.msk [vmem:[#allocation3 + $0x370] sm:$0xff] %vm1444, %v1393
        %1468 = vst.msk [vmem:[#allocation3 + $0x398] sm:$0xff] %vm1444, %v1395
        %1469 = vst.msk [vmem:[#allocation3 + $0x3c0] sm:$0xff] %vm1444, %v1397
        %1470 = vst.msk [vmem:[#allocation3 + $0x3e8] sm:$0xff] %vm1444, %v1399
        %1471 = vst.msk [vmem:[#allocation3 + $0x410] sm:$0xff] %vm1444, %v1401
        %1472 = vst.msk [vmem:[#allocation3 + $0x438] sm:$0xff] %vm1444, %v1403
        %1473 = vst.msk [vmem:[#allocation3 + $0x460] sm:$0xff] %vm1444, %v1405
        %1474 = vst.msk [vmem:[#allocation3 + $0x488] sm:$0xff] %vm1444, %v1407
        %1475 = vst.msk [vmem:[#allocation3 + $0x4b0] sm:$0xff] %vm1444, %v1409
        %1476 = vst.msk [vmem:[#allocation3 + $0x4d8] sm:$0xff] %vm1444, %v1411
        %v1477 = vld [vmem:[%s607 + $0x2] sm:$0xff]
        %v1478 = vld [vmem:[%s607 + $0xa] sm:$0xff]
        %v1479 = vld [vmem:[%s607 + $0x1a] sm:$0xff]
        %v1480 = vld [vmem:[%s607 + $0x22] sm:$0xff]
        %v1481 = vld [vmem:[%s607 + $0x32] sm:$0xff]
        %v1482 = vld [vmem:[%s607 + $0x3a] sm:$0xff]
        %v1483 = vld [vmem:[%s607 + $0x4a] sm:$0xff]
        %v1484 = vld [vmem:[%s607 + $0x52] sm:$0xff]
        %v1485 = vld [vmem:[%s607 + $0x62] sm:$0xff]
        %v1486 = vld [vmem:[%s607 + $0x6a] sm:$0xff]
        %v1487 = vld [vmem:[%s607 + $0x7a] sm:$0xff]
        %v1488 = vld [vmem:[%s607 + $0x82] sm:$0xff]
        %v1489 = vld [vmem:[%s607 + $0x92] sm:$0xff]
        %v1490 = vld [vmem:[%s607 + $0x9a] sm:$0xff]
        %v1491 = vld [vmem:[%s607 + $0xaa] sm:$0xff]
        %v1492 = vld [vmem:[%s607 + $0xb2] sm:$0xff]
        %v1493 = vld [vmem:[%s607 + $0xc2] sm:$0xff]
        %v1494 = vld [vmem:[%s607 + $0xca] sm:$0xff]
        %v1495 = vld [vmem:[%s607 + $0xda] sm:$0xff]
        %v1496 = vld [vmem:[%s607 + $0xe2] sm:$0xff]
        %v1497 = vld [vmem:[%s607 + $0xf2] sm:$0xff]
        %v1498 = vld [vmem:[%s607 + $0xfa] sm:$0xff]
        %v1499 = vld [vmem:[%s607 + $0x10a] sm:$0xff]
        %v1500 = vld [vmem:[%s607 + $0x112] sm:$0xff]
        %v1501 = vld [vmem:[%s607 + $0x122] sm:$0xff]
        %v1502 = vld [vmem:[%s607 + $0x12a] sm:$0xff]
        %v1503 = vld [vmem:[%s607 + $0x13a] sm:$0xff]
        %v1504 = vld [vmem:[%s607 + $0x142] sm:$0xff]
        %v1505 = vld [vmem:[%s607 + $0x152] sm:$0xff]
        %v1506 = vld [vmem:[%s607 + $0x15a] sm:$0xff]
        %v1507 = vld [vmem:[%s607 + $0x16a] sm:$0xff]
        %v1508 = vld [vmem:[%s607 + $0x172] sm:$0xff]
        %1541 = vrot.lane.b32.xlu0 %v1477, 20
        %v1542 = vpop.permute.xlu0 %1541
        %1543 = vrot.lane.b32.xlu0 %v1478, 20
        %v1544 = vpop.permute.xlu0 %1543
        %1545 = vrot.lane.b32.xlu0 %v1479, 20
        %v1546 = vpop.permute.xlu0 %1545
        %1547 = vrot.lane.b32.xlu0 %v1480, 20
        %v1548 = vpop.permute.xlu0 %1547
        %1549 = vrot.lane.b32.xlu0 %v1481, 20
        %v1550 = vpop.permute.xlu0 %1549
        %1551 = vrot.lane.b32.xlu0 %v1482, 20
        %v1552 = vpop.permute.xlu0 %1551
        %1553 = vrot.lane.b32.xlu0 %v1483, 20
        %v1554 = vpop.permute.xlu0 %1553
        %1555 = vrot.lane.b32.xlu0 %v1484, 20
        %v1556 = vpop.permute.xlu0 %1555
        %1557 = vrot.lane.b32.xlu0 %v1485, 20
        %v1558 = vpop.permute.xlu0 %1557
        %1559 = vrot.lane.b32.xlu0 %v1486, 20
        %v1560 = vpop.permute.xlu0 %1559
        %1561 = vrot.lane.b32.xlu0 %v1487, 20
        %v1562 = vpop.permute.xlu0 %1561
        %1563 = vrot.lane.b32.xlu0 %v1488, 20
        %v1564 = vpop.permute.xlu0 %1563
        %1565 = vrot.lane.b32.xlu0 %v1489, 20
        %v1566 = vpop.permute.xlu0 %1565
        %1567 = vrot.lane.b32.xlu0 %v1490, 20
        %v1568 = vpop.permute.xlu0 %1567
        %1569 = vrot.lane.b32.xlu0 %v1491, 20
        %v1570 = vpop.permute.xlu0 %1569
        %1571 = vrot.lane.b32.xlu0 %v1492, 20
        %v1572 = vpop.permute.xlu0 %1571
        %1573 = vrot.lane.b32.xlu0 %v1493, 20
        %v1574 = vpop.permute.xlu0 %1573
        %1575 = vrot.lane.b32.xlu0 %v1494, 20
        %v1576 = vpop.permute.xlu0 %1575
        %1577 = vrot.lane.b32.xlu0 %v1495, 20
        %v1578 = vpop.permute.xlu0 %1577
        %1579 = vrot.lane.b32.xlu0 %v1496, 20
        %v1580 = vpop.permute.xlu0 %1579
        %1581 = vrot.lane.b32.xlu0 %v1497, 20
        %v1582 = vpop.permute.xlu0 %1581
        %1583 = vrot.lane.b32.xlu0 %v1498, 20
        %v1584 = vpop.permute.xlu0 %1583
        %1585 = vrot.lane.b32.xlu0 %v1499, 20
        %v1586 = vpop.permute.xlu0 %1585
        %1587 = vrot.lane.b32.xlu0 %v1500, 20
        %v1588 = vpop.permute.xlu0 %1587
        %1589 = vrot.lane.b32.xlu0 %v1501, 20
        %v1590 = vpop.permute.xlu0 %1589
        %1591 = vrot.lane.b32.xlu0 %v1502, 20
        %v1592 = vpop.permute.xlu0 %1591
        %1593 = vrot.lane.b32.xlu0 %v1503, 20
        %v1594 = vpop.permute.xlu0 %1593
        %1595 = vrot.lane.b32.xlu0 %v1504, 20
        %v1596 = vpop.permute.xlu0 %1595
        %1597 = vrot.lane.b32.xlu0 %v1505, 20
        %v1598 = vpop.permute.xlu0 %1597
        %1599 = vrot.lane.b32.xlu0 %v1506, 20
        %v1600 = vpop.permute.xlu0 %1599
        %1601 = vrot.lane.b32.xlu0 %v1507, 20
        %v1602 = vpop.permute.xlu0 %1601
        %1603 = vrot.lane.b32.xlu0 %v1508, 20
        %v1604 = vpop.permute.xlu0 %1603
        %vm1637 = vcmask 195744
        %1638 = vst.msk [vmem:[#allocation3] sm:$0xff] %vm1637, %v1542
        %1639 = vst.msk [vmem:[#allocation3 + $0x28] sm:$0xff] %vm1637, %v1544
        %1640 = vst.msk [vmem:[#allocation3 + $0x50] sm:$0xff] %vm1637, %v1546
        %1641 = vst.msk [vmem:[#allocation3 + $0x78] sm:$0xff] %vm1637, %v1548
        %1642 = vst.msk [vmem:[#allocation3 + $0xa0] sm:$0xff] %vm1637, %v1550
        %1643 = vst.msk [vmem:[#allocation3 + $0xc8] sm:$0xff] %vm1637, %v1552
        %1644 = vst.msk [vmem:[#allocation3 + $0xf0] sm:$0xff] %vm1637, %v1554
        %1645 = vst.msk [vmem:[#allocation3 + $0x118] sm:$0xff] %vm1637, %v1556
        %1646 = vst.msk [vmem:[#allocation3 + $0x140] sm:$0xff] %vm1637, %v1558
        %1647 = vst.msk [vmem:[#allocation3 + $0x168] sm:$0xff] %vm1637, %v1560
        %1648 = vst.msk [vmem:[#allocation3 + $0x190] sm:$0xff] %vm1637, %v1562
        %1649 = vst.msk [vmem:[#allocation3 + $0x1b8] sm:$0xff] %vm1637, %v1564
        %1650 = vst.msk [vmem:[#allocation3 + $0x1e0] sm:$0xff] %vm1637, %v1566
        %1651 = vst.msk [vmem:[#allocation3 + $0x208] sm:$0xff] %vm1637, %v1568
        %1652 = vst.msk [vmem:[#allocation3 + $0x230] sm:$0xff] %vm1637, %v1570
        %1653 = vst.msk [vmem:[#allocation3 + $0x258] sm:$0xff] %vm1637, %v1572
        %1654 = vst.msk [vmem:[#allocation3 + $0x280] sm:$0xff] %vm1637, %v1574
        %1655 = vst.msk [vmem:[#allocation3 + $0x2a8] sm:$0xff] %vm1637, %v1576
        %1656 = vst.msk [vmem:[#allocation3 + $0x2d0] sm:$0xff] %vm1637, %v1578
        %1657 = vst.msk [vmem:[#allocation3 + $0x2f8] sm:$0xff] %vm1637, %v1580
        %1658 = vst.msk [vmem:[#allocation3 + $0x320] sm:$0xff] %vm1637, %v1582
        %1659 = vst.msk [vmem:[#allocation3 + $0x348] sm:$0xff] %vm1637, %v1584
        %1660 = vst.msk [vmem:[#allocation3 + $0x370] sm:$0xff] %vm1637, %v1586
        %1661 = vst.msk [vmem:[#allocation3 + $0x398] sm:$0xff] %vm1637, %v1588
        %1662 = vst.msk [vmem:[#allocation3 + $0x3c0] sm:$0xff] %vm1637, %v1590
        %1663 = vst.msk [vmem:[#allocation3 + $0x3e8] sm:$0xff] %vm1637, %v1592
        %1664 = vst.msk [vmem:[#allocation3 + $0x410] sm:$0xff] %vm1637, %v1594
        %1665 = vst.msk [vmem:[#allocation3 + $0x438] sm:$0xff] %vm1637, %v1596
        %1666 = vst.msk [vmem:[#allocation3 + $0x460] sm:$0xff] %vm1637, %v1598
        %1667 = vst.msk [vmem:[#allocation3 + $0x488] sm:$0xff] %vm1637, %v1600
        %1668 = vst.msk [vmem:[#allocation3 + $0x4b0] sm:$0xff] %vm1637, %v1602
        %1669 = vst.msk [vmem:[#allocation3 + $0x4d8] sm:$0xff] %vm1637, %v1604
        %s1670 = scalar_lea.vmem [#allocation2], 48
        %v1671 = vld [vmem:[%s1670] sm:$0xff]
        %v1672 = vld [vmem:[%s1670 + $0x8] sm:$0xff]
        %v1673 = vld [vmem:[%s1670 + $0x18] sm:$0xff]
        %v1674 = vld [vmem:[%s1670 + $0x20] sm:$0xff]
        %v1675 = vld [vmem:[%s1670 + $0x30] sm:$0xff]
        %v1676 = vld [vmem:[%s1670 + $0x38] sm:$0xff]
        %v1677 = vld [vmem:[%s1670 + $0x48] sm:$0xff]
        %v1678 = vld [vmem:[%s1670 + $0x50] sm:$0xff]
        %v1679 = vld [vmem:[%s1670 + $0x60] sm:$0xff]
        %v1680 = vld [vmem:[%s1670 + $0x68] sm:$0xff]
        %v1681 = vld [vmem:[%s1670 + $0x78] sm:$0xff]
        %v1682 = vld [vmem:[%s1670 + $0x80] sm:$0xff]
        %v1683 = vld [vmem:[%s1670 + $0x90] sm:$0xff]
        %v1684 = vld [vmem:[%s1670 + $0x98] sm:$0xff]
        %v1685 = vld [vmem:[%s1670 + $0xa8] sm:$0xff]
        %v1686 = vld [vmem:[%s1670 + $0xb0] sm:$0xff]
        %v1687 = vld [vmem:[%s1670 + $0xc0] sm:$0xff]
        %v1688 = vld [vmem:[%s1670 + $0xc8] sm:$0xff]
        %v1689 = vld [vmem:[%s1670 + $0xd8] sm:$0xff]
        %v1690 = vld [vmem:[%s1670 + $0xe0] sm:$0xff]
        %v1691 = vld [vmem:[%s1670 + $0xf0] sm:$0xff]
        %v1692 = vld [vmem:[%s1670 + $0xf8] sm:$0xff]
        %v1693 = vld [vmem:[%s1670 + $0x108] sm:$0xff]
        %v1694 = vld [vmem:[%s1670 + $0x110] sm:$0xff]
        %v1695 = vld [vmem:[%s1670 + $0x120] sm:$0xff]
        %v1696 = vld [vmem:[%s1670 + $0x128] sm:$0xff]
        %v1697 = vld [vmem:[%s1670 + $0x138] sm:$0xff]
        %v1698 = vld [vmem:[%s1670 + $0x140] sm:$0xff]
        %v1699 = vld [vmem:[%s1670 + $0x150] sm:$0xff]
        %v1700 = vld [vmem:[%s1670 + $0x158] sm:$0xff]
        %v1701 = vld [vmem:[%s1670 + $0x168] sm:$0xff]
        %v1702 = vld [vmem:[%s1670 + $0x170] sm:$0xff]
        %1735 = vrot.lane.b32.xlu0 %v1671, 24
        %v1736 = vpop.permute.xlu0 %1735
        %1737 = vrot.lane.b32.xlu0 %v1672, 24
        %v1738 = vpop.permute.xlu0 %1737
        %1739 = vrot.lane.b32.xlu0 %v1673, 24
        %v1740 = vpop.permute.xlu0 %1739
        %1741 = vrot.lane.b32.xlu0 %v1674, 24
        %v1742 = vpop.permute.xlu0 %1741
        %1743 = vrot.lane.b32.xlu0 %v1675, 24
        %v1744 = vpop.permute.xlu0 %1743
        %1745 = vrot.lane.b32.xlu0 %v1676, 24
        %v1746 = vpop.permute.xlu0 %1745
        %1747 = vrot.lane.b32.xlu0 %v1677, 24
        %v1748 = vpop.permute.xlu0 %1747
        %1749 = vrot.lane.b32.xlu0 %v1678, 24
        %v1750 = vpop.permute.xlu0 %1749
        %1751 = vrot.lane.b32.xlu0 %v1679, 24
        %v1752 = vpop.permute.xlu0 %1751
        %1753 = vrot.lane.b32.xlu0 %v1680, 24
        %v1754 = vpop.permute.xlu0 %1753
        %1755 = vrot.lane.b32.xlu0 %v1681, 24
        %v1756 = vpop.permute.xlu0 %1755
        %1757 = vrot.lane.b32.xlu0 %v1682, 24
        %v1758 = vpop.permute.xlu0 %1757
        %1759 = vrot.lane.b32.xlu0 %v1683, 24
        %v1760 = vpop.permute.xlu0 %1759
        %1761 = vrot.lane.b32.xlu0 %v1684, 24
        %v1762 = vpop.permute.xlu0 %1761
        %1763 = vrot.lane.b32.xlu0 %v1685, 24
        %v1764 = vpop.permute.xlu0 %1763
        %1765 = vrot.lane.b32.xlu0 %v1686, 24
        %v1766 = vpop.permute.xlu0 %1765
        %1767 = vrot.lane.b32.xlu0 %v1687, 24
        %v1768 = vpop.permute.xlu0 %1767
        %1769 = vrot.lane.b32.xlu0 %v1688, 24
        %v1770 = vpop.permute.xlu0 %1769
        %1771 = vrot.lane.b32.xlu0 %v1689, 24
        %v1772 = vpop.permute.xlu0 %1771
        %1773 = vrot.lane.b32.xlu0 %v1690, 24
        %v1774 = vpop.permute.xlu0 %1773
        %1775 = vrot.lane.b32.xlu0 %v1691, 24
        %v1776 = vpop.permute.xlu0 %1775
        %1777 = vrot.lane.b32.xlu0 %v1692, 24
        %v1778 = vpop.permute.xlu0 %1777
        %1779 = vrot.lane.b32.xlu0 %v1693, 24
        %v1780 = vpop.permute.xlu0 %1779
        %1781 = vrot.lane.b32.xlu0 %v1694, 24
        %v1782 = vpop.permute.xlu0 %1781
        %1783 = vrot.lane.b32.xlu0 %v1695, 24
        %v1784 = vpop.permute.xlu0 %1783
        %1785 = vrot.lane.b32.xlu0 %v1696, 24
        %v1786 = vpop.permute.xlu0 %1785
        %1787 = vrot.lane.b32.xlu0 %v1697, 24
        %v1788 = vpop.permute.xlu0 %1787
        %1789 = vrot.lane.b32.xlu0 %v1698, 24
        %v1790 = vpop.permute.xlu0 %1789
        %1791 = vrot.lane.b32.xlu0 %v1699, 24
        %v1792 = vpop.permute.xlu0 %1791
        %1793 = vrot.lane.b32.xlu0 %v1700, 24
        %v1794 = vpop.permute.xlu0 %1793
        %1795 = vrot.lane.b32.xlu0 %v1701, 24
        %v1796 = vpop.permute.xlu0 %1795
        %1797 = vrot.lane.b32.xlu0 %v1702, 24
        %v1798 = vpop.permute.xlu0 %1797
        %vm1831 = vcmask 228544
        %1832 = vst.msk [vmem:[#allocation3] sm:$0xff] %vm1831, %v1736
        %1833 = vst.msk [vmem:[#allocation3 + $0x28] sm:$0xff] %vm1831, %v1738
        %1834 = vst.msk [vmem:[#allocation3 + $0x50] sm:$0xff] %vm1831, %v1740
        %1835 = vst.msk [vmem:[#allocation3 + $0x78] sm:$0xff] %vm1831, %v1742
        %1836 = vst.msk [vmem:[#allocation3 + $0xa0] sm:$0xff] %vm1831, %v1744
        %1837 = vst.msk [vmem:[#allocation3 + $0xc8] sm:$0xff] %vm1831, %v1746
        %1838 = vst.msk [vmem:[#allocation3 + $0xf0] sm:$0xff] %vm1831, %v1748
        %1839 = vst.msk [vmem:[#allocation3 + $0x118] sm:$0xff] %vm1831, %v1750
        %1840 = vst.msk [vmem:[#allocation3 + $0x140] sm:$0xff] %vm1831, %v1752
        %1841 = vst.msk [vmem:[#allocation3 + $0x168] sm:$0xff] %vm1831, %v1754
        %1842 = vst.msk [vmem:[#allocation3 + $0x190] sm:$0xff] %vm1831, %v1756
        %1843 = vst.msk [vmem:[#allocation3 + $0x1b8] sm:$0xff] %vm1831, %v1758
        %1844 = vst.msk [vmem:[#allocation3 + $0x1e0] sm:$0xff] %vm1831, %v1760
        %1845 = vst.msk [vmem:[#allocation3 + $0x208] sm:$0xff] %vm1831, %v1762
        %1846 = vst.msk [vmem:[#allocation3 + $0x230] sm:$0xff] %vm1831, %v1764
        %1847 = vst.msk [vmem:[#allocation3 + $0x258] sm:$0xff] %vm1831, %v1766
        %1848 = vst.msk [vmem:[#allocation3 + $0x280] sm:$0xff] %vm1831, %v1768
        %1849 = vst.msk [vmem:[#allocation3 + $0x2a8] sm:$0xff] %vm1831, %v1770
        %1850 = vst.msk [vmem:[#allocation3 + $0x2d0] sm:$0xff] %vm1831, %v1772
        %1851 = vst.msk [vmem:[#allocation3 + $0x2f8] sm:$0xff] %vm1831, %v1774
        %1852 = vst.msk [vmem:[#allocation3 + $0x320] sm:$0xff] %vm1831, %v1776
        %1853 = vst.msk [vmem:[#allocation3 + $0x348] sm:$0xff] %vm1831, %v1778
        %1854 = vst.msk [vmem:[#allocation3 + $0x370] sm:$0xff] %vm1831, %v1780
        %1855 = vst.msk [vmem:[#allocation3 + $0x398] sm:$0xff] %vm1831, %v1782
        %1856 = vst.msk [vmem:[#allocation3 + $0x3c0] sm:$0xff] %vm1831, %v1784
        %1857 = vst.msk [vmem:[#allocation3 + $0x3e8] sm:$0xff] %vm1831, %v1786
        %1858 = vst.msk [vmem:[#allocation3 + $0x410] sm:$0xff] %vm1831, %v1788
        %1859 = vst.msk [vmem:[#allocation3 + $0x438] sm:$0xff] %vm1831, %v1790
        %1860 = vst.msk [vmem:[#allocation3 + $0x460] sm:$0xff] %vm1831, %v1792
        %1861 = vst.msk [vmem:[#allocation3 + $0x488] sm:$0xff] %vm1831, %v1794
        %1862 = vst.msk [vmem:[#allocation3 + $0x4b0] sm:$0xff] %vm1831, %v1796
        %1863 = vst.msk [vmem:[#allocation3 + $0x4d8] sm:$0xff] %vm1831, %v1798
        %v1864 = vld [vmem:[%s1670 + $0x1] sm:$0xff]
        %v1865 = vld [vmem:[%s1670 + $0x9] sm:$0xff]
        %v1866 = vld [vmem:[%s1670 + $0x19] sm:$0xff]
        %v1867 = vld [vmem:[%s1670 + $0x21] sm:$0xff]
        %v1868 = vld [vmem:[%s1670 + $0x31] sm:$0xff]
        %v1869 = vld [vmem:[%s1670 + $0x39] sm:$0xff]
        %v1870 = vld [vmem:[%s1670 + $0x49] sm:$0xff]
        %v1871 = vld [vmem:[%s1670 + $0x51] sm:$0xff]
        %v1872 = vld [vmem:[%s1670 + $0x61] sm:$0xff]
        %v1873 = vld [vmem:[%s1670 + $0x69] sm:$0xff]
        %v1874 = vld [vmem:[%s1670 + $0x79] sm:$0xff]
        %v1875 = vld [vmem:[%s1670 + $0x81] sm:$0xff]
        %v1876 = vld [vmem:[%s1670 + $0x91] sm:$0xff]
        %v1877 = vld [vmem:[%s1670 + $0x99] sm:$0xff]
        %v1878 = vld [vmem:[%s1670 + $0xa9] sm:$0xff]
        %v1879 = vld [vmem:[%s1670 + $0xb1] sm:$0xff]
        %v1880 = vld [vmem:[%s1670 + $0xc1] sm:$0xff]
        %v1881 = vld [vmem:[%s1670 + $0xc9] sm:$0xff]
        %v1882 = vld [vmem:[%s1670 + $0xd9] sm:$0xff]
        %v1883 = vld [vmem:[%s1670 + $0xe1] sm:$0xff]
        %v1884 = vld [vmem:[%s1670 + $0xf1] sm:$0xff]
        %v1885 = vld [vmem:[%s1670 + $0xf9] sm:$0xff]
        %v1886 = vld [vmem:[%s1670 + $0x109] sm:$0xff]
        %v1887 = vld [vmem:[%s1670 + $0x111] sm:$0xff]
        %v1888 = vld [vmem:[%s1670 + $0x121] sm:$0xff]
        %v1889 = vld [vmem:[%s1670 + $0x129] sm:$0xff]
        %v1890 = vld [vmem:[%s1670 + $0x139] sm:$0xff]
        %v1891 = vld [vmem:[%s1670 + $0x141] sm:$0xff]
        %v1892 = vld [vmem:[%s1670 + $0x151] sm:$0xff]
        %v1893 = vld [vmem:[%s1670 + $0x159] sm:$0xff]
        %v1894 = vld [vmem:[%s1670 + $0x169] sm:$0xff]
        %v1895 = vld [vmem:[%s1670 + $0x171] sm:$0xff]
        %1928 = vrot.lane.b32.xlu0 %v1864, 28
        %v1929 = vpop.permute.xlu0 %1928
        %1930 = vrot.lane.b32.xlu0 %v1865, 28
        %v1931 = vpop.permute.xlu0 %1930
        %1932 = vrot.lane.b32.xlu0 %v1866, 28
        %v1933 = vpop.permute.xlu0 %1932
        %1934 = vrot.lane.b32.xlu0 %v1867, 28
        %v1935 = vpop.permute.xlu0 %1934
        %1936 = vrot.lane.b32.xlu0 %v1868, 28
        %v1937 = vpop.permute.xlu0 %1936
        %1938 = vrot.lane.b32.xlu0 %v1869, 28
        %v1939 = vpop.permute.xlu0 %1938
        %1940 = vrot.lane.b32.xlu0 %v1870, 28
        %v1941 = vpop.permute.xlu0 %1940
        %1942 = vrot.lane.b32.xlu0 %v1871, 28
        %v1943 = vpop.permute.xlu0 %1942
        %1944 = vrot.lane.b32.xlu0 %v1872, 28
        %v1945 = vpop.permute.xlu0 %1944
        %1946 = vrot.lane.b32.xlu0 %v1873, 28
        %v1947 = vpop.permute.xlu0 %1946
        %1948 = vrot.lane.b32.xlu0 %v1874, 28
        %v1949 = vpop.permute.xlu0 %1948
        %1950 = vrot.lane.b32.xlu0 %v1875, 28
        %v1951 = vpop.permute.xlu0 %1950
        %1952 = vrot.lane.b32.xlu0 %v1876, 28
        %v1953 = vpop.permute.xlu0 %1952
        %1954 = vrot.lane.b32.xlu0 %v1877, 28
        %v1955 = vpop.permute.xlu0 %1954
        %1956 = vrot.lane.b32.xlu0 %v1878, 28
        %v1957 = vpop.permute.xlu0 %1956
        %1958 = vrot.lane.b32.xlu0 %v1879, 28
        %v1959 = vpop.permute.xlu0 %1958
        %1960 = vrot.lane.b32.xlu0 %v1880, 28
        %v1961 = vpop.permute.xlu0 %1960
        %1962 = vrot.lane.b32.xlu0 %v1881, 28
        %v1963 = vpop.permute.xlu0 %1962
        %1964 = vrot.lane.b32.xlu0 %v1882, 28
        %v1965 = vpop.permute.xlu0 %1964
        %1966 = vrot.lane.b32.xlu0 %v1883, 28
        %v1967 = vpop.permute.xlu0 %1966
        %1968 = vrot.lane.b32.xlu0 %v1884, 28
        %v1969 = vpop.permute.xlu0 %1968
        %1970 = vrot.lane.b32.xlu0 %v1885, 28
        %v1971 = vpop.permute.xlu0 %1970
        %1972 = vrot.lane.b32.xlu0 %v1886, 28
        %v1973 = vpop.permute.xlu0 %1972
        %1974 = vrot.lane.b32.xlu0 %v1887, 28
        %v1975 = vpop.permute.xlu0 %1974
        %1976 = vrot.lane.b32.xlu0 %v1888, 28
        %v1977 = vpop.permute.xlu0 %1976
        %1978 = vrot.lane.b32.xlu0 %v1889, 28
        %v1979 = vpop.permute.xlu0 %1978
        %1980 = vrot.lane.b32.xlu0 %v1890, 28
        %v1981 = vpop.permute.xlu0 %1980
        %1982 = vrot.lane.b32.xlu0 %v1891, 28
        %v1983 = vpop.permute.xlu0 %1982
        %1984 = vrot.lane.b32.xlu0 %v1892, 28
        %v1985 = vpop.permute.xlu0 %1984
        %1986 = vrot.lane.b32.xlu0 %v1893, 28
        %v1987 = vpop.permute.xlu0 %1986
        %1988 = vrot.lane.b32.xlu0 %v1894, 28
        %v1989 = vpop.permute.xlu0 %1988
        %1990 = vrot.lane.b32.xlu0 %v1895, 28
        %v1991 = vpop.permute.xlu0 %1990
        %vm2024 = vcmask 261344
        %2025 = vst.msk [vmem:[#allocation3] sm:$0xff] %vm2024, %v1929
        %2026 = vst.msk [vmem:[#allocation3 + $0x28] sm:$0xff] %vm2024, %v1931
        %2027 = vst.msk [vmem:[#allocation3 + $0x50] sm:$0xff] %vm2024, %v1933
        %2028 = vst.msk [vmem:[#allocation3 + $0x78] sm:$0xff] %vm2024, %v1935
        %2029 = vst.msk [vmem:[#allocation3 + $0xa0] sm:$0xff] %vm2024, %v1937
        %2030 = vst.msk [vmem:[#allocation3 + $0xc8] sm:$0xff] %vm2024, %v1939
        %2031 = vst.msk [vmem:[#allocation3 + $0xf0] sm:$0xff] %vm2024, %v1941
        %2032 = vst.msk [vmem:[#allocation3 + $0x118] sm:$0xff] %vm2024, %v1943
        %2033 = vst.msk [vmem:[#allocation3 + $0x140] sm:$0xff] %vm2024, %v1945
        %2034 = vst.msk [vmem:[#allocation3 + $0x168] sm:$0xff] %vm2024, %v1947
        %2035 = vst.msk [vmem:[#allocation3 + $0x190] sm:$0xff] %vm2024, %v1949
        %2036 = vst.msk [vmem:[#allocation3 + $0x1b8] sm:$0xff] %vm2024, %v1951
        %2037 = vst.msk [vmem:[#allocation3 + $0x1e0] sm:$0xff] %vm2024, %v1953
        %2038 = vst.msk [vmem:[#allocation3 + $0x208] sm:$0xff] %vm2024, %v1955
        %2039 = vst.msk [vmem:[#allocation3 + $0x230] sm:$0xff] %vm2024, %v1957
        %2040 = vst.msk [vmem:[#allocation3 + $0x258] sm:$0xff] %vm2024, %v1959
        %2041 = vst.msk [vmem:[#allocation3 + $0x280] sm:$0xff] %vm2024, %v1961
        %2042 = vst.msk [vmem:[#allocation3 + $0x2a8] sm:$0xff] %vm2024, %v1963
        %2043 = vst.msk [vmem:[#allocation3 + $0x2d0] sm:$0xff] %vm2024, %v1965
        %2044 = vst.msk [vmem:[#allocation3 + $0x2f8] sm:$0xff] %vm2024, %v1967
        %2045 = vst.msk [vmem:[#allocation3 + $0x320] sm:$0xff] %vm2024, %v1969
        %2046 = vst.msk [vmem:[#allocation3 + $0x348] sm:$0xff] %vm2024, %v1971
        %2047 = vst.msk [vmem:[#allocation3 + $0x370] sm:$0xff] %vm2024, %v1973
        %2048 = vst.msk [vmem:[#allocation3 + $0x398] sm:$0xff] %vm2024, %v1975
        %2049 = vst.msk [vmem:[#allocation3 + $0x3c0] sm:$0xff] %vm2024, %v1977
        %2050 = vst.msk [vmem:[#allocation3 + $0x3e8] sm:$0xff] %vm2024, %v1979
        %2051 = vst.msk [vmem:[#allocation3 + $0x410] sm:$0xff] %vm2024, %v1981
        %2052 = vst.msk [vmem:[#allocation3 + $0x438] sm:$0xff] %vm2024, %v1983
        %2053 = vst.msk [vmem:[#allocation3 + $0x460] sm:$0xff] %vm2024, %v1985
        %2054 = vst.msk [vmem:[#allocation3 + $0x488] sm:$0xff] %vm2024, %v1987
        %2055 = vst.msk [vmem:[#allocation3 + $0x4b0] sm:$0xff] %vm2024, %v1989
        %2056 = vst.msk [vmem:[#allocation3 + $0x4d8] sm:$0xff] %vm2024, %v1991
        %v2057 = vld [vmem:[%s1670 + $0x2] sm:$0xff]
        %v2058 = vld [vmem:[%s1670 + $0xa] sm:$0xff]
        %v2059 = vld [vmem:[%s1670 + $0x1a] sm:$0xff]
        %v2060 = vld [vmem:[%s1670 + $0x22] sm:$0xff]
        %v2061 = vld [vmem:[%s1670 + $0x32] sm:$0xff]
        %v2062 = vld [vmem:[%s1670 + $0x3a] sm:$0xff]
        %v2063 = vld [vmem:[%s1670 + $0x4a] sm:$0xff]
        %v2064 = vld [vmem:[%s1670 + $0x52] sm:$0xff]
        %v2065 = vld [vmem:[%s1670 + $0x62] sm:$0xff]
        %v2066 = vld [vmem:[%s1670 + $0x6a] sm:$0xff]
        %v2067 = vld [vmem:[%s1670 + $0x7a] sm:$0xff]
        %v2068 = vld [vmem:[%s1670 + $0x82] sm:$0xff]
        %v2069 = vld [vmem:[%s1670 + $0x92] sm:$0xff]
        %v2070 = vld [vmem:[%s1670 + $0x9a] sm:$0xff]
        %v2071 = vld [vmem:[%s1670 + $0xaa] sm:$0xff]
        %v2072 = vld [vmem:[%s1670 + $0xb2] sm:$0xff]
        %v2073 = vld [vmem:[%s1670 + $0xc2] sm:$0xff]
        %v2074 = vld [vmem:[%s1670 + $0xca] sm:$0xff]
        %v2075 = vld [vmem:[%s1670 + $0xda] sm:$0xff]
        %v2076 = vld [vmem:[%s1670 + $0xe2] sm:$0xff]
        %v2077 = vld [vmem:[%s1670 + $0xf2] sm:$0xff]
        %v2078 = vld [vmem:[%s1670 + $0xfa] sm:$0xff]
        %v2079 = vld [vmem:[%s1670 + $0x10a] sm:$0xff]
        %v2080 = vld [vmem:[%s1670 + $0x112] sm:$0xff]
        %v2081 = vld [vmem:[%s1670 + $0x122] sm:$0xff]
        %v2082 = vld [vmem:[%s1670 + $0x12a] sm:$0xff]
        %v2083 = vld [vmem:[%s1670 + $0x13a] sm:$0xff]
        %v2084 = vld [vmem:[%s1670 + $0x142] sm:$0xff]
        %v2085 = vld [vmem:[%s1670 + $0x152] sm:$0xff]
        %v2086 = vld [vmem:[%s1670 + $0x15a] sm:$0xff]
        %v2087 = vld [vmem:[%s1670 + $0x16a] sm:$0xff]
        %v2088 = vld [vmem:[%s1670 + $0x172] sm:$0xff]
        %2121 = vrot.lane.b32.xlu0 %v2057, 32
        %v2122 = vpop.permute.xlu0 %2121
        %2123 = vrot.lane.b32.xlu0 %v2058, 32
        %v2124 = vpop.permute.xlu0 %2123
        %2125 = vrot.lane.b32.xlu0 %v2059, 32
        %v2126 = vpop.permute.xlu0 %2125
        %2127 = vrot.lane.b32.xlu0 %v2060, 32
        %v2128 = vpop.permute.xlu0 %2127
        %2129 = vrot.lane.b32.xlu0 %v2061, 32
        %v2130 = vpop.permute.xlu0 %2129
        %2131 = vrot.lane.b32.xlu0 %v2062, 32
        %v2132 = vpop.permute.xlu0 %2131
        %2133 = vrot.lane.b32.xlu0 %v2063, 32
        %v2134 = vpop.permute.xlu0 %2133
        %2135 = vrot.lane.b32.xlu0 %v2064, 32
        %v2136 = vpop.permute.xlu0 %2135
        %2137 = vrot.lane.b32.xlu0 %v2065, 32
        %v2138 = vpop.permute.xlu0 %2137
        %2139 = vrot.lane.b32.xlu0 %v2066, 32
        %v2140 = vpop.permute.xlu0 %2139
        %2141 = vrot.lane.b32.xlu0 %v2067, 32
        %v2142 = vpop.permute.xlu0 %2141
        %2143 = vrot.lane.b32.xlu0 %v2068, 32
        %v2144 = vpop.permute.xlu0 %2143
        %2145 = vrot.lane.b32.xlu0 %v2069, 32
        %v2146 = vpop.permute.xlu0 %2145
        %2147 = vrot.lane.b32.xlu0 %v2070, 32
        %v2148 = vpop.permute.xlu0 %2147
        %2149 = vrot.lane.b32.xlu0 %v2071, 32
        %v2150 = vpop.permute.xlu0 %2149
        %2151 = vrot.lane.b32.xlu0 %v2072, 32
        %v2152 = vpop.permute.xlu0 %2151
        %2153 = vrot.lane.b32.xlu0 %v2073, 32
        %v2154 = vpop.permute.xlu0 %2153
        %2155 = vrot.lane.b32.xlu0 %v2074, 32
        %v2156 = vpop.permute.xlu0 %2155
        %2157 = vrot.lane.b32.xlu0 %v2075, 32
        %v2158 = vpop.permute.xlu0 %2157
        %2159 = vrot.lane.b32.xlu0 %v2076, 32
        %v2160 = vpop.permute.xlu0 %2159
        %2161 = vrot.lane.b32.xlu0 %v2077, 32
        %v2162 = vpop.permute.xlu0 %2161
        %2163 = vrot.lane.b32.xlu0 %v2078, 32
        %v2164 = vpop.permute.xlu0 %2163
        %2165 = vrot.lane.b32.xlu0 %v2079, 32
        %v2166 = vpop.permute.xlu0 %2165
        %2167 = vrot.lane.b32.xlu0 %v2080, 32
        %v2168 = vpop.permute.xlu0 %2167
        %2169 = vrot.lane.b32.xlu0 %v2081, 32
        %v2170 = vpop.permute.xlu0 %2169
        %2171 = vrot.lane.b32.xlu0 %v2082, 32
        %v2172 = vpop.permute.xlu0 %2171
        %2173 = vrot.lane.b32.xlu0 %v2083, 32
        %v2174 = vpop.permute.xlu0 %2173
        %2175 = vrot.lane.b32.xlu0 %v2084, 32
        %v2176 = vpop.permute.xlu0 %2175
        %2177 = vrot.lane.b32.xlu0 %v2085, 32
        %v2178 = vpop.permute.xlu0 %2177
        %2179 = vrot.lane.b32.xlu0 %v2086, 32
        %v2180 = vpop.permute.xlu0 %2179
        %2181 = vrot.lane.b32.xlu0 %v2087, 32
        %v2182 = vpop.permute.xlu0 %2181
        %2183 = vrot.lane.b32.xlu0 %v2088, 32
        %v2184 = vpop.permute.xlu0 %2183
        %vm2217 = vcmask 294144
        %2218 = vst.msk [vmem:[#allocation3] sm:$0xff] %vm2217, %v2122
        %2219 = vst.msk [vmem:[#allocation3 + $0x28] sm:$0xff] %vm2217, %v2124
        %2220 = vst.msk [vmem:[#allocation3 + $0x50] sm:$0xff] %vm2217, %v2126
        %2221 = vst.msk [vmem:[#allocation3 + $0x78] sm:$0xff] %vm2217, %v2128
        %2222 = vst.msk [vmem:[#allocation3 + $0xa0] sm:$0xff] %vm2217, %v2130
        %2223 = vst.msk [vmem:[#allocation3 + $0xc8] sm:$0xff] %vm2217, %v2132
        %2224 = vst.msk [vmem:[#allocation3 + $0xf0] sm:$0xff] %vm2217, %v2134
        %2225 = vst.msk [vmem:[#allocation3 + $0x118] sm:$0xff] %vm2217, %v2136
        %2226 = vst.msk [vmem:[#allocation3 + $0x140] sm:$0xff] %vm2217, %v2138
        %2227 = vst.msk [vmem:[#allocation3 + $0x168] sm:$0xff] %vm2217, %v2140
        %2228 = vst.msk [vmem:[#allocation3 + $0x190] sm:$0xff] %vm2217, %v2142
        %2229 = vst.msk [vmem:[#allocation3 + $0x1b8] sm:$0xff] %vm2217, %v2144
        %2230 = vst.msk [vmem:[#allocation3 + $0x1e0] sm:$0xff] %vm2217, %v2146
        %2231 = vst.msk [vmem:[#allocation3 + $0x208] sm:$0xff] %vm2217, %v2148
        %2232 = vst.msk [vmem:[#allocation3 + $0x230] sm:$0xff] %vm2217, %v2150
        %2233 = vst.msk [vmem:[#allocation3 + $0x258] sm:$0xff] %vm2217, %v2152
        %2234 = vst.msk [vmem:[#allocation3 + $0x280] sm:$0xff] %vm2217, %v2154
        %2235 = vst.msk [vmem:[#allocation3 + $0x2a8] sm:$0xff] %vm2217, %v2156
        %2236 = vst.msk [vmem:[#allocation3 + $0x2d0] sm:$0xff] %vm2217, %v2158
        %2237 = vst.msk [vmem:[#allocation3 + $0x2f8] sm:$0xff] %vm2217, %v2160
        %2238 = vst.msk [vmem:[#allocation3 + $0x320] sm:$0xff] %vm2217, %v2162
        %2239 = vst.msk [vmem:[#allocation3 + $0x348] sm:$0xff] %vm2217, %v2164
        %2240 = vst.msk [vmem:[#allocation3 + $0x370] sm:$0xff] %vm2217, %v2166
        %2241 = vst.msk [vmem:[#allocation3 + $0x398] sm:$0xff] %vm2217, %v2168
        %2242 = vst.msk [vmem:[#allocation3 + $0x3c0] sm:$0xff] %vm2217, %v2170
        %2243 = vst.msk [vmem:[#allocation3 + $0x3e8] sm:$0xff] %vm2217, %v2172
        %2244 = vst.msk [vmem:[#allocation3 + $0x410] sm:$0xff] %vm2217, %v2174
        %2245 = vst.msk [vmem:[#allocation3 + $0x438] sm:$0xff] %vm2217, %v2176
        %2246 = vst.msk [vmem:[#allocation3 + $0x460] sm:$0xff] %vm2217, %v2178
        %2247 = vst.msk [vmem:[#allocation3 + $0x488] sm:$0xff] %vm2217, %v2180
        %2248 = vst.msk [vmem:[#allocation3 + $0x4b0] sm:$0xff] %vm2217, %v2182
        %2249 = vst.msk [vmem:[#allocation3 + $0x4d8] sm:$0xff] %vm2217, %v2184
        %v2250 = vld [vmem:[#allocation3] sm:$0xff]
        %v2251 = vld [vmem:[#allocation3 + $0x28] sm:$0xff]
        %v2252 = vld [vmem:[#allocation3 + $0x50] sm:$0xff]
        %v2253 = vld [vmem:[#allocation3 + $0x78] sm:$0xff]
        %v2254 = vld [vmem:[#allocation3 + $0xa0] sm:$0xff]
        %v2255 = vld [vmem:[#allocation3 + $0xc8] sm:$0xff]
        %v2256 = vld [vmem:[#allocation3 + $0xf0] sm:$0xff]
        %v2257 = vld [vmem:[#allocation3 + $0x118] sm:$0xff]
        %v2258 = vld [vmem:[#allocation3 + $0x140] sm:$0xff]
        %v2259 = vld [vmem:[#allocation3 + $0x168] sm:$0xff]
        %v2260 = vld [vmem:[#allocation3 + $0x190] sm:$0xff]
        %v2261 = vld [vmem:[#allocation3 + $0x1b8] sm:$0xff]
        %v2262 = vld [vmem:[#allocation3 + $0x1e0] sm:$0xff]
        %v2263 = vld [vmem:[#allocation3 + $0x208] sm:$0xff]
        %v2264 = vld [vmem:[#allocation3 + $0x230] sm:$0xff]
        %v2265 = vld [vmem:[#allocation3 + $0x258] sm:$0xff]
        %v2266 = vld [vmem:[#allocation3 + $0x280] sm:$0xff]
        %v2267 = vld [vmem:[#allocation3 + $0x2a8] sm:$0xff]
        %v2268 = vld [vmem:[#allocation3 + $0x2d0] sm:$0xff]
        %v2269 = vld [vmem:[#allocation3 + $0x2f8] sm:$0xff]
        %v2270 = vld [vmem:[#allocation3 + $0x320] sm:$0xff]
        %v2271 = vld [vmem:[#allocation3 + $0x348] sm:$0xff]
        %v2272 = vld [vmem:[#allocation3 + $0x370] sm:$0xff]
        %v2273 = vld [vmem:[#allocation3 + $0x398] sm:$0xff]
        %v2274 = vld [vmem:[#allocation3 + $0x3c0] sm:$0xff]
        %v2275 = vld [vmem:[#allocation3 + $0x3e8] sm:$0xff]
        %v2276 = vld [vmem:[#allocation3 + $0x410] sm:$0xff]
        %v2277 = vld [vmem:[#allocation3 + $0x438] sm:$0xff]
        %v2278 = vld [vmem:[#allocation3 + $0x460] sm:$0xff]
        %v2279 = vld [vmem:[#allocation3 + $0x488] sm:$0xff]
        %v2280 = vld [vmem:[#allocation3 + $0x4b0] sm:$0xff]
        %v2281 = vld [vmem:[#allocation3 + $0x4d8] sm:$0xff]
        %v2282 = vld [vmem:[%s1] sm:$0xff]
        %v2283 = vld [vmem:[%s1 + $0x8] sm:$0xff]
        %v2284 = vld [vmem:[%s1 + $0x10] sm:$0xff]
        %v2285 = vld [vmem:[%s1 + $0x18] sm:$0xff]
        %v2286 = vld [vmem:[%s1 + $0x20] sm:$0xf]
        %vm2287 = vcmask 293888
        %v2289 = vsel %vm2287, %v2250, 0
        %v2292 = vsel %vm2287, %v2251, 0
        %v2295 = vsel %vm2287, %v2252, 0
        %v2298 = vsel %vm2287, %v2253, 0
        %v2301 = vsel %vm2287, %v2254, 0
        %v2304 = vsel %vm2287, %v2255, 0
        %v2307 = vsel %vm2287, %v2256, 0
        %v2310 = vsel %vm2287, %v2257, 0
        %v2313 = vsel %vm2287, %v2258, 0
        %v2316 = vsel %vm2287, %v2259, 0
        %v2319 = vsel %vm2287, %v2260, 0
        %v2322 = vsel %vm2287, %v2261, 0
        %v2325 = vsel %vm2287, %v2262, 0
        %v2328 = vsel %vm2287, %v2263, 0
        %v2331 = vsel %vm2287, %v2264, 0
        %v2334 = vsel %vm2287, %v2265, 0
        %v2337 = vsel %vm2287, %v2266, 0
        %v2340 = vsel %vm2287, %v2267, 0
        %v2343 = vsel %vm2287, %v2268, 0
        %v2346 = vsel %vm2287, %v2269, 0
        %v2349 = vsel %vm2287, %v2270, 0
        %v2352 = vsel %vm2287, %v2271, 0
        %v2355 = vsel %vm2287, %v2272, 0
        %v2358 = vsel %vm2287, %v2273, 0
        %v2361 = vsel %vm2287, %v2274, 0
        %v2364 = vsel %vm2287, %v2275, 0
        %v2367 = vsel %vm2287, %v2276, 0
        %v2370 = vsel %vm2287, %v2277, 0
        %v2373 = vsel %vm2287, %v2278, 0
        %v2376 = vsel %vm2287, %v2279, 0
        %v2379 = vsel %vm2287, %v2280, 0
        %v2382 = vsel %vm2287, %v2281, 0
        %vm2384 = vcmask 1043456
        %v2386 = vsel %vm2384, %v2286, 0
        %2388 = vmatprep.subr.mxu0 0.0
        %2389 = vmatpush1.msra.mxu0 %v2282
        %2390 = vmatprep.subr.mxu0 0.0
        %2391 = vmatpush1.msra.mxu0 %v2283
        %2392 = vmatprep.subr.mxu0 0.0
        %2393 = vmatpush1.msra.mxu0 %v2284
        %2394 = vmatprep.subr.mxu0 0.0
        %2395 = vmatpush1.msra.mxu0 %v2285
        %2396 = vmatprep.subr.mxu0 0.0
        %2397 = vmatpush1.msra.mxu0 %v2386
        %2398 = vmatprep.subr.mxu0 0.0
        %2399 = vmatpush1.msra.mxu0 0.0
        %2400 = vmatprep.subr.mxu0 0.0
        %2401 = vmatpush1.msra.mxu0 0.0
        %2402 = vmatprep.subr.mxu0 0.0
        %2403 = vmatpush1.msra.mxu0 0.0
        %2404 = vmatprep.subr.mxu0 0.0
        %2405 = vmatpush1.msra.mxu0 0.0
        %2406 = vmatprep.subr.mxu0 0.0
        %2407 = vmatpush1.msra.mxu0 0.0
        %2408 = vmatprep.subr.mxu0 0.0
        %2409 = vmatpush1.msra.mxu0 0.0
        %2410 = vmatprep.subr.mxu0 0.0
        %2411 = vmatpush1.msra.mxu0 0.0
        %2412 = vmatprep.subr.mxu0 0.0
        %2413 = vmatpush1.msra.mxu0 0.0
        %2414 = vmatprep.subr.mxu0 0.0
        %2415 = vmatpush1.msra.mxu0 0.0
        %2416 = vmatprep.subr.mxu0 0.0
        %2417 = vmatpush1.msra.mxu0 0.0
        %2418 = vmatprep.subr.mxu0 0.0
        %2419 = vmatpush1.msra.mxu0 0.0
        %2420 = vmatprep.subr.mxu0 0.0
        %2421 = vmatpush1.msra.mxu0 0.0
        %2422 = vmatprep.subr.mxu0 0.0
        %2423 = vmatpush1.msra.mxu0 0.0
        %2424 = vmatprep.subr.mxu0 0.0
        %2425 = vmatpush1.msra.mxu0 0.0
        %2426 = vmatprep.subr.mxu0 0.0
        %2427 = vmatpush1.msra.mxu0 0.0
        %2428 = vmatprep.subr.mxu0 0.0
        %2429 = vmatpush1.msra.mxu0 0.0
        %2430 = vmatprep.subr.mxu0 0.0
        %2431 = vmatpush1.msra.mxu0 0.0
        %2432 = vmatprep.subr.mxu0 0.0
        %2433 = vmatpush1.msra.mxu0 0.0
        %2434 = vmatprep.subr.mxu0 0.0
        %2435 = vmatpush1.msra.mxu0 0.0
        %2436 = vmatprep.subr.mxu0 0.0
        %2437 = vmatpush1.msra.mxu0 0.0
        %2438 = vmatprep.subr.mxu0 0.0
        %2439 = vmatpush1.msra.mxu0 0.0
        %2440 = vmatprep.subr.mxu0 0.0
        %2441 = vmatpush1.msra.mxu0 0.0
        %2442 = vmatprep.subr.mxu0 0.0
        %2443 = vmatpush1.msra.mxu0 0.0
        %2444 = vmatprep.subr.mxu0 0.0
        %2445 = vmatpush1.msra.mxu0 0.0
        %2446 = vmatprep.subr.mxu0 0.0
        %2447 = vmatpush1.msra.mxu0 0.0
        %2448 = vmatprep.subr.mxu0 0.0
        %2449 = vmatpush1.msra.mxu0 0.0
        %2450 = vmatprep.subr.mxu0 0.0
        %2451 = vmatpush1.msra.mxu0 0.0
        %2452 = vmatprep.mubr.f32.mxu0 0.0
        %2453 = vmatmul.mubr.f32.gmra.mrb[0].mxu0 %v2289
        %v2454 = vpop.f32.mrb[0].mxu0
        %v2455 = vadd.f32 0.0, %v2454
        %v2456 = vpop.f32.mrb[0].mxu0
        %2457 = vmatprep.mubr.f32.mxu0 0.0
        %2458 = vmatmul.mubr.f32.gmra.mrb[0].mxu0 %v2292
        %v2459 = vpop.f32.mrb[0].mxu0
        %v2460 = vadd.f32 0.0, %v2459
        %v2461 = vpop.f32.mrb[0].mxu0
        %2462 = vmatprep.mubr.f32.mxu0 0.0
        %2463 = vmatmul.mubr.f32.gmra.mrb[0].mxu0 %v2295
        %v2464 = vpop.f32.mrb[0].mxu0
        %v2465 = vadd.f32 0.0, %v2464
        %v2466 = vpop.f32.mrb[0].mxu0
        %2467 = vmatprep.mubr.f32.mxu0 0.0
        %2468 = vmatmul.mubr.f32.gmra.mrb[0].mxu0 %v2298
        %v2469 = vpop.f32.mrb[0].mxu0
        %v2470 = vadd.f32 0.0, %v2469
        %v2471 = vpop.f32.mrb[0].mxu0
        %2472 = vmatprep.mubr.f32.mxu0 0.0
        %2473 = vmatmul.mubr.f32.gmra.mrb[0].mxu0 %v2301
        %v2474 = vpop.f32.mrb[0].mxu0
        %v2475 = vadd.f32 0.0, %v2474
        %v2476 = vpop.f32.mrb[0].mxu0
        %2477 = vmatprep.mubr.f32.mxu0 0.0
        %2478 = vmatmul.mubr.f32.gmra.mrb[0].mxu0 %v2304
        %v2479 = vpop.f32.mrb[0].mxu0
        %v2480 = vadd.f32 0.0, %v2479
        %v2481 = vpop.f32.mrb[0].mxu0
        %2482 = vmatprep.mubr.f32.mxu0 0.0
        %2483 = vmatmul.mubr.f32.gmra.mrb[0].mxu0 %v2307
        %v2484 = vpop.f32.mrb[0].mxu0
        %v2485 = vadd.f32 0.0, %v2484
        %v2486 = vpop.f32.mrb[0].mxu0
        %2487 = vmatprep.mubr.f32.mxu0 0.0
        %2488 = vmatmul.mubr.f32.gmra.mrb[0].mxu0 %v2310
        %v2489 = vpop.f32.mrb[0].mxu0
        %v2490 = vadd.f32 0.0, %v2489
        %v2491 = vpop.f32.mrb[0].mxu0
        %2492 = vmatprep.mubr.f32.mxu0 0.0
        %2493 = vmatmul.mubr.f32.gmra.mrb[0].mxu0 %v2313
        %v2494 = vpop.f32.mrb[0].mxu0
        %v2495 = vadd.f32 0.0, %v2494
        %v2496 = vpop.f32.mrb[0].mxu0
        %2497 = vmatprep.mubr.f32.mxu0 0.0
        %2498 = vmatmul.mubr.f32.gmra.mrb[0].mxu0 %v2316
        %v2499 = vpop.f32.mrb[0].mxu0
        %v2500 = vadd.f32 0.0, %v2499
        %v2501 = vpop.f32.mrb[0].mxu0
        %2502 = vmatprep.mubr.f32.mxu0 0.0
        %2503 = vmatmul.mubr.f32.gmra.mrb[0].mxu0 %v2319
        %v2504 = vpop.f32.mrb[0].mxu0
        %v2505 = vadd.f32 0.0, %v2504
        %v2506 = vpop.f32.mrb[0].mxu0
        %2507 = vmatprep.mubr.f32.mxu0 0.0
        %2508 = vmatmul.mubr.f32.gmra.mrb[0].mxu0 %v2322
        %v2509 = vpop.f32.mrb[0].mxu0
        %v2510 = vadd.f32 0.0, %v2509
        %v2511 = vpop.f32.mrb[0].mxu0
        %2512 = vmatprep.mubr.f32.mxu0 0.0
        %2513 = vmatmul.mubr.f32.gmra.mrb[0].mxu0 %v2325
        %v2514 = vpop.f32.mrb[0].mxu0
        %v2515 = vadd.f32 0.0, %v2514
        %v2516 = vpop.f32.mrb[0].mxu0
        %2517 = vmatprep.mubr.f32.mxu0 0.0
        %2518 = vmatmul.mubr.f32.gmra.mrb[0].mxu0 %v2328
        %v2519 = vpop.f32.mrb[0].mxu0
        %v2520 = vadd.f32 0.0, %v2519
        %v2521 = vpop.f32.mrb[0].mxu0
        %2522 = vmatprep.mubr.f32.mxu0 0.0
        %2523 = vmatmul.mubr.f32.gmra.mrb[0].mxu0 %v2331
        %v2524 = vpop.f32.mrb[0].mxu0
        %v2525 = vadd.f32 0.0, %v2524
        %v2526 = vpop.f32.mrb[0].mxu0
        %2527 = vmatprep.mubr.f32.mxu0 0.0
        %2528 = vmatmul.mubr.f32.gmra.mrb[0].mxu0 %v2334
        %v2529 = vpop.f32.mrb[0].mxu0
        %v2530 = vadd.f32 0.0, %v2529
        %v2531 = vpop.f32.mrb[0].mxu0
        %2532 = vmatprep.mubr.f32.mxu0 0.0
        %2533 = vmatmul.mubr.f32.gmra.mrb[0].mxu0 %v2337
        %v2534 = vpop.f32.mrb[0].mxu0
        %v2535 = vadd.f32 0.0, %v2534
        %v2536 = vpop.f32.mrb[0].mxu0
        %2537 = vmatprep.mubr.f32.mxu0 0.0
        %2538 = vmatmul.mubr.f32.gmra.mrb[0].mxu0 %v2340
        %v2539 = vpop.f32.mrb[0].mxu0
        %v2540 = vadd.f32 0.0, %v2539
        %v2541 = vpop.f32.mrb[0].mxu0
        %2542 = vmatprep.mubr.f32.mxu0 0.0
        %2543 = vmatmul.mubr.f32.gmra.mrb[0].mxu0 %v2343
        %v2544 = vpop.f32.mrb[0].mxu0
        %v2545 = vadd.f32 0.0, %v2544
        %v2546 = vpop.f32.mrb[0].mxu0
        %2547 = vmatprep.mubr.f32.mxu0 0.0
        %2548 = vmatmul.mubr.f32.gmra.mrb[0].mxu0 %v2346
        %v2549 = vpop.f32.mrb[0].mxu0
        %v2550 = vadd.f32 0.0, %v2549
        %v2551 = vpop.f32.mrb[0].mxu0
        %2552 = vmatprep.mubr.f32.mxu0 0.0
        %2553 = vmatmul.mubr.f32.gmra.mrb[0].mxu0 %v2349
        %v2554 = vpop.f32.mrb[0].mxu0
        %v2555 = vadd.f32 0.0, %v2554
        %v2556 = vpop.f32.mrb[0].mxu0
        %2557 = vmatprep.mubr.f32.mxu0 0.0
        %2558 = vmatmul.mubr.f32.gmra.mrb[0].mxu0 %v2352
        %v2559 = vpop.f32.mrb[0].mxu0
        %v2560 = vadd.f32 0.0, %v2559
        %v2561 = vpop.f32.mrb[0].mxu0
        %2562 = vmatprep.mubr.f32.mxu0 0.0
        %2563 = vmatmul.mubr.f32.gmra.mrb[0].mxu0 %v2355
        %v2564 = vpop.f32.mrb[0].mxu0
        %v2565 = vadd.f32 0.0, %v2564
        %v2566 = vpop.f32.mrb[0].mxu0
        %2567 = vmatprep.mubr.f32.mxu0 0.0
        %2568 = vmatmul.mubr.f32.gmra.mrb[0].mxu0 %v2358
        %v2569 = vpop.f32.mrb[0].mxu0
        %v2570 = vadd.f32 0.0, %v2569
        %v2571 = vpop.f32.mrb[0].mxu0
        %2572 = vmatprep.mubr.f32.mxu0 0.0
        %2573 = vmatmul.mubr.f32.gmra.mrb[0].mxu0 %v2361
        %v2574 = vpop.f32.mrb[0].mxu0
        %v2575 = vadd.f32 0.0, %v2574
        %v2576 = vpop.f32.mrb[0].mxu0
        %2577 = vmatprep.mubr.f32.mxu0 0.0
        %2578 = vmatmul.mubr.f32.gmra.mrb[0].mxu0 %v2364
        %v2579 = vpop.f32.mrb[0].mxu0
        %v2580 = vadd.f32 0.0, %v2579
        %v2581 = vpop.f32.mrb[0].mxu0
        %2582 = vmatprep.mubr.f32.mxu0 0.0
        %2583 = vmatmul.mubr.f32.gmra.mrb[0].mxu0 %v2367
        %v2584 = vpop.f32.mrb[0].mxu0
        %v2585 = vadd.f32 0.0, %v2584
        %v2586 = vpop.f32.mrb[0].mxu0
        %2587 = vmatprep.mubr.f32.mxu0 0.0
        %2588 = vmatmul.mubr.f32.gmra.mrb[0].mxu0 %v2370
        %v2589 = vpop.f32.mrb[0].mxu0
        %v2590 = vadd.f32 0.0, %v2589
        %v2591 = vpop.f32.mrb[0].mxu0
        %2592 = vmatprep.mubr.f32.mxu0 0.0
        %2593 = vmatmul.mubr.f32.gmra.mrb[0].mxu0 %v2373
        %v2594 = vpop.f32.mrb[0].mxu0
        %v2595 = vadd.f32 0.0, %v2594
        %v2596 = vpop.f32.mrb[0].mxu0
        %2597 = vmatprep.mubr.f32.mxu0 0.0
        %2598 = vmatmul.mubr.f32.gmra.mrb[0].mxu0 %v2376
        %v2599 = vpop.f32.mrb[0].mxu0
        %v2600 = vadd.f32 0.0, %v2599
        %v2601 = vpop.f32.mrb[0].mxu0
        %2602 = vmatprep.mubr.f32.mxu0 0.0
        %2603 = vmatmul.mubr.f32.gmra.mrb[0].mxu0 %v2379
        %v2604 = vpop.f32.mrb[0].mxu0
        %v2605 = vadd.f32 0.0, %v2604
        %v2606 = vpop.f32.mrb[0].mxu0
        %2607 = vmatprep.mubr.f32.mxu0 0.0
        %2608 = vmatmul.mubr.f32.gmra.mrb[0].mxu0 %v2382
        %v2609 = vpop.f32.mrb[0].mxu0
        %v2610 = vadd.f32 0.0, %v2609
        %v2611 = vpop.f32.mrb[0].mxu0
        %2612 = vdwg.mxu0
        %v2613 = vld [vmem:[%s2] sm:$0x1]
        %v2615 = vlaneseq
        %v2616 = vshrl.u32 %v2615, 7
        %v2617 = vsub.s32 0, %v2616
        %v2618 = vrot.slane %v2613, %v2617
        %v2620 = vmul.f32 %v2455, %v2618
        %v2621 = vmul.f32 %v2460, %v2618
        %v2622 = vmul.f32 %v2465, %v2618
        %v2623 = vmul.f32 %v2470, %v2618
        %v2624 = vmul.f32 %v2475, %v2618
        %v2625 = vmul.f32 %v2480, %v2618
        %v2626 = vmul.f32 %v2485, %v2618
        %v2627 = vmul.f32 %v2490, %v2618
        %v2628 = vmul.f32 %v2495, %v2618
        %v2629 = vmul.f32 %v2500, %v2618
        %v2630 = vmul.f32 %v2505, %v2618
        %v2631 = vmul.f32 %v2510, %v2618
        %v2632 = vmul.f32 %v2515, %v2618
        %v2633 = vmul.f32 %v2520, %v2618
        %v2634 = vmul.f32 %v2525, %v2618
        %v2635 = vmul.f32 %v2530, %v2618
        %v2636 = vmul.f32 %v2535, %v2618
        %v2637 = vmul.f32 %v2540, %v2618
        %v2638 = vmul.f32 %v2545, %v2618
        %v2639 = vmul.f32 %v2550, %v2618
        %v2640 = vmul.f32 %v2555, %v2618
        %v2641 = vmul.f32 %v2560, %v2618
        %v2642 = vmul.f32 %v2565, %v2618
        %v2643 = vmul.f32 %v2570, %v2618
        %v2644 = vmul.f32 %v2575, %v2618
        %v2645 = vmul.f32 %v2580, %v2618
        %v2646 = vmul.f32 %v2585, %v2618
        %v2647 = vmul.f32 %v2590, %v2618
        %v2648 = vmul.f32 %v2595, %v2618
        %v2649 = vmul.f32 %v2600, %v2618
        %v2650 = vmul.f32 %v2605, %v2618
        %v2651 = vmul.f32 %v2610, %v2618
        %v2652 = vld [vmem:[%s3] sm:$0x1]
        %v2654 = vlaneseq
        %v2655 = vshrl.u32 %v2654, 7
        %v2656 = vsub.s32 0, %v2655
        %v2657 = vrot.slane %v2652, %v2656
        %v2659 = vadd.f32 %v2620, %v2657
        %v2660 = vadd.f32 %v2621, %v2657
        %v2661 = vadd.f32 %v2622, %v2657
        %v2662 = vadd.f32 %v2623, %v2657
        %v2663 = vadd.f32 %v2624, %v2657
        %v2664 = vadd.f32 %v2625, %v2657
        %v2665 = vadd.f32 %v2626, %v2657
        %v2666 = vadd.f32 %v2627, %v2657
        %v2667 = vadd.f32 %v2628, %v2657
        %v2668 = vadd.f32 %v2629, %v2657
        %v2669 = vadd.f32 %v2630, %v2657
        %v2670 = vadd.f32 %v2631, %v2657
        %v2671 = vadd.f32 %v2632, %v2657
        %v2672 = vadd.f32 %v2633, %v2657
        %v2673 = vadd.f32 %v2634, %v2657
        %v2674 = vadd.f32 %v2635, %v2657
        %v2675 = vadd.f32 %v2636, %v2657
        %v2676 = vadd.f32 %v2637, %v2657
        %v2677 = vadd.f32 %v2638, %v2657
        %v2678 = vadd.f32 %v2639, %v2657
        %v2679 = vadd.f32 %v2640, %v2657
        %v2680 = vadd.f32 %v2641, %v2657
        %v2681 = vadd.f32 %v2642, %v2657
        %v2682 = vadd.f32 %v2643, %v2657
        %v2683 = vadd.f32 %v2644, %v2657
        %v2684 = vadd.f32 %v2645, %v2657
        %v2685 = vadd.f32 %v2646, %v2657
        %v2686 = vadd.f32 %v2647, %v2657
        %v2687 = vadd.f32 %v2648, %v2657
        %v2688 = vadd.f32 %v2649, %v2657
        %v2689 = vadd.f32 %v2650, %v2657
        %v2690 = vadd.f32 %v2651, %v2657
        %v2691 = vmax.f32 %v2659, 0.0
        %v2692 = vmax.f32 %v2660, 0.0
        %v2693 = vmax.f32 %v2661, 0.0
        %v2694 = vmax.f32 %v2662, 0.0
        %v2695 = vmax.f32 %v2663, 0.0
        %v2696 = vmax.f32 %v2664, 0.0
        %v2697 = vmax.f32 %v2665, 0.0
        %v2698 = vmax.f32 %v2666, 0.0
        %v2699 = vmax.f32 %v2667, 0.0
        %v2700 = vmax.f32 %v2668, 0.0
        %v2701 = vmax.f32 %v2669, 0.0
        %v2702 = vmax.f32 %v2670, 0.0
        %v2703 = vmax.f32 %v2671, 0.0
        %v2704 = vmax.f32 %v2672, 0.0
        %v2705 = vmax.f32 %v2673, 0.0
        %v2706 = vmax.f32 %v2674, 0.0
        %v2707 = vmax.f32 %v2675, 0.0
        %v2708 = vmax.f32 %v2676, 0.0
        %v2709 = vmax.f32 %v2677, 0.0
        %v2710 = vmax.f32 %v2678, 0.0
        %v2711 = vmax.f32 %v2679, 0.0
        %v2712 = vmax.f32 %v2680, 0.0
        %v2713 = vmax.f32 %v2681, 0.0
        %v2714 = vmax.f32 %v2682, 0.0
        %v2715 = vmax.f32 %v2683, 0.0
        %v2716 = vmax.f32 %v2684, 0.0
        %v2717 = vmax.f32 %v2685, 0.0
        %v2718 = vmax.f32 %v2686, 0.0
        %v2719 = vmax.f32 %v2687, 0.0
        %v2720 = vmax.f32 %v2688, 0.0
        %v2721 = vmax.f32 %v2689, 0.0
        %v2722 = vmax.f32 %v2690, 0.0
        %vm2723 = vcmask 261120
        %2724 = vst.msk [vmem:[%s607 + $0x1] sm:$0xff] %vm2723, %v2691
        %2725 = vst.msk [vmem:[%s607 + $0x9] sm:$0xff] %vm2723, %v2692
        %2726 = vst.msk [vmem:[%s607 + $0x19] sm:$0xff] %vm2723, %v2693
        %2727 = vst.msk [vmem:[%s607 + $0x21] sm:$0xff] %vm2723, %v2694
        %2728 = vst.msk [vmem:[%s607 + $0x31] sm:$0xff] %vm2723, %v2695
        %2729 = vst.msk [vmem:[%s607 + $0x39] sm:$0xff] %vm2723, %v2696
        %2730 = vst.msk [vmem:[%s607 + $0x49] sm:$0xff] %vm2723, %v2697
        %2731 = vst.msk [vmem:[%s607 + $0x51] sm:$0xff] %vm2723, %v2698
        %2732 = vst.msk [vmem:[%s607 + $0x61] sm:$0xff] %vm2723, %v2699
        %2733 = vst.msk [vmem:[%s607 + $0x69] sm:$0xff] %vm2723, %v2700
        %2734 = vst.msk [vmem:[%s607 + $0x79] sm:$0xff] %vm2723, %v2701
        %2735 = vst.msk [vmem:[%s607 + $0x81] sm:$0xff] %vm2723, %v2702
        %2736 = vst.msk [vmem:[%s607 + $0x91] sm:$0xff] %vm2723, %v2703
        %2737 = vst.msk [vmem:[%s607 + $0x99] sm:$0xff] %vm2723, %v2704
        %2738 = vst.msk [vmem:[%s607 + $0xa9] sm:$0xff] %vm2723, %v2705
        %2739 = vst.msk [vmem:[%s607 + $0xb1] sm:$0xff] %vm2723, %v2706
        %2740 = vst.msk [vmem:[%s607 + $0xc1] sm:$0xff] %vm2723, %v2707
        %2741 = vst.msk [vmem:[%s607 + $0xc9] sm:$0xff] %vm2723, %v2708
        %2742 = vst.msk [vmem:[%s607 + $0xd9] sm:$0xff] %vm2723, %v2709
        %2743 = vst.msk [vmem:[%s607 + $0xe1] sm:$0xff] %vm2723, %v2710
        %2744 = vst.msk [vmem:[%s607 + $0xf1] sm:$0xff] %vm2723, %v2711
        %2745 = vst.msk [vmem:[%s607 + $0xf9] sm:$0xff] %vm2723, %v2712
        %2746 = vst.msk [vmem:[%s607 + $0x109] sm:$0xff] %vm2723, %v2713
        %2747 = vst.msk [vmem:[%s607 + $0x111] sm:$0xff] %vm2723, %v2714
        %2748 = vst.msk [vmem:[%s607 + $0x121] sm:$0xff] %vm2723, %v2715
        %2749 = vst.msk [vmem:[%s607 + $0x129] sm:$0xff] %vm2723, %v2716
        %2750 = vst.msk [vmem:[%s607 + $0x139] sm:$0xff] %vm2723, %v2717
        %2751 = vst.msk [vmem:[%s607 + $0x141] sm:$0xff] %vm2723, %v2718
        %2752 = vst.msk [vmem:[%s607 + $0x151] sm:$0xff] %vm2723, %v2719
        %2753 = vst.msk [vmem:[%s607 + $0x159] sm:$0xff] %vm2723, %v2720
        %2754 = vst.msk [vmem:[%s607 + $0x169] sm:$0xff] %vm2723, %v2721
        %2755 = vst.msk [vmem:[%s607 + $0x171] sm:$0xff] %vm2723, %v2722
        %v2756 = vld [vmem:[#allocation2] sm:$0xff]
        %v2757 = vld [vmem:[#allocation2 + $0x8] sm:$0xff]
        %v2758 = vld [vmem:[#allocation2 + $0x18] sm:$0xff]
        %v2759 = vld [vmem:[#allocation2 + $0x20] sm:$0xff]
        %v2760 = vld [vmem:[#allocation2 + $0x30] sm:$0xff]
        %v2761 = vld [vmem:[#allocation2 + $0x38] sm:$0xff]
        %v2762 = vld [vmem:[#allocation2 + $0x48] sm:$0xff]
        %v2763 = vld [vmem:[#allocation2 + $0x50] sm:$0xff]
        %v2764 = vld [vmem:[#allocation2 + $0x60] sm:$0xff]
        %v2765 = vld [vmem:[#allocation2 + $0x68] sm:$0xff]
        %v2766 = vld [vmem:[#allocation2 + $0x78] sm:$0xff]
        %v2767 = vld [vmem:[#allocation2 + $0x80] sm:$0xff]
        %v2768 = vld [vmem:[#allocation2 + $0x90] sm:$0xff]
        %v2769 = vld [vmem:[#allocation2 + $0x98] sm:$0xff]
        %v2770 = vld [vmem:[#allocation2 + $0xa8] sm:$0xff]
        %v2771 = vld [vmem:[#allocation2 + $0xb0] sm:$0xff]
        %v2772 = vld [vmem:[#allocation2 + $0xc0] sm:$0xff]
        %v2773 = vld [vmem:[#allocation2 + $0xc8] sm:$0xff]
        %v2774 = vld [vmem:[#allocation2 + $0xd8] sm:$0xff]
        %v2775 = vld [vmem:[#allocation2 + $0xe0] sm:$0xff]
        %v2776 = vld [vmem:[#allocation2 + $0xf0] sm:$0xff]
        %v2777 = vld [vmem:[#allocation2 + $0xf8] sm:$0xff]
        %v2778 = vld [vmem:[#allocation2 + $0x108] sm:$0xff]
        %v2779 = vld [vmem:[#allocation2 + $0x110] sm:$0xff]
        %v2780 = vld [vmem:[#allocation2 + $0x120] sm:$0xff]
        %v2781 = vld [vmem:[#allocation2 + $0x128] sm:$0xff]
        %v2782 = vld [vmem:[#allocation2 + $0x138] sm:$0xff]
        %v2783 = vld [vmem:[#allocation2 + $0x140] sm:$0xff]
        %v2784 = vld [vmem:[#allocation2 + $0x150] sm:$0xff]
        %v2785 = vld [vmem:[#allocation2 + $0x158] sm:$0xff]
        %v2786 = vld [vmem:[#allocation2 + $0x168] sm:$0xff]
        %v2787 = vld [vmem:[#allocation2 + $0x170] sm:$0xff]
        %2788 = vst.msk [vmem:[#allocation3] sm:$0xff] %vm2723, %v2756
        %2789 = vst.msk [vmem:[#allocation3 + $0x28] sm:$0xff] %vm2723, %v2757
        %2790 = vst.msk [vmem:[#allocation3 + $0x50] sm:$0xff] %vm2723, %v2758
        %2791 = vst.msk [vmem:[#allocation3 + $0x78] sm:$0xff] %vm2723, %v2759
        %2792 = vst.msk [vmem:[#allocation3 + $0xa0] sm:$0xff] %vm2723, %v2760
        %2793 = vst.msk [vmem:[#allocation3 + $0xc8] sm:$0xff] %vm2723, %v2761
        %2794 = vst.msk [vmem:[#allocation3 + $0xf0] sm:$0xff] %vm2723, %v2762
        %2795 = vst.msk [vmem:[#allocation3 + $0x118] sm:$0xff] %vm2723, %v2763
        %2796 = vst.msk [vmem:[#allocation3 + $0x140] sm:$0xff] %vm2723, %v2764
        %2797 = vst.msk [vmem:[#allocation3 + $0x168] sm:$0xff] %vm2723, %v2765
        %2798 = vst.msk [vmem:[#allocation3 + $0x190] sm:$0xff] %vm2723, %v2766
        %2799 = vst.msk [vmem:[#allocation3 + $0x1b8] sm:$0xff] %vm2723, %v2767
        %2800 = vst.msk [vmem:[#allocation3 + $0x1e0] sm:$0xff] %vm2723, %v2768
        %2801 = vst.msk [vmem:[#allocation3 + $0x208] sm:$0xff] %vm2723, %v2769
        %2802 = vst.msk [vmem:[#allocation3 + $0x230] sm:$0xff] %vm2723, %v2770
        %2803 = vst.msk [vmem:[#allocation3 + $0x258] sm:$0xff] %vm2723, %v2771
        %2804 = vst.msk [vmem:[#allocation3 + $0x280] sm:$0xff] %vm2723, %v2772
        %2805 = vst.msk [vmem:[#allocation3 + $0x2a8] sm:$0xff] %vm2723, %v2773
        %2806 = vst.msk [vmem:[#allocation3 + $0x2d0] sm:$0xff] %vm2723, %v2774
        %2807 = vst.msk [vmem:[#allocation3 + $0x2f8] sm:$0xff] %vm2723, %v2775
        %2808 = vst.msk [vmem:[#allocation3 + $0x320] sm:$0xff] %vm2723, %v2776
        %2809 = vst.msk [vmem:[#allocation3 + $0x348] sm:$0xff] %vm2723, %v2777
        %2810 = vst.msk [vmem:[#allocation3 + $0x370] sm:$0xff] %vm2723, %v2778
        %2811 = vst.msk [vmem:[#allocation3 + $0x398] sm:$0xff] %vm2723, %v2779
        %2812 = vst.msk [vmem:[#allocation3 + $0x3c0] sm:$0xff] %vm2723, %v2780
        %2813 = vst.msk [vmem:[#allocation3 + $0x3e8] sm:$0xff] %vm2723, %v2781
        %2814 = vst.msk [vmem:[#allocation3 + $0x410] sm:$0xff] %vm2723, %v2782
        %2815 = vst.msk [vmem:[#allocation3 + $0x438] sm:$0xff] %vm2723, %v2783
        %2816 = vst.msk [vmem:[#allocation3 + $0x460] sm:$0xff] %vm2723, %v2784
        %2817 = vst.msk [vmem:[#allocation3 + $0x488] sm:$0xff] %vm2723, %v2785
        %2818 = vst.msk [vmem:[#allocation3 + $0x4b0] sm:$0xff] %vm2723, %v2786
        %2819 = vst.msk [vmem:[#allocation3 + $0x4d8] sm:$0xff] %vm2723, %v2787
        %v2820 = vld [vmem:[#allocation2 + $0x1] sm:$0xff]
        %v2821 = vld [vmem:[#allocation2 + $0x9] sm:$0xff]
        %v2822 = vld [vmem:[#allocation2 + $0x19] sm:$0xff]
        %v2823 = vld [vmem:[#allocation2 + $0x21] sm:$0xff]
        %v2824 = vld [vmem:[#allocation2 + $0x31] sm:$0xff]
        %v2825 = vld [vmem:[#allocation2 + $0x39] sm:$0xff]
        %v2826 = vld [vmem:[#allocation2 + $0x49] sm:$0xff]
        %v2827 = vld [vmem:[#allocation2 + $0x51] sm:$0xff]
        %v2828 = vld [vmem:[#allocation2 + $0x61] sm:$0xff]
        %v2829 = vld [vmem:[#allocation2 + $0x69] sm:$0xff]
        %v2830 = vld [vmem:[#allocation2 + $0x79] sm:$0xff]
        %v2831 = vld [vmem:[#allocation2 + $0x81] sm:$0xff]
        %v2832 = vld [vmem:[#allocation2 + $0x91] sm:$0xff]
        %v2833 = vld [vmem:[#allocation2 + $0x99] sm:$0xff]
        %v2834 = vld [vmem:[#allocation2 + $0xa9] sm:$0xff]
        %v2835 = vld [vmem:[#allocation2 + $0xb1] sm:$0xff]
        %v2836 = vld [vmem:[#allocation2 + $0xc1] sm:$0xff]
        %v2837 = vld [vmem:[#allocation2 + $0xc9] sm:$0xff]
        %v2838 = vld [vmem:[#allocation2 + $0xd9] sm:$0xff]
        %v2839 = vld [vmem:[#allocation2 + $0xe1] sm:$0xff]
        %v2840 = vld [vmem:[#allocation2 + $0xf1] sm:$0xff]
        %v2841 = vld [vmem:[#allocation2 + $0xf9] sm:$0xff]
        %v2842 = vld [vmem:[#allocation2 + $0x109] sm:$0xff]
        %v2843 = vld [vmem:[#allocation2 + $0x111] sm:$0xff]
        %v2844 = vld [vmem:[#allocation2 + $0x121] sm:$0xff]
        %v2845 = vld [vmem:[#allocation2 + $0x129] sm:$0xff]
        %v2846 = vld [vmem:[#allocation2 + $0x139] sm:$0xff]
        %v2847 = vld [vmem:[#allocation2 + $0x141] sm:$0xff]
        %v2848 = vld [vmem:[#allocation2 + $0x151] sm:$0xff]
        %v2849 = vld [vmem:[#allocation2 + $0x159] sm:$0xff]
        %v2850 = vld [vmem:[#allocation2 + $0x169] sm:$0xff]
        %v2851 = vld [vmem:[#allocation2 + $0x171] sm:$0xff]
        %2884 = vrot.lane.b32.xlu0 %v2820, 32
        %v2885 = vpop.permute.xlu0 %2884
        %2886 = vrot.lane.b32.xlu0 %v2821, 32
        %v2887 = vpop.permute.xlu0 %2886
        %2888 = vrot.lane.b32.xlu0 %v2822, 32
        %v2889 = vpop.permute.xlu0 %2888
        %2890 = vrot.lane.b32.xlu0 %v2823, 32
        %v2891 = vpop.permute.xlu0 %2890
        %2892 = vrot.lane.b32.xlu0 %v2824, 32
        %v2893 = vpop.permute.xlu0 %2892
        %2894 = vrot.lane.b32.xlu0 %v2825, 32
        %v2895 = vpop.permute.xlu0 %2894
        %2896 = vrot.lane.b32.xlu0 %v2826, 32
        %v2897 = vpop.permute.xlu0 %2896
        %2898 = vrot.lane.b32.xlu0 %v2827, 32
        %v2899 = vpop.permute.xlu0 %2898
        %2900 = vrot.lane.b32.xlu0 %v2828, 32
        %v2901 = vpop.permute.xlu0 %2900
        %2902 = vrot.lane.b32.xlu0 %v2829, 32
        %v2903 = vpop.permute.xlu0 %2902
        %2904 = vrot.lane.b32.xlu0 %v2830, 32
        %v2905 = vpop.permute.xlu0 %2904
        %2906 = vrot.lane.b32.xlu0 %v2831, 32
        %v2907 = vpop.permute.xlu0 %2906
        %2908 = vrot.lane.b32.xlu0 %v2832, 32
        %v2909 = vpop.permute.xlu0 %2908
        %2910 = vrot.lane.b32.xlu0 %v2833, 32
        %v2911 = vpop.permute.xlu0 %2910
        %2912 = vrot.lane.b32.xlu0 %v2834, 32
        %v2913 = vpop.permute.xlu0 %2912
        %2914 = vrot.lane.b32.xlu0 %v2835, 32
        %v2915 = vpop.permute.xlu0 %2914
        %2916 = vrot.lane.b32.xlu0 %v2836, 32
        %v2917 = vpop.permute.xlu0 %2916
        %2918 = vrot.lane.b32.xlu0 %v2837, 32
        %v2919 = vpop.permute.xlu0 %2918
        %2920 = vrot.lane.b32.xlu0 %v2838, 32
        %v2921 = vpop.permute.xlu0 %2920
        %2922 = vrot.lane.b32.xlu0 %v2839, 32
        %v2923 = vpop.permute.xlu0 %2922
        %2924 = vrot.lane.b32.xlu0 %v2840, 32
        %v2925 = vpop.permute.xlu0 %2924
        %2926 = vrot.lane.b32.xlu0 %v2841, 32
        %v2927 = vpop.permute.xlu0 %2926
        %2928 = vrot.lane.b32.xlu0 %v2842, 32
        %v2929 = vpop.permute.xlu0 %2928
        %2930 = vrot.lane.b32.xlu0 %v2843, 32
        %v2931 = vpop.permute.xlu0 %2930
        %2932 = vrot.lane.b32.xlu0 %v2844, 32
        %v2933 = vpop.permute.xlu0 %2932
        %2934 = vrot.lane.b32.xlu0 %v2845, 32
        %v2935 = vpop.permute.xlu0 %2934
        %2936 = vrot.lane.b32.xlu0 %v2846, 32
        %v2937 = vpop.permute.xlu0 %2936
        %2938 = vrot.lane.b32.xlu0 %v2847, 32
        %v2939 = vpop.permute.xlu0 %2938
        %2940 = vrot.lane.b32.xlu0 %v2848, 32
        %v2941 = vpop.permute.xlu0 %2940
        %2942 = vrot.lane.b32.xlu0 %v2849, 32
        %v2943 = vpop.permute.xlu0 %2942
        %2944 = vrot.lane.b32.xlu0 %v2850, 32
        %v2945 = vpop.permute.xlu0 %2944
        %2946 = vrot.lane.b32.xlu0 %v2851, 32
        %v2947 = vpop.permute.xlu0 %2946
        %vm2980 = vcmask 523520
        %2981 = vst.msk [vmem:[#allocation3] sm:$0xff] %vm2980, %v2885
        %2982 = vst.msk [vmem:[#allocation3 + $0x28] sm:$0xff] %vm2980, %v2887
        %2983 = vst.msk [vmem:[#allocation3 + $0x50] sm:$0xff] %vm2980, %v2889
        %2984 = vst.msk [vmem:[#allocation3 + $0x78] sm:$0xff] %vm2980, %v2891
        %2985 = vst.msk [vmem:[#allocation3 + $0xa0] sm:$0xff] %vm2980, %v2893
        %2986 = vst.msk [vmem:[#allocation3 + $0xc8] sm:$0xff] %vm2980, %v2895
        %2987 = vst.msk [vmem:[#allocation3 + $0xf0] sm:$0xff] %vm2980, %v2897
        %2988 = vst.msk [vmem:[#allocation3 + $0x118] sm:$0xff] %vm2980, %v2899
        %2989 = vst.msk [vmem:[#allocation3 + $0x140] sm:$0xff] %vm2980, %v2901
        %2990 = vst.msk [vmem:[#allocation3 + $0x168] sm:$0xff] %vm2980, %v2903
        %2991 = vst.msk [vmem:[#allocation3 + $0x190] sm:$0xff] %vm2980, %v2905
        %2992 = vst.msk [vmem:[#allocation3 + $0x1b8] sm:$0xff] %vm2980, %v2907
        %2993 = vst.msk [vmem:[#allocation3 + $0x1e0] sm:$0xff] %vm2980, %v2909
        %2994 = vst.msk [vmem:[#allocation3 + $0x208] sm:$0xff] %vm2980, %v2911
        %2995 = vst.msk [vmem:[#allocation3 + $0x230] sm:$0xff] %vm2980, %v2913
        %2996 = vst.msk [vmem:[#allocation3 + $0x258] sm:$0xff] %vm2980, %v2915
        %2997 = vst.msk [vmem:[#allocation3 + $0x280] sm:$0xff] %vm2980, %v2917
        %2998 = vst.msk [vmem:[#allocation3 + $0x2a8] sm:$0xff] %vm2980, %v2919
        %2999 = vst.msk [vmem:[#allocation3 + $0x2d0] sm:$0xff] %vm2980, %v2921
        %3000 = vst.msk [vmem:[#allocation3 + $0x2f8] sm:$0xff] %vm2980, %v2923
        %3001 = vst.msk [vmem:[#allocation3 + $0x320] sm:$0xff] %vm2980, %v2925
        %3002 = vst.msk [vmem:[#allocation3 + $0x348] sm:$0xff] %vm2980, %v2927
        %3003 = vst.msk [vmem:[#allocation3 + $0x370] sm:$0xff] %vm2980, %v2929
        %3004 = vst.msk [vmem:[#allocation3 + $0x398] sm:$0xff] %vm2980, %v2931
        %3005 = vst.msk [vmem:[#allocation3 + $0x3c0] sm:$0xff] %vm2980, %v2933
        %3006 = vst.msk [vmem:[#allocation3 + $0x3e8] sm:$0xff] %vm2980, %v2935
        %3007 = vst.msk [vmem:[#allocation3 + $0x410] sm:$0xff] %vm2980, %v2937
        %3008 = vst.msk [vmem:[#allocation3 + $0x438] sm:$0xff] %vm2980, %v2939
        %3009 = vst.msk [vmem:[#allocation3 + $0x460] sm:$0xff] %vm2980, %v2941
        %3010 = vst.msk [vmem:[#allocation3 + $0x488] sm:$0xff] %vm2980, %v2943
        %3011 = vst.msk [vmem:[#allocation3 + $0x4b0] sm:$0xff] %vm2980, %v2945
        %3012 = vst.msk [vmem:[#allocation3 + $0x4d8] sm:$0xff] %vm2980, %v2947
        %v3013 = vld [vmem:[#allocation2 + $0x2] sm:$0xff]
        %v3014 = vld [vmem:[#allocation2 + $0xa] sm:$0xff]
        %v3015 = vld [vmem:[#allocation2 + $0x1a] sm:$0xff]
        %v3016 = vld [vmem:[#allocation2 + $0x22] sm:$0xff]
        %v3017 = vld [vmem:[#allocation2 + $0x32] sm:$0xff]
        %v3018 = vld [vmem:[#allocation2 + $0x3a] sm:$0xff]
        %v3019 = vld [vmem:[#allocation2 + $0x4a] sm:$0xff]
        %v3020 = vld [vmem:[#allocation2 + $0x52] sm:$0xff]
        %v3021 = vld [vmem:[#allocation2 + $0x62] sm:$0xff]
        %v3022 = vld [vmem:[#allocation2 + $0x6a] sm:$0xff]
        %v3023 = vld [vmem:[#allocation2 + $0x7a] sm:$0xff]
        %v3024 = vld [vmem:[#allocation2 + $0x82] sm:$0xff]
        %v3025 = vld [vmem:[#allocation2 + $0x92] sm:$0xff]
        %v3026 = vld [vmem:[#allocation2 + $0x9a] sm:$0xff]
        %v3027 = vld [vmem:[#allocation2 + $0xaa] sm:$0xff]
        %v3028 = vld [vmem:[#allocation2 + $0xb2] sm:$0xff]
        %v3029 = vld [vmem:[#allocation2 + $0xc2] sm:$0xff]
        %v3030 = vld [vmem:[#allocation2 + $0xca] sm:$0xff]
        %v3031 = vld [vmem:[#allocation2 + $0xda] sm:$0xff]
        %v3032 = vld [vmem:[#allocation2 + $0xe2] sm:$0xff]
        %v3033 = vld [vmem:[#allocation2 + $0xf2] sm:$0xff]
        %v3034 = vld [vmem:[#allocation2 + $0xfa] sm:$0xff]
        %v3035 = vld [vmem:[#allocation2 + $0x10a] sm:$0xff]
        %v3036 = vld [vmem:[#allocation2 + $0x112] sm:$0xff]
        %v3037 = vld [vmem:[#allocation2 + $0x122] sm:$0xff]
        %v3038 = vld [vmem:[#allocation2 + $0x12a] sm:$0xff]
        %v3039 = vld [vmem:[#allocation2 + $0x13a] sm:$0xff]
        %v3040 = vld [vmem:[#allocation2 + $0x142] sm:$0xff]
        %v3041 = vld [vmem:[#allocation2 + $0x152] sm:$0xff]
        %v3042 = vld [vmem:[#allocation2 + $0x15a] sm:$0xff]
        %v3043 = vld [vmem:[#allocation2 + $0x16a] sm:$0xff]
        %v3044 = vld [vmem:[#allocation2 + $0x172] sm:$0xff]
        %3077 = vrot.lane.b32.xlu0 %v3013, 64
        %v3078 = vpop.permute.xlu0 %3077
        %3079 = vrot.lane.b32.xlu0 %v3014, 64
        %v3080 = vpop.permute.xlu0 %3079
        %3081 = vrot.lane.b32.xlu0 %v3015, 64
        %v3082 = vpop.permute.xlu0 %3081
        %3083 = vrot.lane.b32.xlu0 %v3016, 64
        %v3084 = vpop.permute.xlu0 %3083
        %3085 = vrot.lane.b32.xlu0 %v3017, 64
        %v3086 = vpop.permute.xlu0 %3085
        %3087 = vrot.lane.b32.xlu0 %v3018, 64
        %v3088 = vpop.permute.xlu0 %3087
        %3089 = vrot.lane.b32.xlu0 %v3019, 64
        %v3090 = vpop.permute.xlu0 %3089
        %3091 = vrot.lane.b32.xlu0 %v3020, 64
        %v3092 = vpop.permute.xlu0 %3091
        %3093 = vrot.lane.b32.xlu0 %v3021, 64
        %v3094 = vpop.permute.xlu0 %3093
        %3095 = vrot.lane.b32.xlu0 %v3022, 64
        %v3096 = vpop.permute.xlu0 %3095
        %3097 = vrot.lane.b32.xlu0 %v3023, 64
        %v3098 = vpop.permute.xlu0 %3097
        %3099 = vrot.lane.b32.xlu0 %v3024, 64
        %v3100 = vpop.permute.xlu0 %3099
        %3101 = vrot.lane.b32.xlu0 %v3025, 64
        %v3102 = vpop.permute.xlu0 %3101
        %3103 = vrot.lane.b32.xlu0 %v3026, 64
        %v3104 = vpop.permute.xlu0 %3103
        %3105 = vrot.lane.b32.xlu0 %v3027, 64
        %v3106 = vpop.permute.xlu0 %3105
        %3107 = vrot.lane.b32.xlu0 %v3028, 64
        %v3108 = vpop.permute.xlu0 %3107
        %3109 = vrot.lane.b32.xlu0 %v3029, 64
        %v3110 = vpop.permute.xlu0 %3109
        %3111 = vrot.lane.b32.xlu0 %v3030, 64
        %v3112 = vpop.permute.xlu0 %3111
        %3113 = vrot.lane.b32.xlu0 %v3031, 64
        %v3114 = vpop.permute.xlu0 %3113
        %3115 = vrot.lane.b32.xlu0 %v3032, 64
        %v3116 = vpop.permute.xlu0 %3115
        %3117 = vrot.lane.b32.xlu0 %v3033, 64
        %v3118 = vpop.permute.xlu0 %3117
        %3119 = vrot.lane.b32.xlu0 %v3034, 64
        %v3120 = vpop.permute.xlu0 %3119
        %3121 = vrot.lane.b32.xlu0 %v3035, 64
        %v3122 = vpop.permute.xlu0 %3121
        %3123 = vrot.lane.b32.xlu0 %v3036, 64
        %v3124 = vpop.permute.xlu0 %3123
        %3125 = vrot.lane.b32.xlu0 %v3037, 64
        %v3126 = vpop.permute.xlu0 %3125
        %3127 = vrot.lane.b32.xlu0 %v3038, 64
        %v3128 = vpop.permute.xlu0 %3127
        %3129 = vrot.lane.b32.xlu0 %v3039, 64
        %v3130 = vpop.permute.xlu0 %3129
        %3131 = vrot.lane.b32.xlu0 %v3040, 64
        %v3132 = vpop.permute.xlu0 %3131
        %3133 = vrot.lane.b32.xlu0 %v3041, 64
        %v3134 = vpop.permute.xlu0 %3133
        %3135 = vrot.lane.b32.xlu0 %v3042, 64
        %v3136 = vpop.permute.xlu0 %3135
        %3137 = vrot.lane.b32.xlu0 %v3043, 64
        %v3138 = vpop.permute.xlu0 %3137
        %3139 = vrot.lane.b32.xlu0 %v3044, 64
        %v3140 = vpop.permute.xlu0 %3139
        %vm3173 = vcmask 785920
        %3174 = vst.msk [vmem:[#allocation3] sm:$0xff] %vm3173, %v3078
        %3175 = vst.msk [vmem:[#allocation3 + $0x28] sm:$0xff] %vm3173, %v3080
        %3176 = vst.msk [vmem:[#allocation3 + $0x50] sm:$0xff] %vm3173, %v3082
        %3177 = vst.msk [vmem:[#allocation3 + $0x78] sm:$0xff] %vm3173, %v3084
        %3178 = vst.msk [vmem:[#allocation3 + $0xa0] sm:$0xff] %vm3173, %v3086
        %3179 = vst.msk [vmem:[#allocation3 + $0xc8] sm:$0xff] %vm3173, %v3088
        %3180 = vst.msk [vmem:[#allocation3 + $0xf0] sm:$0xff] %vm3173, %v3090
        %3181 = vst.msk [vmem:[#allocation3 + $0x118] sm:$0xff] %vm3173, %v3092
        %3182 = vst.msk [vmem:[#allocation3 + $0x140] sm:$0xff] %vm3173, %v3094
        %3183 = vst.msk [vmem:[#allocation3 + $0x168] sm:$0xff] %vm3173, %v3096
        %3184 = vst.msk [vmem:[#allocation3 + $0x190] sm:$0xff] %vm3173, %v3098
        %3185 = vst.msk [vmem:[#allocation3 + $0x1b8] sm:$0xff] %vm3173, %v3100
        %3186 = vst.msk [vmem:[#allocation3 + $0x1e0] sm:$0xff] %vm3173, %v3102
        %3187 = vst.msk [vmem:[#allocation3 + $0x208] sm:$0xff] %vm3173, %v3104
        %3188 = vst.msk [vmem:[#allocation3 + $0x230] sm:$0xff] %vm3173, %v3106
        %3189 = vst.msk [vmem:[#allocation3 + $0x258] sm:$0xff] %vm3173, %v3108
        %3190 = vst.msk [vmem:[#allocation3 + $0x280] sm:$0xff] %vm3173, %v3110
        %3191 = vst.msk [vmem:[#allocation3 + $0x2a8] sm:$0xff] %vm3173, %v3112
        %3192 = vst.msk [vmem:[#allocation3 + $0x2d0] sm:$0xff] %vm3173, %v3114
        %3193 = vst.msk [vmem:[#allocation3 + $0x2f8] sm:$0xff] %vm3173, %v3116
        %3194 = vst.msk [vmem:[#allocation3 + $0x320] sm:$0xff] %vm3173, %v3118
        %3195 = vst.msk [vmem:[#allocation3 + $0x348] sm:$0xff] %vm3173, %v3120
        %3196 = vst.msk [vmem:[#allocation3 + $0x370] sm:$0xff] %vm3173, %v3122
        %3197 = vst.msk [vmem:[#allocation3 + $0x398] sm:$0xff] %vm3173, %v3124
        %3198 = vst.msk [vmem:[#allocation3 + $0x3c0] sm:$0xff] %vm3173, %v3126
        %3199 = vst.msk [vmem:[#allocation3 + $0x3e8] sm:$0xff] %vm3173, %v3128
        %3200 = vst.msk [vmem:[#allocation3 + $0x410] sm:$0xff] %vm3173, %v3130
        %3201 = vst.msk [vmem:[#allocation3 + $0x438] sm:$0xff] %vm3173, %v3132
        %3202 = vst.msk [vmem:[#allocation3 + $0x460] sm:$0xff] %vm3173, %v3134
        %3203 = vst.msk [vmem:[#allocation3 + $0x488] sm:$0xff] %vm3173, %v3136
        %3204 = vst.msk [vmem:[#allocation3 + $0x4b0] sm:$0xff] %vm3173, %v3138
        %3205 = vst.msk [vmem:[#allocation3 + $0x4d8] sm:$0xff] %vm3173, %v3140
        %v3206 = vld [vmem:[%s607] sm:$0xff]
        %v3207 = vld [vmem:[%s607 + $0x8] sm:$0xff]
        %v3208 = vld [vmem:[%s607 + $0x18] sm:$0xff]
        %v3209 = vld [vmem:[%s607 + $0x20] sm:$0xff]
        %v3210 = vld [vmem:[%s607 + $0x30] sm:$0xff]
        %v3211 = vld [vmem:[%s607 + $0x38] sm:$0xff]
        %v3212 = vld [vmem:[%s607 + $0x48] sm:$0xff]
        %v3213 = vld [vmem:[%s607 + $0x50] sm:$0xff]
        %v3214 = vld [vmem:[%s607 + $0x60] sm:$0xff]
        %v3215 = vld [vmem:[%s607 + $0x68] sm:$0xff]
        %v3216 = vld [vmem:[%s607 + $0x78] sm:$0xff]
        %v3217 = vld [vmem:[%s607 + $0x80] sm:$0xff]
        %v3218 = vld [vmem:[%s607 + $0x90] sm:$0xff]
        %v3219 = vld [vmem:[%s607 + $0x98] sm:$0xff]
        %v3220 = vld [vmem:[%s607 + $0xa8] sm:$0xff]
        %v3221 = vld [vmem:[%s607 + $0xb0] sm:$0xff]
        %v3222 = vld [vmem:[%s607 + $0xc0] sm:$0xff]
        %v3223 = vld [vmem:[%s607 + $0xc8] sm:$0xff]
        %v3224 = vld [vmem:[%s607 + $0xd8] sm:$0xff]
        %v3225 = vld [vmem:[%s607 + $0xe0] sm:$0xff]
        %v3226 = vld [vmem:[%s607 + $0xf0] sm:$0xff]
        %v3227 = vld [vmem:[%s607 + $0xf8] sm:$0xff]
        %v3228 = vld [vmem:[%s607 + $0x108] sm:$0xff]
        %v3229 = vld [vmem:[%s607 + $0x110] sm:$0xff]
        %v3230 = vld [vmem:[%s607 + $0x120] sm:$0xff]
        %v3231 = vld [vmem:[%s607 + $0x128] sm:$0xff]
        %v3232 = vld [vmem:[%s607 + $0x138] sm:$0xff]
        %v3233 = vld [vmem:[%s607 + $0x140] sm:$0xff]
        %v3234 = vld [vmem:[%s607 + $0x150] sm:$0xff]
        %v3235 = vld [vmem:[%s607 + $0x158] sm:$0xff]
        %v3236 = vld [vmem:[%s607 + $0x168] sm:$0xff]
        %v3237 = vld [vmem:[%s607 + $0x170] sm:$0xff]
        %3270 = vrot.lane.b32.xlu0 %v3206, 96
        %v3271 = vpop.permute.xlu0 %3270
        %3272 = vrot.lane.b32.xlu0 %v3207, 96
        %v3273 = vpop.permute.xlu0 %3272
        %3274 = vrot.lane.b32.xlu0 %v3208, 96
        %v3275 = vpop.permute.xlu0 %3274
        %3276 = vrot.lane.b32.xlu0 %v3209, 96
        %v3277 = vpop.permute.xlu0 %3276
        %3278 = vrot.lane.b32.xlu0 %v3210, 96
        %v3279 = vpop.permute.xlu0 %3278
        %3280 = vrot.lane.b32.xlu0 %v3211, 96
        %v3281 = vpop.permute.xlu0 %3280
        %3282 = vrot.lane.b32.xlu0 %v3212, 96
        %v3283 = vpop.permute.xlu0 %3282
        %3284 = vrot.lane.b32.xlu0 %v3213, 96
        %v3285 = vpop.permute.xlu0 %3284
        %3286 = vrot.lane.b32.xlu0 %v3214, 96
        %v3287 = vpop.permute.xlu0 %3286
        %3288 = vrot.lane.b32.xlu0 %v3215, 96
        %v3289 = vpop.permute.xlu0 %3288
        %3290 = vrot.lane.b32.xlu0 %v3216, 96
        %v3291 = vpop.permute.xlu0 %3290
        %3292 = vrot.lane.b32.xlu0 %v3217, 96
        %v3293 = vpop.permute.xlu0 %3292
        %3294 = vrot.lane.b32.xlu0 %v3218, 96
        %v3295 = vpop.permute.xlu0 %3294
        %3296 = vrot.lane.b32.xlu0 %v3219, 96
        %v3297 = vpop.permute.xlu0 %3296
        %3298 = vrot.lane.b32.xlu0 %v3220, 96
        %v3299 = vpop.permute.xlu0 %3298
        %3300 = vrot.lane.b32.xlu0 %v3221, 96
        %v3301 = vpop.permute.xlu0 %3300
        %3302 = vrot.lane.b32.xlu0 %v3222, 96
        %v3303 = vpop.permute.xlu0 %3302
        %3304 = vrot.lane.b32.xlu0 %v3223, 96
        %v3305 = vpop.permute.xlu0 %3304
        %3306 = vrot.lane.b32.xlu0 %v3224, 96
        %v3307 = vpop.permute.xlu0 %3306
        %3308 = vrot.lane.b32.xlu0 %v3225, 96
        %v3309 = vpop.permute.xlu0 %3308
        %3310 = vrot.lane.b32.xlu0 %v3226, 96
        %v3311 = vpop.permute.xlu0 %3310
        %3312 = vrot.lane.b32.xlu0 %v3227, 96
        %v3313 = vpop.permute.xlu0 %3312
        %3314 = vrot.lane.b32.xlu0 %v3228, 96
        %v3315 = vpop.permute.xlu0 %3314
        %3316 = vrot.lane.b32.xlu0 %v3229, 96
        %v3317 = vpop.permute.xlu0 %3316
        %3318 = vrot.lane.b32.xlu0 %v3230, 96
        %v3319 = vpop.permute.xlu0 %3318
        %3320 = vrot.lane.b32.xlu0 %v3231, 96
        %v3321 = vpop.permute.xlu0 %3320
        %3322 = vrot.lane.b32.xlu0 %v3232, 96
        %v3323 = vpop.permute.xlu0 %3322
        %3324 = vrot.lane.b32.xlu0 %v3233, 96
        %v3325 = vpop.permute.xlu0 %3324
        %3326 = vrot.lane.b32.xlu0 %v3234, 96
        %v3327 = vpop.permute.xlu0 %3326
        %3328 = vrot.lane.b32.xlu0 %v3235, 96
        %v3329 = vpop.permute.xlu0 %3328
        %3330 = vrot.lane.b32.xlu0 %v3236, 96
        %v3331 = vpop.permute.xlu0 %3330
        %3332 = vrot.lane.b32.xlu0 %v3237, 96
        %v3333 = vpop.permute.xlu0 %3332
        %vm3366 = vcmask 1048320
        %3367 = vst.msk [vmem:[#allocation3] sm:$0xff] %vm3366, %v3271
        %3368 = vst.msk [vmem:[#allocation3 + $0x28] sm:$0xff] %vm3366, %v3273
        %3369 = vst.msk [vmem:[#allocation3 + $0x50] sm:$0xff] %vm3366, %v3275
        %3370 = vst.msk [vmem:[#allocation3 + $0x78] sm:$0xff] %vm3366, %v3277
        %3371 = vst.msk [vmem:[#allocation3 + $0xa0] sm:$0xff] %vm3366, %v3279
        %3372 = vst.msk [vmem:[#allocation3 + $0xc8] sm:$0xff] %vm3366, %v3281
        %3373 = vst.msk [vmem:[#allocation3 + $0xf0] sm:$0xff] %vm3366, %v3283
        %3374 = vst.msk [vmem:[#allocation3 + $0x118] sm:$0xff] %vm3366, %v3285
        %3375 = vst.msk [vmem:[#allocation3 + $0x140] sm:$0xff] %vm3366, %v3287
        %3376 = vst.msk [vmem:[#allocation3 + $0x168] sm:$0xff] %vm3366, %v3289
        %3377 = vst.msk [vmem:[#allocation3 + $0x190] sm:$0xff] %vm3366, %v3291
        %3378 = vst.msk [vmem:[#allocation3 + $0x1b8] sm:$0xff] %vm3366, %v3293
        %3379 = vst.msk [vmem:[#allocation3 + $0x1e0] sm:$0xff] %vm3366, %v3295
        %3380 = vst.msk [vmem:[#allocation3 + $0x208] sm:$0xff] %vm3366, %v3297
        %3381 = vst.msk [vmem:[#allocation3 + $0x230] sm:$0xff] %vm3366, %v3299
        %3382 = vst.msk [vmem:[#allocation3 + $0x258] sm:$0xff] %vm3366, %v3301
        %3383 = vst.msk [vmem:[#allocation3 + $0x280] sm:$0xff] %vm3366, %v3303
        %3384 = vst.msk [vmem:[#allocation3 + $0x2a8] sm:$0xff] %vm3366, %v3305
        %3385 = vst.msk [vmem:[#allocation3 + $0x2d0] sm:$0xff] %vm3366, %v3307
        %3386 = vst.msk [vmem:[#allocation3 + $0x2f8] sm:$0xff] %vm3366, %v3309
        %3387 = vst.msk [vmem:[#allocation3 + $0x320] sm:$0xff] %vm3366, %v3311
        %3388 = vst.msk [vmem:[#allocation3 + $0x348] sm:$0xff] %vm3366, %v3313
        %3389 = vst.msk [vmem:[#allocation3 + $0x370] sm:$0xff] %vm3366, %v3315
        %3390 = vst.msk [vmem:[#allocation3 + $0x398] sm:$0xff] %vm3366, %v3317
        %3391 = vst.msk [vmem:[#allocation3 + $0x3c0] sm:$0xff] %vm3366, %v3319
        %3392 = vst.msk [vmem:[#allocation3 + $0x3e8] sm:$0xff] %vm3366, %v3321
        %3393 = vst.msk [vmem:[#allocation3 + $0x410] sm:$0xff] %vm3366, %v3323
        %3394 = vst.msk [vmem:[#allocation3 + $0x438] sm:$0xff] %vm3366, %v3325
        %3395 = vst.msk [vmem:[#allocation3 + $0x460] sm:$0xff] %vm3366, %v3327
        %3396 = vst.msk [vmem:[#allocation3 + $0x488] sm:$0xff] %vm3366, %v3329
        %3397 = vst.msk [vmem:[#allocation3 + $0x4b0] sm:$0xff] %vm3366, %v3331
        %3398 = vst.msk [vmem:[#allocation3 + $0x4d8] sm:$0xff] %vm3366, %v3333
        %v3399 = vld [vmem:[%s607 + $0x1] sm:$0xff]
        %v3400 = vld [vmem:[%s607 + $0x9] sm:$0xff]
        %v3401 = vld [vmem:[%s607 + $0x19] sm:$0xff]
        %v3402 = vld [vmem:[%s607 + $0x21] sm:$0xff]
        %v3403 = vld [vmem:[%s607 + $0x31] sm:$0xff]
        %v3404 = vld [vmem:[%s607 + $0x39] sm:$0xff]
        %v3405 = vld [vmem:[%s607 + $0x49] sm:$0xff]
        %v3406 = vld [vmem:[%s607 + $0x51] sm:$0xff]
        %v3407 = vld [vmem:[%s607 + $0x61] sm:$0xff]
        %v3408 = vld [vmem:[%s607 + $0x69] sm:$0xff]
        %v3409 = vld [vmem:[%s607 + $0x79] sm:$0xff]
        %v3410 = vld [vmem:[%s607 + $0x81] sm:$0xff]
        %v3411 = vld [vmem:[%s607 + $0x91] sm:$0xff]
        %v3412 = vld [vmem:[%s607 + $0x99] sm:$0xff]
        %v3413 = vld [vmem:[%s607 + $0xa9] sm:$0xff]
        %v3414 = vld [vmem:[%s607 + $0xb1] sm:$0xff]
        %v3415 = vld [vmem:[%s607 + $0xc1] sm:$0xff]
        %v3416 = vld [vmem:[%s607 + $0xc9] sm:$0xff]
        %v3417 = vld [vmem:[%s607 + $0xd9] sm:$0xff]
        %v3418 = vld [vmem:[%s607 + $0xe1] sm:$0xff]
        %v3419 = vld [vmem:[%s607 + $0xf1] sm:$0xff]
        %v3420 = vld [vmem:[%s607 + $0xf9] sm:$0xff]
        %v3421 = vld [vmem:[%s607 + $0x109] sm:$0xff]
        %v3422 = vld [vmem:[%s607 + $0x111] sm:$0xff]
        %v3423 = vld [vmem:[%s607 + $0x121] sm:$0xff]
        %v3424 = vld [vmem:[%s607 + $0x129] sm:$0xff]
        %v3425 = vld [vmem:[%s607 + $0x139] sm:$0xff]
        %v3426 = vld [vmem:[%s607 + $0x141] sm:$0xff]
        %v3427 = vld [vmem:[%s607 + $0x151] sm:$0xff]
        %v3428 = vld [vmem:[%s607 + $0x159] sm:$0xff]
        %v3429 = vld [vmem:[%s607 + $0x169] sm:$0xff]
        %v3430 = vld [vmem:[%s607 + $0x171] sm:$0xff]
        %3431 = vst.msk [vmem:[#allocation3 + $0x8] sm:$0xff] %vm2723, %v3399
        %3432 = vst.msk [vmem:[#allocation3 + $0x30] sm:$0xff] %vm2723, %v3400
        %3433 = vst.msk [vmem:[#allocation3 + $0x58] sm:$0xff] %vm2723, %v3401
        %3434 = vst.msk [vmem:[#allocation3 + $0x80] sm:$0xff] %vm2723, %v3402
        %3435 = vst.msk [vmem:[#allocation3 + $0xa8] sm:$0xff] %vm2723, %v3403
        %3436 = vst.msk [vmem:[#allocation3 + $0xd0] sm:$0xff] %vm2723, %v3404
        %3437 = vst.msk [vmem:[#allocation3 + $0xf8] sm:$0xff] %vm2723, %v3405
        %3438 = vst.msk [vmem:[#allocation3 + $0x120] sm:$0xff] %vm2723, %v3406
        %3439 = vst.msk [vmem:[#allocation3 + $0x148] sm:$0xff] %vm2723, %v3407
        %3440 = vst.msk [vmem:[#allocation3 + $0x170] sm:$0xff] %vm2723, %v3408
        %3441 = vst.msk [vmem:[#allocation3 + $0x198] sm:$0xff] %vm2723, %v3409
        %3442 = vst.msk [vmem:[#allocation3 + $0x1c0] sm:$0xff] %vm2723, %v3410
        %3443 = vst.msk [vmem:[#allocation3 + $0x1e8] sm:$0xff] %vm2723, %v3411
        %3444 = vst.msk [vmem:[#allocation3 + $0x210] sm:$0xff] %vm2723, %v3412
        %3445 = vst.msk [vmem:[#allocation3 + $0x238] sm:$0xff] %vm2723, %v3413
        %3446 = vst.msk [vmem:[#allocation3 + $0x260] sm:$0xff] %vm2723, %v3414
        %3447 = vst.msk [vmem:[#allocation3 + $0x288] sm:$0xff] %vm2723, %v3415
        %3448 = vst.msk [vmem:[#allocation3 + $0x2b0] sm:$0xff] %vm2723, %v3416
        %3449 = vst.msk [vmem:[#allocation3 + $0x2d8] sm:$0xff] %vm2723, %v3417
        %3450 = vst.msk [vmem:[#allocation3 + $0x300] sm:$0xff] %vm2723, %v3418
        %3451 = vst.msk [vmem:[#allocation3 + $0x328] sm:$0xff] %vm2723, %v3419
        %3452 = vst.msk [vmem:[#allocation3 + $0x350] sm:$0xff] %vm2723, %v3420
        %3453 = vst.msk [vmem:[#allocation3 + $0x378] sm:$0xff] %vm2723, %v3421
        %3454 = vst.msk [vmem:[#allocation3 + $0x3a0] sm:$0xff] %vm2723, %v3422
        %3455 = vst.msk [vmem:[#allocation3 + $0x3c8] sm:$0xff] %vm2723, %v3423
        %3456 = vst.msk [vmem:[#allocation3 + $0x3f0] sm:$0xff] %vm2723, %v3424
        %3457 = vst.msk [vmem:[#allocation3 + $0x418] sm:$0xff] %vm2723, %v3425
        %3458 = vst.msk [vmem:[#allocation3 + $0x440] sm:$0xff] %vm2723, %v3426
        %3459 = vst.msk [vmem:[#allocation3 + $0x468] sm:$0xff] %vm2723, %v3427
        %3460 = vst.msk [vmem:[#allocation3 + $0x490] sm:$0xff] %vm2723, %v3428
        %3461 = vst.msk [vmem:[#allocation3 + $0x4b8] sm:$0xff] %vm2723, %v3429
        %3462 = vst.msk [vmem:[#allocation3 + $0x4e0] sm:$0xff] %vm2723, %v3430
        %v3463 = vld [vmem:[%s607 + $0x2] sm:$0xff]
        %v3464 = vld [vmem:[%s607 + $0xa] sm:$0xff]
        %v3465 = vld [vmem:[%s607 + $0x1a] sm:$0xff]
        %v3466 = vld [vmem:[%s607 + $0x22] sm:$0xff]
        %v3467 = vld [vmem:[%s607 + $0x32] sm:$0xff]
        %v3468 = vld [vmem:[%s607 + $0x3a] sm:$0xff]
        %v3469 = vld [vmem:[%s607 + $0x4a] sm:$0xff]
        %v3470 = vld [vmem:[%s607 + $0x52] sm:$0xff]
        %v3471 = vld [vmem:[%s607 + $0x62] sm:$0xff]
        %v3472 = vld [vmem:[%s607 + $0x6a] sm:$0xff]
        %v3473 = vld [vmem:[%s607 + $0x7a] sm:$0xff]
        %v3474 = vld [vmem:[%s607 + $0x82] sm:$0xff]
        %v3475 = vld [vmem:[%s607 + $0x92] sm:$0xff]
        %v3476 = vld [vmem:[%s607 + $0x9a] sm:$0xff]
        %v3477 = vld [vmem:[%s607 + $0xaa] sm:$0xff]
        %v3478 = vld [vmem:[%s607 + $0xb2] sm:$0xff]
        %v3479 = vld [vmem:[%s607 + $0xc2] sm:$0xff]
        %v3480 = vld [vmem:[%s607 + $0xca] sm:$0xff]
        %v3481 = vld [vmem:[%s607 + $0xda] sm:$0xff]
        %v3482 = vld [vmem:[%s607 + $0xe2] sm:$0xff]
        %v3483 = vld [vmem:[%s607 + $0xf2] sm:$0xff]
        %v3484 = vld [vmem:[%s607 + $0xfa] sm:$0xff]
        %v3485 = vld [vmem:[%s607 + $0x10a] sm:$0xff]
        %v3486 = vld [vmem:[%s607 + $0x112] sm:$0xff]
        %v3487 = vld [vmem:[%s607 + $0x122] sm:$0xff]
        %v3488 = vld [vmem:[%s607 + $0x12a] sm:$0xff]
        %v3489 = vld [vmem:[%s607 + $0x13a] sm:$0xff]
        %v3490 = vld [vmem:[%s607 + $0x142] sm:$0xff]
        %v3491 = vld [vmem:[%s607 + $0x152] sm:$0xff]
        %v3492 = vld [vmem:[%s607 + $0x15a] sm:$0xff]
        %v3493 = vld [vmem:[%s607 + $0x16a] sm:$0xff]
        %v3494 = vld [vmem:[%s607 + $0x172] sm:$0xff]
        %3527 = vrot.lane.b32.xlu0 %v3463, 32
        %v3528 = vpop.permute.xlu0 %3527
        %3529 = vrot.lane.b32.xlu0 %v3464, 32
        %v3530 = vpop.permute.xlu0 %3529
        %3531 = vrot.lane.b32.xlu0 %v3465, 32
        %v3532 = vpop.permute.xlu0 %3531
        %3533 = vrot.lane.b32.xlu0 %v3466, 32
        %v3534 = vpop.permute.xlu0 %3533
        %3535 = vrot.lane.b32.xlu0 %v3467, 32
        %v3536 = vpop.permute.xlu0 %3535
        %3537 = vrot.lane.b32.xlu0 %v3468, 32
        %v3538 = vpop.permute.xlu0 %3537
        %3539 = vrot.lane.b32.xlu0 %v3469, 32
        %v3540 = vpop.permute.xlu0 %3539
        %3541 = vrot.lane.b32.xlu0 %v3470, 32
        %v3542 = vpop.permute.xlu0 %3541
        %3543 = vrot.lane.b32.xlu0 %v3471, 32
        %v3544 = vpop.permute.xlu0 %3543
        %3545 = vrot.lane.b32.xlu0 %v3472, 32
        %v3546 = vpop.permute.xlu0 %3545
        %3547 = vrot.lane.b32.xlu0 %v3473, 32
        %v3548 = vpop.permute.xlu0 %3547
        %3549 = vrot.lane.b32.xlu0 %v3474, 32
        %v3550 = vpop.permute.xlu0 %3549
        %3551 = vrot.lane.b32.xlu0 %v3475, 32
        %v3552 = vpop.permute.xlu0 %3551
        %3553 = vrot.lane.b32.xlu0 %v3476, 32
        %v3554 = vpop.permute.xlu0 %3553
        %3555 = vrot.lane.b32.xlu0 %v3477, 32
        %v3556 = vpop.permute.xlu0 %3555
        %3557 = vrot.lane.b32.xlu0 %v3478, 32
        %v3558 = vpop.permute.xlu0 %3557
        %3559 = vrot.lane.b32.xlu0 %v3479, 32
        %v3560 = vpop.permute.xlu0 %3559
        %3561 = vrot.lane.b32.xlu0 %v3480, 32
        %v3562 = vpop.permute.xlu0 %3561
        %3563 = vrot.lane.b32.xlu0 %v3481, 32
        %v3564 = vpop.permute.xlu0 %3563
        %3565 = vrot.lane.b32.xlu0 %v3482, 32
        %v3566 = vpop.permute.xlu0 %3565
        %3567 = vrot.lane.b32.xlu0 %v3483, 32
        %v3568 = vpop.permute.xlu0 %3567
        %3569 = vrot.lane.b32.xlu0 %v3484, 32
        %v3570 = vpop.permute.xlu0 %3569
        %3571 = vrot.lane.b32.xlu0 %v3485, 32
        %v3572 = vpop.permute.xlu0 %3571
        %3573 = vrot.lane.b32.xlu0 %v3486, 32
        %v3574 = vpop.permute.xlu0 %3573
        %3575 = vrot.lane.b32.xlu0 %v3487, 32
        %v3576 = vpop.permute.xlu0 %3575
        %3577 = vrot.lane.b32.xlu0 %v3488, 32
        %v3578 = vpop.permute.xlu0 %3577
        %3579 = vrot.lane.b32.xlu0 %v3489, 32
        %v3580 = vpop.permute.xlu0 %3579
        %3581 = vrot.lane.b32.xlu0 %v3490, 32
        %v3582 = vpop.permute.xlu0 %3581
        %3583 = vrot.lane.b32.xlu0 %v3491, 32
        %v3584 = vpop.permute.xlu0 %3583
        %3585 = vrot.lane.b32.xlu0 %v3492, 32
        %v3586 = vpop.permute.xlu0 %3585
        %3587 = vrot.lane.b32.xlu0 %v3493, 32
        %v3588 = vpop.permute.xlu0 %3587
        %3589 = vrot.lane.b32.xlu0 %v3494, 32
        %v3590 = vpop.permute.xlu0 %3589
        %3623 = vst.msk [vmem:[#allocation3 + $0x8] sm:$0xff] %vm2980, %v3528
        %3624 = vst.msk [vmem:[#allocation3 + $0x30] sm:$0xff] %vm2980, %v3530
        %3625 = vst.msk [vmem:[#allocation3 + $0x58] sm:$0xff] %vm2980, %v3532
        %3626 = vst.msk [vmem:[#allocation3 + $0x80] sm:$0xff] %vm2980, %v3534
        %3627 = vst.msk [vmem:[#allocation3 + $0xa8] sm:$0xff] %vm2980, %v3536
        %3628 = vst.msk [vmem:[#allocation3 + $0xd0] sm:$0xff] %vm2980, %v3538
        %3629 = vst.msk [vmem:[#allocation3 + $0xf8] sm:$0xff] %vm2980, %v3540
        %3630 = vst.msk [vmem:[#allocation3 + $0x120] sm:$0xff] %vm2980, %v3542
        %3631 = vst.msk [vmem:[#allocation3 + $0x148] sm:$0xff] %vm2980, %v3544
        %3632 = vst.msk [vmem:[#allocation3 + $0x170] sm:$0xff] %vm2980, %v3546
        %3633 = vst.msk [vmem:[#allocation3 + $0x198] sm:$0xff] %vm2980, %v3548
        %3634 = vst.msk [vmem:[#allocation3 + $0x1c0] sm:$0xff] %vm2980, %v3550
        %3635 = vst.msk [vmem:[#allocation3 + $0x1e8] sm:$0xff] %vm2980, %v3552
        %3636 = vst.msk [vmem:[#allocation3 + $0x210] sm:$0xff] %vm2980, %v3554
        %3637 = vst.msk [vmem:[#allocation3 + $0x238] sm:$0xff] %vm2980, %v3556
        %3638 = vst.msk [vmem:[#allocation3 + $0x260] sm:$0xff] %vm2980, %v3558
        %3639 = vst.msk [vmem:[#allocation3 + $0x288] sm:$0xff] %vm2980, %v3560
        %3640 = vst.msk [vmem:[#allocation3 + $0x2b0] sm:$0xff] %vm2980, %v3562
        %3641 = vst.msk [vmem:[#allocation3 + $0x2d8] sm:$0xff] %vm2980, %v3564
        %3642 = vst.msk [vmem:[#allocation3 + $0x300] sm:$0xff] %vm2980, %v3566
        %3643 = vst.msk [vmem:[#allocation3 + $0x328] sm:$0xff] %vm2980, %v3568
        %3644 = vst.msk [vmem:[#allocation3 + $0x350] sm:$0xff] %vm2980, %v3570
        %3645 = vst.msk [vmem:[#allocation3 + $0x378] sm:$0xff] %vm2980, %v3572
        %3646 = vst.msk [vmem:[#allocation3 + $0x3a0] sm:$0xff] %vm2980, %v3574
        %3647 = vst.msk [vmem:[#allocation3 + $0x3c8] sm:$0xff] %vm2980, %v3576
        %3648 = vst.msk [vmem:[#allocation3 + $0x3f0] sm:$0xff] %vm2980, %v3578
        %3649 = vst.msk [vmem:[#allocation3 + $0x418] sm:$0xff] %vm2980, %v3580
        %3650 = vst.msk [vmem:[#allocation3 + $0x440] sm:$0xff] %vm2980, %v3582
        %3651 = vst.msk [vmem:[#allocation3 + $0x468] sm:$0xff] %vm2980, %v3584
        %3652 = vst.msk [vmem:[#allocation3 + $0x490] sm:$0xff] %vm2980, %v3586
        %3653 = vst.msk [vmem:[#allocation3 + $0x4b8] sm:$0xff] %vm2980, %v3588
        %3654 = vst.msk [vmem:[#allocation3 + $0x4e0] sm:$0xff] %vm2980, %v3590
        %v3655 = vld [vmem:[%s1670] sm:$0xff]
        %v3656 = vld [vmem:[%s1670 + $0x8] sm:$0xff]
        %v3657 = vld [vmem:[%s1670 + $0x18] sm:$0xff]
        %v3658 = vld [vmem:[%s1670 + $0x20] sm:$0xff]
        %v3659 = vld [vmem:[%s1670 + $0x30] sm:$0xff]
        %v3660 = vld [vmem:[%s1670 + $0x38] sm:$0xff]
        %v3661 = vld [vmem:[%s1670 + $0x48] sm:$0xff]
        %v3662 = vld [vmem:[%s1670 + $0x50] sm:$0xff]
        %v3663 = vld [vmem:[%s1670 + $0x60] sm:$0xff]
        %v3664 = vld [vmem:[%s1670 + $0x68] sm:$0xff]
        %v3665 = vld [vmem:[%s1670 + $0x78] sm:$0xff]
        %v3666 = vld [vmem:[%s1670 + $0x80] sm:$0xff]
        %v3667 = vld [vmem:[%s1670 + $0x90] sm:$0xff]
        %v3668 = vld [vmem:[%s1670 + $0x98] sm:$0xff]
        %v3669 = vld [vmem:[%s1670 + $0xa8] sm:$0xff]
        %v3670 = vld [vmem:[%s1670 + $0xb0] sm:$0xff]
        %v3671 = vld [vmem:[%s1670 + $0xc0] sm:$0xff]
        %v3672 = vld [vmem:[%s1670 + $0xc8] sm:$0xff]
        %v3673 = vld [vmem:[%s1670 + $0xd8] sm:$0xff]
        %v3674 = vld [vmem:[%s1670 + $0xe0] sm:$0xff]
        %v3675 = vld [vmem:[%s1670 + $0xf0] sm:$0xff]
        %v3676 = vld [vmem:[%s1670 + $0xf8] sm:$0xff]
        %v3677 = vld [vmem:[%s1670 + $0x108] sm:$0xff]
        %v3678 = vld [vmem:[%s1670 + $0x110] sm:$0xff]
        %v3679 = vld [vmem:[%s1670 + $0x120] sm:$0xff]
        %v3680 = vld [vmem:[%s1670 + $0x128] sm:$0xff]
        %v3681 = vld [vmem:[%s1670 + $0x138] sm:$0xff]
        %v3682 = vld [vmem:[%s1670 + $0x140] sm:$0xff]
        %v3683 = vld [vmem:[%s1670 + $0x150] sm:$0xff]
        %v3684 = vld [vmem:[%s1670 + $0x158] sm:$0xff]
        %v3685 = vld [vmem:[%s1670 + $0x168] sm:$0xff]
        %v3686 = vld [vmem:[%s1670 + $0x170] sm:$0xff]
        %3719 = vrot.lane.b32.xlu0 %v3655, 64
        %v3720 = vpop.permute.xlu0 %3719
        %3721 = vrot.lane.b32.xlu0 %v3656, 64
        %v3722 = vpop.permute.xlu0 %3721
        %3723 = vrot.lane.b32.xlu0 %v3657, 64
        %v3724 = vpop.permute.xlu0 %3723
        %3725 = vrot.lane.b32.xlu0 %v3658, 64
        %v3726 = vpop.permute.xlu0 %3725
        %3727 = vrot.lane.b32.xlu0 %v3659, 64
        %v3728 = vpop.permute.xlu0 %3727
        %3729 = vrot.lane.b32.xlu0 %v3660, 64
        %v3730 = vpop.permute.xlu0 %3729
        %3731 = vrot.lane.b32.xlu0 %v3661, 64
        %v3732 = vpop.permute.xlu0 %3731
        %3733 = vrot.lane.b32.xlu0 %v3662, 64
        %v3734 = vpop.permute.xlu0 %3733
        %3735 = vrot.lane.b32.xlu0 %v3663, 64
        %v3736 = vpop.permute.xlu0 %3735
        %3737 = vrot.lane.b32.xlu0 %v3664, 64
        %v3738 = vpop.permute.xlu0 %3737
        %3739 = vrot.lane.b32.xlu0 %v3665, 64
        %v3740 = vpop.permute.xlu0 %3739
        %3741 = vrot.lane.b32.xlu0 %v3666, 64
        %v3742 = vpop.permute.xlu0 %3741
        %3743 = vrot.lane.b32.xlu0 %v3667, 64
        %v3744 = vpop.permute.xlu0 %3743
        %3745 = vrot.lane.b32.xlu0 %v3668, 64
        %v3746 = vpop.permute.xlu0 %3745
        %3747 = vrot.lane.b32.xlu0 %v3669, 64
        %v3748 = vpop.permute.xlu0 %3747
        %3749 = vrot.lane.b32.xlu0 %v3670, 64
        %v3750 = vpop.permute.xlu0 %3749
        %3751 = vrot.lane.b32.xlu0 %v3671, 64
        %v3752 = vpop.permute.xlu0 %3751
        %3753 = vrot.lane.b32.xlu0 %v3672, 64
        %v3754 = vpop.permute.xlu0 %3753
        %3755 = vrot.lane.b32.xlu0 %v3673, 64
        %v3756 = vpop.permute.xlu0 %3755
        %3757 = vrot.lane.b32.xlu0 %v3674, 64
        %v3758 = vpop.permute.xlu0 %3757
        %3759 = vrot.lane.b32.xlu0 %v3675, 64
        %v3760 = vpop.permute.xlu0 %3759
        %3761 = vrot.lane.b32.xlu0 %v3676, 64
        %v3762 = vpop.permute.xlu0 %3761
        %3763 = vrot.lane.b32.xlu0 %v3677, 64
        %v3764 = vpop.permute.xlu0 %3763
        %3765 = vrot.lane.b32.xlu0 %v3678, 64
        %v3766 = vpop.permute.xlu0 %3765
        %3767 = vrot.lane.b32.xlu0 %v3679, 64
        %v3768 = vpop.permute.xlu0 %3767
        %3769 = vrot.lane.b32.xlu0 %v3680, 64
        %v3770 = vpop.permute.xlu0 %3769
        %3771 = vrot.lane.b32.xlu0 %v3681, 64
        %v3772 = vpop.permute.xlu0 %3771
        %3773 = vrot.lane.b32.xlu0 %v3682, 64
        %v3774 = vpop.permute.xlu0 %3773
        %3775 = vrot.lane.b32.xlu0 %v3683, 64
        %v3776 = vpop.permute.xlu0 %3775
        %3777 = vrot.lane.b32.xlu0 %v3684, 64
        %v3778 = vpop.permute.xlu0 %3777
        %3779 = vrot.lane.b32.xlu0 %v3685, 64
        %v3780 = vpop.permute.xlu0 %3779
        %3781 = vrot.lane.b32.xlu0 %v3686, 64
        %v3782 = vpop.permute.xlu0 %3781
        %3815 = vst.msk [vmem:[#allocation3 + $0x8] sm:$0xff] %vm3173, %v3720
        %3816 = vst.msk [vmem:[#allocation3 + $0x30] sm:$0xff] %vm3173, %v3722
        %3817 = vst.msk [vmem:[#allocation3 + $0x58] sm:$0xff] %vm3173, %v3724
        %3818 = vst.msk [vmem:[#allocation3 + $0x80] sm:$0xff] %vm3173, %v3726
        %3819 = vst.msk [vmem:[#allocation3 + $0xa8] sm:$0xff] %vm3173, %v3728
        %3820 = vst.msk [vmem:[#allocation3 + $0xd0] sm:$0xff] %vm3173, %v3730
        %3821 = vst.msk [vmem:[#allocation3 + $0xf8] sm:$0xff] %vm3173, %v3732
        %3822 = vst.msk [vmem:[#allocation3 + $0x120] sm:$0xff] %vm3173, %v3734
        %3823 = vst.msk [vmem:[#allocation3 + $0x148] sm:$0xff] %vm3173, %v3736
        %3824 = vst.msk [vmem:[#allocation3 + $0x170] sm:$0xff] %vm3173, %v3738
        %3825 = vst.msk [vmem:[#allocation3 + $0x198] sm:$0xff] %vm3173, %v3740
        %3826 = vst.msk [vmem:[#allocation3 + $0x1c0] sm:$0xff] %vm3173, %v3742
        %3827 = vst.msk [vmem:[#allocation3 + $0x1e8] sm:$0xff] %vm3173, %v3744
        %3828 = vst.msk [vmem:[#allocation3 + $0x210] sm:$0xff] %vm3173, %v3746
        %3829 = vst.msk [vmem:[#allocation3 + $0x238] sm:$0xff] %vm3173, %v3748
        %3830 = vst.msk [vmem:[#allocation3 + $0x260] sm:$0xff] %vm3173, %v3750
        %3831 = vst.msk [vmem:[#allocation3 + $0x288] sm:$0xff] %vm3173, %v3752
        %3832 = vst.msk [vmem:[#allocation3 + $0x2b0] sm:$0xff] %vm3173, %v3754
        %3833 = vst.msk [vmem:[#allocation3 + $0x2d8] sm:$0xff] %vm3173, %v3756
        %3834 = vst.msk [vmem:[#allocation3 + $0x300] sm:$0xff] %vm3173, %v3758
        %3835 = vst.msk [vmem:[#allocation3 + $0x328] sm:$0xff] %vm3173, %v3760
        %3836 = vst.msk [vmem:[#allocation3 + $0x350] sm:$0xff] %vm3173, %v3762
        %3837 = vst.msk [vmem:[#allocation3 + $0x378] sm:$0xff] %vm3173, %v3764
        %3838 = vst.msk [vmem:[#allocation3 + $0x3a0] sm:$0xff] %vm3173, %v3766
        %3839 = vst.msk [vmem:[#allocation3 + $0x3c8] sm:$0xff] %vm3173, %v3768
        %3840 = vst.msk [vmem:[#allocation3 + $0x3f0] sm:$0xff] %vm3173, %v3770
        %3841 = vst.msk [vmem:[#allocation3 + $0x418] sm:$0xff] %vm3173, %v3772
        %3842 = vst.msk [vmem:[#allocation3 + $0x440] sm:$0xff] %vm3173, %v3774
        %3843 = vst.msk [vmem:[#allocation3 + $0x468] sm:$0xff] %vm3173, %v3776
        %3844 = vst.msk [vmem:[#allocation3 + $0x490] sm:$0xff] %vm3173, %v3778
        %3845 = vst.msk [vmem:[#allocation3 + $0x4b8] sm:$0xff] %vm3173, %v3780
        %3846 = vst.msk [vmem:[#allocation3 + $0x4e0] sm:$0xff] %vm3173, %v3782
        %v3847 = vld [vmem:[%s1670 + $0x1] sm:$0xff]
        %v3848 = vld [vmem:[%s1670 + $0x9] sm:$0xff]
        %v3849 = vld [vmem:[%s1670 + $0x19] sm:$0xff]
        %v3850 = vld [vmem:[%s1670 + $0x21] sm:$0xff]
        %v3851 = vld [vmem:[%s1670 + $0x31] sm:$0xff]
        %v3852 = vld [vmem:[%s1670 + $0x39] sm:$0xff]
        %v3853 = vld [vmem:[%s1670 + $0x49] sm:$0xff]
        %v3854 = vld [vmem:[%s1670 + $0x51] sm:$0xff]
        %v3855 = vld [vmem:[%s1670 + $0x61] sm:$0xff]
        %v3856 = vld [vmem:[%s1670 + $0x69] sm:$0xff]
        %v3857 = vld [vmem:[%s1670 + $0x79] sm:$0xff]
        %v3858 = vld [vmem:[%s1670 + $0x81] sm:$0xff]
        %v3859 = vld [vmem:[%s1670 + $0x91] sm:$0xff]
        %v3860 = vld [vmem:[%s1670 + $0x99] sm:$0xff]
        %v3861 = vld [vmem:[%s1670 + $0xa9] sm:$0xff]
        %v3862 = vld [vmem:[%s1670 + $0xb1] sm:$0xff]
        %v3863 = vld [vmem:[%s1670 + $0xc1] sm:$0xff]
        %v3864 = vld [vmem:[%s1670 + $0xc9] sm:$0xff]
        %v3865 = vld [vmem:[%s1670 + $0xd9] sm:$0xff]
        %v3866 = vld [vmem:[%s1670 + $0xe1] sm:$0xff]
        %v3867 = vld [vmem:[%s1670 + $0xf1] sm:$0xff]
        %v3868 = vld [vmem:[%s1670 + $0xf9] sm:$0xff]
        %v3869 = vld [vmem:[%s1670 + $0x109] sm:$0xff]
        %v3870 = vld [vmem:[%s1670 + $0x111] sm:$0xff]
        %v3871 = vld [vmem:[%s1670 + $0x121] sm:$0xff]
        %v3872 = vld [vmem:[%s1670 + $0x129] sm:$0xff]
        %v3873 = vld [vmem:[%s1670 + $0x139] sm:$0xff]
        %v3874 = vld [vmem:[%s1670 + $0x141] sm:$0xff]
        %v3875 = vld [vmem:[%s1670 + $0x151] sm:$0xff]
        %v3876 = vld [vmem:[%s1670 + $0x159] sm:$0xff]
        %v3877 = vld [vmem:[%s1670 + $0x169] sm:$0xff]
        %v3878 = vld [vmem:[%s1670 + $0x171] sm:$0xff]
        %3911 = vrot.lane.b32.xlu0 %v3847, 96
        %v3912 = vpop.permute.xlu0 %3911
        %3913 = vrot.lane.b32.xlu0 %v3848, 96
        %v3914 = vpop.permute.xlu0 %3913
        %3915 = vrot.lane.b32.xlu0 %v3849, 96
        %v3916 = vpop.permute.xlu0 %3915
        %3917 = vrot.lane.b32.xlu0 %v3850, 96
        %v3918 = vpop.permute.xlu0 %3917
        %3919 = vrot.lane.b32.xlu0 %v3851, 96
        %v3920 = vpop.permute.xlu0 %3919
        %3921 = vrot.lane.b32.xlu0 %v3852, 96
        %v3922 = vpop.permute.xlu0 %3921
        %3923 = vrot.lane.b32.xlu0 %v3853, 96
        %v3924 = vpop.permute.xlu0 %3923
        %3925 = vrot.lane.b32.xlu0 %v3854, 96
        %v3926 = vpop.permute.xlu0 %3925
        %3927 = vrot.lane.b32.xlu0 %v3855, 96
        %v3928 = vpop.permute.xlu0 %3927
        %3929 = vrot.lane.b32.xlu0 %v3856, 96
        %v3930 = vpop.permute.xlu0 %3929
        %3931 = vrot.lane.b32.xlu0 %v3857, 96
        %v3932 = vpop.permute.xlu0 %3931
        %3933 = vrot.lane.b32.xlu0 %v3858, 96
        %v3934 = vpop.permute.xlu0 %3933
        %3935 = vrot.lane.b32.xlu0 %v3859, 96
        %v3936 = vpop.permute.xlu0 %3935
        %3937 = vrot.lane.b32.xlu0 %v3860, 96
        %v3938 = vpop.permute.xlu0 %3937
        %3939 = vrot.lane.b32.xlu0 %v3861, 96
        %v3940 = vpop.permute.xlu0 %3939
        %3941 = vrot.lane.b32.xlu0 %v3862, 96
        %v3942 = vpop.permute.xlu0 %3941
        %3943 = vrot.lane.b32.xlu0 %v3863, 96
        %v3944 = vpop.permute.xlu0 %3943
        %3945 = vrot.lane.b32.xlu0 %v3864, 96
        %v3946 = vpop.permute.xlu0 %3945
        %3947 = vrot.lane.b32.xlu0 %v3865, 96
        %v3948 = vpop.permute.xlu0 %3947
        %3949 = vrot.lane.b32.xlu0 %v3866, 96
        %v3950 = vpop.permute.xlu0 %3949
        %3951 = vrot.lane.b32.xlu0 %v3867, 96
        %v3952 = vpop.permute.xlu0 %3951
        %3953 = vrot.lane.b32.xlu0 %v3868, 96
        %v3954 = vpop.permute.xlu0 %3953
        %3955 = vrot.lane.b32.xlu0 %v3869, 96
        %v3956 = vpop.permute.xlu0 %3955
        %3957 = vrot.lane.b32.xlu0 %v3870, 96
        %v3958 = vpop.permute.xlu0 %3957
        %3959 = vrot.lane.b32.xlu0 %v3871, 96
        %v3960 = vpop.permute.xlu0 %3959
        %3961 = vrot.lane.b32.xlu0 %v3872, 96
        %v3962 = vpop.permute.xlu0 %3961
        %3963 = vrot.lane.b32.xlu0 %v3873, 96
        %v3964 = vpop.permute.xlu0 %3963
        %3965 = vrot.lane.b32.xlu0 %v3874, 96
        %v3966 = vpop.permute.xlu0 %3965
        %3967 = vrot.lane.b32.xlu0 %v3875, 96
        %v3968 = vpop.permute.xlu0 %3967
        %3969 = vrot.lane.b32.xlu0 %v3876, 96
        %v3970 = vpop.permute.xlu0 %3969
        %3971 = vrot.lane.b32.xlu0 %v3877, 96
        %v3972 = vpop.permute.xlu0 %3971
        %3973 = vrot.lane.b32.xlu0 %v3878, 96
        %v3974 = vpop.permute.xlu0 %3973
        %4007 = vst.msk [vmem:[#allocation3 + $0x8] sm:$0xff] %vm3366, %v3912
        %4008 = vst.msk [vmem:[#allocation3 + $0x30] sm:$0xff] %vm3366, %v3914
        %4009 = vst.msk [vmem:[#allocation3 + $0x58] sm:$0xff] %vm3366, %v3916
        %4010 = vst.msk [vmem:[#allocation3 + $0x80] sm:$0xff] %vm3366, %v3918
        %4011 = vst.msk [vmem:[#allocation3 + $0xa8] sm:$0xff] %vm3366, %v3920
        %4012 = vst.msk [vmem:[#allocation3 + $0xd0] sm:$0xff] %vm3366, %v3922
        %4013 = vst.msk [vmem:[#allocation3 + $0xf8] sm:$0xff] %vm3366, %v3924
        %4014 = vst.msk [vmem:[#allocation3 + $0x120] sm:$0xff] %vm3366, %v3926
        %4015 = vst.msk [vmem:[#allocation3 + $0x148] sm:$0xff] %vm3366, %v3928
        %4016 = vst.msk [vmem:[#allocation3 + $0x170] sm:$0xff] %vm3366, %v3930
        %4017 = vst.msk [vmem:[#allocation3 + $0x198] sm:$0xff] %vm3366, %v3932
        %4018 = vst.msk [vmem:[#allocation3 + $0x1c0] sm:$0xff] %vm3366, %v3934
        %4019 = vst.msk [vmem:[#allocation3 + $0x1e8] sm:$0xff] %vm3366, %v3936
        %4020 = vst.msk [vmem:[#allocation3 + $0x210] sm:$0xff] %vm3366, %v3938
        %4021 = vst.msk [vmem:[#allocation3 + $0x238] sm:$0xff] %vm3366, %v3940
        %4022 = vst.msk [vmem:[#allocation3 + $0x260] sm:$0xff] %vm3366, %v3942
        %4023 = vst.msk [vmem:[#allocation3 + $0x288] sm:$0xff] %vm3366, %v3944
        %4024 = vst.msk [vmem:[#allocation3 + $0x2b0] sm:$0xff] %vm3366, %v3946
        %4025 = vst.msk [vmem:[#allocation3 + $0x2d8] sm:$0xff] %vm3366, %v3948
        %4026 = vst.msk [vmem:[#allocation3 + $0x300] sm:$0xff] %vm3366, %v3950
        %4027 = vst.msk [vmem:[#allocation3 + $0x328] sm:$0xff] %vm3366, %v3952
        %4028 = vst.msk [vmem:[#allocation3 + $0x350] sm:$0xff] %vm3366, %v3954
        %4029 = vst.msk [vmem:[#allocation3 + $0x378] sm:$0xff] %vm3366, %v3956
        %4030 = vst.msk [vmem:[#allocation3 + $0x3a0] sm:$0xff] %vm3366, %v3958
        %4031 = vst.msk [vmem:[#allocation3 + $0x3c8] sm:$0xff] %vm3366, %v3960
        %4032 = vst.msk [vmem:[#allocation3 + $0x3f0] sm:$0xff] %vm3366, %v3962
        %4033 = vst.msk [vmem:[#allocation3 + $0x418] sm:$0xff] %vm3366, %v3964
        %4034 = vst.msk [vmem:[#allocation3 + $0x440] sm:$0xff] %vm3366, %v3966
        %4035 = vst.msk [vmem:[#allocation3 + $0x468] sm:$0xff] %vm3366, %v3968
        %4036 = vst.msk [vmem:[#allocation3 + $0x490] sm:$0xff] %vm3366, %v3970
        %4037 = vst.msk [vmem:[#allocation3 + $0x4b8] sm:$0xff] %vm3366, %v3972
        %4038 = vst.msk [vmem:[#allocation3 + $0x4e0] sm:$0xff] %vm3366, %v3974
        %v4039 = vld [vmem:[%s1670 + $0x2] sm:$0xff]
        %v4040 = vld [vmem:[%s1670 + $0xa] sm:$0xff]
        %v4041 = vld [vmem:[%s1670 + $0x1a] sm:$0xff]
        %v4042 = vld [vmem:[%s1670 + $0x22] sm:$0xff]
        %v4043 = vld [vmem:[%s1670 + $0x32] sm:$0xff]
        %v4044 = vld [vmem:[%s1670 + $0x3a] sm:$0xff]
        %v4045 = vld [vmem:[%s1670 + $0x4a] sm:$0xff]
        %v4046 = vld [vmem:[%s1670 + $0x52] sm:$0xff]
        %v4047 = vld [vmem:[%s1670 + $0x62] sm:$0xff]
        %v4048 = vld [vmem:[%s1670 + $0x6a] sm:$0xff]
        %v4049 = vld [vmem:[%s1670 + $0x7a] sm:$0xff]
        %v4050 = vld [vmem:[%s1670 + $0x82] sm:$0xff]
        %v4051 = vld [vmem:[%s1670 + $0x92] sm:$0xff]
        %v4052 = vld [vmem:[%s1670 + $0x9a] sm:$0xff]
        %v4053 = vld [vmem:[%s1670 + $0xaa] sm:$0xff]
        %v4054 = vld [vmem:[%s1670 + $0xb2] sm:$0xff]
        %v4055 = vld [vmem:[%s1670 + $0xc2] sm:$0xff]
        %v4056 = vld [vmem:[%s1670 + $0xca] sm:$0xff]
        %v4057 = vld [vmem:[%s1670 + $0xda] sm:$0xff]
        %v4058 = vld [vmem:[%s1670 + $0xe2] sm:$0xff]
        %v4059 = vld [vmem:[%s1670 + $0xf2] sm:$0xff]
        %v4060 = vld [vmem:[%s1670 + $0xfa] sm:$0xff]
        %v4061 = vld [vmem:[%s1670 + $0x10a] sm:$0xff]
        %v4062 = vld [vmem:[%s1670 + $0x112] sm:$0xff]
        %v4063 = vld [vmem:[%s1670 + $0x122] sm:$0xff]
        %v4064 = vld [vmem:[%s1670 + $0x12a] sm:$0xff]
        %v4065 = vld [vmem:[%s1670 + $0x13a] sm:$0xff]
        %v4066 = vld [vmem:[%s1670 + $0x142] sm:$0xff]
        %v4067 = vld [vmem:[%s1670 + $0x152] sm:$0xff]
        %v4068 = vld [vmem:[%s1670 + $0x15a] sm:$0xff]
        %v4069 = vld [vmem:[%s1670 + $0x16a] sm:$0xff]
        %v4070 = vld [vmem:[%s1670 + $0x172] sm:$0xff]
        %4071 = vst.msk [vmem:[#allocation3 + $0x10] sm:$0xff] %vm2723, %v4039
        %4072 = vst.msk [vmem:[#allocation3 + $0x38] sm:$0xff] %vm2723, %v4040
        %4073 = vst.msk [vmem:[#allocation3 + $0x60] sm:$0xff] %vm2723, %v4041
        %4074 = vst.msk [vmem:[#allocation3 + $0x88] sm:$0xff] %vm2723, %v4042
        %4075 = vst.msk [vmem:[#allocation3 + $0xb0] sm:$0xff] %vm2723, %v4043
        %4076 = vst.msk [vmem:[#allocation3 + $0xd8] sm:$0xff] %vm2723, %v4044
        %4077 = vst.msk [vmem:[#allocation3 + $0x100] sm:$0xff] %vm2723, %v4045
        %4078 = vst.msk [vmem:[#allocation3 + $0x128] sm:$0xff] %vm2723, %v4046
        %4079 = vst.msk [vmem:[#allocation3 + $0x150] sm:$0xff] %vm2723, %v4047
        %4080 = vst.msk [vmem:[#allocation3 + $0x178] sm:$0xff] %vm2723, %v4048
        %4081 = vst.msk [vmem:[#allocation3 + $0x1a0] sm:$0xff] %vm2723, %v4049
        %4082 = vst.msk [vmem:[#allocation3 + $0x1c8] sm:$0xff] %vm2723, %v4050
        %4083 = vst.msk [vmem:[#allocation3 + $0x1f0] sm:$0xff] %vm2723, %v4051
        %4084 = vst.msk [vmem:[#allocation3 + $0x218] sm:$0xff] %vm2723, %v4052
        %4085 = vst.msk [vmem:[#allocation3 + $0x240] sm:$0xff] %vm2723, %v4053
        %4086 = vst.msk [vmem:[#allocation3 + $0x268] sm:$0xff] %vm2723, %v4054
        %4087 = vst.msk [vmem:[#allocation3 + $0x290] sm:$0xff] %vm2723, %v4055
        %4088 = vst.msk [vmem:[#allocation3 + $0x2b8] sm:$0xff] %vm2723, %v4056
        %4089 = vst.msk [vmem:[#allocation3 + $0x2e0] sm:$0xff] %vm2723, %v4057
        %4090 = vst.msk [vmem:[#allocation3 + $0x308] sm:$0xff] %vm2723, %v4058
        %4091 = vst.msk [vmem:[#allocation3 + $0x330] sm:$0xff] %vm2723, %v4059
        %4092 = vst.msk [vmem:[#allocation3 + $0x358] sm:$0xff] %vm2723, %v4060
        %4093 = vst.msk [vmem:[#allocation3 + $0x380] sm:$0xff] %vm2723, %v4061
        %4094 = vst.msk [vmem:[#allocation3 + $0x3a8] sm:$0xff] %vm2723, %v4062
        %4095 = vst.msk [vmem:[#allocation3 + $0x3d0] sm:$0xff] %vm2723, %v4063
        %4096 = vst.msk [vmem:[#allocation3 + $0x3f8] sm:$0xff] %vm2723, %v4064
        %4097 = vst.msk [vmem:[#allocation3 + $0x420] sm:$0xff] %vm2723, %v4065
        %4098 = vst.msk [vmem:[#allocation3 + $0x448] sm:$0xff] %vm2723, %v4066
        %4099 = vst.msk [vmem:[#allocation3 + $0x470] sm:$0xff] %vm2723, %v4067
        %4100 = vst.msk [vmem:[#allocation3 + $0x498] sm:$0xff] %vm2723, %v4068
        %4101 = vst.msk [vmem:[#allocation3 + $0x4c0] sm:$0xff] %vm2723, %v4069
        %4102 = vst.msk [vmem:[#allocation3 + $0x4e8] sm:$0xff] %vm2723, %v4070
        %v4103 = vld [vmem:[#allocation3] sm:$0xff]
        %v4104 = vld [vmem:[#allocation3 + $0x8] sm:$0xff]
        %v4105 = vld [vmem:[#allocation3 + $0x10] sm:$0xff]
        %v4106 = vld [vmem:[#allocation3 + $0x28] sm:$0xff]
        %v4107 = vld [vmem:[#allocation3 + $0x30] sm:$0xff]
        %v4108 = vld [vmem:[#allocation3 + $0x38] sm:$0xff]
        %v4109 = vld [vmem:[#allocation3 + $0x50] sm:$0xff]
        %v4110 = vld [vmem:[#allocation3 + $0x58] sm:$0xff]
        %v4111 = vld [vmem:[#allocation3 + $0x60] sm:$0xff]
        %v4112 = vld [vmem:[#allocation3 + $0x78] sm:$0xff]
        %v4113 = vld [vmem:[#allocation3 + $0x80] sm:$0xff]
        %v4114 = vld [vmem:[#allocation3 + $0x88] sm:$0xff]
        %v4115 = vld [vmem:[#allocation3 + $0xa0] sm:$0xff]
        %v4116 = vld [vmem:[#allocation3 + $0xa8] sm:$0xff]
        %v4117 = vld [vmem:[#allocation3 + $0xb0] sm:$0xff]
        %v4118 = vld [vmem:[#allocation3 + $0xc8] sm:$0xff]
        %v4119 = vld [vmem:[#allocation3 + $0xd0] sm:$0xff]
        %v4120 = vld [vmem:[#allocation3 + $0xd8] sm:$0xff]
        %v4121 = vld [vmem:[#allocation3 + $0xf0] sm:$0xff]
        %v4122 = vld [vmem:[#allocation3 + $0xf8] sm:$0xff]
        %v4123 = vld [vmem:[#allocation3 + $0x100] sm:$0xff]
        %v4124 = vld [vmem:[#allocation3 + $0x118] sm:$0xff]
        %v4125 = vld [vmem:[#allocation3 + $0x120] sm:$0xff]
        %v4126 = vld [vmem:[#allocation3 + $0x128] sm:$0xff]
        %v4127 = vld [vmem:[#allocation3 + $0x140] sm:$0xff]
        %v4128 = vld [vmem:[#allocation3 + $0x148] sm:$0xff]
        %v4129 = vld [vmem:[#allocation3 + $0x150] sm:$0xff]
        %v4130 = vld [vmem:[#allocation3 + $0x168] sm:$0xff]
        %v4131 = vld [vmem:[#allocation3 + $0x170] sm:$0xff]
        %v4132 = vld [vmem:[#allocation3 + $0x178] sm:$0xff]
        %v4133 = vld [vmem:[#allocation3 + $0x190] sm:$0xff]
        %v4134 = vld [vmem:[#allocation3 + $0x198] sm:$0xff]
        %v4135 = vld [vmem:[#allocation3 + $0x1a0] sm:$0xff]
        %v4136 = vld [vmem:[#allocation3 + $0x1b8] sm:$0xff]
        %v4137 = vld [vmem:[#allocation3 + $0x1c0] sm:$0xff]
        %v4138 = vld [vmem:[#allocation3 + $0x1c8] sm:$0xff]
        %v4139 = vld [vmem:[#allocation3 + $0x1e0] sm:$0xff]
        %v4140 = vld [vmem:[#allocation3 + $0x1e8] sm:$0xff]
        %v4141 = vld [vmem:[#allocation3 + $0x1f0] sm:$0xff]
        %v4142 = vld [vmem:[#allocation3 + $0x208] sm:$0xff]
        %v4143 = vld [vmem:[#allocation3 + $0x210] sm:$0xff]
        %v4144 = vld [vmem:[#allocation3 + $0x218] sm:$0xff]
        %v4145 = vld [vmem:[#allocation3 + $0x230] sm:$0xff]
        %v4146 = vld [vmem:[#allocation3 + $0x238] sm:$0xff]
        %v4147 = vld [vmem:[#allocation3 + $0x240] sm:$0xff]
        %v4148 = vld [vmem:[#allocation3 + $0x258] sm:$0xff]
        %v4149 = vld [vmem:[#allocation3 + $0x260] sm:$0xff]
        %v4150 = vld [vmem:[#allocation3 + $0x268] sm:$0xff]
        %v4151 = vld [vmem:[#allocation3 + $0x280] sm:$0xff]
        %v4152 = vld [vmem:[#allocation3 + $0x288] sm:$0xff]
        %v4153 = vld [vmem:[#allocation3 + $0x290] sm:$0xff]
        %v4154 = vld [vmem:[#allocation3 + $0x2a8] sm:$0xff]
        %v4155 = vld [vmem:[#allocation3 + $0x2b0] sm:$0xff]
        %v4156 = vld [vmem:[#allocation3 + $0x2b8] sm:$0xff]
        %v4157 = vld [vmem:[#allocation3 + $0x2d0] sm:$0xff]
        %v4158 = vld [vmem:[#allocation3 + $0x2d8] sm:$0xff]
        %v4159 = vld [vmem:[#allocation3 + $0x2e0] sm:$0xff]
        %v4160 = vld [vmem:[#allocation3 + $0x2f8] sm:$0xff]
        %v4161 = vld [vmem:[#allocation3 + $0x300] sm:$0xff]
        %v4162 = vld [vmem:[#allocation3 + $0x308] sm:$0xff]
        %v4163 = vld [vmem:[#allocation3 + $0x320] sm:$0xff]
        %v4164 = vld [vmem:[#allocation3 + $0x328] sm:$0xff]
        %v4165 = vld [vmem:[#allocation3 + $0x330] sm:$0xff]
        %v4166 = vld [vmem:[#allocation3 + $0x348] sm:$0xff]
        %v4167 = vld [vmem:[#allocation3 + $0x350] sm:$0xff]
        %v4168 = vld [vmem:[#allocation3 + $0x358] sm:$0xff]
        %v4169 = vld [vmem:[#allocation3 + $0x370] sm:$0xff]
        %v4170 = vld [vmem:[#allocation3 + $0x378] sm:$0xff]
        %v4171 = vld [vmem:[#allocation3 + $0x380] sm:$0xff]
        %v4172 = vld [vmem:[#allocation3 + $0x398] sm:$0xff]
        %v4173 = vld [vmem:[#allocation3 + $0x3a0] sm:$0xff]
        %v4174 = vld [vmem:[#allocation3 + $0x3a8] sm:$0xff]
        %v4175 = vld [vmem:[#allocation3 + $0x3c0] sm:$0xff]
        %v4176 = vld [vmem:[#allocation3 + $0x3c8] sm:$0xff]
        %v4177 = vld [vmem:[#allocation3 + $0x3d0] sm:$0xff]
        %v4178 = vld [vmem:[#allocation3 + $0x3e8] sm:$0xff]
        %v4179 = vld [vmem:[#allocation3 + $0x3f0] sm:$0xff]
        %v4180 = vld [vmem:[#allocation3 + $0x3f8] sm:$0xff]
        %v4181 = vld [vmem:[#allocation3 + $0x410] sm:$0xff]
        %v4182 = vld [vmem:[#allocation3 + $0x418] sm:$0xff]
        %v4183 = vld [vmem:[#allocation3 + $0x420] sm:$0xff]
        %v4184 = vld [vmem:[#allocation3 + $0x438] sm:$0xff]
        %v4185 = vld [vmem:[#allocation3 + $0x440] sm:$0xff]
        %v4186 = vld [vmem:[#allocation3 + $0x448] sm:$0xff]
        %v4187 = vld [vmem:[#allocation3 + $0x460] sm:$0xff]
        %v4188 = vld [vmem:[#allocation3 + $0x468] sm:$0xff]
        %v4189 = vld [vmem:[#allocation3 + $0x470] sm:$0xff]
        %v4190 = vld [vmem:[#allocation3 + $0x488] sm:$0xff]
        %v4191 = vld [vmem:[#allocation3 + $0x490] sm:$0xff]
        %v4192 = vld [vmem:[#allocation3 + $0x498] sm:$0xff]
        %v4193 = vld [vmem:[#allocation3 + $0x4b0] sm:$0xff]
        %v4194 = vld [vmem:[#allocation3 + $0x4b8] sm:$0xff]
        %v4195 = vld [vmem:[#allocation3 + $0x4c0] sm:$0xff]
        %v4196 = vld [vmem:[#allocation3 + $0x4d8] sm:$0xff]
        %v4197 = vld [vmem:[#allocation3 + $0x4e0] sm:$0xff]
        %v4198 = vld [vmem:[#allocation3 + $0x4e8] sm:$0xff]
        %v4199 = vld [vmem:[%s4] sm:$0xff]
        %v4200 = vld [vmem:[%s4 + $0x8] sm:$0xff]
        %v4201 = vld [vmem:[%s4 + $0x10] sm:$0xff]
        %v4202 = vld [vmem:[%s4 + $0x18] sm:$0xff]
        %v4203 = vld [vmem:[%s4 + $0x20] sm:$0xff]
        %v4204 = vld [vmem:[%s4 + $0x28] sm:$0xff]
        %v4205 = vld [vmem:[%s4 + $0x30] sm:$0xff]
        %v4206 = vld [vmem:[%s4 + $0x38] sm:$0xff]
        %v4207 = vld [vmem:[%s4 + $0x40] sm:$0xff]
        %v4208 = vld [vmem:[%s4 + $0x48] sm:$0xff]
        %v4209 = vld [vmem:[%s4 + $0x50] sm:$0xff]
        %v4210 = vld [vmem:[%s4 + $0x58] sm:$0xff]
        %v4211 = vld [vmem:[%s4 + $0x60] sm:$0xff]
        %v4212 = vld [vmem:[%s4 + $0x68] sm:$0xff]
        %v4213 = vld [vmem:[%s4 + $0x70] sm:$0xff]
        %v4214 = vld [vmem:[%s4 + $0x78] sm:$0xff]
        %v4215 = vld [vmem:[%s4 + $0x80] sm:$0xff]
        %v4216 = vld [vmem:[%s4 + $0x88] sm:$0xff]
        %v4217 = vld [vmem:[%s4 + $0x90] sm:$0xff]
        %v4218 = vld [vmem:[%s4 + $0x98] sm:$0xff]
        %v4219 = vld [vmem:[%s4 + $0xa0] sm:$0xff]
        %v4220 = vld [vmem:[%s4 + $0xa8] sm:$0xff]
        %v4221 = vld [vmem:[%s4 + $0xb0] sm:$0xff]
        %v4222 = vld [vmem:[%s4 + $0xb8] sm:$0xff]
        %v4223 = vld [vmem:[%s4 + $0xc0] sm:$0xff]
        %v4224 = vld [vmem:[%s4 + $0xc8] sm:$0xff]
        %v4225 = vld [vmem:[%s4 + $0xd0] sm:$0xff]
        %v4226 = vld [vmem:[%s4 + $0xd8] sm:$0xff]
        %v4227 = vld [vmem:[%s4 + $0xe0] sm:$0xff]
        %v4228 = vld [vmem:[%s4 + $0xe8] sm:$0xff]
        %v4229 = vld [vmem:[%s4 + $0xf0] sm:$0xff]
        %v4230 = vld [vmem:[%s4 + $0xf8] sm:$0xff]
        %v4231 = vld [vmem:[%s4 + $0x100] sm:$0xff]
        %v4232 = vld [vmem:[%s4 + $0x108] sm:$0xff]
        %v4233 = vld [vmem:[%s4 + $0x110] sm:$0xff]
        %v4234 = vld [vmem:[%s4 + $0x118] sm:$0xff]
        %v4236 = vsel %vm2723, %v4105, 0
        %v4239 = vsel %vm2723, %v4108, 0
        %v4242 = vsel %vm2723, %v4111, 0
        %v4245 = vsel %vm2723, %v4114, 0
        %v4248 = vsel %vm2723, %v4117, 0
        %v4251 = vsel %vm2723, %v4120, 0
        %v4254 = vsel %vm2723, %v4123, 0
        %v4257 = vsel %vm2723, %v4126, 0
        %v4260 = vsel %vm2723, %v4129, 0
        %v4263 = vsel %vm2723, %v4132, 0
        %v4266 = vsel %vm2723, %v4135, 0
        %v4269 = vsel %vm2723, %v4138, 0
        %v4272 = vsel %vm2723, %v4141, 0
        %v4275 = vsel %vm2723, %v4144, 0
        %v4278 = vsel %vm2723, %v4147, 0
        %v4281 = vsel %vm2723, %v4150, 0
        %v4284 = vsel %vm2723, %v4153, 0
        %v4287 = vsel %vm2723, %v4156, 0
        %v4290 = vsel %vm2723, %v4159, 0
        %v4293 = vsel %vm2723, %v4162, 0
        %v4296 = vsel %vm2723, %v4165, 0
        %v4299 = vsel %vm2723, %v4168, 0
        %v4302 = vsel %vm2723, %v4171, 0
        %v4305 = vsel %vm2723, %v4174, 0
        %v4308 = vsel %vm2723, %v4177, 0
        %v4311 = vsel %vm2723, %v4180, 0
        %v4314 = vsel %vm2723, %v4183, 0
        %v4317 = vsel %vm2723, %v4186, 0
        %v4320 = vsel %vm2723, %v4189, 0
        %v4323 = vsel %vm2723, %v4192, 0
        %v4326 = vsel %vm2723, %v4195, 0
        %v4329 = vsel %vm2723, %v4198, 0
        %4331 = vmatprep.subr.mxu0 0.0
        %4332 = vmatpush1.msra.mxu0 %v4199
        %4333 = vmatprep.subr.mxu0 0.0
        %4334 = vmatpush1.msra.mxu0 %v4200
        %4335 = vmatprep.subr.mxu0 0.0
        %4336 = vmatpush1.msra.mxu0 %v4201
        %4337 = vmatprep.subr.mxu0 0.0
        %4338 = vmatpush1.msra.mxu0 %v4202
        %4339 = vmatprep.subr.mxu0 0.0
        %4340 = vmatpush1.msra.mxu0 %v4203
        %4341 = vmatprep.subr.mxu0 0.0
        %4342 = vmatpush1.msra.mxu0 %v4204
        %4343 = vmatprep.subr.mxu0 0.0
        %4344 = vmatpush1.msra.mxu0 %v4205
        %4345 = vmatprep.subr.mxu0 0.0
        %4346 = vmatpush1.msra.mxu0 %v4206
        %4347 = vmatprep.subr.mxu0 0.0
        %4348 = vmatpush1.msra.mxu0 %v4207
        %4349 = vmatprep.subr.mxu0 0.0
        %4350 = vmatpush1.msra.mxu0 %v4208
        %4351 = vmatprep.subr.mxu0 0.0
        %4352 = vmatpush1.msra.mxu0 %v4209
        %4353 = vmatprep.subr.mxu0 0.0
        %4354 = vmatpush1.msra.mxu0 %v4210
        %4355 = vmatprep.subr.mxu0 0.0
        %4356 = vmatpush1.msra.mxu0 %v4211
        %4357 = vmatprep.subr.mxu0 0.0
        %4358 = vmatpush1.msra.mxu0 %v4212
        %4359 = vmatprep.subr.mxu0 0.0
        %4360 = vmatpush1.msra.mxu0 %v4213
        %4361 = vmatprep.subr.mxu0 0.0
        %4362 = vmatpush1.msra.mxu0 %v4214
        %4363 = vmatprep.subr.mxu0 0.0
        %4364 = vmatpush1.msra.mxu0 %v4215
        %4365 = vmatprep.subr.mxu0 0.0
        %4366 = vmatpush1.msra.mxu0 %v4216
        %4367 = vmatprep.subr.mxu0 0.0
        %4368 = vmatpush1.msra.mxu0 %v4217
        %4369 = vmatprep.subr.mxu0 0.0
        %4370 = vmatpush1.msra.mxu0 %v4218
        %4371 = vmatprep.subr.mxu0 0.0
        %4372 = vmatpush1.msra.mxu0 %v4219
        %4373 = vmatprep.subr.mxu0 0.0
        %4374 = vmatpush1.msra.mxu0 %v4220
        %4375 = vmatprep.subr.mxu0 0.0
        %4376 = vmatpush1.msra.mxu0 %v4221
        %4377 = vmatprep.subr.mxu0 0.0
        %4378 = vmatpush1.msra.mxu0 %v4222
        %4379 = vmatprep.subr.mxu0 0.0
        %4380 = vmatpush1.msra.mxu0 %v4223
        %4381 = vmatprep.subr.mxu0 0.0
        %4382 = vmatpush1.msra.mxu0 %v4224
        %4383 = vmatprep.subr.mxu0 0.0
        %4384 = vmatpush1.msra.mxu0 %v4225
        %4385 = vmatprep.subr.mxu0 0.0
        %4386 = vmatpush1.msra.mxu0 %v4226
        %4387 = vmatprep.subr.mxu0 0.0
        %4388 = vmatpush1.msra.mxu0 %v4227
        %4389 = vmatprep.subr.mxu0 0.0
        %4390 = vmatpush1.msra.mxu0 %v4228
        %4391 = vmatprep.subr.mxu0 0.0
        %4392 = vmatpush1.msra.mxu0 %v4229
        %4393 = vmatprep.subr.mxu0 0.0
        %4394 = vmatpush1.msra.mxu0 %v4230
        %4395 = vmatprep.mubr.f32.mxu0 %v4104
        %4396 = vmatmul.mubr.f32.gmra.mrb[0].mxu0 %v4103
        %v4397 = vpop.f32.mrb[0].mxu0
        %v4398 = vadd.f32 0.0, %v4397
        %v4399 = vpop.f32.mrb[0].mxu0
        %4400 = vmatprep.mubr.f32.mxu0 %v4107
        %4401 = vmatmul.mubr.f32.gmra.mrb[0].mxu0 %v4106
        %v4402 = vpop.f32.mrb[0].mxu0
        %v4403 = vadd.f32 0.0, %v4402
        %v4404 = vpop.f32.mrb[0].mxu0
        %4405 = vmatprep.mubr.f32.mxu0 %v4110
        %4406 = vmatmul.mubr.f32.gmra.mrb[0].mxu0 %v4109
        %v4407 = vpop.f32.mrb[0].mxu0
        %v4408 = vadd.f32 0.0, %v4407
        %v4409 = vpop.f32.mrb[0].mxu0
        %4410 = vmatprep.mubr.f32.mxu0 %v4113
        %4411 = vmatmul.mubr.f32.gmra.mrb[0].mxu0 %v4112
        %v4412 = vpop.f32.mrb[0].mxu0
        %v4413 = vadd.f32 0.0, %v4412
        %v4414 = vpop.f32.mrb[0].mxu0
        %4415 = vmatprep.mubr.f32.mxu0 %v4116
        %4416 = vmatmul.mubr.f32.gmra.mrb[0].mxu0 %v4115
        %v4417 = vpop.f32.mrb[0].mxu0
        %v4418 = vadd.f32 0.0, %v4417
        %v4419 = vpop.f32.mrb[0].mxu0
        %4420 = vmatprep.mubr.f32.mxu0 %v4119
        %4421 = vmatmul.mubr.f32.gmra.mrb[0].mxu0 %v4118
        %v4422 = vpop.f32.mrb[0].mxu0
        %v4423 = vadd.f32 0.0, %v4422
        %v4424 = vpop.f32.mrb[0].mxu0
        %4425 = vmatprep.mubr.f32.mxu0 %v4122
        %4426 = vmatmul.mubr.f32.gmra.mrb[0].mxu0 %v4121
        %v4427 = vpop.f32.mrb[0].mxu0
        %v4428 = vadd.f32 0.0, %v4427
        %v4429 = vpop.f32.mrb[0].mxu0
        %4430 = vmatprep.mubr.f32.mxu0 %v4125
        %4431 = vmatmul.mubr.f32.gmra.mrb[0].mxu0 %v4124
        %v4432 = vpop.f32.mrb[0].mxu0
        %v4433 = vadd.f32 0.0, %v4432
        %v4434 = vpop.f32.mrb[0].mxu0
        %4435 = vmatprep.mubr.f32.mxu0 %v4128
        %4436 = vmatmul.mubr.f32.gmra.mrb[0].mxu0 %v4127
        %v4437 = vpop.f32.mrb[0].mxu0
        %v4438 = vadd.f32 0.0, %v4437
        %v4439 = vpop.f32.mrb[0].mxu0
        %4440 = vmatprep.mubr.f32.mxu0 %v4131
        %4441 = vmatmul.mubr.f32.gmra.mrb[0].mxu0 %v4130
        %v4442 = vpop.f32.mrb[0].mxu0
        %v4443 = vadd.f32 0.0, %v4442
        %v4444 = vpop.f32.mrb[0].mxu0
        %4445 = vmatprep.mubr.f32.mxu0 %v4134
        %4446 = vmatmul.mubr.f32.gmra.mrb[0].mxu0 %v4133
        %v4447 = vpop.f32.mrb[0].mxu0
        %v4448 = vadd.f32 0.0, %v4447
        %v4449 = vpop.f32.mrb[0].mxu0
        %4450 = vmatprep.mubr.f32.mxu0 %v4137
        %4451 = vmatmul.mubr.f32.gmra.mrb[0].mxu0 %v4136
        %v4452 = vpop.f32.mrb[0].mxu0
        %v4453 = vadd.f32 0.0, %v4452
        %v4454 = vpop.f32.mrb[0].mxu0
        %4455 = vmatprep.mubr.f32.mxu0 %v4140
        %4456 = vmatmul.mubr.f32.gmra.mrb[0].mxu0 %v4139
        %v4457 = vpop.f32.mrb[0].mxu0
        %v4458 = vadd.f32 0.0, %v4457
        %v4459 = vpop.f32.mrb[0].mxu0
        %4460 = vmatprep.mubr.f32.mxu0 %v4143
        %4461 = vmatmul.mubr.f32.gmra.mrb[0].mxu0 %v4142
        %v4462 = vpop.f32.mrb[0].mxu0
        %v4463 = vadd.f32 0.0, %v4462
        %v4464 = vpop.f32.mrb[0].mxu0
        %4465 = vmatprep.mubr.f32.mxu0 %v4146
        %4466 = vmatmul.mubr.f32.gmra.mrb[0].mxu0 %v4145
        %v4467 = vpop.f32.mrb[0].mxu0
        %v4468 = vadd.f32 0.0, %v4467
        %v4469 = vpop.f32.mrb[0].mxu0
        %4470 = vmatprep.mubr.f32.mxu0 %v4149
        %4471 = vmatmul.mubr.f32.gmra.mrb[0].mxu0 %v4148
        %v4472 = vpop.f32.mrb[0].mxu0
        %v4473 = vadd.f32 0.0, %v4472
        %v4474 = vpop.f32.mrb[0].mxu0
        %4475 = vmatprep.mubr.f32.mxu0 %v4152
        %4476 = vmatmul.mubr.f32.gmra.mrb[0].mxu0 %v4151
        %v4477 = vpop.f32.mrb[0].mxu0
        %v4478 = vadd.f32 0.0, %v4477
        %v4479 = vpop.f32.mrb[0].mxu0
        %4480 = vmatprep.mubr.f32.mxu0 %v4155
        %4481 = vmatmul.mubr.f32.gmra.mrb[0].mxu0 %v4154
        %v4482 = vpop.f32.mrb[0].mxu0
        %v4483 = vadd.f32 0.0, %v4482
        %v4484 = vpop.f32.mrb[0].mxu0
        %4485 = vmatprep.mubr.f32.mxu0 %v4158
        %4486 = vmatmul.mubr.f32.gmra.mrb[0].mxu0 %v4157
        %v4487 = vpop.f32.mrb[0].mxu0
        %v4488 = vadd.f32 0.0, %v4487
        %v4489 = vpop.f32.mrb[0].mxu0
        %4490 = vmatprep.mubr.f32.mxu0 %v4161
        %4491 = vmatmul.mubr.f32.gmra.mrb[0].mxu0 %v4160
        %v4492 = vpop.f32.mrb[0].mxu0
        %v4493 = vadd.f32 0.0, %v4492
        %v4494 = vpop.f32.mrb[0].mxu0
        %4495 = vmatprep.mubr.f32.mxu0 %v4164
        %4496 = vmatmul.mubr.f32.gmra.mrb[0].mxu0 %v4163
        %v4497 = vpop.f32.mrb[0].mxu0
        %v4498 = vadd.f32 0.0, %v4497
        %v4499 = vpop.f32.mrb[0].mxu0
        %4500 = vmatprep.mubr.f32.mxu0 %v4167
        %4501 = vmatmul.mubr.f32.gmra.mrb[0].mxu0 %v4166
        %v4502 = vpop.f32.mrb[0].mxu0
        %v4503 = vadd.f32 0.0, %v4502
        %v4504 = vpop.f32.mrb[0].mxu0
        %4505 = vmatprep.mubr.f32.mxu0 %v4170
        %4506 = vmatmul.mubr.f32.gmra.mrb[0].mxu0 %v4169
        %v4507 = vpop.f32.mrb[0].mxu0
        %v4508 = vadd.f32 0.0, %v4507
        %v4509 = vpop.f32.mrb[0].mxu0
        %4510 = vmatprep.mubr.f32.mxu0 %v4173
        %4511 = vmatmul.mubr.f32.gmra.mrb[0].mxu0 %v4172
        %v4512 = vpop.f32.mrb[0].mxu0
        %v4513 = vadd.f32 0.0, %v4512
        %v4514 = vpop.f32.mrb[0].mxu0
        %4515 = vmatprep.mubr.f32.mxu0 %v4176
        %4516 = vmatmul.mubr.f32.gmra.mrb[0].mxu0 %v4175
        %v4517 = vpop.f32.mrb[0].mxu0
        %v4518 = vadd.f32 0.0, %v4517
        %v4519 = vpop.f32.mrb[0].mxu0
        %4520 = vmatprep.mubr.f32.mxu0 %v4179
        %4521 = vmatmul.mubr.f32.gmra.mrb[0].mxu0 %v4178
        %v4522 = vpop.f32.mrb[0].mxu0
        %v4523 = vadd.f32 0.0, %v4522
        %v4524 = vpop.f32.mrb[0].mxu0
        %4525 = vmatprep.mubr.f32.mxu0 %v4182
        %4526 = vmatmul.mubr.f32.gmra.mrb[0].mxu0 %v4181
        %v4527 = vpop.f32.mrb[0].mxu0
        %v4528 = vadd.f32 0.0, %v4527
        %v4529 = vpop.f32.mrb[0].mxu0
        %4530 = vmatprep.mubr.f32.mxu0 %v4185
        %4531 = vmatmul.mubr.f32.gmra.mrb[0].mxu0 %v4184
        %v4532 = vpop.f32.mrb[0].mxu0
        %v4533 = vadd.f32 0.0, %v4532
        %v4534 = vpop.f32.mrb[0].mxu0
        %4535 = vmatprep.mubr.f32.mxu0 %v4188
        %4536 = vmatmul.mubr.f32.gmra.mrb[0].mxu0 %v4187
        %v4537 = vpop.f32.mrb[0].mxu0
        %v4538 = vadd.f32 0.0, %v4537
        %v4539 = vpop.f32.mrb[0].mxu0
        %4540 = vmatprep.mubr.f32.mxu0 %v4191
        %4541 = vmatmul.mubr.f32.gmra.mrb[0].mxu0 %v4190
        %v4542 = vpop.f32.mrb[0].mxu0
        %v4543 = vadd.f32 0.0, %v4542
        %v4544 = vpop.f32.mrb[0].mxu0
        %4545 = vmatprep.mubr.f32.mxu0 %v4194
        %4546 = vmatmul.mubr.f32.gmra.mrb[0].mxu0 %v4193
        %v4547 = vpop.f32.mrb[0].mxu0
        %v4548 = vadd.f32 0.0, %v4547
        %v4549 = vpop.f32.mrb[0].mxu0
        %4550 = vmatprep.mubr.f32.mxu0 %v4197
        %4551 = vmatmul.mubr.f32.gmra.mrb[0].mxu0 %v4196
        %v4552 = vpop.f32.mrb[0].mxu0
        %v4553 = vadd.f32 0.0, %v4552
        %v4554 = vpop.f32.mrb[0].mxu0
        %4555 = vdwg.mxu0
        %4556 = vmatprep.subr.mxu0 0.0
        %4557 = vmatpush1.msra.mxu0 %v4231
        %4558 = vmatprep.subr.mxu0 0.0
        %4559 = vmatpush1.msra.mxu0 %v4232
        %4560 = vmatprep.subr.mxu0 0.0
        %4561 = vmatpush1.msra.mxu0 %v4233
        %4562 = vmatprep.subr.mxu0 0.0
        %4563 = vmatpush1.msra.mxu0 %v4234
        %4564 = vmatprep.subr.mxu0 0.0
        %4565 = vmatpush1.msra.mxu0 0.0
        %4566 = vmatprep.subr.mxu0 0.0
        %4567 = vmatpush1.msra.mxu0 0.0
        %4568 = vmatprep.subr.mxu0 0.0
        %4569 = vmatpush1.msra.mxu0 0.0
        %4570 = vmatprep.subr.mxu0 0.0
        %4571 = vmatpush1.msra.mxu0 0.0
        %4572 = vmatprep.subr.mxu0 0.0
        %4573 = vmatpush1.msra.mxu0 0.0
        %4574 = vmatprep.subr.mxu0 0.0
        %4575 = vmatpush1.msra.mxu0 0.0
        %4576 = vmatprep.subr.mxu0 0.0
        %4577 = vmatpush1.msra.mxu0 0.0
        %4578 = vmatprep.subr.mxu0 0.0
        %4579 = vmatpush1.msra.mxu0 0.0
        %4580 = vmatprep.subr.mxu0 0.0
        %4581 = vmatpush1.msra.mxu0 0.0
        %4582 = vmatprep.subr.mxu0 0.0
        %4583 = vmatpush1.msra.mxu0 0.0
        %4584 = vmatprep.subr.mxu0 0.0
        %4585 = vmatpush1.msra.mxu0 0.0
        %4586 = vmatprep.subr.mxu0 0.0
        %4587 = vmatpush1.msra.mxu0 0.0
        %4588 = vmatprep.subr.mxu0 0.0
        %4589 = vmatpush1.msra.mxu0 0.0
        %4590 = vmatprep.subr.mxu0 0.0
        %4591 = vmatpush1.msra.mxu0 0.0
        %4592 = vmatprep.subr.mxu0 0.0
        %4593 = vmatpush1.msra.mxu0 0.0
        %4594 = vmatprep.subr.mxu0 0.0
        %4595 = vmatpush1.msra.mxu0 0.0
        %4596 = vmatprep.subr.mxu0 0.0
        %4597 = vmatpush1.msra.mxu0 0.0
        %4598 = vmatprep.subr.mxu0 0.0
        %4599 = vmatpush1.msra.mxu0 0.0
        %4600 = vmatprep.subr.mxu0 0.0
        %4601 = vmatpush1.msra.mxu0 0.0
        %4602 = vmatprep.subr.mxu0 0.0
        %4603 = vmatpush1.msra.mxu0 0.0
        %4604 = vmatprep.subr.mxu0 0.0
        %4605 = vmatpush1.msra.mxu0 0.0
        %4606 = vmatprep.subr.mxu0 0.0
        %4607 = vmatpush1.msra.mxu0 0.0
        %4608 = vmatprep.subr.mxu0 0.0
        %4609 = vmatpush1.msra.mxu0 0.0
        %4610 = vmatprep.subr.mxu0 0.0
        %4611 = vmatpush1.msra.mxu0 0.0
        %4612 = vmatprep.subr.mxu0 0.0
        %4613 = vmatpush1.msra.mxu0 0.0
        %4614 = vmatprep.subr.mxu0 0.0
        %4615 = vmatpush1.msra.mxu0 0.0
        %4616 = vmatprep.subr.mxu0 0.0
        %4617 = vmatpush1.msra.mxu0 0.0
        %4618 = vmatprep.subr.mxu0 0.0
        %4619 = vmatpush1.msra.mxu0 0.0
        %4620 = vmatprep.mubr.f32.mxu0 0.0
        %4621 = vmatmul.mubr.f32.gmra.mrb[0].mxu0 %v4236
        %v4622 = vpop.f32.mrb[0].mxu0
        %v4623 = vadd.f32 %v4398, %v4622
        %v4624 = vpop.f32.mrb[0].mxu0
        %4625 = vmatprep.mubr.f32.mxu0 0.0
        %4626 = vmatmul.mubr.f32.gmra.mrb[0].mxu0 %v4239
        %v4627 = vpop.f32.mrb[0].mxu0
        %v4628 = vadd.f32 %v4403, %v4627
        %v4629 = vpop.f32.mrb[0].mxu0
        %4630 = vmatprep.mubr.f32.mxu0 0.0
        %4631 = vmatmul.mubr.f32.gmra.mrb[0].mxu0 %v4242
        %v4632 = vpop.f32.mrb[0].mxu0
        %v4633 = vadd.f32 %v4408, %v4632
        %v4634 = vpop.f32.mrb[0].mxu0
        %4635 = vmatprep.mubr.f32.mxu0 0.0
        %4636 = vmatmul.mubr.f32.gmra.mrb[0].mxu0 %v4245
        %v4637 = vpop.f32.mrb[0].mxu0
        %v4638 = vadd.f32 %v4413, %v4637
        %v4639 = vpop.f32.mrb[0].mxu0
        %4640 = vmatprep.mubr.f32.mxu0 0.0
        %4641 = vmatmul.mubr.f32.gmra.mrb[0].mxu0 %v4248
        %v4642 = vpop.f32.mrb[0].mxu0
        %v4643 = vadd.f32 %v4418, %v4642
        %v4644 = vpop.f32.mrb[0].mxu0
        %4645 = vmatprep.mubr.f32.mxu0 0.0
        %4646 = vmatmul.mubr.f32.gmra.mrb[0].mxu0 %v4251
        %v4647 = vpop.f32.mrb[0].mxu0
        %v4648 = vadd.f32 %v4423, %v4647
        %v4649 = vpop.f32.mrb[0].mxu0
        %4650 = vmatprep.mubr.f32.mxu0 0.0
        %4651 = vmatmul.mubr.f32.gmra.mrb[0].mxu0 %v4254
        %v4652 = vpop.f32.mrb[0].mxu0
        %v4653 = vadd.f32 %v4428, %v4652
        %v4654 = vpop.f32.mrb[0].mxu0
        %4655 = vmatprep.mubr.f32.mxu0 0.0
        %4656 = vmatmul.mubr.f32.gmra.mrb[0].mxu0 %v4257
        %v4657 = vpop.f32.mrb[0].mxu0
        %v4658 = vadd.f32 %v4433, %v4657
        %v4659 = vpop.f32.mrb[0].mxu0
        %4660 = vmatprep.mubr.f32.mxu0 0.0
        %4661 = vmatmul.mubr.f32.gmra.mrb[0].mxu0 %v4260
        %v4662 = vpop.f32.mrb[0].mxu0
        %v4663 = vadd.f32 %v4438, %v4662
        %v4664 = vpop.f32.mrb[0].mxu0
        %4665 = vmatprep.mubr.f32.mxu0 0.0
        %4666 = vmatmul.mubr.f32.gmra.mrb[0].mxu0 %v4263
        %v4667 = vpop.f32.mrb[0].mxu0
        %v4668 = vadd.f32 %v4443, %v4667
        %v4669 = vpop.f32.mrb[0].mxu0
        %4670 = vmatprep.mubr.f32.mxu0 0.0
        %4671 = vmatmul.mubr.f32.gmra.mrb[0].mxu0 %v4266
        %v4672 = vpop.f32.mrb[0].mxu0
        %v4673 = vadd.f32 %v4448, %v4672
        %v4674 = vpop.f32.mrb[0].mxu0
        %4675 = vmatprep.mubr.f32.mxu0 0.0
        %4676 = vmatmul.mubr.f32.gmra.mrb[0].mxu0 %v4269
        %v4677 = vpop.f32.mrb[0].mxu0
        %v4678 = vadd.f32 %v4453, %v4677
        %v4679 = vpop.f32.mrb[0].mxu0
        %4680 = vmatprep.mubr.f32.mxu0 0.0
        %4681 = vmatmul.mubr.f32.gmra.mrb[0].mxu0 %v4272
        %v4682 = vpop.f32.mrb[0].mxu0
        %v4683 = vadd.f32 %v4458, %v4682
        %v4684 = vpop.f32.mrb[0].mxu0
        %4685 = vmatprep.mubr.f32.mxu0 0.0
        %4686 = vmatmul.mubr.f32.gmra.mrb[0].mxu0 %v4275
        %v4687 = vpop.f32.mrb[0].mxu0
        %v4688 = vadd.f32 %v4463, %v4687
        %v4689 = vpop.f32.mrb[0].mxu0
        %4690 = vmatprep.mubr.f32.mxu0 0.0
        %4691 = vmatmul.mubr.f32.gmra.mrb[0].mxu0 %v4278
        %v4692 = vpop.f32.mrb[0].mxu0
        %v4693 = vadd.f32 %v4468, %v4692
        %v4694 = vpop.f32.mrb[0].mxu0
        %4695 = vmatprep.mubr.f32.mxu0 0.0
        %4696 = vmatmul.mubr.f32.gmra.mrb[0].mxu0 %v4281
        %v4697 = vpop.f32.mrb[0].mxu0
        %v4698 = vadd.f32 %v4473, %v4697
        %v4699 = vpop.f32.mrb[0].mxu0
        %4700 = vmatprep.mubr.f32.mxu0 0.0
        %4701 = vmatmul.mubr.f32.gmra.mrb[0].mxu0 %v4284
        %v4702 = vpop.f32.mrb[0].mxu0
        %v4703 = vadd.f32 %v4478, %v4702
        %v4704 = vpop.f32.mrb[0].mxu0
        %4705 = vmatprep.mubr.f32.mxu0 0.0
        %4706 = vmatmul.mubr.f32.gmra.mrb[0].mxu0 %v4287
        %v4707 = vpop.f32.mrb[0].mxu0
        %v4708 = vadd.f32 %v4483, %v4707
        %v4709 = vpop.f32.mrb[0].mxu0
        %4710 = vmatprep.mubr.f32.mxu0 0.0
        %4711 = vmatmul.mubr.f32.gmra.mrb[0].mxu0 %v4290
        %v4712 = vpop.f32.mrb[0].mxu0
        %v4713 = vadd.f32 %v4488, %v4712
        %v4714 = vpop.f32.mrb[0].mxu0
        %4715 = vmatprep.mubr.f32.mxu0 0.0
        %4716 = vmatmul.mubr.f32.gmra.mrb[0].mxu0 %v4293
        %v4717 = vpop.f32.mrb[0].mxu0
        %v4718 = vadd.f32 %v4493, %v4717
        %v4719 = vpop.f32.mrb[0].mxu0
        %4720 = vmatprep.mubr.f32.mxu0 0.0
        %4721 = vmatmul.mubr.f32.gmra.mrb[0].mxu0 %v4296
        %v4722 = vpop.f32.mrb[0].mxu0
        %v4723 = vadd.f32 %v4498, %v4722
        %v4724 = vpop.f32.mrb[0].mxu0
        %4725 = vmatprep.mubr.f32.mxu0 0.0
        %4726 = vmatmul.mubr.f32.gmra.mrb[0].mxu0 %v4299
        %v4727 = vpop.f32.mrb[0].mxu0
        %v4728 = vadd.f32 %v4503, %v4727
        %v4729 = vpop.f32.mrb[0].mxu0
        %4730 = vmatprep.mubr.f32.mxu0 0.0
        %4731 = vmatmul.mubr.f32.gmra.mrb[0].mxu0 %v4302
        %v4732 = vpop.f32.mrb[0].mxu0
        %v4733 = vadd.f32 %v4508, %v4732
        %v4734 = vpop.f32.mrb[0].mxu0
        %4735 = vmatprep.mubr.f32.mxu0 0.0
        %4736 = vmatmul.mubr.f32.gmra.mrb[0].mxu0 %v4305
        %v4737 = vpop.f32.mrb[0].mxu0
        %v4738 = vadd.f32 %v4513, %v4737
        %v4739 = vpop.f32.mrb[0].mxu0
        %4740 = vmatprep.mubr.f32.mxu0 0.0
        %4741 = vmatmul.mubr.f32.gmra.mrb[0].mxu0 %v4308
        %v4742 = vpop.f32.mrb[0].mxu0
        %v4743 = vadd.f32 %v4518, %v4742
        %v4744 = vpop.f32.mrb[0].mxu0
        %4745 = vmatprep.mubr.f32.mxu0 0.0
        %4746 = vmatmul.mubr.f32.gmra.mrb[0].mxu0 %v4311
        %v4747 = vpop.f32.mrb[0].mxu0
        %v4748 = vadd.f32 %v4523, %v4747
        %v4749 = vpop.f32.mrb[0].mxu0
        %4750 = vmatprep.mubr.f32.mxu0 0.0
        %4751 = vmatmul.mubr.f32.gmra.mrb[0].mxu0 %v4314
        %v4752 = vpop.f32.mrb[0].mxu0
        %v4753 = vadd.f32 %v4528, %v4752
        %v4754 = vpop.f32.mrb[0].mxu0
        %4755 = vmatprep.mubr.f32.mxu0 0.0
        %4756 = vmatmul.mubr.f32.gmra.mrb[0].mxu0 %v4317
        %v4757 = vpop.f32.mrb[0].mxu0
        %v4758 = vadd.f32 %v4533, %v4757
        %v4759 = vpop.f32.mrb[0].mxu0
        %4760 = vmatprep.mubr.f32.mxu0 0.0
        %4761 = vmatmul.mubr.f32.gmra.mrb[0].mxu0 %v4320
        %v4762 = vpop.f32.mrb[0].mxu0
        %v4763 = vadd.f32 %v4538, %v4762
        %v4764 = vpop.f32.mrb[0].mxu0
        %4765 = vmatprep.mubr.f32.mxu0 0.0
        %4766 = vmatmul.mubr.f32.gmra.mrb[0].mxu0 %v4323
        %v4767 = vpop.f32.mrb[0].mxu0
        %v4768 = vadd.f32 %v4543, %v4767
        %v4769 = vpop.f32.mrb[0].mxu0
        %4770 = vmatprep.mubr.f32.mxu0 0.0
        %4771 = vmatmul.mubr.f32.gmra.mrb[0].mxu0 %v4326
        %v4772 = vpop.f32.mrb[0].mxu0
        %v4773 = vadd.f32 %v4548, %v4772
        %v4774 = vpop.f32.mrb[0].mxu0
        %4775 = vmatprep.mubr.f32.mxu0 0.0
        %4776 = vmatmul.mubr.f32.gmra.mrb[0].mxu0 %v4329
        %v4777 = vpop.f32.mrb[0].mxu0
        %v4778 = vadd.f32 %v4553, %v4777
        %v4779 = vpop.f32.mrb[0].mxu0
        %4780 = vdwg.mxu0
        %v4781 = vld [vmem:[%s5] sm:$0x1]
        %v4783 = vlaneseq
        %v4784 = vshrl.u32 %v4783, 7
        %v4785 = vsub.s32 0, %v4784
        %v4786 = vrot.slane %v4781, %v4785
        %v4788 = vmul.f32 %v4623, %v4786
        %v4789 = vmul.f32 %v4628, %v4786
        %v4790 = vmul.f32 %v4633, %v4786
        %v4791 = vmul.f32 %v4638, %v4786
        %v4792 = vmul.f32 %v4643, %v4786
        %v4793 = vmul.f32 %v4648, %v4786
        %v4794 = vmul.f32 %v4653, %v4786
        %v4795 = vmul.f32 %v4658, %v4786
        %v4796 = vmul.f32 %v4663, %v4786
        %v4797 = vmul.f32 %v4668, %v4786
        %v4798 = vmul.f32 %v4673, %v4786
        %v4799 = vmul.f32 %v4678, %v4786
        %v4800 = vmul.f32 %v4683, %v4786
        %v4801 = vmul.f32 %v4688, %v4786
        %v4802 = vmul.f32 %v4693, %v4786
        %v4803 = vmul.f32 %v4698, %v4786
        %v4804 = vmul.f32 %v4703, %v4786
        %v4805 = vmul.f32 %v4708, %v4786
        %v4806 = vmul.f32 %v4713, %v4786
        %v4807 = vmul.f32 %v4718, %v4786
        %v4808 = vmul.f32 %v4723, %v4786
        %v4809 = vmul.f32 %v4728, %v4786
        %v4810 = vmul.f32 %v4733, %v4786
        %v4811 = vmul.f32 %v4738, %v4786
        %v4812 = vmul.f32 %v4743, %v4786
        %v4813 = vmul.f32 %v4748, %v4786
        %v4814 = vmul.f32 %v4753, %v4786
        %v4815 = vmul.f32 %v4758, %v4786
        %v4816 = vmul.f32 %v4763, %v4786
        %v4817 = vmul.f32 %v4768, %v4786
        %v4818 = vmul.f32 %v4773, %v4786
        %v4819 = vmul.f32 %v4778, %v4786
        %v4820 = vld [vmem:[%s6] sm:$0x1]
        %v4822 = vlaneseq
        %v4823 = vshrl.u32 %v4822, 7
        %v4824 = vsub.s32 0, %v4823
        %v4825 = vrot.slane %v4820, %v4824
        %v4827 = vadd.f32 %v4788, %v4825
        %v4828 = vadd.f32 %v4789, %v4825
        %v4829 = vadd.f32 %v4790, %v4825
        %v4830 = vadd.f32 %v4791, %v4825
        %v4831 = vadd.f32 %v4792, %v4825
        %v4832 = vadd.f32 %v4793, %v4825
        %v4833 = vadd.f32 %v4794, %v4825
        %v4834 = vadd.f32 %v4795, %v4825
        %v4835 = vadd.f32 %v4796, %v4825
        %v4836 = vadd.f32 %v4797, %v4825
        %v4837 = vadd.f32 %v4798, %v4825
        %v4838 = vadd.f32 %v4799, %v4825
        %v4839 = vadd.f32 %v4800, %v4825
        %v4840 = vadd.f32 %v4801, %v4825
        %v4841 = vadd.f32 %v4802, %v4825
        %v4842 = vadd.f32 %v4803, %v4825
        %v4843 = vadd.f32 %v4804, %v4825
        %v4844 = vadd.f32 %v4805, %v4825
        %v4845 = vadd.f32 %v4806, %v4825
        %v4846 = vadd.f32 %v4807, %v4825
        %v4847 = vadd.f32 %v4808, %v4825
        %v4848 = vadd.f32 %v4809, %v4825
        %v4849 = vadd.f32 %v4810, %v4825
        %v4850 = vadd.f32 %v4811, %v4825
        %v4851 = vadd.f32 %v4812, %v4825
        %v4852 = vadd.f32 %v4813, %v4825
        %v4853 = vadd.f32 %v4814, %v4825
        %v4854 = vadd.f32 %v4815, %v4825
        %v4855 = vadd.f32 %v4816, %v4825
        %v4856 = vadd.f32 %v4817, %v4825
        %v4857 = vadd.f32 %v4818, %v4825
        %v4858 = vadd.f32 %v4819, %v4825
        %v4859 = vmax.f32 %v4827, 0.0
        %v4860 = vmax.f32 %v4828, 0.0
        %v4861 = vmax.f32 %v4829, 0.0
        %v4862 = vmax.f32 %v4830, 0.0
        %v4863 = vmax.f32 %v4831, 0.0
        %v4864 = vmax.f32 %v4832, 0.0
        %v4865 = vmax.f32 %v4833, 0.0
        %v4866 = vmax.f32 %v4834, 0.0
        %v4867 = vmax.f32 %v4835, 0.0
        %v4868 = vmax.f32 %v4836, 0.0
        %v4869 = vmax.f32 %v4837, 0.0
        %v4870 = vmax.f32 %v4838, 0.0
        %v4871 = vmax.f32 %v4839, 0.0
        %v4872 = vmax.f32 %v4840, 0.0
        %v4873 = vmax.f32 %v4841, 0.0
        %v4874 = vmax.f32 %v4842, 0.0
        %v4875 = vmax.f32 %v4843, 0.0
        %v4876 = vmax.f32 %v4844, 0.0
        %v4877 = vmax.f32 %v4845, 0.0
        %v4878 = vmax.f32 %v4846, 0.0
        %v4879 = vmax.f32 %v4847, 0.0
        %v4880 = vmax.f32 %v4848, 0.0
        %v4881 = vmax.f32 %v4849, 0.0
        %v4882 = vmax.f32 %v4850, 0.0
        %v4883 = vmax.f32 %v4851, 0.0
        %v4884 = vmax.f32 %v4852, 0.0
        %v4885 = vmax.f32 %v4853, 0.0
        %v4886 = vmax.f32 %v4854, 0.0
        %v4887 = vmax.f32 %v4855, 0.0
        %v4888 = vmax.f32 %v4856, 0.0
        %v4889 = vmax.f32 %v4857, 0.0
        %v4890 = vmax.f32 %v4858, 0.0
        %4891 = vst.msk [vmem:[%s607 + $0x1] sm:$0xff] %vm519, %v4859
        %4892 = vst.msk [vmem:[%s607 + $0x9] sm:$0xff] %vm519, %v4860
        %4893 = vst.msk [vmem:[%s607 + $0x19] sm:$0xff] %vm519, %v4861
        %4894 = vst.msk [vmem:[%s607 + $0x21] sm:$0xff] %vm519, %v4862
        %4895 = vst.msk [vmem:[%s607 + $0x31] sm:$0xff] %vm519, %v4863
        %4896 = vst.msk [vmem:[%s607 + $0x39] sm:$0xff] %vm519, %v4864
        %4897 = vst.msk [vmem:[%s607 + $0x49] sm:$0xff] %vm519, %v4865
        %4898 = vst.msk [vmem:[%s607 + $0x51] sm:$0xff] %vm519, %v4866
        %4899 = vst.msk [vmem:[%s607 + $0x61] sm:$0xff] %vm519, %v4867
        %4900 = vst.msk [vmem:[%s607 + $0x69] sm:$0xff] %vm519, %v4868
        %4901 = vst.msk [vmem:[%s607 + $0x79] sm:$0xff] %vm519, %v4869
        %4902 = vst.msk [vmem:[%s607 + $0x81] sm:$0xff] %vm519, %v4870
        %4903 = vst.msk [vmem:[%s607 + $0x91] sm:$0xff] %vm519, %v4871
        %4904 = vst.msk [vmem:[%s607 + $0x99] sm:$0xff] %vm519, %v4872
        %4905 = vst.msk [vmem:[%s607 + $0xa9] sm:$0xff] %vm519, %v4873
        %4906 = vst.msk [vmem:[%s607 + $0xb1] sm:$0xff] %vm519, %v4874
        %4907 = vst.msk [vmem:[%s607 + $0xc1] sm:$0xff] %vm519, %v4875
        %4908 = vst.msk [vmem:[%s607 + $0xc9] sm:$0xff] %vm519, %v4876
        %4909 = vst.msk [vmem:[%s607 + $0xd9] sm:$0xff] %vm519, %v4877
        %4910 = vst.msk [vmem:[%s607 + $0xe1] sm:$0xff] %vm519, %v4878
        %4911 = vst.msk [vmem:[%s607 + $0xf1] sm:$0xff] %vm519, %v4879
        %4912 = vst.msk [vmem:[%s607 + $0xf9] sm:$0xff] %vm519, %v4880
        %4913 = vst.msk [vmem:[%s607 + $0x109] sm:$0xff] %vm519, %v4881
        %4914 = vst.msk [vmem:[%s607 + $0x111] sm:$0xff] %vm519, %v4882
        %4915 = vst.msk [vmem:[%s607 + $0x121] sm:$0xff] %vm519, %v4883
        %4916 = vst.msk [vmem:[%s607 + $0x129] sm:$0xff] %vm519, %v4884
        %4917 = vst.msk [vmem:[%s607 + $0x139] sm:$0xff] %vm519, %v4885
        %4918 = vst.msk [vmem:[%s607 + $0x141] sm:$0xff] %vm519, %v4886
        %4919 = vst.msk [vmem:[%s607 + $0x151] sm:$0xff] %vm519, %v4887
        %4920 = vst.msk [vmem:[%s607 + $0x159] sm:$0xff] %vm519, %v4888
        %4921 = vst.msk [vmem:[%s607 + $0x169] sm:$0xff] %vm519, %v4889
        %4922 = vst.msk [vmem:[%s607 + $0x171] sm:$0xff] %vm519, %v4890
        %v4923 = vld [vmem:[#allocation2] sm:$0xff]
        %v4924 = vld [vmem:[#allocation2 + $0x8] sm:$0xff]
        %v4925 = vld [vmem:[#allocation2 + $0x18] sm:$0xff]
        %v4926 = vld [vmem:[#allocation2 + $0x20] sm:$0xff]
        %v4927 = vld [vmem:[#allocation2 + $0x30] sm:$0xff]
        %v4928 = vld [vmem:[#allocation2 + $0x38] sm:$0xff]
        %v4929 = vld [vmem:[#allocation2 + $0x48] sm:$0xff]
        %v4930 = vld [vmem:[#allocation2 + $0x50] sm:$0xff]
        %v4931 = vld [vmem:[#allocation2 + $0x60] sm:$0xff]
        %v4932 = vld [vmem:[#allocation2 + $0x68] sm:$0xff]
        %v4933 = vld [vmem:[#allocation2 + $0x78] sm:$0xff]
        %v4934 = vld [vmem:[#allocation2 + $0x80] sm:$0xff]
        %v4935 = vld [vmem:[#allocation2 + $0x90] sm:$0xff]
        %v4936 = vld [vmem:[#allocation2 + $0x98] sm:$0xff]
        %v4937 = vld [vmem:[#allocation2 + $0xa8] sm:$0xff]
        %v4938 = vld [vmem:[#allocation2 + $0xb0] sm:$0xff]
        %v4939 = vld [vmem:[#allocation2 + $0xc0] sm:$0xff]
        %v4940 = vld [vmem:[#allocation2 + $0xc8] sm:$0xff]
        %v4941 = vld [vmem:[#allocation2 + $0xd8] sm:$0xff]
        %v4942 = vld [vmem:[#allocation2 + $0xe0] sm:$0xff]
        %v4943 = vld [vmem:[#allocation2 + $0xf0] sm:$0xff]
        %v4944 = vld [vmem:[#allocation2 + $0xf8] sm:$0xff]
        %v4945 = vld [vmem:[#allocation2 + $0x108] sm:$0xff]
        %v4946 = vld [vmem:[#allocation2 + $0x110] sm:$0xff]
        %v4947 = vld [vmem:[#allocation2 + $0x120] sm:$0xff]
        %v4948 = vld [vmem:[#allocation2 + $0x128] sm:$0xff]
        %v4949 = vld [vmem:[#allocation2 + $0x138] sm:$0xff]
        %v4950 = vld [vmem:[#allocation2 + $0x140] sm:$0xff]
        %v4951 = vld [vmem:[#allocation2 + $0x150] sm:$0xff]
        %v4952 = vld [vmem:[#allocation2 + $0x158] sm:$0xff]
        %v4953 = vld [vmem:[#allocation2 + $0x168] sm:$0xff]
        %v4954 = vld [vmem:[#allocation2 + $0x170] sm:$0xff]
        %4955 = vst.msk [vmem:[#allocation3] sm:$0xff] %vm519, %v4923
        %4956 = vst.msk [vmem:[#allocation3 + $0x28] sm:$0xff] %vm519, %v4924
        %4957 = vst.msk [vmem:[#allocation3 + $0x50] sm:$0xff] %vm519, %v4925
        %4958 = vst.msk [vmem:[#allocation3 + $0x78] sm:$0xff] %vm519, %v4926
        %4959 = vst.msk [vmem:[#allocation3 + $0xa0] sm:$0xff] %vm519, %v4927
        %4960 = vst.msk [vmem:[#allocation3 + $0xc8] sm:$0xff] %vm519, %v4928
        %4961 = vst.msk [vmem:[#allocation3 + $0xf0] sm:$0xff] %vm519, %v4929
        %4962 = vst.msk [vmem:[#allocation3 + $0x118] sm:$0xff] %vm519, %v4930
        %4963 = vst.msk [vmem:[#allocation3 + $0x140] sm:$0xff] %vm519, %v4931
        %4964 = vst.msk [vmem:[#allocation3 + $0x168] sm:$0xff] %vm519, %v4932
        %4965 = vst.msk [vmem:[#allocation3 + $0x190] sm:$0xff] %vm519, %v4933
        %4966 = vst.msk [vmem:[#allocation3 + $0x1b8] sm:$0xff] %vm519, %v4934
        %4967 = vst.msk [vmem:[#allocation3 + $0x1e0] sm:$0xff] %vm519, %v4935
        %4968 = vst.msk [vmem:[#allocation3 + $0x208] sm:$0xff] %vm519, %v4936
        %4969 = vst.msk [vmem:[#allocation3 + $0x230] sm:$0xff] %vm519, %v4937
        %4970 = vst.msk [vmem:[#allocation3 + $0x258] sm:$0xff] %vm519, %v4938
        %4971 = vst.msk [vmem:[#allocation3 + $0x280] sm:$0xff] %vm519, %v4939
        %4972 = vst.msk [vmem:[#allocation3 + $0x2a8] sm:$0xff] %vm519, %v4940
        %4973 = vst.msk [vmem:[#allocation3 + $0x2d0] sm:$0xff] %vm519, %v4941
        %4974 = vst.msk [vmem:[#allocation3 + $0x2f8] sm:$0xff] %vm519, %v4942
        %4975 = vst.msk [vmem:[#allocation3 + $0x320] sm:$0xff] %vm519, %v4943
        %4976 = vst.msk [vmem:[#allocation3 + $0x348] sm:$0xff] %vm519, %v4944
        %4977 = vst.msk [vmem:[#allocation3 + $0x370] sm:$0xff] %vm519, %v4945
        %4978 = vst.msk [vmem:[#allocation3 + $0x398] sm:$0xff] %vm519, %v4946
        %4979 = vst.msk [vmem:[#allocation3 + $0x3c0] sm:$0xff] %vm519, %v4947
        %4980 = vst.msk [vmem:[#allocation3 + $0x3e8] sm:$0xff] %vm519, %v4948
        %4981 = vst.msk [vmem:[#allocation3 + $0x410] sm:$0xff] %vm519, %v4949
        %4982 = vst.msk [vmem:[#allocation3 + $0x438] sm:$0xff] %vm519, %v4950
        %4983 = vst.msk [vmem:[#allocation3 + $0x460] sm:$0xff] %vm519, %v4951
        %4984 = vst.msk [vmem:[#allocation3 + $0x488] sm:$0xff] %vm519, %v4952
        %4985 = vst.msk [vmem:[#allocation3 + $0x4b0] sm:$0xff] %vm519, %v4953
        %4986 = vst.msk [vmem:[#allocation3 + $0x4d8] sm:$0xff] %vm519, %v4954
        %v4987 = vld [vmem:[#allocation2 + $0x1] sm:$0xff]
        %v4988 = vld [vmem:[#allocation2 + $0x9] sm:$0xff]
        %v4989 = vld [vmem:[#allocation2 + $0x19] sm:$0xff]
        %v4990 = vld [vmem:[#allocation2 + $0x21] sm:$0xff]
        %v4991 = vld [vmem:[#allocation2 + $0x31] sm:$0xff]
        %v4992 = vld [vmem:[#allocation2 + $0x39] sm:$0xff]
        %v4993 = vld [vmem:[#allocation2 + $0x49] sm:$0xff]
        %v4994 = vld [vmem:[#allocation2 + $0x51] sm:$0xff]
        %v4995 = vld [vmem:[#allocation2 + $0x61] sm:$0xff]
        %v4996 = vld [vmem:[#allocation2 + $0x69] sm:$0xff]
        %v4997 = vld [vmem:[#allocation2 + $0x79] sm:$0xff]
        %v4998 = vld [vmem:[#allocation2 + $0x81] sm:$0xff]
        %v4999 = vld [vmem:[#allocation2 + $0x91] sm:$0xff]
        %v5000 = vld [vmem:[#allocation2 + $0x99] sm:$0xff]
        %v5001 = vld [vmem:[#allocation2 + $0xa9] sm:$0xff]
        %v5002 = vld [vmem:[#allocation2 + $0xb1] sm:$0xff]
        %v5003 = vld [vmem:[#allocation2 + $0xc1] sm:$0xff]
        %v5004 = vld [vmem:[#allocation2 + $0xc9] sm:$0xff]
        %v5005 = vld [vmem:[#allocation2 + $0xd9] sm:$0xff]
        %v5006 = vld [vmem:[#allocation2 + $0xe1] sm:$0xff]
        %v5007 = vld [vmem:[#allocation2 + $0xf1] sm:$0xff]
        %v5008 = vld [vmem:[#allocation2 + $0xf9] sm:$0xff]
        %v5009 = vld [vmem:[#allocation2 + $0x109] sm:$0xff]
        %v5010 = vld [vmem:[#allocation2 + $0x111] sm:$0xff]
        %v5011 = vld [vmem:[#allocation2 + $0x121] sm:$0xff]
        %v5012 = vld [vmem:[#allocation2 + $0x129] sm:$0xff]
        %v5013 = vld [vmem:[#allocation2 + $0x139] sm:$0xff]
        %v5014 = vld [vmem:[#allocation2 + $0x141] sm:$0xff]
        %v5015 = vld [vmem:[#allocation2 + $0x151] sm:$0xff]
        %v5016 = vld [vmem:[#allocation2 + $0x159] sm:$0xff]
        %v5017 = vld [vmem:[#allocation2 + $0x169] sm:$0xff]
        %v5018 = vld [vmem:[#allocation2 + $0x171] sm:$0xff]
        %5051 = vrot.lane.b32.xlu0 %v4987, 64
        %v5052 = vpop.permute.xlu0 %5051
        %5053 = vrot.lane.b32.xlu0 %v4988, 64
        %v5054 = vpop.permute.xlu0 %5053
        %5055 = vrot.lane.b32.xlu0 %v4989, 64
        %v5056 = vpop.permute.xlu0 %5055
        %5057 = vrot.lane.b32.xlu0 %v4990, 64
        %v5058 = vpop.permute.xlu0 %5057
        %5059 = vrot.lane.b32.xlu0 %v4991, 64
        %v5060 = vpop.permute.xlu0 %5059
        %5061 = vrot.lane.b32.xlu0 %v4992, 64
        %v5062 = vpop.permute.xlu0 %5061
        %5063 = vrot.lane.b32.xlu0 %v4993, 64
        %v5064 = vpop.permute.xlu0 %5063
        %5065 = vrot.lane.b32.xlu0 %v4994, 64
        %v5066 = vpop.permute.xlu0 %5065
        %5067 = vrot.lane.b32.xlu0 %v4995, 64
        %v5068 = vpop.permute.xlu0 %5067
        %5069 = vrot.lane.b32.xlu0 %v4996, 64
        %v5070 = vpop.permute.xlu0 %5069
        %5071 = vrot.lane.b32.xlu0 %v4997, 64
        %v5072 = vpop.permute.xlu0 %5071
        %5073 = vrot.lane.b32.xlu0 %v4998, 64
        %v5074 = vpop.permute.xlu0 %5073
        %5075 = vrot.lane.b32.xlu0 %v4999, 64
        %v5076 = vpop.permute.xlu0 %5075
        %5077 = vrot.lane.b32.xlu0 %v5000, 64
        %v5078 = vpop.permute.xlu0 %5077
        %5079 = vrot.lane.b32.xlu0 %v5001, 64
        %v5080 = vpop.permute.xlu0 %5079
        %5081 = vrot.lane.b32.xlu0 %v5002, 64
        %v5082 = vpop.permute.xlu0 %5081
        %5083 = vrot.lane.b32.xlu0 %v5003, 64
        %v5084 = vpop.permute.xlu0 %5083
        %5085 = vrot.lane.b32.xlu0 %v5004, 64
        %v5086 = vpop.permute.xlu0 %5085
        %5087 = vrot.lane.b32.xlu0 %v5005, 64
        %v5088 = vpop.permute.xlu0 %5087
        %5089 = vrot.lane.b32.xlu0 %v5006, 64
        %v5090 = vpop.permute.xlu0 %5089
        %5091 = vrot.lane.b32.xlu0 %v5007, 64
        %v5092 = vpop.permute.xlu0 %5091
        %5093 = vrot.lane.b32.xlu0 %v5008, 64
        %v5094 = vpop.permute.xlu0 %5093
        %5095 = vrot.lane.b32.xlu0 %v5009, 64
        %v5096 = vpop.permute.xlu0 %5095
        %5097 = vrot.lane.b32.xlu0 %v5010, 64
        %v5098 = vpop.permute.xlu0 %5097
        %5099 = vrot.lane.b32.xlu0 %v5011, 64
        %v5100 = vpop.permute.xlu0 %5099
        %5101 = vrot.lane.b32.xlu0 %v5012, 64
        %v5102 = vpop.permute.xlu0 %5101
        %5103 = vrot.lane.b32.xlu0 %v5013, 64
        %v5104 = vpop.permute.xlu0 %5103
        %5105 = vrot.lane.b32.xlu0 %v5014, 64
        %v5106 = vpop.permute.xlu0 %5105
        %5107 = vrot.lane.b32.xlu0 %v5015, 64
        %v5108 = vpop.permute.xlu0 %5107
        %5109 = vrot.lane.b32.xlu0 %v5016, 64
        %v5110 = vpop.permute.xlu0 %5109
        %5111 = vrot.lane.b32.xlu0 %v5017, 64
        %v5112 = vpop.permute.xlu0 %5111
        %5113 = vrot.lane.b32.xlu0 %v5018, 64
        %v5114 = vpop.permute.xlu0 %5113
        %vm5147 = vcmask 1048064
        %5148 = vst.msk [vmem:[#allocation3] sm:$0xff] %vm5147, %v5052
        %5149 = vst.msk [vmem:[#allocation3 + $0x28] sm:$0xff] %vm5147, %v5054
        %5150 = vst.msk [vmem:[#allocation3 + $0x50] sm:$0xff] %vm5147, %v5056
        %5151 = vst.msk [vmem:[#allocation3 + $0x78] sm:$0xff] %vm5147, %v5058
        %5152 = vst.msk [vmem:[#allocation3 + $0xa0] sm:$0xff] %vm5147, %v5060
        %5153 = vst.msk [vmem:[#allocation3 + $0xc8] sm:$0xff] %vm5147, %v5062
        %5154 = vst.msk [vmem:[#allocation3 + $0xf0] sm:$0xff] %vm5147, %v5064
        %5155 = vst.msk [vmem:[#allocation3 + $0x118] sm:$0xff] %vm5147, %v5066
        %5156 = vst.msk [vmem:[#allocation3 + $0x140] sm:$0xff] %vm5147, %v5068
        %5157 = vst.msk [vmem:[#allocation3 + $0x168] sm:$0xff] %vm5147, %v5070
        %5158 = vst.msk [vmem:[#allocation3 + $0x190] sm:$0xff] %vm5147, %v5072
        %5159 = vst.msk [vmem:[#allocation3 + $0x1b8] sm:$0xff] %vm5147, %v5074
        %5160 = vst.msk [vmem:[#allocation3 + $0x1e0] sm:$0xff] %vm5147, %v5076
        %5161 = vst.msk [vmem:[#allocation3 + $0x208] sm:$0xff] %vm5147, %v5078
        %5162 = vst.msk [vmem:[#allocation3 + $0x230] sm:$0xff] %vm5147, %v5080
        %5163 = vst.msk [vmem:[#allocation3 + $0x258] sm:$0xff] %vm5147, %v5082
        %5164 = vst.msk [vmem:[#allocation3 + $0x280] sm:$0xff] %vm5147, %v5084
        %5165 = vst.msk [vmem:[#allocation3 + $0x2a8] sm:$0xff] %vm5147, %v5086
        %5166 = vst.msk [vmem:[#allocation3 + $0x2d0] sm:$0xff] %vm5147, %v5088
        %5167 = vst.msk [vmem:[#allocation3 + $0x2f8] sm:$0xff] %vm5147, %v5090
        %5168 = vst.msk [vmem:[#allocation3 + $0x320] sm:$0xff] %vm5147, %v5092
        %5169 = vst.msk [vmem:[#allocation3 + $0x348] sm:$0xff] %vm5147, %v5094
        %5170 = vst.msk [vmem:[#allocation3 + $0x370] sm:$0xff] %vm5147, %v5096
        %5171 = vst.msk [vmem:[#allocation3 + $0x398] sm:$0xff] %vm5147, %v5098
        %5172 = vst.msk [vmem:[#allocation3 + $0x3c0] sm:$0xff] %vm5147, %v5100
        %5173 = vst.msk [vmem:[#allocation3 + $0x3e8] sm:$0xff] %vm5147, %v5102
        %5174 = vst.msk [vmem:[#allocation3 + $0x410] sm:$0xff] %vm5147, %v5104
        %5175 = vst.msk [vmem:[#allocation3 + $0x438] sm:$0xff] %vm5147, %v5106
        %5176 = vst.msk [vmem:[#allocation3 + $0x460] sm:$0xff] %vm5147, %v5108
        %5177 = vst.msk [vmem:[#allocation3 + $0x488] sm:$0xff] %vm5147, %v5110
        %5178 = vst.msk [vmem:[#allocation3 + $0x4b0] sm:$0xff] %vm5147, %v5112
        %5179 = vst.msk [vmem:[#allocation3 + $0x4d8] sm:$0xff] %vm5147, %v5114
        %v5180 = vld [vmem:[#allocation2 + $0x2] sm:$0xff]
        %v5181 = vld [vmem:[#allocation2 + $0xa] sm:$0xff]
        %v5182 = vld [vmem:[#allocation2 + $0x1a] sm:$0xff]
        %v5183 = vld [vmem:[#allocation2 + $0x22] sm:$0xff]
        %v5184 = vld [vmem:[#allocation2 + $0x32] sm:$0xff]
        %v5185 = vld [vmem:[#allocation2 + $0x3a] sm:$0xff]
        %v5186 = vld [vmem:[#allocation2 + $0x4a] sm:$0xff]
        %v5187 = vld [vmem:[#allocation2 + $0x52] sm:$0xff]
        %v5188 = vld [vmem:[#allocation2 + $0x62] sm:$0xff]
        %v5189 = vld [vmem:[#allocation2 + $0x6a] sm:$0xff]
        %v5190 = vld [vmem:[#allocation2 + $0x7a] sm:$0xff]
        %v5191 = vld [vmem:[#allocation2 + $0x82] sm:$0xff]
        %v5192 = vld [vmem:[#allocation2 + $0x92] sm:$0xff]
        %v5193 = vld [vmem:[#allocation2 + $0x9a] sm:$0xff]
        %v5194 = vld [vmem:[#allocation2 + $0xaa] sm:$0xff]
        %v5195 = vld [vmem:[#allocation2 + $0xb2] sm:$0xff]
        %v5196 = vld [vmem:[#allocation2 + $0xc2] sm:$0xff]
        %v5197 = vld [vmem:[#allocation2 + $0xca] sm:$0xff]
        %v5198 = vld [vmem:[#allocation2 + $0xda] sm:$0xff]
        %v5199 = vld [vmem:[#allocation2 + $0xe2] sm:$0xff]
        %v5200 = vld [vmem:[#allocation2 + $0xf2] sm:$0xff]
        %v5201 = vld [vmem:[#allocation2 + $0xfa] sm:$0xff]
        %v5202 = vld [vmem:[#allocation2 + $0x10a] sm:$0xff]
        %v5203 = vld [vmem:[#allocation2 + $0x112] sm:$0xff]
        %v5204 = vld [vmem:[#allocation2 + $0x122] sm:$0xff]
        %v5205 = vld [vmem:[#allocation2 + $0x12a] sm:$0xff]
        %v5206 = vld [vmem:[#allocation2 + $0x13a] sm:$0xff]
        %v5207 = vld [vmem:[#allocation2 + $0x142] sm:$0xff]
        %v5208 = vld [vmem:[#allocation2 + $0x152] sm:$0xff]
        %v5209 = vld [vmem:[#allocation2 + $0x15a] sm:$0xff]
        %v5210 = vld [vmem:[#allocation2 + $0x16a] sm:$0xff]
        %v5211 = vld [vmem:[#allocation2 + $0x172] sm:$0xff]
        %5212 = vst.msk [vmem:[#allocation3 + $0x8] sm:$0xff] %vm519, %v5180
        %5213 = vst.msk [vmem:[#allocation3 + $0x30] sm:$0xff] %vm519, %v5181
        %5214 = vst.msk [vmem:[#allocation3 + $0x58] sm:$0xff] %vm519, %v5182
        %5215 = vst.msk [vmem:[#allocation3 + $0x80] sm:$0xff] %vm519, %v5183
        %5216 = vst.msk [vmem:[#allocation3 + $0xa8] sm:$0xff] %vm519, %v5184
        %5217 = vst.msk [vmem:[#allocation3 + $0xd0] sm:$0xff] %vm519, %v5185
        %5218 = vst.msk [vmem:[#allocation3 + $0xf8] sm:$0xff] %vm519, %v5186
        %5219 = vst.msk [vmem:[#allocation3 + $0x120] sm:$0xff] %vm519, %v5187
        %5220 = vst.msk [vmem:[#allocation3 + $0x148] sm:$0xff] %vm519, %v5188
        %5221 = vst.msk [vmem:[#allocation3 + $0x170] sm:$0xff] %vm519, %v5189
        %5222 = vst.msk [vmem:[#allocation3 + $0x198] sm:$0xff] %vm519, %v5190
        %5223 = vst.msk [vmem:[#allocation3 + $0x1c0] sm:$0xff] %vm519, %v5191
        %5224 = vst.msk [vmem:[#allocation3 + $0x1e8] sm:$0xff] %vm519, %v5192
        %5225 = vst.msk [vmem:[#allocation3 + $0x210] sm:$0xff] %vm519, %v5193
        %5226 = vst.msk [vmem:[#allocation3 + $0x238] sm:$0xff] %vm519, %v5194
        %5227 = vst.msk [vmem:[#allocation3 + $0x260] sm:$0xff] %vm519, %v5195
        %5228 = vst.msk [vmem:[#allocation3 + $0x288] sm:$0xff] %vm519, %v5196
        %5229 = vst.msk [vmem:[#allocation3 + $0x2b0] sm:$0xff] %vm519, %v5197
        %5230 = vst.msk [vmem:[#allocation3 + $0x2d8] sm:$0xff] %vm519, %v5198
        %5231 = vst.msk [vmem:[#allocation3 + $0x300] sm:$0xff] %vm519, %v5199
        %5232 = vst.msk [vmem:[#allocation3 + $0x328] sm:$0xff] %vm519, %v5200
        %5233 = vst.msk [vmem:[#allocation3 + $0x350] sm:$0xff] %vm519, %v5201
        %5234 = vst.msk [vmem:[#allocation3 + $0x378] sm:$0xff] %vm519, %v5202
        %5235 = vst.msk [vmem:[#allocation3 + $0x3a0] sm:$0xff] %vm519, %v5203
        %5236 = vst.msk [vmem:[#allocation3 + $0x3c8] sm:$0xff] %vm519, %v5204
        %5237 = vst.msk [vmem:[#allocation3 + $0x3f0] sm:$0xff] %vm519, %v5205
        %5238 = vst.msk [vmem:[#allocation3 + $0x418] sm:$0xff] %vm519, %v5206
        %5239 = vst.msk [vmem:[#allocation3 + $0x440] sm:$0xff] %vm519, %v5207
        %5240 = vst.msk [vmem:[#allocation3 + $0x468] sm:$0xff] %vm519, %v5208
        %5241 = vst.msk [vmem:[#allocation3 + $0x490] sm:$0xff] %vm519, %v5209
        %5242 = vst.msk [vmem:[#allocation3 + $0x4b8] sm:$0xff] %vm519, %v5210
        %5243 = vst.msk [vmem:[#allocation3 + $0x4e0] sm:$0xff] %vm519, %v5211
        %v5244 = vld [vmem:[%s607] sm:$0xff]
        %v5245 = vld [vmem:[%s607 + $0x8] sm:$0xff]
        %v5246 = vld [vmem:[%s607 + $0x18] sm:$0xff]
        %v5247 = vld [vmem:[%s607 + $0x20] sm:$0xff]
        %v5248 = vld [vmem:[%s607 + $0x30] sm:$0xff]
        %v5249 = vld [vmem:[%s607 + $0x38] sm:$0xff]
        %v5250 = vld [vmem:[%s607 + $0x48] sm:$0xff]
        %v5251 = vld [vmem:[%s607 + $0x50] sm:$0xff]
        %v5252 = vld [vmem:[%s607 + $0x60] sm:$0xff]
        %v5253 = vld [vmem:[%s607 + $0x68] sm:$0xff]
        %v5254 = vld [vmem:[%s607 + $0x78] sm:$0xff]
        %v5255 = vld [vmem:[%s607 + $0x80] sm:$0xff]
        %v5256 = vld [vmem:[%s607 + $0x90] sm:$0xff]
        %v5257 = vld [vmem:[%s607 + $0x98] sm:$0xff]
        %v5258 = vld [vmem:[%s607 + $0xa8] sm:$0xff]
        %v5259 = vld [vmem:[%s607 + $0xb0] sm:$0xff]
        %v5260 = vld [vmem:[%s607 + $0xc0] sm:$0xff]
        %v5261 = vld [vmem:[%s607 + $0xc8] sm:$0xff]
        %v5262 = vld [vmem:[%s607 + $0xd8] sm:$0xff]
        %v5263 = vld [vmem:[%s607 + $0xe0] sm:$0xff]
        %v5264 = vld [vmem:[%s607 + $0xf0] sm:$0xff]
        %v5265 = vld [vmem:[%s607 + $0xf8] sm:$0xff]
        %v5266 = vld [vmem:[%s607 + $0x108] sm:$0xff]
        %v5267 = vld [vmem:[%s607 + $0x110] sm:$0xff]
        %v5268 = vld [vmem:[%s607 + $0x120] sm:$0xff]
        %v5269 = vld [vmem:[%s607 + $0x128] sm:$0xff]
        %v5270 = vld [vmem:[%s607 + $0x138] sm:$0xff]
        %v5271 = vld [vmem:[%s607 + $0x140] sm:$0xff]
        %v5272 = vld [vmem:[%s607 + $0x150] sm:$0xff]
        %v5273 = vld [vmem:[%s607 + $0x158] sm:$0xff]
        %v5274 = vld [vmem:[%s607 + $0x168] sm:$0xff]
        %v5275 = vld [vmem:[%s607 + $0x170] sm:$0xff]
        %5308 = vrot.lane.b32.xlu0 %v5244, 64
        %v5309 = vpop.permute.xlu0 %5308
        %5310 = vrot.lane.b32.xlu0 %v5245, 64
        %v5311 = vpop.permute.xlu0 %5310
        %5312 = vrot.lane.b32.xlu0 %v5246, 64
        %v5313 = vpop.permute.xlu0 %5312
        %5314 = vrot.lane.b32.xlu0 %v5247, 64
        %v5315 = vpop.permute.xlu0 %5314
        %5316 = vrot.lane.b32.xlu0 %v5248, 64
        %v5317 = vpop.permute.xlu0 %5316
        %5318 = vrot.lane.b32.xlu0 %v5249, 64
        %v5319 = vpop.permute.xlu0 %5318
        %5320 = vrot.lane.b32.xlu0 %v5250, 64
        %v5321 = vpop.permute.xlu0 %5320
        %5322 = vrot.lane.b32.xlu0 %v5251, 64
        %v5323 = vpop.permute.xlu0 %5322
        %5324 = vrot.lane.b32.xlu0 %v5252, 64
        %v5325 = vpop.permute.xlu0 %5324
        %5326 = vrot.lane.b32.xlu0 %v5253, 64
        %v5327 = vpop.permute.xlu0 %5326
        %5328 = vrot.lane.b32.xlu0 %v5254, 64
        %v5329 = vpop.permute.xlu0 %5328
        %5330 = vrot.lane.b32.xlu0 %v5255, 64
        %v5331 = vpop.permute.xlu0 %5330
        %5332 = vrot.lane.b32.xlu0 %v5256, 64
        %v5333 = vpop.permute.xlu0 %5332
        %5334 = vrot.lane.b32.xlu0 %v5257, 64
        %v5335 = vpop.permute.xlu0 %5334
        %5336 = vrot.lane.b32.xlu0 %v5258, 64
        %v5337 = vpop.permute.xlu0 %5336
        %5338 = vrot.lane.b32.xlu0 %v5259, 64
        %v5339 = vpop.permute.xlu0 %5338
        %5340 = vrot.lane.b32.xlu0 %v5260, 64
        %v5341 = vpop.permute.xlu0 %5340
        %5342 = vrot.lane.b32.xlu0 %v5261, 64
        %v5343 = vpop.permute.xlu0 %5342
        %5344 = vrot.lane.b32.xlu0 %v5262, 64
        %v5345 = vpop.permute.xlu0 %5344
        %5346 = vrot.lane.b32.xlu0 %v5263, 64
        %v5347 = vpop.permute.xlu0 %5346
        %5348 = vrot.lane.b32.xlu0 %v5264, 64
        %v5349 = vpop.permute.xlu0 %5348
        %5350 = vrot.lane.b32.xlu0 %v5265, 64
        %v5351 = vpop.permute.xlu0 %5350
        %5352 = vrot.lane.b32.xlu0 %v5266, 64
        %v5353 = vpop.permute.xlu0 %5352
        %5354 = vrot.lane.b32.xlu0 %v5267, 64
        %v5355 = vpop.permute.xlu0 %5354
        %5356 = vrot.lane.b32.xlu0 %v5268, 64
        %v5357 = vpop.permute.xlu0 %5356
        %5358 = vrot.lane.b32.xlu0 %v5269, 64
        %v5359 = vpop.permute.xlu0 %5358
        %5360 = vrot.lane.b32.xlu0 %v5270, 64
        %v5361 = vpop.permute.xlu0 %5360
        %5362 = vrot.lane.b32.xlu0 %v5271, 64
        %v5363 = vpop.permute.xlu0 %5362
        %5364 = vrot.lane.b32.xlu0 %v5272, 64
        %v5365 = vpop.permute.xlu0 %5364
        %5366 = vrot.lane.b32.xlu0 %v5273, 64
        %v5367 = vpop.permute.xlu0 %5366
        %5368 = vrot.lane.b32.xlu0 %v5274, 64
        %v5369 = vpop.permute.xlu0 %5368
        %5370 = vrot.lane.b32.xlu0 %v5275, 64
        %v5371 = vpop.permute.xlu0 %5370
        %5404 = vst.msk [vmem:[#allocation3 + $0x8] sm:$0xff] %vm5147, %v5309
        %5405 = vst.msk [vmem:[#allocation3 + $0x30] sm:$0xff] %vm5147, %v5311
        %5406 = vst.msk [vmem:[#allocation3 + $0x58] sm:$0xff] %vm5147, %v5313
        %5407 = vst.msk [vmem:[#allocation3 + $0x80] sm:$0xff] %vm5147, %v5315
        %5408 = vst.msk [vmem:[#allocation3 + $0xa8] sm:$0xff] %vm5147, %v5317
        %5409 = vst.msk [vmem:[#allocation3 + $0xd0] sm:$0xff] %vm5147, %v5319
        %5410 = vst.msk [vmem:[#allocation3 + $0xf8] sm:$0xff] %vm5147, %v5321
        %5411 = vst.msk [vmem:[#allocation3 + $0x120] sm:$0xff] %vm5147, %v5323
        %5412 = vst.msk [vmem:[#allocation3 + $0x148] sm:$0xff] %vm5147, %v5325
        %5413 = vst.msk [vmem:[#allocation3 + $0x170] sm:$0xff] %vm5147, %v5327
        %5414 = vst.msk [vmem:[#allocation3 + $0x198] sm:$0xff] %vm5147, %v5329
        %5415 = vst.msk [vmem:[#allocation3 + $0x1c0] sm:$0xff] %vm5147, %v5331
        %5416 = vst.msk [vmem:[#allocation3 + $0x1e8] sm:$0xff] %vm5147, %v5333
        %5417 = vst.msk [vmem:[#allocation3 + $0x210] sm:$0xff] %vm5147, %v5335
        %5418 = vst.msk [vmem:[#allocation3 + $0x238] sm:$0xff] %vm5147, %v5337
        %5419 = vst.msk [vmem:[#allocation3 + $0x260] sm:$0xff] %vm5147, %v5339
        %5420 = vst.msk [vmem:[#allocation3 + $0x288] sm:$0xff] %vm5147, %v5341
        %5421 = vst.msk [vmem:[#allocation3 + $0x2b0] sm:$0xff] %vm5147, %v5343
        %5422 = vst.msk [vmem:[#allocation3 + $0x2d8] sm:$0xff] %vm5147, %v5345
        %5423 = vst.msk [vmem:[#allocation3 + $0x300] sm:$0xff] %vm5147, %v5347
        %5424 = vst.msk [vmem:[#allocation3 + $0x328] sm:$0xff] %vm5147, %v5349
        %5425 = vst.msk [vmem:[#allocation3 + $0x350] sm:$0xff] %vm5147, %v5351
        %5426 = vst.msk [vmem:[#allocation3 + $0x378] sm:$0xff] %vm5147, %v5353
        %5427 = vst.msk [vmem:[#allocation3 + $0x3a0] sm:$0xff] %vm5147, %v5355
        %5428 = vst.msk [vmem:[#allocation3 + $0x3c8] sm:$0xff] %vm5147, %v5357
        %5429 = vst.msk [vmem:[#allocation3 + $0x3f0] sm:$0xff] %vm5147, %v5359
        %5430 = vst.msk [vmem:[#allocation3 + $0x418] sm:$0xff] %vm5147, %v5361
        %5431 = vst.msk [vmem:[#allocation3 + $0x440] sm:$0xff] %vm5147, %v5363
        %5432 = vst.msk [vmem:[#allocation3 + $0x468] sm:$0xff] %vm5147, %v5365
        %5433 = vst.msk [vmem:[#allocation3 + $0x490] sm:$0xff] %vm5147, %v5367
        %5434 = vst.msk [vmem:[#allocation3 + $0x4b8] sm:$0xff] %vm5147, %v5369
        %5435 = vst.msk [vmem:[#allocation3 + $0x4e0] sm:$0xff] %vm5147, %v5371
        %v5436 = vld [vmem:[%s607 + $0x1] sm:$0xff]
        %v5437 = vld [vmem:[%s607 + $0x9] sm:$0xff]
        %v5438 = vld [vmem:[%s607 + $0x19] sm:$0xff]
        %v5439 = vld [vmem:[%s607 + $0x21] sm:$0xff]
        %v5440 = vld [vmem:[%s607 + $0x31] sm:$0xff]
        %v5441 = vld [vmem:[%s607 + $0x39] sm:$0xff]
        %v5442 = vld [vmem:[%s607 + $0x49] sm:$0xff]
        %v5443 = vld [vmem:[%s607 + $0x51] sm:$0xff]
        %v5444 = vld [vmem:[%s607 + $0x61] sm:$0xff]
        %v5445 = vld [vmem:[%s607 + $0x69] sm:$0xff]
        %v5446 = vld [vmem:[%s607 + $0x79] sm:$0xff]
        %v5447 = vld [vmem:[%s607 + $0x81] sm:$0xff]
        %v5448 = vld [vmem:[%s607 + $0x91] sm:$0xff]
        %v5449 = vld [vmem:[%s607 + $0x99] sm:$0xff]
        %v5450 = vld [vmem:[%s607 + $0xa9] sm:$0xff]
        %v5451 = vld [vmem:[%s607 + $0xb1] sm:$0xff]
        %v5452 = vld [vmem:[%s607 + $0xc1] sm:$0xff]
        %v5453 = vld [vmem:[%s607 + $0xc9] sm:$0xff]
        %v5454 = vld [vmem:[%s607 + $0xd9] sm:$0xff]
        %v5455 = vld [vmem:[%s607 + $0xe1] sm:$0xff]
        %v5456 = vld [vmem:[%s607 + $0xf1] sm:$0xff]
        %v5457 = vld [vmem:[%s607 + $0xf9] sm:$0xff]
        %v5458 = vld [vmem:[%s607 + $0x109] sm:$0xff]
        %v5459 = vld [vmem:[%s607 + $0x111] sm:$0xff]
        %v5460 = vld [vmem:[%s607 + $0x121] sm:$0xff]
        %v5461 = vld [vmem:[%s607 + $0x129] sm:$0xff]
        %v5462 = vld [vmem:[%s607 + $0x139] sm:$0xff]
        %v5463 = vld [vmem:[%s607 + $0x141] sm:$0xff]
        %v5464 = vld [vmem:[%s607 + $0x151] sm:$0xff]
        %v5465 = vld [vmem:[%s607 + $0x159] sm:$0xff]
        %v5466 = vld [vmem:[%s607 + $0x169] sm:$0xff]
        %v5467 = vld [vmem:[%s607 + $0x171] sm:$0xff]
        %5468 = vst.msk [vmem:[#allocation3 + $0x10] sm:$0xff] %vm519, %v5436
        %5469 = vst.msk [vmem:[#allocation3 + $0x38] sm:$0xff] %vm519, %v5437
        %5470 = vst.msk [vmem:[#allocation3 + $0x60] sm:$0xff] %vm519, %v5438
        %5471 = vst.msk [vmem:[#allocation3 + $0x88] sm:$0xff] %vm519, %v5439
        %5472 = vst.msk [vmem:[#allocation3 + $0xb0] sm:$0xff] %vm519, %v5440
        %5473 = vst.msk [vmem:[#allocation3 + $0xd8] sm:$0xff] %vm519, %v5441
        %5474 = vst.msk [vmem:[#allocation3 + $0x100] sm:$0xff] %vm519, %v5442
        %5475 = vst.msk [vmem:[#allocation3 + $0x128] sm:$0xff] %vm519, %v5443
        %5476 = vst.msk [vmem:[#allocation3 + $0x150] sm:$0xff] %vm519, %v5444
        %5477 = vst.msk [vmem:[#allocation3 + $0x178] sm:$0xff] %vm519, %v5445
        %5478 = vst.msk [vmem:[#allocation3 + $0x1a0] sm:$0xff] %vm519, %v5446
        %5479 = vst.msk [vmem:[#allocation3 + $0x1c8] sm:$0xff] %vm519, %v5447
        %5480 = vst.msk [vmem:[#allocation3 + $0x1f0] sm:$0xff] %vm519, %v5448
        %5481 = vst.msk [vmem:[#allocation3 + $0x218] sm:$0xff] %vm519, %v5449
        %5482 = vst.msk [vmem:[#allocation3 + $0x240] sm:$0xff] %vm519, %v5450
        %5483 = vst.msk [vmem:[#allocation3 + $0x268] sm:$0xff] %vm519, %v5451
        %5484 = vst.msk [vmem:[#allocation3 + $0x290] sm:$0xff] %vm519, %v5452
        %5485 = vst.msk [vmem:[#allocation3 + $0x2b8] sm:$0xff] %vm519, %v5453
        %5486 = vst.msk [vmem:[#allocation3 + $0x2e0] sm:$0xff] %vm519, %v5454
        %5487 = vst.msk [vmem:[#allocation3 + $0x308] sm:$0xff] %vm519, %v5455
        %5488 = vst.msk [vmem:[#allocation3 + $0x330] sm:$0xff] %vm519, %v5456
        %5489 = vst.msk [vmem:[#allocation3 + $0x358] sm:$0xff] %vm519, %v5457
        %5490 = vst.msk [vmem:[#allocation3 + $0x380] sm:$0xff] %vm519, %v5458
        %5491 = vst.msk [vmem:[#allocation3 + $0x3a8] sm:$0xff] %vm519, %v5459
        %5492 = vst.msk [vmem:[#allocation3 + $0x3d0] sm:$0xff] %vm519, %v5460
        %5493 = vst.msk [vmem:[#allocation3 + $0x3f8] sm:$0xff] %vm519, %v5461
        %5494 = vst.msk [vmem:[#allocation3 + $0x420] sm:$0xff] %vm519, %v5462
        %5495 = vst.msk [vmem:[#allocation3 + $0x448] sm:$0xff] %vm519, %v5463
        %5496 = vst.msk [vmem:[#allocation3 + $0x470] sm:$0xff] %vm519, %v5464
        %5497 = vst.msk [vmem:[#allocation3 + $0x498] sm:$0xff] %vm519, %v5465
        %5498 = vst.msk [vmem:[#allocation3 + $0x4c0] sm:$0xff] %vm519, %v5466
        %5499 = vst.msk [vmem:[#allocation3 + $0x4e8] sm:$0xff] %vm519, %v5467
        %v5500 = vld [vmem:[%s607 + $0x2] sm:$0xff]
        %v5501 = vld [vmem:[%s607 + $0xa] sm:$0xff]
        %v5502 = vld [vmem:[%s607 + $0x1a] sm:$0xff]
        %v5503 = vld [vmem:[%s607 + $0x22] sm:$0xff]
        %v5504 = vld [vmem:[%s607 + $0x32] sm:$0xff]
        %v5505 = vld [vmem:[%s607 + $0x3a] sm:$0xff]
        %v5506 = vld [vmem:[%s607 + $0x4a] sm:$0xff]
        %v5507 = vld [vmem:[%s607 + $0x52] sm:$0xff]
        %v5508 = vld [vmem:[%s607 + $0x62] sm:$0xff]
        %v5509 = vld [vmem:[%s607 + $0x6a] sm:$0xff]
        %v5510 = vld [vmem:[%s607 + $0x7a] sm:$0xff]
        %v5511 = vld [vmem:[%s607 + $0x82] sm:$0xff]
        %v5512 = vld [vmem:[%s607 + $0x92] sm:$0xff]
        %v5513 = vld [vmem:[%s607 + $0x9a] sm:$0xff]
        %v5514 = vld [vmem:[%s607 + $0xaa] sm:$0xff]
        %v5515 = vld [vmem:[%s607 + $0xb2] sm:$0xff]
        %v5516 = vld [vmem:[%s607 + $0xc2] sm:$0xff]
        %v5517 = vld [vmem:[%s607 + $0xca] sm:$0xff]
        %v5518 = vld [vmem:[%s607 + $0xda] sm:$0xff]
        %v5519 = vld [vmem:[%s607 + $0xe2] sm:$0xff]
        %v5520 = vld [vmem:[%s607 + $0xf2] sm:$0xff]
        %v5521 = vld [vmem:[%s607 + $0xfa] sm:$0xff]
        %v5522 = vld [vmem:[%s607 + $0x10a] sm:$0xff]
        %v5523 = vld [vmem:[%s607 + $0x112] sm:$0xff]
        %v5524 = vld [vmem:[%s607 + $0x122] sm:$0xff]
        %v5525 = vld [vmem:[%s607 + $0x12a] sm:$0xff]
        %v5526 = vld [vmem:[%s607 + $0x13a] sm:$0xff]
        %v5527 = vld [vmem:[%s607 + $0x142] sm:$0xff]
        %v5528 = vld [vmem:[%s607 + $0x152] sm:$0xff]
        %v5529 = vld [vmem:[%s607 + $0x15a] sm:$0xff]
        %v5530 = vld [vmem:[%s607 + $0x16a] sm:$0xff]
        %v5531 = vld [vmem:[%s607 + $0x172] sm:$0xff]
        %5564 = vrot.lane.b32.xlu0 %v5500, 64
        %v5565 = vpop.permute.xlu0 %5564
        %5566 = vrot.lane.b32.xlu0 %v5501, 64
        %v5567 = vpop.permute.xlu0 %5566
        %5568 = vrot.lane.b32.xlu0 %v5502, 64
        %v5569 = vpop.permute.xlu0 %5568
        %5570 = vrot.lane.b32.xlu0 %v5503, 64
        %v5571 = vpop.permute.xlu0 %5570
        %5572 = vrot.lane.b32.xlu0 %v5504, 64
        %v5573 = vpop.permute.xlu0 %5572
        %5574 = vrot.lane.b32.xlu0 %v5505, 64
        %v5575 = vpop.permute.xlu0 %5574
        %5576 = vrot.lane.b32.xlu0 %v5506, 64
        %v5577 = vpop.permute.xlu0 %5576
        %5578 = vrot.lane.b32.xlu0 %v5507, 64
        %v5579 = vpop.permute.xlu0 %5578
        %5580 = vrot.lane.b32.xlu0 %v5508, 64
        %v5581 = vpop.permute.xlu0 %5580
        %5582 = vrot.lane.b32.xlu0 %v5509, 64
        %v5583 = vpop.permute.xlu0 %5582
        %5584 = vrot.lane.b32.xlu0 %v5510, 64
        %v5585 = vpop.permute.xlu0 %5584
        %5586 = vrot.lane.b32.xlu0 %v5511, 64
        %v5587 = vpop.permute.xlu0 %5586
        %5588 = vrot.lane.b32.xlu0 %v5512, 64
        %v5589 = vpop.permute.xlu0 %5588
        %5590 = vrot.lane.b32.xlu0 %v5513, 64
        %v5591 = vpop.permute.xlu0 %5590
        %5592 = vrot.lane.b32.xlu0 %v5514, 64
        %v5593 = vpop.permute.xlu0 %5592
        %5594 = vrot.lane.b32.xlu0 %v5515, 64
        %v5595 = vpop.permute.xlu0 %5594
        %5596 = vrot.lane.b32.xlu0 %v5516, 64
        %v5597 = vpop.permute.xlu0 %5596
        %5598 = vrot.lane.b32.xlu0 %v5517, 64
        %v5599 = vpop.permute.xlu0 %5598
        %5600 = vrot.lane.b32.xlu0 %v5518, 64
        %v5601 = vpop.permute.xlu0 %5600
        %5602 = vrot.lane.b32.xlu0 %v5519, 64
        %v5603 = vpop.permute.xlu0 %5602
        %5604 = vrot.lane.b32.xlu0 %v5520, 64
        %v5605 = vpop.permute.xlu0 %5604
        %5606 = vrot.lane.b32.xlu0 %v5521, 64
        %v5607 = vpop.permute.xlu0 %5606
        %5608 = vrot.lane.b32.xlu0 %v5522, 64
        %v5609 = vpop.permute.xlu0 %5608
        %5610 = vrot.lane.b32.xlu0 %v5523, 64
        %v5611 = vpop.permute.xlu0 %5610
        %5612 = vrot.lane.b32.xlu0 %v5524, 64
        %v5613 = vpop.permute.xlu0 %5612
        %5614 = vrot.lane.b32.xlu0 %v5525, 64
        %v5615 = vpop.permute.xlu0 %5614
        %5616 = vrot.lane.b32.xlu0 %v5526, 64
        %v5617 = vpop.permute.xlu0 %5616
        %5618 = vrot.lane.b32.xlu0 %v5527, 64
        %v5619 = vpop.permute.xlu0 %5618
        %5620 = vrot.lane.b32.xlu0 %v5528, 64
        %v5621 = vpop.permute.xlu0 %5620
        %5622 = vrot.lane.b32.xlu0 %v5529, 64
        %v5623 = vpop.permute.xlu0 %5622
        %5624 = vrot.lane.b32.xlu0 %v5530, 64
        %v5625 = vpop.permute.xlu0 %5624
        %5626 = vrot.lane.b32.xlu0 %v5531, 64
        %v5627 = vpop.permute.xlu0 %5626
        %5660 = vst.msk [vmem:[#allocation3 + $0x10] sm:$0xff] %vm5147, %v5565
        %5661 = vst.msk [vmem:[#allocation3 + $0x38] sm:$0xff] %vm5147, %v5567
        %5662 = vst.msk [vmem:[#allocation3 + $0x60] sm:$0xff] %vm5147, %v5569
        %5663 = vst.msk [vmem:[#allocation3 + $0x88] sm:$0xff] %vm5147, %v5571
        %5664 = vst.msk [vmem:[#allocation3 + $0xb0] sm:$0xff] %vm5147, %v5573
        %5665 = vst.msk [vmem:[#allocation3 + $0xd8] sm:$0xff] %vm5147, %v5575
        %5666 = vst.msk [vmem:[#allocation3 + $0x100] sm:$0xff] %vm5147, %v5577
        %5667 = vst.msk [vmem:[#allocation3 + $0x128] sm:$0xff] %vm5147, %v5579
        %5668 = vst.msk [vmem:[#allocation3 + $0x150] sm:$0xff] %vm5147, %v5581
        %5669 = vst.msk [vmem:[#allocation3 + $0x178] sm:$0xff] %vm5147, %v5583
        %5670 = vst.msk [vmem:[#allocation3 + $0x1a0] sm:$0xff] %vm5147, %v5585
        %5671 = vst.msk [vmem:[#allocation3 + $0x1c8] sm:$0xff] %vm5147, %v5587
        %5672 = vst.msk [vmem:[#allocation3 + $0x1f0] sm:$0xff] %vm5147, %v5589
        %5673 = vst.msk [vmem:[#allocation3 + $0x218] sm:$0xff] %vm5147, %v5591
        %5674 = vst.msk [vmem:[#allocation3 + $0x240] sm:$0xff] %vm5147, %v5593
        %5675 = vst.msk [vmem:[#allocation3 + $0x268] sm:$0xff] %vm5147, %v5595
        %5676 = vst.msk [vmem:[#allocation3 + $0x290] sm:$0xff] %vm5147, %v5597
        %5677 = vst.msk [vmem:[#allocation3 + $0x2b8] sm:$0xff] %vm5147, %v5599
        %5678 = vst.msk [vmem:[#allocation3 + $0x2e0] sm:$0xff] %vm5147, %v5601
        %5679 = vst.msk [vmem:[#allocation3 + $0x308] sm:$0xff] %vm5147, %v5603
        %5680 = vst.msk [vmem:[#allocation3 + $0x330] sm:$0xff] %vm5147, %v5605
        %5681 = vst.msk [vmem:[#allocation3 + $0x358] sm:$0xff] %vm5147, %v5607
        %5682 = vst.msk [vmem:[#allocation3 + $0x380] sm:$0xff] %vm5147, %v5609
        %5683 = vst.msk [vmem:[#allocation3 + $0x3a8] sm:$0xff] %vm5147, %v5611
        %5684 = vst.msk [vmem:[#allocation3 + $0x3d0] sm:$0xff] %vm5147, %v5613
        %5685 = vst.msk [vmem:[#allocation3 + $0x3f8] sm:$0xff] %vm5147, %v5615
        %5686 = vst.msk [vmem:[#allocation3 + $0x420] sm:$0xff] %vm5147, %v5617
        %5687 = vst.msk [vmem:[#allocation3 + $0x448] sm:$0xff] %vm5147, %v5619
        %5688 = vst.msk [vmem:[#allocation3 + $0x470] sm:$0xff] %vm5147, %v5621
        %5689 = vst.msk [vmem:[#allocation3 + $0x498] sm:$0xff] %vm5147, %v5623
        %5690 = vst.msk [vmem:[#allocation3 + $0x4c0] sm:$0xff] %vm5147, %v5625
        %5691 = vst.msk [vmem:[#allocation3 + $0x4e8] sm:$0xff] %vm5147, %v5627
        %v5692 = vld [vmem:[%s1670] sm:$0xff]
        %v5693 = vld [vmem:[%s1670 + $0x8] sm:$0xff]
        %v5694 = vld [vmem:[%s1670 + $0x18] sm:$0xff]
        %v5695 = vld [vmem:[%s1670 + $0x20] sm:$0xff]
        %v5696 = vld [vmem:[%s1670 + $0x30] sm:$0xff]
        %v5697 = vld [vmem:[%s1670 + $0x38] sm:$0xff]
        %v5698 = vld [vmem:[%s1670 + $0x48] sm:$0xff]
        %v5699 = vld [vmem:[%s1670 + $0x50] sm:$0xff]
        %v5700 = vld [vmem:[%s1670 + $0x60] sm:$0xff]
        %v5701 = vld [vmem:[%s1670 + $0x68] sm:$0xff]
        %v5702 = vld [vmem:[%s1670 + $0x78] sm:$0xff]
        %v5703 = vld [vmem:[%s1670 + $0x80] sm:$0xff]
        %v5704 = vld [vmem:[%s1670 + $0x90] sm:$0xff]
        %v5705 = vld [vmem:[%s1670 + $0x98] sm:$0xff]
        %v5706 = vld [vmem:[%s1670 + $0xa8] sm:$0xff]
        %v5707 = vld [vmem:[%s1670 + $0xb0] sm:$0xff]
        %v5708 = vld [vmem:[%s1670 + $0xc0] sm:$0xff]
        %v5709 = vld [vmem:[%s1670 + $0xc8] sm:$0xff]
        %v5710 = vld [vmem:[%s1670 + $0xd8] sm:$0xff]
        %v5711 = vld [vmem:[%s1670 + $0xe0] sm:$0xff]
        %v5712 = vld [vmem:[%s1670 + $0xf0] sm:$0xff]
        %v5713 = vld [vmem:[%s1670 + $0xf8] sm:$0xff]
        %v5714 = vld [vmem:[%s1670 + $0x108] sm:$0xff]
        %v5715 = vld [vmem:[%s1670 + $0x110] sm:$0xff]
        %v5716 = vld [vmem:[%s1670 + $0x120] sm:$0xff]
        %v5717 = vld [vmem:[%s1670 + $0x128] sm:$0xff]
        %v5718 = vld [vmem:[%s1670 + $0x138] sm:$0xff]
        %v5719 = vld [vmem:[%s1670 + $0x140] sm:$0xff]
        %v5720 = vld [vmem:[%s1670 + $0x150] sm:$0xff]
        %v5721 = vld [vmem:[%s1670 + $0x158] sm:$0xff]
        %v5722 = vld [vmem:[%s1670 + $0x168] sm:$0xff]
        %v5723 = vld [vmem:[%s1670 + $0x170] sm:$0xff]
        %5724 = vst.msk [vmem:[#allocation3 + $0x18] sm:$0xff] %vm519, %v5692
        %5725 = vst.msk [vmem:[#allocation3 + $0x40] sm:$0xff] %vm519, %v5693
        %5726 = vst.msk [vmem:[#allocation3 + $0x68] sm:$0xff] %vm519, %v5694
        %5727 = vst.msk [vmem:[#allocation3 + $0x90] sm:$0xff] %vm519, %v5695
        %5728 = vst.msk [vmem:[#allocation3 + $0xb8] sm:$0xff] %vm519, %v5696
        %5729 = vst.msk [vmem:[#allocation3 + $0xe0] sm:$0xff] %vm519, %v5697
        %5730 = vst.msk [vmem:[#allocation3 + $0x108] sm:$0xff] %vm519, %v5698
        %5731 = vst.msk [vmem:[#allocation3 + $0x130] sm:$0xff] %vm519, %v5699
        %5732 = vst.msk [vmem:[#allocation3 + $0x158] sm:$0xff] %vm519, %v5700
        %5733 = vst.msk [vmem:[#allocation3 + $0x180] sm:$0xff] %vm519, %v5701
        %5734 = vst.msk [vmem:[#allocation3 + $0x1a8] sm:$0xff] %vm519, %v5702
        %5735 = vst.msk [vmem:[#allocation3 + $0x1d0] sm:$0xff] %vm519, %v5703
        %5736 = vst.msk [vmem:[#allocation3 + $0x1f8] sm:$0xff] %vm519, %v5704
        %5737 = vst.msk [vmem:[#allocation3 + $0x220] sm:$0xff] %vm519, %v5705
        %5738 = vst.msk [vmem:[#allocation3 + $0x248] sm:$0xff] %vm519, %v5706
        %5739 = vst.msk [vmem:[#allocation3 + $0x270] sm:$0xff] %vm519, %v5707
        %5740 = vst.msk [vmem:[#allocation3 + $0x298] sm:$0xff] %vm519, %v5708
        %5741 = vst.msk [vmem:[#allocation3 + $0x2c0] sm:$0xff] %vm519, %v5709
        %5742 = vst.msk [vmem:[#allocation3 + $0x2e8] sm:$0xff] %vm519, %v5710
        %5743 = vst.msk [vmem:[#allocation3 + $0x310] sm:$0xff] %vm519, %v5711
        %5744 = vst.msk [vmem:[#allocation3 + $0x338] sm:$0xff] %vm519, %v5712
        %5745 = vst.msk [vmem:[#allocation3 + $0x360] sm:$0xff] %vm519, %v5713
        %5746 = vst.msk [vmem:[#allocation3 + $0x388] sm:$0xff] %vm519, %v5714
        %5747 = vst.msk [vmem:[#allocation3 + $0x3b0] sm:$0xff] %vm519, %v5715
        %5748 = vst.msk [vmem:[#allocation3 + $0x3d8] sm:$0xff] %vm519, %v5716
        %5749 = vst.msk [vmem:[#allocation3 + $0x400] sm:$0xff] %vm519, %v5717
        %5750 = vst.msk [vmem:[#allocation3 + $0x428] sm:$0xff] %vm519, %v5718
        %5751 = vst.msk [vmem:[#allocation3 + $0x450] sm:$0xff] %vm519, %v5719
        %5752 = vst.msk [vmem:[#allocation3 + $0x478] sm:$0xff] %vm519, %v5720
        %5753 = vst.msk [vmem:[#allocation3 + $0x4a0] sm:$0xff] %vm519, %v5721
        %5754 = vst.msk [vmem:[#allocation3 + $0x4c8] sm:$0xff] %vm519, %v5722
        %5755 = vst.msk [vmem:[#allocation3 + $0x4f0] sm:$0xff] %vm519, %v5723
        %v5756 = vld [vmem:[%s1670 + $0x1] sm:$0xff]
        %v5757 = vld [vmem:[%s1670 + $0x9] sm:$0xff]
        %v5758 = vld [vmem:[%s1670 + $0x19] sm:$0xff]
        %v5759 = vld [vmem:[%s1670 + $0x21] sm:$0xff]
        %v5760 = vld [vmem:[%s1670 + $0x31] sm:$0xff]
        %v5761 = vld [vmem:[%s1670 + $0x39] sm:$0xff]
        %v5762 = vld [vmem:[%s1670 + $0x49] sm:$0xff]
        %v5763 = vld [vmem:[%s1670 + $0x51] sm:$0xff]
        %v5764 = vld [vmem:[%s1670 + $0x61] sm:$0xff]
        %v5765 = vld [vmem:[%s1670 + $0x69] sm:$0xff]
        %v5766 = vld [vmem:[%s1670 + $0x79] sm:$0xff]
        %v5767 = vld [vmem:[%s1670 + $0x81] sm:$0xff]
        %v5768 = vld [vmem:[%s1670 + $0x91] sm:$0xff]
        %v5769 = vld [vmem:[%s1670 + $0x99] sm:$0xff]
        %v5770 = vld [vmem:[%s1670 + $0xa9] sm:$0xff]
        %v5771 = vld [vmem:[%s1670 + $0xb1] sm:$0xff]
        %v5772 = vld [vmem:[%s1670 + $0xc1] sm:$0xff]
        %v5773 = vld [vmem:[%s1670 + $0xc9] sm:$0xff]
        %v5774 = vld [vmem:[%s1670 + $0xd9] sm:$0xff]
        %v5775 = vld [vmem:[%s1670 + $0xe1] sm:$0xff]
        %v5776 = vld [vmem:[%s1670 + $0xf1] sm:$0xff]
        %v5777 = vld [vmem:[%s1670 + $0xf9] sm:$0xff]
        %v5778 = vld [vmem:[%s1670 + $0x109] sm:$0xff]
        %v5779 = vld [vmem:[%s1670 + $0x111] sm:$0xff]
        %v5780 = vld [vmem:[%s1670 + $0x121] sm:$0xff]
        %v5781 = vld [vmem:[%s1670 + $0x129] sm:$0xff]
        %v5782 = vld [vmem:[%s1670 + $0x139] sm:$0xff]
        %v5783 = vld [vmem:[%s1670 + $0x141] sm:$0xff]
        %v5784 = vld [vmem:[%s1670 + $0x151] sm:$0xff]
        %v5785 = vld [vmem:[%s1670 + $0x159] sm:$0xff]
        %v5786 = vld [vmem:[%s1670 + $0x169] sm:$0xff]
        %v5787 = vld [vmem:[%s1670 + $0x171] sm:$0xff]
        %5820 = vrot.lane.b32.xlu0 %v5756, 64
        %v5821 = vpop.permute.xlu0 %5820
        %5822 = vrot.lane.b32.xlu0 %v5757, 64
        %v5823 = vpop.permute.xlu0 %5822
        %5824 = vrot.lane.b32.xlu0 %v5758, 64
        %v5825 = vpop.permute.xlu0 %5824
        %5826 = vrot.lane.b32.xlu0 %v5759, 64
        %v5827 = vpop.permute.xlu0 %5826
        %5828 = vrot.lane.b32.xlu0 %v5760, 64
        %v5829 = vpop.permute.xlu0 %5828
        %5830 = vrot.lane.b32.xlu0 %v5761, 64
        %v5831 = vpop.permute.xlu0 %5830
        %5832 = vrot.lane.b32.xlu0 %v5762, 64
        %v5833 = vpop.permute.xlu0 %5832
        %5834 = vrot.lane.b32.xlu0 %v5763, 64
        %v5835 = vpop.permute.xlu0 %5834
        %5836 = vrot.lane.b32.xlu0 %v5764, 64
        %v5837 = vpop.permute.xlu0 %5836
        %5838 = vrot.lane.b32.xlu0 %v5765, 64
        %v5839 = vpop.permute.xlu0 %5838
        %5840 = vrot.lane.b32.xlu0 %v5766, 64
        %v5841 = vpop.permute.xlu0 %5840
        %5842 = vrot.lane.b32.xlu0 %v5767, 64
        %v5843 = vpop.permute.xlu0 %5842
        %5844 = vrot.lane.b32.xlu0 %v5768, 64
        %v5845 = vpop.permute.xlu0 %5844
        %5846 = vrot.lane.b32.xlu0 %v5769, 64
        %v5847 = vpop.permute.xlu0 %5846
        %5848 = vrot.lane.b32.xlu0 %v5770, 64
        %v5849 = vpop.permute.xlu0 %5848
        %5850 = vrot.lane.b32.xlu0 %v5771, 64
        %v5851 = vpop.permute.xlu0 %5850
        %5852 = vrot.lane.b32.xlu0 %v5772, 64
        %v5853 = vpop.permute.xlu0 %5852
        %5854 = vrot.lane.b32.xlu0 %v5773, 64
        %v5855 = vpop.permute.xlu0 %5854
        %5856 = vrot.lane.b32.xlu0 %v5774, 64
        %v5857 = vpop.permute.xlu0 %5856
        %5858 = vrot.lane.b32.xlu0 %v5775, 64
        %v5859 = vpop.permute.xlu0 %5858
        %5860 = vrot.lane.b32.xlu0 %v5776, 64
        %v5861 = vpop.permute.xlu0 %5860
        %5862 = vrot.lane.b32.xlu0 %v5777, 64
        %v5863 = vpop.permute.xlu0 %5862
        %5864 = vrot.lane.b32.xlu0 %v5778, 64
        %v5865 = vpop.permute.xlu0 %5864
        %5866 = vrot.lane.b32.xlu0 %v5779, 64
        %v5867 = vpop.permute.xlu0 %5866
        %5868 = vrot.lane.b32.xlu0 %v5780, 64
        %v5869 = vpop.permute.xlu0 %5868
        %5870 = vrot.lane.b32.xlu0 %v5781, 64
        %v5871 = vpop.permute.xlu0 %5870
        %5872 = vrot.lane.b32.xlu0 %v5782, 64
        %v5873 = vpop.permute.xlu0 %5872
        %5874 = vrot.lane.b32.xlu0 %v5783, 64
        %v5875 = vpop.permute.xlu0 %5874
        %5876 = vrot.lane.b32.xlu0 %v5784, 64
        %v5877 = vpop.permute.xlu0 %5876
        %5878 = vrot.lane.b32.xlu0 %v5785, 64
        %v5879 = vpop.permute.xlu0 %5878
        %5880 = vrot.lane.b32.xlu0 %v5786, 64
        %v5881 = vpop.permute.xlu0 %5880
        %5882 = vrot.lane.b32.xlu0 %v5787, 64
        %v5883 = vpop.permute.xlu0 %5882
        %5916 = vst.msk [vmem:[#allocation3 + $0x18] sm:$0xff] %vm5147, %v5821
        %5917 = vst.msk [vmem:[#allocation3 + $0x40] sm:$0xff] %vm5147, %v5823
        %5918 = vst.msk [vmem:[#allocation3 + $0x68] sm:$0xff] %vm5147, %v5825
        %5919 = vst.msk [vmem:[#allocation3 + $0x90] sm:$0xff] %vm5147, %v5827
        %5920 = vst.msk [vmem:[#allocation3 + $0xb8] sm:$0xff] %vm5147, %v5829
        %5921 = vst.msk [vmem:[#allocation3 + $0xe0] sm:$0xff] %vm5147, %v5831
        %5922 = vst.msk [vmem:[#allocation3 + $0x108] sm:$0xff] %vm5147, %v5833
        %5923 = vst.msk [vmem:[#allocation3 + $0x130] sm:$0xff] %vm5147, %v5835
        %5924 = vst.msk [vmem:[#allocation3 + $0x158] sm:$0xff] %vm5147, %v5837
        %5925 = vst.msk [vmem:[#allocation3 + $0x180] sm:$0xff] %vm5147, %v5839
        %5926 = vst.msk [vmem:[#allocation3 + $0x1a8] sm:$0xff] %vm5147, %v5841
        %5927 = vst.msk [vmem:[#allocation3 + $0x1d0] sm:$0xff] %vm5147, %v5843
        %5928 = vst.msk [vmem:[#allocation3 + $0x1f8] sm:$0xff] %vm5147, %v5845
        %5929 = vst.msk [vmem:[#allocation3 + $0x220] sm:$0xff] %vm5147, %v5847
        %5930 = vst.msk [vmem:[#allocation3 + $0x248] sm:$0xff] %vm5147, %v5849
        %5931 = vst.msk [vmem:[#allocation3 + $0x270] sm:$0xff] %vm5147, %v5851
        %5932 = vst.msk [vmem:[#allocation3 + $0x298] sm:$0xff] %vm5147, %v5853
        %5933 = vst.msk [vmem:[#allocation3 + $0x2c0] sm:$0xff] %vm5147, %v5855
        %5934 = vst.msk [vmem:[#allocation3 + $0x2e8] sm:$0xff] %vm5147, %v5857
        %5935 = vst.msk [vmem:[#allocation3 + $0x310] sm:$0xff] %vm5147, %v5859
        %5936 = vst.msk [vmem:[#allocation3 + $0x338] sm:$0xff] %vm5147, %v5861
        %5937 = vst.msk [vmem:[#allocation3 + $0x360] sm:$0xff] %vm5147, %v5863
        %5938 = vst.msk [vmem:[#allocation3 + $0x388] sm:$0xff] %vm5147, %v5865
        %5939 = vst.msk [vmem:[#allocation3 + $0x3b0] sm:$0xff] %vm5147, %v5867
        %5940 = vst.msk [vmem:[#allocation3 + $0x3d8] sm:$0xff] %vm5147, %v5869
        %5941 = vst.msk [vmem:[#allocation3 + $0x400] sm:$0xff] %vm5147, %v5871
        %5942 = vst.msk [vmem:[#allocation3 + $0x428] sm:$0xff] %vm5147, %v5873
        %5943 = vst.msk [vmem:[#allocation3 + $0x450] sm:$0xff] %vm5147, %v5875
        %5944 = vst.msk [vmem:[#allocation3 + $0x478] sm:$0xff] %vm5147, %v5877
        %5945 = vst.msk [vmem:[#allocation3 + $0x4a0] sm:$0xff] %vm5147, %v5879
        %5946 = vst.msk [vmem:[#allocation3 + $0x4c8] sm:$0xff] %vm5147, %v5881
        %5947 = vst.msk [vmem:[#allocation3 + $0x4f0] sm:$0xff] %vm5147, %v5883
        %v5948 = vld [vmem:[%s1670 + $0x2] sm:$0xff]
        %v5949 = vld [vmem:[%s1670 + $0xa] sm:$0xff]
        %v5950 = vld [vmem:[%s1670 + $0x1a] sm:$0xff]
        %v5951 = vld [vmem:[%s1670 + $0x22] sm:$0xff]
        %v5952 = vld [vmem:[%s1670 + $0x32] sm:$0xff]
        %v5953 = vld [vmem:[%s1670 + $0x3a] sm:$0xff]
        %v5954 = vld [vmem:[%s1670 + $0x4a] sm:$0xff]
        %v5955 = vld [vmem:[%s1670 + $0x52] sm:$0xff]
        %v5956 = vld [vmem:[%s1670 + $0x62] sm:$0xff]
        %v5957 = vld [vmem:[%s1670 + $0x6a] sm:$0xff]
        %v5958 = vld [vmem:[%s1670 + $0x7a] sm:$0xff]
        %v5959 = vld [vmem:[%s1670 + $0x82] sm:$0xff]
        %v5960 = vld [vmem:[%s1670 + $0x92] sm:$0xff]
        %v5961 = vld [vmem:[%s1670 + $0x9a] sm:$0xff]
        %v5962 = vld [vmem:[%s1670 + $0xaa] sm:$0xff]
        %v5963 = vld [vmem:[%s1670 + $0xb2] sm:$0xff]
        %v5964 = vld [vmem:[%s1670 + $0xc2] sm:$0xff]
        %v5965 = vld [vmem:[%s1670 + $0xca] sm:$0xff]
        %v5966 = vld [vmem:[%s1670 + $0xda] sm:$0xff]
        %v5967 = vld [vmem:[%s1670 + $0xe2] sm:$0xff]
        %v5968 = vld [vmem:[%s1670 + $0xf2] sm:$0xff]
        %v5969 = vld [vmem:[%s1670 + $0xfa] sm:$0xff]
        %v5970 = vld [vmem:[%s1670 + $0x10a] sm:$0xff]
        %v5971 = vld [vmem:[%s1670 + $0x112] sm:$0xff]
        %v5972 = vld [vmem:[%s1670 + $0x122] sm:$0xff]
        %v5973 = vld [vmem:[%s1670 + $0x12a] sm:$0xff]
        %v5974 = vld [vmem:[%s1670 + $0x13a] sm:$0xff]
        %v5975 = vld [vmem:[%s1670 + $0x142] sm:$0xff]
        %v5976 = vld [vmem:[%s1670 + $0x152] sm:$0xff]
        %v5977 = vld [vmem:[%s1670 + $0x15a] sm:$0xff]
        %v5978 = vld [vmem:[%s1670 + $0x16a] sm:$0xff]
        %v5979 = vld [vmem:[%s1670 + $0x172] sm:$0xff]
        %5980 = vst.msk [vmem:[#allocation3 + $0x20] sm:$0xff] %vm519, %v5948
        %5981 = vst.msk [vmem:[#allocation3 + $0x48] sm:$0xff] %vm519, %v5949
        %5982 = vst.msk [vmem:[#allocation3 + $0x70] sm:$0xff] %vm519, %v5950
        %5983 = vst.msk [vmem:[#allocation3 + $0x98] sm:$0xff] %vm519, %v5951
        %5984 = vst.msk [vmem:[#allocation3 + $0xc0] sm:$0xff] %vm519, %v5952
        %5985 = vst.msk [vmem:[#allocation3 + $0xe8] sm:$0xff] %vm519, %v5953
        %5986 = vst.msk [vmem:[#allocation3 + $0x110] sm:$0xff] %vm519, %v5954
        %5987 = vst.msk [vmem:[#allocation3 + $0x138] sm:$0xff] %vm519, %v5955
        %5988 = vst.msk [vmem:[#allocation3 + $0x160] sm:$0xff] %vm519, %v5956
        %5989 = vst.msk [vmem:[#allocation3 + $0x188] sm:$0xff] %vm519, %v5957
        %5990 = vst.msk [vmem:[#allocation3 + $0x1b0] sm:$0xff] %vm519, %v5958
        %5991 = vst.msk [vmem:[#allocation3 + $0x1d8] sm:$0xff] %vm519, %v5959
        %5992 = vst.msk [vmem:[#allocation3 + $0x200] sm:$0xff] %vm519, %v5960
        %5993 = vst.msk [vmem:[#allocation3 + $0x228] sm:$0xff] %vm519, %v5961
        %5994 = vst.msk [vmem:[#allocation3 + $0x250] sm:$0xff] %vm519, %v5962
        %5995 = vst.msk [vmem:[#allocation3 + $0x278] sm:$0xff] %vm519, %v5963
        %5996 = vst.msk [vmem:[#allocation3 + $0x2a0] sm:$0xff] %vm519, %v5964
        %5997 = vst.msk [vmem:[#allocation3 + $0x2c8] sm:$0xff] %vm519, %v5965
        %5998 = vst.msk [vmem:[#allocation3 + $0x2f0] sm:$0xff] %vm519, %v5966
        %5999 = vst.msk [vmem:[#allocation3 + $0x318] sm:$0xff] %vm519, %v5967
        %6000 = vst.msk [vmem:[#allocation3 + $0x340] sm:$0xff] %vm519, %v5968
        %6001 = vst.msk [vmem:[#allocation3 + $0x368] sm:$0xff] %vm519, %v5969
        %6002 = vst.msk [vmem:[#allocation3 + $0x390] sm:$0xff] %vm519, %v5970
        %6003 = vst.msk [vmem:[#allocation3 + $0x3b8] sm:$0xff] %vm519, %v5971
        %6004 = vst.msk [vmem:[#allocation3 + $0x3e0] sm:$0xff] %vm519, %v5972
        %6005 = vst.msk [vmem:[#allocation3 + $0x408] sm:$0xff] %vm519, %v5973
        %6006 = vst.msk [vmem:[#allocation3 + $0x430] sm:$0xff] %vm519, %v5974
        %6007 = vst.msk [vmem:[#allocation3 + $0x458] sm:$0xff] %vm519, %v5975
        %6008 = vst.msk [vmem:[#allocation3 + $0x480] sm:$0xff] %vm519, %v5976
        %6009 = vst.msk [vmem:[#allocation3 + $0x4a8] sm:$0xff] %vm519, %v5977
        %6010 = vst.msk [vmem:[#allocation3 + $0x4d0] sm:$0xff] %vm519, %v5978
        %6011 = vst.msk [vmem:[#allocation3 + $0x4f8] sm:$0xff] %vm519, %v5979
        %v6012 = vld [vmem:[#allocation3] sm:$0xff]
        %v6013 = vld [vmem:[#allocation3 + $0x8] sm:$0xff]
        %v6014 = vld [vmem:[#allocation3 + $0x10] sm:$0xff]
        %v6015 = vld [vmem:[#allocation3 + $0x18] sm:$0xff]
        %v6016 = vld [vmem:[#allocation3 + $0x20] sm:$0xff]
        %v6017 = vld [vmem:[#allocation3 + $0x28] sm:$0xff]
        %v6018 = vld [vmem:[#allocation3 + $0x30] sm:$0xff]
        %v6019 = vld [vmem:[#allocation3 + $0x38] sm:$0xff]
        %v6020 = vld [vmem:[#allocation3 + $0x40] sm:$0xff]
        %v6021 = vld [vmem:[#allocation3 + $0x48] sm:$0xff]
        %v6022 = vld [vmem:[#allocation3 + $0x50] sm:$0xff]
        %v6023 = vld [vmem:[#allocation3 + $0x58] sm:$0xff]
        %v6024 = vld [vmem:[#allocation3 + $0x60] sm:$0xff]
        %v6025 = vld [vmem:[#allocation3 + $0x68] sm:$0xff]
        %v6026 = vld [vmem:[#allocation3 + $0x70] sm:$0xff]
        %v6027 = vld [vmem:[#allocation3 + $0x78] sm:$0xff]
        %v6028 = vld [vmem:[#allocation3 + $0x80] sm:$0xff]
        %v6029 = vld [vmem:[#allocation3 + $0x88] sm:$0xff]
        %v6030 = vld [vmem:[#allocation3 + $0x90] sm:$0xff]
        %v6031 = vld [vmem:[#allocation3 + $0x98] sm:$0xff]
        %v6032 = vld [vmem:[#allocation3 + $0xa0] sm:$0xff]
        %v6033 = vld [vmem:[#allocation3 + $0xa8] sm:$0xff]
        %v6034 = vld [vmem:[#allocation3 + $0xb0] sm:$0xff]
        %v6035 = vld [vmem:[#allocation3 + $0xb8] sm:$0xff]
        %v6036 = vld [vmem:[#allocation3 + $0xc0] sm:$0xff]
        %v6037 = vld [vmem:[#allocation3 + $0xc8] sm:$0xff]
        %v6038 = vld [vmem:[#allocation3 + $0xd0] sm:$0xff]
        %v6039 = vld [vmem:[#allocation3 + $0xd8] sm:$0xff]
        %v6040 = vld [vmem:[#allocation3 + $0xe0] sm:$0xff]
        %v6041 = vld [vmem:[#allocation3 + $0xe8] sm:$0xff]
        %v6042 = vld [vmem:[#allocation3 + $0xf0] sm:$0xff]
        %v6043 = vld [vmem:[#allocation3 + $0xf8] sm:$0xff]
        %v6044 = vld [vmem:[#allocation3 + $0x100] sm:$0xff]
        %v6045 = vld [vmem:[#allocation3 + $0x108] sm:$0xff]
        %v6046 = vld [vmem:[#allocation3 + $0x110] sm:$0xff]
        %v6047 = vld [vmem:[#allocation3 + $0x118] sm:$0xff]
        %v6048 = vld [vmem:[#allocation3 + $0x120] sm:$0xff]
        %v6049 = vld [vmem:[#allocation3 + $0x128] sm:$0xff]
        %v6050 = vld [vmem:[#allocation3 + $0x130] sm:$0xff]
        %v6051 = vld [vmem:[#allocation3 + $0x138] sm:$0xff]
        %v6052 = vld [vmem:[#allocation3 + $0x140] sm:$0xff]
        %v6053 = vld [vmem:[#allocation3 + $0x148] sm:$0xff]
        %v6054 = vld [vmem:[#allocation3 + $0x150] sm:$0xff]
        %v6055 = vld [vmem:[#allocation3 + $0x158] sm:$0xff]
        %v6056 = vld [vmem:[#allocation3 + $0x160] sm:$0xff]
        %v6057 = vld [vmem:[#allocation3 + $0x168] sm:$0xff]
        %v6058 = vld [vmem:[#allocation3 + $0x170] sm:$0xff]
        %v6059 = vld [vmem:[#allocation3 + $0x178] sm:$0xff]
        %v6060 = vld [vmem:[#allocation3 + $0x180] sm:$0xff]
        %v6061 = vld [vmem:[#allocation3 + $0x188] sm:$0xff]
        %v6062 = vld [vmem:[#allocation3 + $0x190] sm:$0xff]
        %v6063 = vld [vmem:[#allocation3 + $0x198] sm:$0xff]
        %v6064 = vld [vmem:[#allocation3 + $0x1a0] sm:$0xff]
        %v6065 = vld [vmem:[#allocation3 + $0x1a8] sm:$0xff]
        %v6066 = vld [vmem:[#allocation3 + $0x1b0] sm:$0xff]
        %v6067 = vld [vmem:[#allocation3 + $0x1b8] sm:$0xff]
        %v6068 = vld [vmem:[#allocation3 + $0x1c0] sm:$0xff]
        %v6069 = vld [vmem:[#allocation3 + $0x1c8] sm:$0xff]
        %v6070 = vld [vmem:[#allocation3 + $0x1d0] sm:$0xff]
        %v6071 = vld [vmem:[#allocation3 + $0x1d8] sm:$0xff]
        %v6072 = vld [vmem:[#allocation3 + $0x1e0] sm:$0xff]
        %v6073 = vld [vmem:[#allocation3 + $0x1e8] sm:$0xff]
        %v6074 = vld [vmem:[#allocation3 + $0x1f0] sm:$0xff]
        %v6075 = vld [vmem:[#allocation3 + $0x1f8] sm:$0xff]
        %v6076 = vld [vmem:[#allocation3 + $0x200] sm:$0xff]
        %v6077 = vld [vmem:[#allocation3 + $0x208] sm:$0xff]
        %v6078 = vld [vmem:[#allocation3 + $0x210] sm:$0xff]
        %v6079 = vld [vmem:[#allocation3 + $0x218] sm:$0xff]
        %v6080 = vld [vmem:[#allocation3 + $0x220] sm:$0xff]
        %v6081 = vld [vmem:[#allocation3 + $0x228] sm:$0xff]
        %v6082 = vld [vmem:[#allocation3 + $0x230] sm:$0xff]
        %v6083 = vld [vmem:[#allocation3 + $0x238] sm:$0xff]
        %v6084 = vld [vmem:[#allocation3 + $0x240] sm:$0xff]
        %v6085 = vld [vmem:[#allocation3 + $0x248] sm:$0xff]
        %v6086 = vld [vmem:[#allocation3 + $0x250] sm:$0xff]
        %v6087 = vld [vmem:[#allocation3 + $0x258] sm:$0xff]
        %v6088 = vld [vmem:[#allocation3 + $0x260] sm:$0xff]
        %v6089 = vld [vmem:[#allocation3 + $0x268] sm:$0xff]
        %v6090 = vld [vmem:[#allocation3 + $0x270] sm:$0xff]
        %v6091 = vld [vmem:[#allocation3 + $0x278] sm:$0xff]
        %v6092 = vld [vmem:[#allocation3 + $0x280] sm:$0xff]
        %v6093 = vld [vmem:[#allocation3 + $0x288] sm:$0xff]
        %v6094 = vld [vmem:[#allocation3 + $0x290] sm:$0xff]
        %v6095 = vld [vmem:[#allocation3 + $0x298] sm:$0xff]
        %v6096 = vld [vmem:[#allocation3 + $0x2a0] sm:$0xff]
        %v6097 = vld [vmem:[#allocation3 + $0x2a8] sm:$0xff]
        %v6098 = vld [vmem:[#allocation3 + $0x2b0] sm:$0xff]
        %v6099 = vld [vmem:[#allocation3 + $0x2b8] sm:$0xff]
        %v6100 = vld [vmem:[#allocation3 + $0x2c0] sm:$0xff]
        %v6101 = vld [vmem:[#allocation3 + $0x2c8] sm:$0xff]
        %v6102 = vld [vmem:[#allocation3 + $0x2d0] sm:$0xff]
        %v6103 = vld [vmem:[#allocation3 + $0x2d8] sm:$0xff]
        %v6104 = vld [vmem:[#allocation3 + $0x2e0] sm:$0xff]
        %v6105 = vld [vmem:[#allocation3 + $0x2e8] sm:$0xff]
        %v6106 = vld [vmem:[#allocation3 + $0x2f0] sm:$0xff]
        %v6107 = vld [vmem:[#allocation3 + $0x2f8] sm:$0xff]
        %v6108 = vld [vmem:[#allocation3 + $0x300] sm:$0xff]
        %v6109 = vld [vmem:[#allocation3 + $0x308] sm:$0xff]
        %v6110 = vld [vmem:[#allocation3 + $0x310] sm:$0xff]
        %v6111 = vld [vmem:[#allocation3 + $0x318] sm:$0xff]
        %v6112 = vld [vmem:[#allocation3 + $0x320] sm:$0xff]
        %v6113 = vld [vmem:[#allocation3 + $0x328] sm:$0xff]
        %v6114 = vld [vmem:[#allocation3 + $0x330] sm:$0xff]
        %v6115 = vld [vmem:[#allocation3 + $0x338] sm:$0xff]
        %v6116 = vld [vmem:[#allocation3 + $0x340] sm:$0xff]
        %v6117 = vld [vmem:[#allocation3 + $0x348] sm:$0xff]
        %v6118 = vld [vmem:[#allocation3 + $0x350] sm:$0xff]
        %v6119 = vld [vmem:[#allocation3 + $0x358] sm:$0xff]
        %v6120 = vld [vmem:[#allocation3 + $0x360] sm:$0xff]
        %v6121 = vld [vmem:[#allocation3 + $0x368] sm:$0xff]
        %v6122 = vld [vmem:[#allocation3 + $0x370] sm:$0xff]
        %v6123 = vld [vmem:[#allocation3 + $0x378] sm:$0xff]
        %v6124 = vld [vmem:[#allocation3 + $0x380] sm:$0xff]
        %v6125 = vld [vmem:[#allocation3 + $0x388] sm:$0xff]
        %v6126 = vld [vmem:[#allocation3 + $0x390] sm:$0xff]
        %v6127 = vld [vmem:[#allocation3 + $0x398] sm:$0xff]
        %v6128 = vld [vmem:[#allocation3 + $0x3a0] sm:$0xff]
        %v6129 = vld [vmem:[#allocation3 + $0x3a8] sm:$0xff]
        %v6130 = vld [vmem:[#allocation3 + $0x3b0] sm:$0xff]
        %v6131 = vld [vmem:[#allocation3 + $0x3b8] sm:$0xff]
        %v6132 = vld [vmem:[#allocation3 + $0x3c0] sm:$0xff]
        %v6133 = vld [vmem:[#allocation3 + $0x3c8] sm:$0xff]
        %v6134 = vld [vmem:[#allocation3 + $0x3d0] sm:$0xff]
        %v6135 = vld [vmem:[#allocation3 + $0x3d8] sm:$0xff]
        %v6136 = vld [vmem:[#allocation3 + $0x3e0] sm:$0xff]
        %v6137 = vld [vmem:[#allocation3 + $0x3e8] sm:$0xff]
        %v6138 = vld [vmem:[#allocation3 + $0x3f0] sm:$0xff]
        %v6139 = vld [vmem:[#allocation3 + $0x3f8] sm:$0xff]
        %v6140 = vld [vmem:[#allocation3 + $0x400] sm:$0xff]
        %v6141 = vld [vmem:[#allocation3 + $0x408] sm:$0xff]
        %v6142 = vld [vmem:[#allocation3 + $0x410] sm:$0xff]
        %v6143 = vld [vmem:[#allocation3 + $0x418] sm:$0xff]
        %v6144 = vld [vmem:[#allocation3 + $0x420] sm:$0xff]
        %v6145 = vld [vmem:[#allocation3 + $0x428] sm:$0xff]
        %v6146 = vld [vmem:[#allocation3 + $0x430] sm:$0xff]
        %v6147 = vld [vmem:[#allocation3 + $0x438] sm:$0xff]
        %v6148 = vld [vmem:[#allocation3 + $0x440] sm:$0xff]
        %v6149 = vld [vmem:[#allocation3 + $0x448] sm:$0xff]
        %v6150 = vld [vmem:[#allocation3 + $0x450] sm:$0xff]
        %v6151 = vld [vmem:[#allocation3 + $0x458] sm:$0xff]
        %v6152 = vld [vmem:[#allocation3 + $0x460] sm:$0xff]
        %v6153 = vld [vmem:[#allocation3 + $0x468] sm:$0xff]
        %v6154 = vld [vmem:[#allocation3 + $0x470] sm:$0xff]
        %v6155 = vld [vmem:[#allocation3 + $0x478] sm:$0xff]
        %v6156 = vld [vmem:[#allocation3 + $0x480] sm:$0xff]
        %v6157 = vld [vmem:[#allocation3 + $0x488] sm:$0xff]
        %v6158 = vld [vmem:[#allocation3 + $0x490] sm:$0xff]
        %v6159 = vld [vmem:[#allocation3 + $0x498] sm:$0xff]
        %v6160 = vld [vmem:[#allocation3 + $0x4a0] sm:$0xff]
        %v6161 = vld [vmem:[#allocation3 + $0x4a8] sm:$0xff]
        %v6162 = vld [vmem:[#allocation3 + $0x4b0] sm:$0xff]
        %v6163 = vld [vmem:[#allocation3 + $0x4b8] sm:$0xff]
        %v6164 = vld [vmem:[#allocation3 + $0x4c0] sm:$0xff]
        %v6165 = vld [vmem:[#allocation3 + $0x4c8] sm:$0xff]
        %v6166 = vld [vmem:[#allocation3 + $0x4d0] sm:$0xff]
        %v6167 = vld [vmem:[#allocation3 + $0x4d8] sm:$0xff]
        %v6168 = vld [vmem:[#allocation3 + $0x4e0] sm:$0xff]
        %v6169 = vld [vmem:[#allocation3 + $0x4e8] sm:$0xff]
        %v6170 = vld [vmem:[#allocation3 + $0x4f0] sm:$0xff]
        %v6171 = vld [vmem:[#allocation3 + $0x4f8] sm:$0xff]
        %v6172 = vld [vmem:[%s7] sm:$0xff]
        %v6173 = vld [vmem:[%s7 + $0x8] sm:$0xff]
        %v6174 = vld [vmem:[%s7 + $0x10] sm:$0xff]
        %v6175 = vld [vmem:[%s7 + $0x18] sm:$0xff]
        %v6176 = vld [vmem:[%s7 + $0x20] sm:$0xff]
        %v6177 = vld [vmem:[%s7 + $0x28] sm:$0xff]
        %v6178 = vld [vmem:[%s7 + $0x30] sm:$0xff]
        %v6179 = vld [vmem:[%s7 + $0x38] sm:$0xff]
        %v6180 = vld [vmem:[%s7 + $0x40] sm:$0xff]
        %v6181 = vld [vmem:[%s7 + $0x48] sm:$0xff]
        %v6182 = vld [vmem:[%s7 + $0x50] sm:$0xff]
        %v6183 = vld [vmem:[%s7 + $0x58] sm:$0xff]
        %v6184 = vld [vmem:[%s7 + $0x60] sm:$0xff]
        %v6185 = vld [vmem:[%s7 + $0x68] sm:$0xff]
        %v6186 = vld [vmem:[%s7 + $0x70] sm:$0xff]
        %v6187 = vld [vmem:[%s7 + $0x78] sm:$0xff]
        %v6188 = vld [vmem:[%s7 + $0x80] sm:$0xff]
        %v6189 = vld [vmem:[%s7 + $0x88] sm:$0xff]
        %v6190 = vld [vmem:[%s7 + $0x90] sm:$0xff]
        %v6191 = vld [vmem:[%s7 + $0x98] sm:$0xff]
        %v6192 = vld [vmem:[%s7 + $0xa0] sm:$0xff]
        %v6193 = vld [vmem:[%s7 + $0xa8] sm:$0xff]
        %v6194 = vld [vmem:[%s7 + $0xb0] sm:$0xff]
        %v6195 = vld [vmem:[%s7 + $0xb8] sm:$0xff]
        %v6196 = vld [vmem:[%s7 + $0xc0] sm:$0xff]
        %v6197 = vld [vmem:[%s7 + $0xc8] sm:$0xff]
        %v6198 = vld [vmem:[%s7 + $0xd0] sm:$0xff]
        %v6199 = vld [vmem:[%s7 + $0xd8] sm:$0xff]
        %v6200 = vld [vmem:[%s7 + $0xe0] sm:$0xff]
        %v6201 = vld [vmem:[%s7 + $0xe8] sm:$0xff]
        %v6202 = vld [vmem:[%s7 + $0xf0] sm:$0xff]
        %v6203 = vld [vmem:[%s7 + $0xf8] sm:$0xff]
        %v6204 = vld [vmem:[%s7 + $0x100] sm:$0xff]
        %v6205 = vld [vmem:[%s7 + $0x108] sm:$0xff]
        %v6206 = vld [vmem:[%s7 + $0x110] sm:$0xff]
        %v6207 = vld [vmem:[%s7 + $0x118] sm:$0xff]
        %v6208 = vld [vmem:[%s7 + $0x120] sm:$0xff]
        %v6209 = vld [vmem:[%s7 + $0x128] sm:$0xff]
        %v6210 = vld [vmem:[%s7 + $0x130] sm:$0xff]
        %v6211 = vld [vmem:[%s7 + $0x138] sm:$0xff]
        %v6212 = vld [vmem:[%s7 + $0x140] sm:$0xff]
        %v6213 = vld [vmem:[%s7 + $0x148] sm:$0xff]
        %v6214 = vld [vmem:[%s7 + $0x150] sm:$0xff]
        %v6215 = vld [vmem:[%s7 + $0x158] sm:$0xff]
        %v6216 = vld [vmem:[%s7 + $0x160] sm:$0xff]
        %v6217 = vld [vmem:[%s7 + $0x168] sm:$0xff]
        %v6218 = vld [vmem:[%s7 + $0x170] sm:$0xff]
        %v6219 = vld [vmem:[%s7 + $0x178] sm:$0xff]
        %v6220 = vld [vmem:[%s7 + $0x180] sm:$0xff]
        %v6221 = vld [vmem:[%s7 + $0x188] sm:$0xff]
        %v6222 = vld [vmem:[%s7 + $0x190] sm:$0xff]
        %v6223 = vld [vmem:[%s7 + $0x198] sm:$0xff]
        %v6224 = vld [vmem:[%s7 + $0x1a0] sm:$0xff]
        %v6225 = vld [vmem:[%s7 + $0x1a8] sm:$0xff]
        %v6226 = vld [vmem:[%s7 + $0x1b0] sm:$0xff]
        %v6227 = vld [vmem:[%s7 + $0x1b8] sm:$0xff]
        %v6228 = vld [vmem:[%s7 + $0x1c0] sm:$0xff]
        %v6229 = vld [vmem:[%s7 + $0x1c8] sm:$0xff]
        %v6230 = vld [vmem:[%s7 + $0x1d0] sm:$0xff]
        %v6231 = vld [vmem:[%s7 + $0x1d8] sm:$0xff]
        %v6232 = vld [vmem:[%s7 + $0x1e0] sm:$0xff]
        %v6233 = vld [vmem:[%s7 + $0x1e8] sm:$0xff]
        %v6234 = vld [vmem:[%s7 + $0x1f0] sm:$0xff]
        %v6235 = vld [vmem:[%s7 + $0x1f8] sm:$0xff]
        %v6236 = vld [vmem:[%s7 + $0x200] sm:$0xff]
        %v6237 = vld [vmem:[%s7 + $0x208] sm:$0xff]
        %v6238 = vld [vmem:[%s7 + $0x210] sm:$0xff]
        %v6239 = vld [vmem:[%s7 + $0x218] sm:$0xff]
        %v6240 = vld [vmem:[%s7 + $0x220] sm:$0xff]
        %v6241 = vld [vmem:[%s7 + $0x228] sm:$0xff]
        %v6242 = vld [vmem:[%s7 + $0x230] sm:$0xff]
        %v6243 = vld [vmem:[%s7 + $0x238] sm:$0xff]
        %v6245 = vsel %vm519, %v6016, 0
        %v6248 = vsel %vm519, %v6021, 0
        %v6251 = vsel %vm519, %v6026, 0
        %v6254 = vsel %vm519, %v6031, 0
        %v6257 = vsel %vm519, %v6036, 0
        %v6260 = vsel %vm519, %v6041, 0
        %v6263 = vsel %vm519, %v6046, 0
        %v6266 = vsel %vm519, %v6051, 0
        %v6269 = vsel %vm519, %v6056, 0
        %v6272 = vsel %vm519, %v6061, 0
        %v6275 = vsel %vm519, %v6066, 0
        %v6278 = vsel %vm519, %v6071, 0
        %v6281 = vsel %vm519, %v6076, 0
        %v6284 = vsel %vm519, %v6081, 0
        %v6287 = vsel %vm519, %v6086, 0
        %v6290 = vsel %vm519, %v6091, 0
        %v6293 = vsel %vm519, %v6096, 0
        %v6296 = vsel %vm519, %v6101, 0
        %v6299 = vsel %vm519, %v6106, 0
        %v6302 = vsel %vm519, %v6111, 0
        %v6305 = vsel %vm519, %v6116, 0
        %v6308 = vsel %vm519, %v6121, 0
        %v6311 = vsel %vm519, %v6126, 0
        %v6314 = vsel %vm519, %v6131, 0
        %v6317 = vsel %vm519, %v6136, 0
        %v6320 = vsel %vm519, %v6141, 0
        %v6323 = vsel %vm519, %v6146, 0
        %v6326 = vsel %vm519, %v6151, 0
        %v6329 = vsel %vm519, %v6156, 0
        %v6332 = vsel %vm519, %v6161, 0
        %v6335 = vsel %vm519, %v6166, 0
        %v6338 = vsel %vm519, %v6171, 0
        %6340 = vmatprep.subr.mxu0 0.0
        %6341 = vmatpush1.msra.mxu0 %v6172
        %6342 = vmatprep.subr.mxu0 0.0
        %6343 = vmatpush1.msra.mxu0 %v6173
        %6344 = vmatprep.subr.mxu0 0.0
        %6345 = vmatpush1.msra.mxu0 %v6174
        %6346 = vmatprep.subr.mxu0 0.0
        %6347 = vmatpush1.msra.mxu0 %v6175
        %6348 = vmatprep.subr.mxu0 0.0
        %6349 = vmatpush1.msra.mxu0 %v6176
        %6350 = vmatprep.subr.mxu0 0.0
        %6351 = vmatpush1.msra.mxu0 %v6177
        %6352 = vmatprep.subr.mxu0 0.0
        %6353 = vmatpush1.msra.mxu0 %v6178
        %6354 = vmatprep.subr.mxu0 0.0
        %6355 = vmatpush1.msra.mxu0 %v6179
        %6356 = vmatprep.subr.mxu0 0.0
        %6357 = vmatpush1.msra.mxu0 %v6180
        %6358 = vmatprep.subr.mxu0 0.0
        %6359 = vmatpush1.msra.mxu0 %v6181
        %6360 = vmatprep.subr.mxu0 0.0
        %6361 = vmatpush1.msra.mxu0 %v6182
        %6362 = vmatprep.subr.mxu0 0.0
        %6363 = vmatpush1.msra.mxu0 %v6183
        %6364 = vmatprep.subr.mxu0 0.0
        %6365 = vmatpush1.msra.mxu0 %v6184
        %6366 = vmatprep.subr.mxu0 0.0
        %6367 = vmatpush1.msra.mxu0 %v6185
        %6368 = vmatprep.subr.mxu0 0.0
        %6369 = vmatpush1.msra.mxu0 %v6186
        %6370 = vmatprep.subr.mxu0 0.0
        %6371 = vmatpush1.msra.mxu0 %v6187
        %6372 = vmatprep.subr.mxu0 0.0
        %6373 = vmatpush1.msra.mxu0 %v6188
        %6374 = vmatprep.subr.mxu0 0.0
        %6375 = vmatpush1.msra.mxu0 %v6189
        %6376 = vmatprep.subr.mxu0 0.0
        %6377 = vmatpush1.msra.mxu0 %v6190
        %6378 = vmatprep.subr.mxu0 0.0
        %6379 = vmatpush1.msra.mxu0 %v6191
        %6380 = vmatprep.subr.mxu0 0.0
        %6381 = vmatpush1.msra.mxu0 %v6192
        %6382 = vmatprep.subr.mxu0 0.0
        %6383 = vmatpush1.msra.mxu0 %v6193
        %6384 = vmatprep.subr.mxu0 0.0
        %6385 = vmatpush1.msra.mxu0 %v6194
        %6386 = vmatprep.subr.mxu0 0.0
        %6387 = vmatpush1.msra.mxu0 %v6195
        %6388 = vmatprep.subr.mxu0 0.0
        %6389 = vmatpush1.msra.mxu0 %v6196
        %6390 = vmatprep.subr.mxu0 0.0
        %6391 = vmatpush1.msra.mxu0 %v6197
        %6392 = vmatprep.subr.mxu0 0.0
        %6393 = vmatpush1.msra.mxu0 %v6198
        %6394 = vmatprep.subr.mxu0 0.0
        %6395 = vmatpush1.msra.mxu0 %v6199
        %6396 = vmatprep.subr.mxu0 0.0
        %6397 = vmatpush1.msra.mxu0 %v6200
        %6398 = vmatprep.subr.mxu0 0.0
        %6399 = vmatpush1.msra.mxu0 %v6201
        %6400 = vmatprep.subr.mxu0 0.0
        %6401 = vmatpush1.msra.mxu0 %v6202
        %6402 = vmatprep.subr.mxu0 0.0
        %6403 = vmatpush1.msra.mxu0 %v6203
        %6404 = vmatprep.mubr.f32.mxu0 %v6013
        %6405 = vmatmul.mubr.f32.gmra.mrb[0].mxu0 %v6012
        %v6406 = vpop.f32.mrb[0].mxu0
        %v6407 = vadd.f32 0.0, %v6406
        %v6408 = vpop.f32.mrb[0].mxu0
        %6409 = vmatprep.mubr.f32.mxu0 %v6018
        %6410 = vmatmul.mubr.f32.gmra.mrb[0].mxu0 %v6017
        %v6411 = vpop.f32.mrb[0].mxu0
        %v6412 = vadd.f32 0.0, %v6411
        %v6413 = vpop.f32.mrb[0].mxu0
        %6414 = vmatprep.mubr.f32.mxu0 %v6023
        %6415 = vmatmul.mubr.f32.gmra.mrb[0].mxu0 %v6022
        %v6416 = vpop.f32.mrb[0].mxu0
        %v6417 = vadd.f32 0.0, %v6416
        %v6418 = vpop.f32.mrb[0].mxu0
        %6419 = vmatprep.mubr.f32.mxu0 %v6028
        %6420 = vmatmul.mubr.f32.gmra.mrb[0].mxu0 %v6027
        %v6421 = vpop.f32.mrb[0].mxu0
        %v6422 = vadd.f32 0.0, %v6421
        %v6423 = vpop.f32.mrb[0].mxu0
        %6424 = vmatprep.mubr.f32.mxu0 %v6033
        %6425 = vmatmul.mubr.f32.gmra.mrb[0].mxu0 %v6032
        %v6426 = vpop.f32.mrb[0].mxu0
        %v6427 = vadd.f32 0.0, %v6426
        %v6428 = vpop.f32.mrb[0].mxu0
        %6429 = vmatprep.mubr.f32.mxu0 %v6038
        %6430 = vmatmul.mubr.f32.gmra.mrb[0].mxu0 %v6037
        %v6431 = vpop.f32.mrb[0].mxu0
        %v6432 = vadd.f32 0.0, %v6431
        %v6433 = vpop.f32.mrb[0].mxu0
        %6434 = vmatprep.mubr.f32.mxu0 %v6043
        %6435 = vmatmul.mubr.f32.gmra.mrb[0].mxu0 %v6042
        %v6436 = vpop.f32.mrb[0].mxu0
        %v6437 = vadd.f32 0.0, %v6436
        %v6438 = vpop.f32.mrb[0].mxu0
        %6439 = vmatprep.mubr.f32.mxu0 %v6048
        %6440 = vmatmul.mubr.f32.gmra.mrb[0].mxu0 %v6047
        %v6441 = vpop.f32.mrb[0].mxu0
        %v6442 = vadd.f32 0.0, %v6441
        %v6443 = vpop.f32.mrb[0].mxu0
        %6444 = vmatprep.mubr.f32.mxu0 %v6053
        %6445 = vmatmul.mubr.f32.gmra.mrb[0].mxu0 %v6052
        %v6446 = vpop.f32.mrb[0].mxu0
        %v6447 = vadd.f32 0.0, %v6446
        %v6448 = vpop.f32.mrb[0].mxu0
        %6449 = vmatprep.mubr.f32.mxu0 %v6058
        %6450 = vmatmul.mubr.f32.gmra.mrb[0].mxu0 %v6057
        %v6451 = vpop.f32.mrb[0].mxu0
        %v6452 = vadd.f32 0.0, %v6451
        %v6453 = vpop.f32.mrb[0].mxu0
        %6454 = vmatprep.mubr.f32.mxu0 %v6063
        %6455 = vmatmul.mubr.f32.gmra.mrb[0].mxu0 %v6062
        %v6456 = vpop.f32.mrb[0].mxu0
        %v6457 = vadd.f32 0.0, %v6456
        %v6458 = vpop.f32.mrb[0].mxu0
        %6459 = vmatprep.mubr.f32.mxu0 %v6068
        %6460 = vmatmul.mubr.f32.gmra.mrb[0].mxu0 %v6067
        %v6461 = vpop.f32.mrb[0].mxu0
        %v6462 = vadd.f32 0.0, %v6461
        %v6463 = vpop.f32.mrb[0].mxu0
        %6464 = vmatprep.mubr.f32.mxu0 %v6073
        %6465 = vmatmul.mubr.f32.gmra.mrb[0].mxu0 %v6072
        %v6466 = vpop.f32.mrb[0].mxu0
        %v6467 = vadd.f32 0.0, %v6466
        %v6468 = vpop.f32.mrb[0].mxu0
        %6469 = vmatprep.mubr.f32.mxu0 %v6078
        %6470 = vmatmul.mubr.f32.gmra.mrb[0].mxu0 %v6077
        %v6471 = vpop.f32.mrb[0].mxu0
        %v6472 = vadd.f32 0.0, %v6471
        %v6473 = vpop.f32.mrb[0].mxu0
        %6474 = vmatprep.mubr.f32.mxu0 %v6083
        %6475 = vmatmul.mubr.f32.gmra.mrb[0].mxu0 %v6082
        %v6476 = vpop.f32.mrb[0].mxu0
        %v6477 = vadd.f32 0.0, %v6476
        %v6478 = vpop.f32.mrb[0].mxu0
        %6479 = vmatprep.mubr.f32.mxu0 %v6088
        %6480 = vmatmul.mubr.f32.gmra.mrb[0].mxu0 %v6087
        %v6481 = vpop.f32.mrb[0].mxu0
        %v6482 = vadd.f32 0.0, %v6481
        %v6483 = vpop.f32.mrb[0].mxu0
        %6484 = vmatprep.mubr.f32.mxu0 %v6093
        %6485 = vmatmul.mubr.f32.gmra.mrb[0].mxu0 %v6092
        %v6486 = vpop.f32.mrb[0].mxu0
        %v6487 = vadd.f32 0.0, %v6486
        %v6488 = vpop.f32.mrb[0].mxu0
        %6489 = vmatprep.mubr.f32.mxu0 %v6098
        %6490 = vmatmul.mubr.f32.gmra.mrb[0].mxu0 %v6097
        %v6491 = vpop.f32.mrb[0].mxu0
        %v6492 = vadd.f32 0.0, %v6491
        %v6493 = vpop.f32.mrb[0].mxu0
        %6494 = vmatprep.mubr.f32.mxu0 %v6103
        %6495 = vmatmul.mubr.f32.gmra.mrb[0].mxu0 %v6102
        %v6496 = vpop.f32.mrb[0].mxu0
        %v6497 = vadd.f32 0.0, %v6496
        %v6498 = vpop.f32.mrb[0].mxu0
        %6499 = vmatprep.mubr.f32.mxu0 %v6108
        %6500 = vmatmul.mubr.f32.gmra.mrb[0].mxu0 %v6107
        %v6501 = vpop.f32.mrb[0].mxu0
        %v6502 = vadd.f32 0.0, %v6501
        %v6503 = vpop.f32.mrb[0].mxu0
        %6504 = vmatprep.mubr.f32.mxu0 %v6113
        %6505 = vmatmul.mubr.f32.gmra.mrb[0].mxu0 %v6112
        %v6506 = vpop.f32.mrb[0].mxu0
        %v6507 = vadd.f32 0.0, %v6506
        %v6508 = vpop.f32.mrb[0].mxu0
        %6509 = vmatprep.mubr.f32.mxu0 %v6118
        %6510 = vmatmul.mubr.f32.gmra.mrb[0].mxu0 %v6117
        %v6511 = vpop.f32.mrb[0].mxu0
        %v6512 = vadd.f32 0.0, %v6511
        %v6513 = vpop.f32.mrb[0].mxu0
        %6514 = vmatprep.mubr.f32.mxu0 %v6123
        %6515 = vmatmul.mubr.f32.gmra.mrb[0].mxu0 %v6122
        %v6516 = vpop.f32.mrb[0].mxu0
        %v6517 = vadd.f32 0.0, %v6516
        %v6518 = vpop.f32.mrb[0].mxu0
        %6519 = vmatprep.mubr.f32.mxu0 %v6128
        %6520 = vmatmul.mubr.f32.gmra.mrb[0].mxu0 %v6127
        %v6521 = vpop.f32.mrb[0].mxu0
        %v6522 = vadd.f32 0.0, %v6521
        %v6523 = vpop.f32.mrb[0].mxu0
        %6524 = vmatprep.mubr.f32.mxu0 %v6133
        %6525 = vmatmul.mubr.f32.gmra.mrb[0].mxu0 %v6132
        %v6526 = vpop.f32.mrb[0].mxu0
        %v6527 = vadd.f32 0.0, %v6526
        %v6528 = vpop.f32.mrb[0].mxu0
        %6529 = vmatprep.mubr.f32.mxu0 %v6138
        %6530 = vmatmul.mubr.f32.gmra.mrb[0].mxu0 %v6137
        %v6531 = vpop.f32.mrb[0].mxu0
        %v6532 = vadd.f32 0.0, %v6531
        %v6533 = vpop.f32.mrb[0].mxu0
        %6534 = vmatprep.mubr.f32.mxu0 %v6143
        %6535 = vmatmul.mubr.f32.gmra.mrb[0].mxu0 %v6142
        %v6536 = vpop.f32.mrb[0].mxu0
        %v6537 = vadd.f32 0.0, %v6536
        %v6538 = vpop.f32.mrb[0].mxu0
        %6539 = vmatprep.mubr.f32.mxu0 %v6148
        %6540 = vmatmul.mubr.f32.gmra.mrb[0].mxu0 %v6147
        %v6541 = vpop.f32.mrb[0].mxu0
        %v6542 = vadd.f32 0.0, %v6541
        %v6543 = vpop.f32.mrb[0].mxu0
        %6544 = vmatprep.mubr.f32.mxu0 %v6153
        %6545 = vmatmul.mubr.f32.gmra.mrb[0].mxu0 %v6152
        %v6546 = vpop.f32.mrb[0].mxu0
        %v6547 = vadd.f32 0.0, %v6546
        %v6548 = vpop.f32.mrb[0].mxu0
        %6549 = vmatprep.mubr.f32.mxu0 %v6158
        %6550 = vmatmul.mubr.f32.gmra.mrb[0].mxu0 %v6157
        %v6551 = vpop.f32.mrb[0].mxu0
        %v6552 = vadd.f32 0.0, %v6551
        %v6553 = vpop.f32.mrb[0].mxu0
        %6554 = vmatprep.mubr.f32.mxu0 %v6163
        %6555 = vmatmul.mubr.f32.gmra.mrb[0].mxu0 %v6162
        %v6556 = vpop.f32.mrb[0].mxu0
        %v6557 = vadd.f32 0.0, %v6556
        %v6558 = vpop.f32.mrb[0].mxu0
        %6559 = vmatprep.mubr.f32.mxu0 %v6168
        %6560 = vmatmul.mubr.f32.gmra.mrb[0].mxu0 %v6167
        %v6561 = vpop.f32.mrb[0].mxu0
        %v6562 = vadd.f32 0.0, %v6561
        %v6563 = vpop.f32.mrb[0].mxu0
        %6564 = vdwg.mxu0
        %6565 = vmatprep.subr.mxu0 0.0
        %6566 = vmatpush1.msra.mxu0 %v6204
        %6567 = vmatprep.subr.mxu0 0.0
        %6568 = vmatpush1.msra.mxu0 %v6205
        %6569 = vmatprep.subr.mxu0 0.0
        %6570 = vmatpush1.msra.mxu0 %v6206
        %6571 = vmatprep.subr.mxu0 0.0
        %6572 = vmatpush1.msra.mxu0 %v6207
        %6573 = vmatprep.subr.mxu0 0.0
        %6574 = vmatpush1.msra.mxu0 %v6208
        %6575 = vmatprep.subr.mxu0 0.0
        %6576 = vmatpush1.msra.mxu0 %v6209
        %6577 = vmatprep.subr.mxu0 0.0
        %6578 = vmatpush1.msra.mxu0 %v6210
        %6579 = vmatprep.subr.mxu0 0.0
        %6580 = vmatpush1.msra.mxu0 %v6211
        %6581 = vmatprep.subr.mxu0 0.0
        %6582 = vmatpush1.msra.mxu0 %v6212
        %6583 = vmatprep.subr.mxu0 0.0
        %6584 = vmatpush1.msra.mxu0 %v6213
        %6585 = vmatprep.subr.mxu0 0.0
        %6586 = vmatpush1.msra.mxu0 %v6214
        %6587 = vmatprep.subr.mxu0 0.0
        %6588 = vmatpush1.msra.mxu0 %v6215
        %6589 = vmatprep.subr.mxu0 0.0
        %6590 = vmatpush1.msra.mxu0 %v6216
        %6591 = vmatprep.subr.mxu0 0.0
        %6592 = vmatpush1.msra.mxu0 %v6217
        %6593 = vmatprep.subr.mxu0 0.0
        %6594 = vmatpush1.msra.mxu0 %v6218
        %6595 = vmatprep.subr.mxu0 0.0
        %6596 = vmatpush1.msra.mxu0 %v6219
        %6597 = vmatprep.subr.mxu0 0.0
        %6598 = vmatpush1.msra.mxu0 %v6220
        %6599 = vmatprep.subr.mxu0 0.0
        %6600 = vmatpush1.msra.mxu0 %v6221
        %6601 = vmatprep.subr.mxu0 0.0
        %6602 = vmatpush1.msra.mxu0 %v6222
        %6603 = vmatprep.subr.mxu0 0.0
        %6604 = vmatpush1.msra.mxu0 %v6223
        %6605 = vmatprep.subr.mxu0 0.0
        %6606 = vmatpush1.msra.mxu0 %v6224
        %6607 = vmatprep.subr.mxu0 0.0
        %6608 = vmatpush1.msra.mxu0 %v6225
        %6609 = vmatprep.subr.mxu0 0.0
        %6610 = vmatpush1.msra.mxu0 %v6226
        %6611 = vmatprep.subr.mxu0 0.0
        %6612 = vmatpush1.msra.mxu0 %v6227
        %6613 = vmatprep.subr.mxu0 0.0
        %6614 = vmatpush1.msra.mxu0 %v6228
        %6615 = vmatprep.subr.mxu0 0.0
        %6616 = vmatpush1.msra.mxu0 %v6229
        %6617 = vmatprep.subr.mxu0 0.0
        %6618 = vmatpush1.msra.mxu0 %v6230
        %6619 = vmatprep.subr.mxu0 0.0
        %6620 = vmatpush1.msra.mxu0 %v6231
        %6621 = vmatprep.subr.mxu0 0.0
        %6622 = vmatpush1.msra.mxu0 %v6232
        %6623 = vmatprep.subr.mxu0 0.0
        %6624 = vmatpush1.msra.mxu0 %v6233
        %6625 = vmatprep.subr.mxu0 0.0
        %6626 = vmatpush1.msra.mxu0 %v6234
        %6627 = vmatprep.subr.mxu0 0.0
        %6628 = vmatpush1.msra.mxu0 %v6235
        %6629 = vmatprep.mubr.f32.mxu0 %v6015
        %6630 = vmatmul.mubr.f32.gmra.mrb[0].mxu0 %v6014
        %v6631 = vpop.f32.mrb[0].mxu0
        %v6632 = vadd.f32 %v6407, %v6631
        %v6633 = vpop.f32.mrb[0].mxu0
        %6634 = vmatprep.mubr.f32.mxu0 %v6020
        %6635 = vmatmul.mubr.f32.gmra.mrb[0].mxu0 %v6019
        %v6636 = vpop.f32.mrb[0].mxu0
        %v6637 = vadd.f32 %v6412, %v6636
        %v6638 = vpop.f32.mrb[0].mxu0
        %6639 = vmatprep.mubr.f32.mxu0 %v6025
        %6640 = vmatmul.mubr.f32.gmra.mrb[0].mxu0 %v6024
        %v6641 = vpop.f32.mrb[0].mxu0
        %v6642 = vadd.f32 %v6417, %v6641
        %v6643 = vpop.f32.mrb[0].mxu0
        %6644 = vmatprep.mubr.f32.mxu0 %v6030
        %6645 = vmatmul.mubr.f32.gmra.mrb[0].mxu0 %v6029
        %v6646 = vpop.f32.mrb[0].mxu0
        %v6647 = vadd.f32 %v6422, %v6646
        %v6648 = vpop.f32.mrb[0].mxu0
        %6649 = vmatprep.mubr.f32.mxu0 %v6035
        %6650 = vmatmul.mubr.f32.gmra.mrb[0].mxu0 %v6034
        %v6651 = vpop.f32.mrb[0].mxu0
        %v6652 = vadd.f32 %v6427, %v6651
        %v6653 = vpop.f32.mrb[0].mxu0
        %6654 = vmatprep.mubr.f32.mxu0 %v6040
        %6655 = vmatmul.mubr.f32.gmra.mrb[0].mxu0 %v6039
        %v6656 = vpop.f32.mrb[0].mxu0
        %v6657 = vadd.f32 %v6432, %v6656
        %v6658 = vpop.f32.mrb[0].mxu0
        %6659 = vmatprep.mubr.f32.mxu0 %v6045
        %6660 = vmatmul.mubr.f32.gmra.mrb[0].mxu0 %v6044
        %v6661 = vpop.f32.mrb[0].mxu0
        %v6662 = vadd.f32 %v6437, %v6661
        %v6663 = vpop.f32.mrb[0].mxu0
        %6664 = vmatprep.mubr.f32.mxu0 %v6050
        %6665 = vmatmul.mubr.f32.gmra.mrb[0].mxu0 %v6049
        %v6666 = vpop.f32.mrb[0].mxu0
        %v6667 = vadd.f32 %v6442, %v6666
        %v6668 = vpop.f32.mrb[0].mxu0
        %6669 = vmatprep.mubr.f32.mxu0 %v6055
        %6670 = vmatmul.mubr.f32.gmra.mrb[0].mxu0 %v6054
        %v6671 = vpop.f32.mrb[0].mxu0
        %v6672 = vadd.f32 %v6447, %v6671
        %v6673 = vpop.f32.mrb[0].mxu0
        %6674 = vmatprep.mubr.f32.mxu0 %v6060
        %6675 = vmatmul.mubr.f32.gmra.mrb[0].mxu0 %v6059
        %v6676 = vpop.f32.mrb[0].mxu0
        %v6677 = vadd.f32 %v6452, %v6676
        %v6678 = vpop.f32.mrb[0].mxu0
        %6679 = vmatprep.mubr.f32.mxu0 %v6065
        %6680 = vmatmul.mubr.f32.gmra.mrb[0].mxu0 %v6064
        %v6681 = vpop.f32.mrb[0].mxu0
        %v6682 = vadd.f32 %v6457, %v6681
        %v6683 = vpop.f32.mrb[0].mxu0
        %6684 = vmatprep.mubr.f32.mxu0 %v6070
        %6685 = vmatmul.mubr.f32.gmra.mrb[0].mxu0 %v6069
        %v6686 = vpop.f32.mrb[0].mxu0
        %v6687 = vadd.f32 %v6462, %v6686
        %v6688 = vpop.f32.mrb[0].mxu0
        %6689 = vmatprep.mubr.f32.mxu0 %v6075
        %6690 = vmatmul.mubr.f32.gmra.mrb[0].mxu0 %v6074
        %v6691 = vpop.f32.mrb[0].mxu0
        %v6692 = vadd.f32 %v6467, %v6691
        %v6693 = vpop.f32.mrb[0].mxu0
        %6694 = vmatprep.mubr.f32.mxu0 %v6080
        %6695 = vmatmul.mubr.f32.gmra.mrb[0].mxu0 %v6079
        %v6696 = vpop.f32.mrb[0].mxu0
        %v6697 = vadd.f32 %v6472, %v6696
        %v6698 = vpop.f32.mrb[0].mxu0
        %6699 = vmatprep.mubr.f32.mxu0 %v6085
        %6700 = vmatmul.mubr.f32.gmra.mrb[0].mxu0 %v6084
        %v6701 = vpop.f32.mrb[0].mxu0
        %v6702 = vadd.f32 %v6477, %v6701
        %v6703 = vpop.f32.mrb[0].mxu0
        %6704 = vmatprep.mubr.f32.mxu0 %v6090
        %6705 = vmatmul.mubr.f32.gmra.mrb[0].mxu0 %v6089
        %v6706 = vpop.f32.mrb[0].mxu0
        %v6707 = vadd.f32 %v6482, %v6706
        %v6708 = vpop.f32.mrb[0].mxu0
        %6709 = vmatprep.mubr.f32.mxu0 %v6095
        %6710 = vmatmul.mubr.f32.gmra.mrb[0].mxu0 %v6094
        %v6711 = vpop.f32.mrb[0].mxu0
        %v6712 = vadd.f32 %v6487, %v6711
        %v6713 = vpop.f32.mrb[0].mxu0
        %6714 = vmatprep.mubr.f32.mxu0 %v6100
        %6715 = vmatmul.mubr.f32.gmra.mrb[0].mxu0 %v6099
        %v6716 = vpop.f32.mrb[0].mxu0
        %v6717 = vadd.f32 %v6492, %v6716
        %v6718 = vpop.f32.mrb[0].mxu0
        %6719 = vmatprep.mubr.f32.mxu0 %v6105
        %6720 = vmatmul.mubr.f32.gmra.mrb[0].mxu0 %v6104
        %v6721 = vpop.f32.mrb[0].mxu0
        %v6722 = vadd.f32 %v6497, %v6721
        %v6723 = vpop.f32.mrb[0].mxu0
        %6724 = vmatprep.mubr.f32.mxu0 %v6110
        %6725 = vmatmul.mubr.f32.gmra.mrb[0].mxu0 %v6109
        %v6726 = vpop.f32.mrb[0].mxu0
        %v6727 = vadd.f32 %v6502, %v6726
        %v6728 = vpop.f32.mrb[0].mxu0
        %6729 = vmatprep.mubr.f32.mxu0 %v6115
        %6730 = vmatmul.mubr.f32.gmra.mrb[0].mxu0 %v6114
        %v6731 = vpop.f32.mrb[0].mxu0
        %v6732 = vadd.f32 %v6507, %v6731
        %v6733 = vpop.f32.mrb[0].mxu0
        %6734 = vmatprep.mubr.f32.mxu0 %v6120
        %6735 = vmatmul.mubr.f32.gmra.mrb[0].mxu0 %v6119
        %v6736 = vpop.f32.mrb[0].mxu0
        %v6737 = vadd.f32 %v6512, %v6736
        %v6738 = vpop.f32.mrb[0].mxu0
        %6739 = vmatprep.mubr.f32.mxu0 %v6125
        %6740 = vmatmul.mubr.f32.gmra.mrb[0].mxu0 %v6124
        %v6741 = vpop.f32.mrb[0].mxu0
        %v6742 = vadd.f32 %v6517, %v6741
        %v6743 = vpop.f32.mrb[0].mxu0
        %6744 = vmatprep.mubr.f32.mxu0 %v6130
        %6745 = vmatmul.mubr.f32.gmra.mrb[0].mxu0 %v6129
        %v6746 = vpop.f32.mrb[0].mxu0
        %v6747 = vadd.f32 %v6522, %v6746
        %v6748 = vpop.f32.mrb[0].mxu0
        %6749 = vmatprep.mubr.f32.mxu0 %v6135
        %6750 = vmatmul.mubr.f32.gmra.mrb[0].mxu0 %v6134
        %v6751 = vpop.f32.mrb[0].mxu0
        %v6752 = vadd.f32 %v6527, %v6751
        %v6753 = vpop.f32.mrb[0].mxu0
        %6754 = vmatprep.mubr.f32.mxu0 %v6140
        %6755 = vmatmul.mubr.f32.gmra.mrb[0].mxu0 %v6139
        %v6756 = vpop.f32.mrb[0].mxu0
        %v6757 = vadd.f32 %v6532, %v6756
        %v6758 = vpop.f32.mrb[0].mxu0
        %6759 = vmatprep.mubr.f32.mxu0 %v6145
        %6760 = vmatmul.mubr.f32.gmra.mrb[0].mxu0 %v6144
        %v6761 = vpop.f32.mrb[0].mxu0
        %v6762 = vadd.f32 %v6537, %v6761
        %v6763 = vpop.f32.mrb[0].mxu0
        %6764 = vmatprep.mubr.f32.mxu0 %v6150
        %6765 = vmatmul.mubr.f32.gmra.mrb[0].mxu0 %v6149
        %v6766 = vpop.f32.mrb[0].mxu0
        %v6767 = vadd.f32 %v6542, %v6766
        %v6768 = vpop.f32.mrb[0].mxu0
        %6769 = vmatprep.mubr.f32.mxu0 %v6155
        %6770 = vmatmul.mubr.f32.gmra.mrb[0].mxu0 %v6154
        %v6771 = vpop.f32.mrb[0].mxu0
        %v6772 = vadd.f32 %v6547, %v6771
        %v6773 = vpop.f32.mrb[0].mxu0
        %6774 = vmatprep.mubr.f32.mxu0 %v6160
        %6775 = vmatmul.mubr.f32.gmra.mrb[0].mxu0 %v6159
        %v6776 = vpop.f32.mrb[0].mxu0
        %v6777 = vadd.f32 %v6552, %v6776
        %v6778 = vpop.f32.mrb[0].mxu0
        %6779 = vmatprep.mubr.f32.mxu0 %v6165
        %6780 = vmatmul.mubr.f32.gmra.mrb[0].mxu0 %v6164
        %v6781 = vpop.f32.mrb[0].mxu0
        %v6782 = vadd.f32 %v6557, %v6781
        %v6783 = vpop.f32.mrb[0].mxu0
        %6784 = vmatprep.mubr.f32.mxu0 %v6170
        %6785 = vmatmul.mubr.f32.gmra.mrb[0].mxu0 %v6169
        %v6786 = vpop.f32.mrb[0].mxu0
        %v6787 = vadd.f32 %v6562, %v6786
        %v6788 = vpop.f32.mrb[0].mxu0
        %6789 = vdwg.mxu0
        %6790 = vmatprep.subr.mxu0 0.0
        %6791 = vmatpush1.msra.mxu0 %v6236
        %6792 = vmatprep.subr.mxu0 0.0
        %6793 = vmatpush1.msra.mxu0 %v6237
        %6794 = vmatprep.subr.mxu0 0.0
        %6795 = vmatpush1.msra.mxu0 %v6238
        %6796 = vmatprep.subr.mxu0 0.0
        %6797 = vmatpush1.msra.mxu0 %v6239
        %6798 = vmatprep.subr.mxu0 0.0
        %6799 = vmatpush1.msra.mxu0 %v6240
        %6800 = vmatprep.subr.mxu0 0.0
        %6801 = vmatpush1.msra.mxu0 %v6241
        %6802 = vmatprep.subr.mxu0 0.0
        %6803 = vmatpush1.msra.mxu0 %v6242
        %6804 = vmatprep.subr.mxu0 0.0
        %6805 = vmatpush1.msra.mxu0 %v6243
        %6806 = vmatprep.subr.mxu0 0.0
        %6807 = vmatpush1.msra.mxu0 0.0
        %6808 = vmatprep.subr.mxu0 0.0
        %6809 = vmatpush1.msra.mxu0 0.0
        %6810 = vmatprep.subr.mxu0 0.0
        %6811 = vmatpush1.msra.mxu0 0.0
        %6812 = vmatprep.subr.mxu0 0.0
        %6813 = vmatpush1.msra.mxu0 0.0
        %6814 = vmatprep.subr.mxu0 0.0
        %6815 = vmatpush1.msra.mxu0 0.0
        %6816 = vmatprep.subr.mxu0 0.0
        %6817 = vmatpush1.msra.mxu0 0.0
        %6818 = vmatprep.subr.mxu0 0.0
        %6819 = vmatpush1.msra.mxu0 0.0
        %6820 = vmatprep.subr.mxu0 0.0
        %6821 = vmatpush1.msra.mxu0 0.0
        %6822 = vmatprep.subr.mxu0 0.0
        %6823 = vmatpush1.msra.mxu0 0.0
        %6824 = vmatprep.subr.mxu0 0.0
        %6825 = vmatpush1.msra.mxu0 0.0
        %6826 = vmatprep.subr.mxu0 0.0
        %6827 = vmatpush1.msra.mxu0 0.0
        %6828 = vmatprep.subr.mxu0 0.0
        %6829 = vmatpush1.msra.mxu0 0.0
        %6830 = vmatprep.subr.mxu0 0.0
        %6831 = vmatpush1.msra.mxu0 0.0
        %6832 = vmatprep.subr.mxu0 0.0
        %6833 = vmatpush1.msra.mxu0 0.0
        %6834 = vmatprep.subr.mxu0 0.0
        %6835 = vmatpush1.msra.mxu0 0.0
        %6836 = vmatprep.subr.mxu0 0.0
        %6837 = vmatpush1.msra.mxu0 0.0
        %6838 = vmatprep.subr.mxu0 0.0
        %6839 = vmatpush1.msra.mxu0 0.0
        %6840 = vmatprep.subr.mxu0 0.0
        %6841 = vmatpush1.msra.mxu0 0.0
        %6842 = vmatprep.subr.mxu0 0.0
        %6843 = vmatpush1.msra.mxu0 0.0
        %6844 = vmatprep.subr.mxu0 0.0
        %6845 = vmatpush1.msra.mxu0 0.0
        %6846 = vmatprep.subr.mxu0 0.0
        %6847 = vmatpush1.msra.mxu0 0.0
        %6848 = vmatprep.subr.mxu0 0.0
        %6849 = vmatpush1.msra.mxu0 0.0
        %6850 = vmatprep.subr.mxu0 0.0
        %6851 = vmatpush1.msra.mxu0 0.0
        %6852 = vmatprep.subr.mxu0 0.0
        %6853 = vmatpush1.msra.mxu0 0.0
        %6854 = vmatprep.mubr.f32.mxu0 0.0
        %6855 = vmatmul.mubr.f32.gmra.mrb[0].mxu0 %v6245
        %v6856 = vpop.f32.mrb[0].mxu0
        %v6857 = vadd.f32 %v6632, %v6856
        %v6858 = vpop.f32.mrb[0].mxu0
        %6859 = vmatprep.mubr.f32.mxu0 0.0
        %6860 = vmatmul.mubr.f32.gmra.mrb[0].mxu0 %v6248
        %v6861 = vpop.f32.mrb[0].mxu0
        %v6862 = vadd.f32 %v6637, %v6861
        %v6863 = vpop.f32.mrb[0].mxu0
        %6864 = vmatprep.mubr.f32.mxu0 0.0
        %6865 = vmatmul.mubr.f32.gmra.mrb[0].mxu0 %v6251
        %v6866 = vpop.f32.mrb[0].mxu0
        %v6867 = vadd.f32 %v6642, %v6866
        %v6868 = vpop.f32.mrb[0].mxu0
        %6869 = vmatprep.mubr.f32.mxu0 0.0
        %6870 = vmatmul.mubr.f32.gmra.mrb[0].mxu0 %v6254
        %v6871 = vpop.f32.mrb[0].mxu0
        %v6872 = vadd.f32 %v6647, %v6871
        %v6873 = vpop.f32.mrb[0].mxu0
        %6874 = vmatprep.mubr.f32.mxu0 0.0
        %6875 = vmatmul.mubr.f32.gmra.mrb[0].mxu0 %v6257
        %v6876 = vpop.f32.mrb[0].mxu0
        %v6877 = vadd.f32 %v6652, %v6876
        %v6878 = vpop.f32.mrb[0].mxu0
        %6879 = vmatprep.mubr.f32.mxu0 0.0
        %6880 = vmatmul.mubr.f32.gmra.mrb[0].mxu0 %v6260
        %v6881 = vpop.f32.mrb[0].mxu0
        %v6882 = vadd.f32 %v6657, %v6881
        %v6883 = vpop.f32.mrb[0].mxu0
        %6884 = vmatprep.mubr.f32.mxu0 0.0
        %6885 = vmatmul.mubr.f32.gmra.mrb[0].mxu0 %v6263
        %v6886 = vpop.f32.mrb[0].mxu0
        %v6887 = vadd.f32 %v6662, %v6886
        %v6888 = vpop.f32.mrb[0].mxu0
        %6889 = vmatprep.mubr.f32.mxu0 0.0
        %6890 = vmatmul.mubr.f32.gmra.mrb[0].mxu0 %v6266
        %v6891 = vpop.f32.mrb[0].mxu0
        %v6892 = vadd.f32 %v6667, %v6891
        %v6893 = vpop.f32.mrb[0].mxu0
        %6894 = vmatprep.mubr.f32.mxu0 0.0
        %6895 = vmatmul.mubr.f32.gmra.mrb[0].mxu0 %v6269
        %v6896 = vpop.f32.mrb[0].mxu0
        %v6897 = vadd.f32 %v6672, %v6896
        %v6898 = vpop.f32.mrb[0].mxu0
        %6899 = vmatprep.mubr.f32.mxu0 0.0
        %6900 = vmatmul.mubr.f32.gmra.mrb[0].mxu0 %v6272
        %v6901 = vpop.f32.mrb[0].mxu0
        %v6902 = vadd.f32 %v6677, %v6901
        %v6903 = vpop.f32.mrb[0].mxu0
        %6904 = vmatprep.mubr.f32.mxu0 0.0
        %6905 = vmatmul.mubr.f32.gmra.mrb[0].mxu0 %v6275
        %v6906 = vpop.f32.mrb[0].mxu0
        %v6907 = vadd.f32 %v6682, %v6906
        %v6908 = vpop.f32.mrb[0].mxu0
        %6909 = vmatprep.mubr.f32.mxu0 0.0
        %6910 = vmatmul.mubr.f32.gmra.mrb[0].mxu0 %v6278
        %v6911 = vpop.f32.mrb[0].mxu0
        %v6912 = vadd.f32 %v6687, %v6911
        %v6913 = vpop.f32.mrb[0].mxu0
        %6914 = vmatprep.mubr.f32.mxu0 0.0
        %6915 = vmatmul.mubr.f32.gmra.mrb[0].mxu0 %v6281
        %v6916 = vpop.f32.mrb[0].mxu0
        %v6917 = vadd.f32 %v6692, %v6916
        %v6918 = vpop.f32.mrb[0].mxu0
        %6919 = vmatprep.mubr.f32.mxu0 0.0
        %6920 = vmatmul.mubr.f32.gmra.mrb[0].mxu0 %v6284
        %v6921 = vpop.f32.mrb[0].mxu0
        %v6922 = vadd.f32 %v6697, %v6921
        %v6923 = vpop.f32.mrb[0].mxu0
        %6924 = vmatprep.mubr.f32.mxu0 0.0
        %6925 = vmatmul.mubr.f32.gmra.mrb[0].mxu0 %v6287
        %v6926 = vpop.f32.mrb[0].mxu0
        %v6927 = vadd.f32 %v6702, %v6926
        %v6928 = vpop.f32.mrb[0].mxu0
        %6929 = vmatprep.mubr.f32.mxu0 0.0
        %6930 = vmatmul.mubr.f32.gmra.mrb[0].mxu0 %v6290
        %v6931 = vpop.f32.mrb[0].mxu0
        %v6932 = vadd.f32 %v6707, %v6931
        %v6933 = vpop.f32.mrb[0].mxu0
        %6934 = vmatprep.mubr.f32.mxu0 0.0
        %6935 = vmatmul.mubr.f32.gmra.mrb[0].mxu0 %v6293
        %v6936 = vpop.f32.mrb[0].mxu0
        %v6937 = vadd.f32 %v6712, %v6936
        %v6938 = vpop.f32.mrb[0].mxu0
        %6939 = vmatprep.mubr.f32.mxu0 0.0
        %6940 = vmatmul.mubr.f32.gmra.mrb[0].mxu0 %v6296
        %v6941 = vpop.f32.mrb[0].mxu0
        %v6942 = vadd.f32 %v6717, %v6941
        %v6943 = vpop.f32.mrb[0].mxu0
        %6944 = vmatprep.mubr.f32.mxu0 0.0
        %6945 = vmatmul.mubr.f32.gmra.mrb[0].mxu0 %v6299
        %v6946 = vpop.f32.mrb[0].mxu0
        %v6947 = vadd.f32 %v6722, %v6946
        %v6948 = vpop.f32.mrb[0].mxu0
        %6949 = vmatprep.mubr.f32.mxu0 0.0
        %6950 = vmatmul.mubr.f32.gmra.mrb[0].mxu0 %v6302
        %v6951 = vpop.f32.mrb[0].mxu0
        %v6952 = vadd.f32 %v6727, %v6951
        %v6953 = vpop.f32.mrb[0].mxu0
        %6954 = vmatprep.mubr.f32.mxu0 0.0
        %6955 = vmatmul.mubr.f32.gmra.mrb[0].mxu0 %v6305
        %v6956 = vpop.f32.mrb[0].mxu0
        %v6957 = vadd.f32 %v6732, %v6956
        %v6958 = vpop.f32.mrb[0].mxu0
        %6959 = vmatprep.mubr.f32.mxu0 0.0
        %6960 = vmatmul.mubr.f32.gmra.mrb[0].mxu0 %v6308
        %v6961 = vpop.f32.mrb[0].mxu0
        %v6962 = vadd.f32 %v6737, %v6961
        %v6963 = vpop.f32.mrb[0].mxu0
        %6964 = vmatprep.mubr.f32.mxu0 0.0
        %6965 = vmatmul.mubr.f32.gmra.mrb[0].mxu0 %v6311
        %v6966 = vpop.f32.mrb[0].mxu0
        %v6967 = vadd.f32 %v6742, %v6966
        %v6968 = vpop.f32.mrb[0].mxu0
        %6969 = vmatprep.mubr.f32.mxu0 0.0
        %6970 = vmatmul.mubr.f32.gmra.mrb[0].mxu0 %v6314
        %v6971 = vpop.f32.mrb[0].mxu0
        %v6972 = vadd.f32 %v6747, %v6971
        %v6973 = vpop.f32.mrb[0].mxu0
        %6974 = vmatprep.mubr.f32.mxu0 0.0
        %6975 = vmatmul.mubr.f32.gmra.mrb[0].mxu0 %v6317
        %v6976 = vpop.f32.mrb[0].mxu0
        %v6977 = vadd.f32 %v6752, %v6976
        %v6978 = vpop.f32.mrb[0].mxu0
        %6979 = vmatprep.mubr.f32.mxu0 0.0
        %6980 = vmatmul.mubr.f32.gmra.mrb[0].mxu0 %v6320
        %v6981 = vpop.f32.mrb[0].mxu0
        %v6982 = vadd.f32 %v6757, %v6981
        %v6983 = vpop.f32.mrb[0].mxu0
        %6984 = vmatprep.mubr.f32.mxu0 0.0
        %6985 = vmatmul.mubr.f32.gmra.mrb[0].mxu0 %v6323
        %v6986 = vpop.f32.mrb[0].mxu0
        %v6987 = vadd.f32 %v6762, %v6986
        %v6988 = vpop.f32.mrb[0].mxu0
        %6989 = vmatprep.mubr.f32.mxu0 0.0
        %6990 = vmatmul.mubr.f32.gmra.mrb[0].mxu0 %v6326
        %v6991 = vpop.f32.mrb[0].mxu0
        %v6992 = vadd.f32 %v6767, %v6991
        %v6993 = vpop.f32.mrb[0].mxu0
        %6994 = vmatprep.mubr.f32.mxu0 0.0
        %6995 = vmatmul.mubr.f32.gmra.mrb[0].mxu0 %v6329
        %v6996 = vpop.f32.mrb[0].mxu0
        %v6997 = vadd.f32 %v6772, %v6996
        %v6998 = vpop.f32.mrb[0].mxu0
        %6999 = vmatprep.mubr.f32.mxu0 0.0
        %7000 = vmatmul.mubr.f32.gmra.mrb[0].mxu0 %v6332
        %v7001 = vpop.f32.mrb[0].mxu0
        %v7002 = vadd.f32 %v6777, %v7001
        %v7003 = vpop.f32.mrb[0].mxu0
        %7004 = vmatprep.mubr.f32.mxu0 0.0
        %7005 = vmatmul.mubr.f32.gmra.mrb[0].mxu0 %v6335
        %v7006 = vpop.f32.mrb[0].mxu0
        %v7007 = vadd.f32 %v6782, %v7006
        %v7008 = vpop.f32.mrb[0].mxu0
        %7009 = vmatprep.mubr.f32.mxu0 0.0
        %7010 = vmatmul.mubr.f32.gmra.mrb[0].mxu0 %v6338
        %v7011 = vpop.f32.mrb[0].mxu0
        %v7012 = vadd.f32 %v6787, %v7011
        %v7013 = vpop.f32.mrb[0].mxu0
        %7014 = vdwg.mxu0
        %v7015 = vld [vmem:[%s8] sm:$0x1]
        %v7017 = vlaneseq
        %v7018 = vshrl.u32 %v7017, 7
        %v7019 = vsub.s32 0, %v7018
        %v7020 = vrot.slane %v7015, %v7019
        %v7022 = vmul.f32 %v6857, %v7020
        %v7023 = vmul.f32 %v6862, %v7020
        %v7024 = vmul.f32 %v6867, %v7020
        %v7025 = vmul.f32 %v6872, %v7020
        %v7026 = vmul.f32 %v6877, %v7020
        %v7027 = vmul.f32 %v6882, %v7020
        %v7028 = vmul.f32 %v6887, %v7020
        %v7029 = vmul.f32 %v6892, %v7020
        %v7030 = vmul.f32 %v6897, %v7020
        %v7031 = vmul.f32 %v6902, %v7020
        %v7032 = vmul.f32 %v6907, %v7020
        %v7033 = vmul.f32 %v6912, %v7020
        %v7034 = vmul.f32 %v6917, %v7020
        %v7035 = vmul.f32 %v6922, %v7020
        %v7036 = vmul.f32 %v6927, %v7020
        %v7037 = vmul.f32 %v6932, %v7020
        %v7038 = vmul.f32 %v6937, %v7020
        %v7039 = vmul.f32 %v6942, %v7020
        %v7040 = vmul.f32 %v6947, %v7020
        %v7041 = vmul.f32 %v6952, %v7020
        %v7042 = vmul.f32 %v6957, %v7020
        %v7043 = vmul.f32 %v6962, %v7020
        %v7044 = vmul.f32 %v6967, %v7020
        %v7045 = vmul.f32 %v6972, %v7020
        %v7046 = vmul.f32 %v6977, %v7020
        %v7047 = vmul.f32 %v6982, %v7020
        %v7048 = vmul.f32 %v6987, %v7020
        %v7049 = vmul.f32 %v6992, %v7020
        %v7050 = vmul.f32 %v6997, %v7020
        %v7051 = vmul.f32 %v7002, %v7020
        %v7052 = vmul.f32 %v7007, %v7020
        %v7053 = vmul.f32 %v7012, %v7020
        %v7054 = vld [vmem:[%s9] sm:$0x1]
        %v7056 = vlaneseq
        %v7057 = vshrl.u32 %v7056, 7
        %v7058 = vsub.s32 0, %v7057
        %v7059 = vrot.slane %v7054, %v7058
        %v7061 = vadd.f32 %v7022, %v7059
        %v7062 = vadd.f32 %v7023, %v7059
        %v7063 = vadd.f32 %v7024, %v7059
        %v7064 = vadd.f32 %v7025, %v7059
        %v7065 = vadd.f32 %v7026, %v7059
        %v7066 = vadd.f32 %v7027, %v7059
        %v7067 = vadd.f32 %v7028, %v7059
        %v7068 = vadd.f32 %v7029, %v7059
        %v7069 = vadd.f32 %v7030, %v7059
        %v7070 = vadd.f32 %v7031, %v7059
        %v7071 = vadd.f32 %v7032, %v7059
        %v7072 = vadd.f32 %v7033, %v7059
        %v7073 = vadd.f32 %v7034, %v7059
        %v7074 = vadd.f32 %v7035, %v7059
        %v7075 = vadd.f32 %v7036, %v7059
        %v7076 = vadd.f32 %v7037, %v7059
        %v7077 = vadd.f32 %v7038, %v7059
        %v7078 = vadd.f32 %v7039, %v7059
        %v7079 = vadd.f32 %v7040, %v7059
        %v7080 = vadd.f32 %v7041, %v7059
        %v7081 = vadd.f32 %v7042, %v7059
        %v7082 = vadd.f32 %v7043, %v7059
        %v7083 = vadd.f32 %v7044, %v7059
        %v7084 = vadd.f32 %v7045, %v7059
        %v7085 = vadd.f32 %v7046, %v7059
        %v7086 = vadd.f32 %v7047, %v7059
        %v7087 = vadd.f32 %v7048, %v7059
        %v7088 = vadd.f32 %v7049, %v7059
        %v7089 = vadd.f32 %v7050, %v7059
        %v7090 = vadd.f32 %v7051, %v7059
        %v7091 = vadd.f32 %v7052, %v7059
        %v7092 = vadd.f32 %v7053, %v7059
        %v7093 = vmax.f32 %v7061, 0.0
        %v7094 = vmax.f32 %v7062, 0.0
        %v7095 = vmax.f32 %v7063, 0.0
        %v7096 = vmax.f32 %v7064, 0.0
        %v7097 = vmax.f32 %v7065, 0.0
        %v7098 = vmax.f32 %v7066, 0.0
        %v7099 = vmax.f32 %v7067, 0.0
        %v7100 = vmax.f32 %v7068, 0.0
        %v7101 = vmax.f32 %v7069, 0.0
        %v7102 = vmax.f32 %v7070, 0.0
        %v7103 = vmax.f32 %v7071, 0.0
        %v7104 = vmax.f32 %v7072, 0.0
        %v7105 = vmax.f32 %v7073, 0.0
        %v7106 = vmax.f32 %v7074, 0.0
        %v7107 = vmax.f32 %v7075, 0.0
        %v7108 = vmax.f32 %v7076, 0.0
        %v7109 = vmax.f32 %v7077, 0.0
        %v7110 = vmax.f32 %v7078, 0.0
        %v7111 = vmax.f32 %v7079, 0.0
        %v7112 = vmax.f32 %v7080, 0.0
        %v7113 = vmax.f32 %v7081, 0.0
        %v7114 = vmax.f32 %v7082, 0.0
        %v7115 = vmax.f32 %v7083, 0.0
        %v7116 = vmax.f32 %v7084, 0.0
        %v7117 = vmax.f32 %v7085, 0.0
        %v7118 = vmax.f32 %v7086, 0.0
        %v7119 = vmax.f32 %v7087, 0.0
        %v7120 = vmax.f32 %v7088, 0.0
        %v7121 = vmax.f32 %v7089, 0.0
        %v7122 = vmax.f32 %v7090, 0.0
        %v7123 = vmax.f32 %v7091, 0.0
        %v7124 = vmax.f32 %v7092, 0.0
        %v7125 = vadd.f32 %v7093, %v7094
        %v7126 = vadd.f32 %v7125, %v7095
        %v7127 = vadd.f32 %v7126, %v7096
        %v7128 = vadd.f32 %v7127, %v7097
        %v7129 = vadd.f32 %v7128, %v7098
        %v7130 = vadd.f32 %v7129, %v7099
        %v7131 = vadd.f32 %v7130, %v7100
        %v7132 = vadd.f32 %v7131, %v7101
        %v7133 = vadd.f32 %v7132, %v7102
        %v7134 = vadd.f32 %v7133, %v7103
        %v7135 = vadd.f32 %v7134, %v7104
        %v7136 = vadd.f32 %v7135, %v7105
        %v7137 = vadd.f32 %v7136, %v7106
        %v7138 = vadd.f32 %v7137, %v7107
        %v7139 = vadd.f32 %v7138, %v7108
        %v7140 = vadd.f32 %v7139, %v7109
        %v7141 = vadd.f32 %v7140, %v7110
        %v7142 = vadd.f32 %v7141, %v7111
        %v7143 = vadd.f32 %v7142, %v7112
        %v7144 = vadd.f32 %v7143, %v7113
        %v7145 = vadd.f32 %v7144, %v7114
        %v7146 = vadd.f32 %v7145, %v7115
        %v7147 = vadd.f32 %v7146, %v7116
        %v7148 = vadd.f32 %v7147, %v7117
        %v7149 = vadd.f32 %v7148, %v7118
        %v7150 = vadd.f32 %v7149, %v7119
        %v7151 = vadd.f32 %v7150, %v7120
        %v7152 = vadd.f32 %v7151, %v7121
        %v7153 = vadd.f32 %v7152, %v7122
        %v7154 = vadd.f32 %v7153, %v7123
        %v7155 = vadd.f32 %v7154, %v7124
        %v7156 = vrot.slane %v7155, 4
        %v7157 = vadd.f32 %v7155, %v7156
        %v7158 = vrot.slane %v7157, 2
        %v7159 = vadd.f32 %v7157, %v7158
        %v7160 = vrot.slane %v7159, 1
        %v7161 = vadd.f32 %v7159, %v7160
        %v7162 = vrcp.pop 256.0
        %v7163 = vmul.f32 %v7161, %v7162
        %v7164 = vld [vmem:[%s10] sm:$0xff]
        %v7165 = vld [vmem:[%s10 + $0x8] sm:$0xff]
        %v7166 = vld [vmem:[%s10 + $0x10] sm:$0xff]
        %v7167 = vld [vmem:[%s10 + $0x18] sm:$0xff]
        %v7168 = vld [vmem:[%s10 + $0x20] sm:$0xff]
        %v7169 = vld [vmem:[%s10 + $0x28] sm:$0xff]
        %v7170 = vld [vmem:[%s10 + $0x30] sm:$0xff]
        %v7171 = vld [vmem:[%s10 + $0x38] sm:$0xff]
        %v7172 = vld [vmem:[%s10 + $0x40] sm:$0xff]
        %v7173 = vld [vmem:[%s10 + $0x48] sm:$0xff]
        %v7174 = vld [vmem:[%s10 + $0x50] sm:$0xff]
        %v7175 = vld [vmem:[%s10 + $0x58] sm:$0xff]
        %v7176 = vld [vmem:[%s10 + $0x60] sm:$0xff]
        %v7177 = vld [vmem:[%s10 + $0x68] sm:$0xff]
        %v7178 = vld [vmem:[%s10 + $0x70] sm:$0xff]
        %v7179 = vld [vmem:[%s10 + $0x78] sm:$0xff]
        %v7180 = vld [vmem:[%s11] sm:$0x1]
        %7181 = vmatprep.subr.mxu0 0.0
        %7182 = vmatpush1.msra.mxu0 %v7164
        %7183 = vmatprep.subr.mxu0 0.0
        %7184 = vmatpush1.msra.mxu0 %v7165
        %7185 = vmatprep.subr.mxu0 0.0
        %7186 = vmatpush1.msra.mxu0 %v7166
        %7187 = vmatprep.subr.mxu0 0.0
        %7188 = vmatpush1.msra.mxu0 %v7167
        %7189 = vmatprep.subr.mxu0 0.0
        %7190 = vmatpush1.msra.mxu0 %v7168
        %7191 = vmatprep.subr.mxu0 0.0
        %7192 = vmatpush1.msra.mxu0 %v7169
        %7193 = vmatprep.subr.mxu0 0.0
        %7194 = vmatpush1.msra.mxu0 %v7170
        %7195 = vmatprep.subr.mxu0 0.0
        %7196 = vmatpush1.msra.mxu0 %v7171
        %7197 = vmatprep.subr.mxu0 0.0
        %7198 = vmatpush1.msra.mxu0 %v7172
        %7199 = vmatprep.subr.mxu0 0.0
        %7200 = vmatpush1.msra.mxu0 %v7173
        %7201 = vmatprep.subr.mxu0 0.0
        %7202 = vmatpush1.msra.mxu0 %v7174
        %7203 = vmatprep.subr.mxu0 0.0
        %7204 = vmatpush1.msra.mxu0 %v7175
        %7205 = vmatprep.subr.mxu0 0.0
        %7206 = vmatpush1.msra.mxu0 %v7176
        %7207 = vmatprep.subr.mxu0 0.0
        %7208 = vmatpush1.msra.mxu0 %v7177
        %7209 = vmatprep.subr.mxu0 0.0
        %7210 = vmatpush1.msra.mxu0 %v7178
        %7211 = vmatprep.subr.mxu0 0.0
        %7212 = vmatpush1.msra.mxu0 %v7179
        %7213 = vmatprep.subr.mxu0 0.0
        %7214 = vmatpush1.msra.mxu0 0.0
        %7215 = vmatprep.subr.mxu0 0.0
        %7216 = vmatpush1.msra.mxu0 0.0
        %7217 = vmatprep.subr.mxu0 0.0
        %7218 = vmatpush1.msra.mxu0 0.0
        %7219 = vmatprep.subr.mxu0 0.0
        %7220 = vmatpush1.msra.mxu0 0.0
        %7221 = vmatprep.subr.mxu0 0.0
        %7222 = vmatpush1.msra.mxu0 0.0
        %7223 = vmatprep.subr.mxu0 0.0
        %7224 = vmatpush1.msra.mxu0 0.0
        %7225 = vmatprep.subr.mxu0 0.0
        %7226 = vmatpush1.msra.mxu0 0.0
        %7227 = vmatprep.subr.mxu0 0.0
        %7228 = vmatpush1.msra.mxu0 0.0
        %7229 = vmatprep.subr.mxu0 0.0
        %7230 = vmatpush1.msra.mxu0 0.0
        %7231 = vmatprep.subr.mxu0 0.0
        %7232 = vmatpush1.msra.mxu0 0.0
        %7233 = vmatprep.subr.mxu0 0.0
        %7234 = vmatpush1.msra.mxu0 0.0
        %7235 = vmatprep.subr.mxu0 0.0
        %7236 = vmatpush1.msra.mxu0 0.0
        %7237 = vmatprep.subr.mxu0 0.0
        %7238 = vmatpush1.msra.mxu0 0.0
        %7239 = vmatprep.subr.mxu0 0.0
        %7240 = vmatpush1.msra.mxu0 0.0
        %7241 = vmatprep.subr.mxu0 0.0
        %7242 = vmatpush1.msra.mxu0 0.0
        %7243 = vmatprep.subr.mxu0 0.0
        %7244 = vmatpush1.msra.mxu0 0.0
        %7245 = vmatprep.mubr.f32.mxu0 0.0
        %7246 = vmatmul.mubr.f32.gmra.mrb[0].mxu0 %v7163
        %v7247 = vpop.f32.mrb[0].mxu0
        %v7248 = vadd.f32 %v7180, %v7247
        %v7249 = vpop.f32.mrb[0].mxu0
        %7250 = vdwg.mxu0
        %v7251 = vmax.f32 %v7248, 0.0
        %v7252 = vld [vmem:[%s12] sm:$0xff]
        %v7253 = vld [vmem:[%s12 + $0x8] sm:$0xff]
        %v7254 = vld [vmem:[%s12 + $0x10] sm:$0xff]
        %v7255 = vld [vmem:[%s12 + $0x18] sm:$0xff]
        %v7256 = vld [vmem:[%s12 + $0x20] sm:$0xff]
        %v7257 = vld [vmem:[%s12 + $0x28] sm:$0xff]
        %v7258 = vld [vmem:[%s12 + $0x30] sm:$0xff]
        %v7259 = vld [vmem:[%s12 + $0x38] sm:$0xff]
        %v7260 = vld [vmem:[%s13] sm:$0x1]
        %v7262 = vsel %vm519, %v7251, 0
        %7264 = vmatprep.subr.mxu0 0.0
        %7265 = vmatpush1.msra.mxu0 %v7252
        %7266 = vmatprep.subr.mxu0 0.0
        %7267 = vmatpush1.msra.mxu0 %v7253
        %7268 = vmatprep.subr.mxu0 0.0
        %7269 = vmatpush1.msra.mxu0 %v7254
        %7270 = vmatprep.subr.mxu0 0.0
        %7271 = vmatpush1.msra.mxu0 %v7255
        %7272 = vmatprep.subr.mxu0 0.0
        %7273 = vmatpush1.msra.mxu0 %v7256
        %7274 = vmatprep.subr.mxu0 0.0
        %7275 = vmatpush1.msra.mxu0 %v7257
        %7276 = vmatprep.subr.mxu0 0.0
        %7277 = vmatpush1.msra.mxu0 %v7258
        %7278 = vmatprep.subr.mxu0 0.0
        %7279 = vmatpush1.msra.mxu0 %v7259
        %7280 = vmatprep.subr.mxu0 0.0
        %7281 = vmatpush1.msra.mxu0 0.0
        %7282 = vmatprep.subr.mxu0 0.0
        %7283 = vmatpush1.msra.mxu0 0.0
        %7284 = vmatprep.subr.mxu0 0.0
        %7285 = vmatpush1.msra.mxu0 0.0
        %7286 = vmatprep.subr.mxu0 0.0
        %7287 = vmatpush1.msra.mxu0 0.0
        %7288 = vmatprep.subr.mxu0 0.0
        %7289 = vmatpush1.msra.mxu0 0.0
        %7290 = vmatprep.subr.mxu0 0.0
        %7291 = vmatpush1.msra.mxu0 0.0
        %7292 = vmatprep.subr.mxu0 0.0
        %7293 = vmatpush1.msra.mxu0 0.0
        %7294 = vmatprep.subr.mxu0 0.0
        %7295 = vmatpush1.msra.mxu0 0.0
        %7296 = vmatprep.subr.mxu0 0.0
        %7297 = vmatpush1.msra.mxu0 0.0
        %7298 = vmatprep.subr.mxu0 0.0
        %7299 = vmatpush1.msra.mxu0 0.0
        %7300 = vmatprep.subr.mxu0 0.0
        %7301 = vmatpush1.msra.mxu0 0.0
        %7302 = vmatprep.subr.mxu0 0.0
        %7303 = vmatpush1.msra.mxu0 0.0
        %7304 = vmatprep.subr.mxu0 0.0
        %7305 = vmatpush1.msra.mxu0 0.0
        %7306 = vmatprep.subr.mxu0 0.0
        %7307 = vmatpush1.msra.mxu0 0.0
        %7308 = vmatprep.subr.mxu0 0.0
        %7309 = vmatpush1.msra.mxu0 0.0
        %7310 = vmatprep.subr.mxu0 0.0
        %7311 = vmatpush1.msra.mxu0 0.0
        %7312 = vmatprep.subr.mxu0 0.0
        %7313 = vmatpush1.msra.mxu0 0.0
        %7314 = vmatprep.subr.mxu0 0.0
        %7315 = vmatpush1.msra.mxu0 0.0
        %7316 = vmatprep.subr.mxu0 0.0
        %7317 = vmatpush1.msra.mxu0 0.0
        %7318 = vmatprep.subr.mxu0 0.0
        %7319 = vmatpush1.msra.mxu0 0.0
        %7320 = vmatprep.subr.mxu0 0.0
        %7321 = vmatpush1.msra.mxu0 0.0
        %7322 = vmatprep.subr.mxu0 0.0
        %7323 = vmatpush1.msra.mxu0 0.0
        %7324 = vmatprep.subr.mxu0 0.0
        %7325 = vmatpush1.msra.mxu0 0.0
        %7326 = vmatprep.subr.mxu0 0.0
        %7327 = vmatpush1.msra.mxu0 0.0
        %7328 = vmatprep.mubr.f32.mxu0 0.0
        %7329 = vmatmul.mubr.f32.gmra.mrb[0].mxu0 %v7262
        %v7330 = vpop.f32.mrb[0].mxu0
        %v7331 = vadd.f32 %v7260, %v7330
        %v7332 = vpop.f32.mrb[0].mxu0
        %7333 = vdwg.mxu0
        %v7334 = vmax.f32 %v7331, 0.0
        %v7335 = vld [vmem:[%s14] sm:$0xff]
        %v7336 = vld [vmem:[%s14 + $0x8] sm:$0xff]
        %v7337 = vld [vmem:[%s14 + $0x10] sm:$0xff]
        %v7338 = vld [vmem:[%s14 + $0x18] sm:$0xff]
        %v7339 = vld [vmem:[%s15] sm:$0x1]
        %v7341 = vsel %vm2723, %v7334, 0
        %7343 = vmatprep.subr.mxu0 0.0
        %7344 = vmatpush1.msra.mxu0 %v7335
        %7345 = vmatprep.subr.mxu0 0.0
        %7346 = vmatpush1.msra.mxu0 %v7336
        %7347 = vmatprep.subr.mxu0 0.0
        %7348 = vmatpush1.msra.mxu0 %v7337
        %7349 = vmatprep.subr.mxu0 0.0
        %7350 = vmatpush1.msra.mxu0 %v7338
        %7351 = vmatprep.subr.mxu0 0.0
        %7352 = vmatpush1.msra.mxu0 0.0
        %7353 = vmatprep.subr.mxu0 0.0
        %7354 = vmatpush1.msra.mxu0 0.0
        %7355 = vmatprep.subr.mxu0 0.0
        %7356 = vmatpush1.msra.mxu0 0.0
        %7357 = vmatprep.subr.mxu0 0.0
        %7358 = vmatpush1.msra.mxu0 0.0
        %7359 = vmatprep.subr.mxu0 0.0
        %7360 = vmatpush1.msra.mxu0 0.0
        %7361 = vmatprep.subr.mxu0 0.0
        %7362 = vmatpush1.msra.mxu0 0.0
        %7363 = vmatprep.subr.mxu0 0.0
        %7364 = vmatpush1.msra.mxu0 0.0
        %7365 = vmatprep.subr.mxu0 0.0
        %7366 = vmatpush1.msra.mxu0 0.0
        %7367 = vmatprep.subr.mxu0 0.0
        %7368 = vmatpush1.msra.mxu0 0.0
        %7369 = vmatprep.subr.mxu0 0.0
        %7370 = vmatpush1.msra.mxu0 0.0
        %7371 = vmatprep.subr.mxu0 0.0
        %7372 = vmatpush1.msra.mxu0 0.0
        %7373 = vmatprep.subr.mxu0 0.0
        %7374 = vmatpush1.msra.mxu0 0.0
        %7375 = vmatprep.subr.mxu0 0.0
        %7376 = vmatpush1.msra.mxu0 0.0
        %7377 = vmatprep.subr.mxu0 0.0
        %7378 = vmatpush1.msra.mxu0 0.0
        %7379 = vmatprep.subr.mxu0 0.0
        %7380 = vmatpush1.msra.mxu0 0.0
        %7381 = vmatprep.subr.mxu0 0.0
        %7382 = vmatpush1.msra.mxu0 0.0
        %7383 = vmatprep.subr.mxu0 0.0
        %7384 = vmatpush1.msra.mxu0 0.0
        %7385 = vmatprep.subr.mxu0 0.0
        %7386 = vmatpush1.msra.mxu0 0.0
        %7387 = vmatprep.subr.mxu0 0.0
        %7388 = vmatpush1.msra.mxu0 0.0
        %7389 = vmatprep.subr.mxu0 0.0
        %7390 = vmatpush1.msra.mxu0 0.0
        %7391 = vmatprep.subr.mxu0 0.0
        %7392 = vmatpush1.msra.mxu0 0.0
        %7393 = vmatprep.subr.mxu0 0.0
        %7394 = vmatpush1.msra.mxu0 0.0
        %7395 = vmatprep.subr.mxu0 0.0
        %7396 = vmatpush1.msra.mxu0 0.0
        %7397 = vmatprep.subr.mxu0 0.0
        %7398 = vmatpush1.msra.mxu0 0.0
        %7399 = vmatprep.subr.mxu0 0.0
        %7400 = vmatpush1.msra.mxu0 0.0
        %7401 = vmatprep.subr.mxu0 0.0
        %7402 = vmatpush1.msra.mxu0 0.0
        %7403 = vmatprep.subr.mxu0 0.0
        %7404 = vmatpush1.msra.mxu0 0.0
        %7405 = vmatprep.subr.mxu0 0.0
        %7406 = vmatpush1.msra.mxu0 0.0
        %7407 = vmatprep.mubr.f32.mxu0 0.0
        %7408 = vmatmul.mubr.f32.gmra.mrb[0].mxu0 %v7341
        %v7409 = vpop.f32.mrb[0].mxu0
        %v7410 = vadd.f32 %v7339, %v7409
        %v7411 = vpop.f32.mrb[0].mxu0
        %7412 = vdwg.mxu0
        %vm7413 = vcmask 16384
        %v7414 = vsel %vm7413, %v7410, -inf
        %7415 = vmax.xlane.f32.xlu0 %v7414
        %v7416 = vpop.xlane.xlu0 %7415
        %v7417 = vsub.f32 %v7410, %v7416
        %v7418 = vmul.f32 %v7417, 1.442695
        %v7419 = vpow.pop %v7418
        %v7420 = vsel %vm7413, %v7419, 0.0
        %7421 = vadd.xlane.f32.xlu0 %v7420
        %v7422 = vpop.xlane.xlu0 %7421
        %v7423 = vrcp.pop %v7422
        %v7424 = vmul.f32 %v7419, %v7423
        %7425 = vst.msk [vmem:[%s513] sm:$0x1] %vm7413, %v7424
        %s7426 = sand.u32 %s379, 1
        %s7427 = scalar_lea.sflag [#allocation5], %s7426
        %s7428 = sand.u32 %s379, 1
        %s7429 = scalar_lea.vmem [#allocation4], %s7428
        // Predicated region
        $region85: #{tpu_custom_call.1} parent=83 // pred_check
          %p7430 = pneg %p389
        $region86: #{tpu_custom_call.1} parent=83 // pred_check_branch
          %7432 = sbr.rel (%p7430) target = $region88
        $region87: #{tpu_custom_call.1} parent=83 // pred_region
          %s7434 = ssub.s32 16, 16
          %7435 = vsyncadd %s7427, %s7434
          %s7436 = smul.addr %s30, 16
          %s7437 = scalar_lea.hbm %s16, %s7436
          %s7439 = sshll.u32 %s7429, 4
          %s7440 = int_to_ptr.vmem [resolvable:$true] %s7439
          %7442 = dma.vmem_to_hbm [thread:$0]  %s7440, 16, %s7437, %s7427
        $region88: #{tpu_custom_call.1} parent=83 // pred_fallthru
          _
      $region84: #{tpu_custom_call.1} parent=5 // pred_fallthru
        _
      %p7443 = scmp.le.s32.totalorder 2, %s25
      // Predicated region
      $region89: #{tpu_custom_call.1} parent=5 // pred_check
        %p7444 = pneg %p7443
      $region90: #{tpu_custom_call.1} parent=5 // pred_check_branch
        %7446 = sbr.rel (%p7444) target = $region92
      $region91: #{tpu_custom_call.1} parent=5 // pred_region
        %s7447 = ssub.s32 %s25, 2
        // Predicated region
        $region93: #{tpu_custom_call.1} parent=91 // pred_check
          %p7448 = pneg %p395
        $region94: #{tpu_custom_call.1} parent=91 // pred_check_branch
          %7450 = sbr.rel (%p7448) target = $region96
        $region95: #{tpu_custom_call.1} parent=91 // pred_region
          %s7451 = sand.u32 %s380, 1
          %s7452 = scalar_lea.sflag [#allocation5], %s7451
          %s7453 = sand.u32 %s380, 1
          %s7454 = scalar_lea.vmem [#allocation4], %s7453
          %7455 = dma.done %s7452, 16
        $region96: #{tpu_custom_call.1} parent=91 // pred_fallthru
          _
      $region92: #{tpu_custom_call.1} parent=5 // pred_fallthru
        _
    $region6: #{tpu_custom_call.1} parent=1 // loop_footer
      %s29 = sadd.s32 1, %s25
    $region7: #{tpu_custom_call.1} parent=1 // loop_footer_branch
      %24 = sbr.rel target = $region3
    $region8: #{tpu_custom_call.1} parent=1 // loop_exit
      _
    %7456 = vsyncpa [#allocation5], 1
    %s7457 = scalar_lea.sflag [#allocation5], 1
    %7458 = vsyncpa %s7457, 1

</llo_original>
